<compile_context>
chip_gen: v5e
topology: v5e:2x2
jax: 0.10.0
libtpu: 0.0.40
codegen_flags: <defaults>
</compile_context>

<pallas_src>
import functools

import numpy as np

import jax
import jax.numpy as jnp
from jax import lax
from jax.experimental import pallas as pl
from jax.experimental.pallas import tpu as pltpu


# ----------------------------------------------------------------------------
# Pallas kernel: the entire encoder for one image of the batch.
# ----------------------------------------------------------------------------
def _encoder_kernel(*refs, acts):
    """refs = (x_ref, [S, T, bias] * n_layers, out_ref).

    x_ref : [1, H, W]  raw image (un-normalized, C==1 folded into W*C).
    S     : [taps, R_out, R_in]   row-selection (H-tap + H-stride + H-pad).
    T     : [taps, W_in*C_in, W_out*C_out]  banded weight slab (W-tap/stride/pad).
    bias  : [1, W_out*C_out]  bias tiled per output column.
    """
    x_ref = refs[0]
    o_ref = refs[-1]
    wrefs = refs[1:-1]

    x = x_ref[...].astype(jnp.float32)          # [1, H, W]
    x = x / 15.0 * 2.0 - 1.0                    # same normalization as torch
    _, H, W = x.shape
    X = x.reshape(H, W)                         # flattened image rows [H, W*C]

    for li, act in enumerate(acts):
        s_ref = wrefs[3 * li]
        t_ref = wrefs[3 * li + 1]
        b_ref = wrefs[3 * li + 2]
        ntaps = s_ref.shape[0]
        r_out = s_ref.shape[1]
        n_out = t_ref.shape[2]

        acc = jnp.zeros((r_out, n_out), jnp.float32)
        for t in range(ntaps):
            rows = jnp.dot(s_ref[t], X, preferred_element_type=jnp.float32)
            acc = acc + jnp.dot(rows, t_ref[t],
                                preferred_element_type=jnp.float32)
        acc = acc + b_ref[...]
        if act == "relu":
            acc = jnp.maximum(acc, 0.0)
        X = acc

    o_ref[...] = X.reshape(o_ref.shape)         # [1, 1, z_dim]


# ----------------------------------------------------------------------------
# Host-side one-time operand preparation (from PyTorch-layout weights).
# ----------------------------------------------------------------------------
def _conv_layer_mats(w, b, stride, h_in, w_in):
    """Conv2d(k=3, pad=1) -> per-tap-row selection S and banded weight slab T."""
    w = np.asarray(w, np.float32)               # [Cout, Cin, 3, 3]
    b = np.asarray(b, np.float32)
    c_out, c_in, kh, kw = w.shape
    pad = 1
    h_out = (h_in + 2 * pad - kh) // stride + 1
    w_out = (w_in + 2 * pad - kw) // stride + 1

    S = np.zeros((kh, h_out, h_in), np.float32)
    T = np.zeros((kh, w_in * c_in, w_out * c_out), np.float32)
    for di in range(kh):
        for oh in range(h_out):
            ih = stride * oh + di - pad
            if 0 <= ih < h_in:
                S[di, oh, ih] = 1.0
        for dj in range(kw):
            P = np.zeros((w_in, w_out), np.float32)
            for ow in range(w_out):
                iw = stride * ow + dj - pad
                if 0 <= iw < w_in:
                    P[iw, ow] = 1.0
            # T[di][iw*Cin+ci, ow*Cout+co] = w[co, ci, di, dj]
            T[di] += np.kron(P, w[:, :, di, dj].T)
    bias_row = np.tile(b, w_out)[None, :]
    return S, T, bias_row, h_out, w_out, c_out


def prepare_encoder_operands(params, image_hw=28):
    """Build the flat operand tuple consumed by the fused kernel."""
    mats = []
    h_in = w_in = image_hw
    c_out = None
    for wn, bn, s in (("w1", "b1", 2), ("w2", "b2", 1), ("w3", "b3", 2),
                      ("w4", "b4", 1), ("w5", "b5", 2)):
        S, T, brow, h_in, w_in, c_out = _conv_layer_mats(
            params[wn], params[bn], s, h_in, w_in)
        mats += [jnp.asarray(S), jnp.asarray(T), jnp.asarray(brow)]

    # Final Linear: z = sum_h Out5[h, :] @ T6[h] + bias, matching torch's
    # NCHW flatten order (c*H*W + h*W + w).
    Wl = np.asarray(params["lin_w"], np.float32)        # [z_dim, C*H*W]
    bl = np.asarray(params["lin_b"], np.float32)
    z_dim = Wl.shape[0]
    Wl4 = Wl.reshape(z_dim, c_out, h_in, w_in)          # [k, c, h, w]
    S6 = np.zeros((h_in, 1, h_in), np.float32)
    T6 = np.zeros((h_in, w_in * c_out, z_dim), np.float32)
    for h in range(h_in):
        S6[h, 0, h] = 1.0
        # rows indexed (w*Cout + c) to match the kernel's activation layout
        T6[h] = np.transpose(Wl4[:, :, h, :], (2, 1, 0)).reshape(w_in * c_out,
                                                                 z_dim)
    mats += [jnp.asarray(S6), jnp.asarray(T6), jnp.asarray(bl[None, :])]
    return tuple(mats)


# ----------------------------------------------------------------------------
# Forward: one fused pallas_call, batch as a "parallel" grid axis.
# ----------------------------------------------------------------------------
def conv_encoder_forward(x, operands):
    B, C, H, W = x.shape
    # NCHW -> flattened rows [B, H, W*C] (channel-minor), tiny one-time reshape.
    x_rows = jnp.transpose(x, (0, 2, 3, 1)).reshape(B, H, W * C)
    z_dim = operands[-1].shape[-1]
    acts = ("relu",) * 5 + ("none",)

    def _const_spec(a):
        nd = a.ndim
        return pl.BlockSpec(a.shape, lambda b, _nd=nd: (0,) * _nd)

    out = pl.pallas_call(
        functools.partial(_encoder_kernel, acts=acts),
        out_shape=jax.ShapeDtypeStruct((B, 1, z_dim), jnp.float32),
        grid=(B,),
        in_specs=[pl.BlockSpec((1, H, W * C), lambda b: (b, 0, 0))]
        + [_const_spec(a) for a in operands],
        out_specs=pl.BlockSpec((1, 1, z_dim), lambda b: (b, 0, 0)),
        compiler_params=pltpu.CompilerParams(
            dimension_semantics=("parallel",),
            vmem_limit_bytes=48 * 1024 * 1024,
        ),
    )(x_rows, *operands)
    return out.reshape(B, z_dim)


# ----------------------------------------------------------------------------
# Parameters (PyTorch layout) + pure-JAX reference for correctness.
# ----------------------------------------------------------------------------
def init_params(key, num_input_channels=1, num_filters=32, z_dim=8):
    c = num_filters
    ks = jax.random.split(key, 12)

    def w(k, shape, scale=0.05):
        return scale * jax.random.normal(k, shape, jnp.float32)

    return {
        "w1": w(ks[0], (c, num_input_channels, 3, 3)), "b1": w(ks[1], (c,)),
        "w2": w(ks[2], (c, c, 3, 3)),                  "b2": w(ks[3], (c,)),
        "w3": w(ks[4], (2 * c, c, 3, 3)),              "b3": w(ks[5], (2 * c,)),
        "w4": w(ks[6], (2 * c, 2 * c, 3, 3)),          "b4": w(ks[7], (2 * c,)),
        "w5": w(ks[8], (2 * c, 2 * c, 3, 3)),          "b5": w(ks[9], (2 * c,)),
        "lin_w": w(ks[10], (z_dim, 2 * 16 * c)),       "lin_b": w(ks[11], (z_dim,)),
    }


def _ref_forward(x, params):
    xn = x.astype(jnp.float32) / 15.0 * 2.0 - 1.0
    dn = ("NCHW", "OIHW", "NCHW")
    hp = jax.lax.Precision.HIGHEST

    def conv(h, w, b, s):
        y = lax.conv_general_dilated(h, w, (s, s), [(1, 1), (1, 1)],
                                     dimension_numbers=dn, precision=hp)
        return jnp.maximum(y + b[None, :, None, None], 0.0)

    h = conv(xn, params["w1"], params["b1"], 2)
    h = conv(h, params["w2"], params["b2"], 1)
    h = conv(h, params["w3"], params["b3"], 2)
    h = conv(h, params["w4"], params["b4"], 1)
    h = conv(h, params["w5"], params["b5"], 2)
    feat = h.reshape(h.shape[0], -1)                    # torch NCHW flatten
    return jnp.dot(feat, params["lin_w"].T, precision=hp) + params["lin_b"]


if __name__ == "__main__":
    key = jax.random.PRNGKey(0)
    pkey, xkey = jax.random.split(key)
    params = init_params(pkey, num_input_channels=1, num_filters=32, z_dim=8)
    # 4-bit-style pixel values in [0, 15], as implied by the /15 normalization.
    x = jnp.round(jax.random.uniform(xkey, (2, 1, 28, 28), jnp.float32,
                                     0.0, 15.0))

    operands = prepare_encoder_operands(params, image_hw=28)   # one-time prep
    fwd = jax.jit(conv_encoder_forward)

    z = jax.block_until_ready(fwd(x, operands))
    assert z.shape == (2, 8), z.shape

    z_ref = _ref_forward(x, params)
    max_err = float(jnp.max(jnp.abs(z - z_ref)))
    assert jnp.allclose(z, z_ref, atol=2e-3, rtol=2e-3), max_err

    print("KERNEL_OK")
</pallas_src>

<mosaic_0001>
module attributes {stable_mosaic.version = 11 : i64} {
  func.func @_encoder_kernel(%arg0: i32, %arg1: memref<1x28x28xf32, #tpu.memory_space<vmem>>, %arg2: memref<3x14x28xf32, #tpu.memory_space<vmem>>, %arg3: memref<3x28x448xf32, #tpu.memory_space<vmem>>, %arg4: memref<1x448xf32, #tpu.memory_space<vmem>>, %arg5: memref<3x14x14xf32, #tpu.memory_space<vmem>>, %arg6: memref<3x448x448xf32, #tpu.memory_space<vmem>>, %arg7: memref<1x448xf32, #tpu.memory_space<vmem>>, %arg8: memref<3x7x14xf32, #tpu.memory_space<vmem>>, %arg9: memref<3x448x448xf32, #tpu.memory_space<vmem>>, %arg10: memref<1x448xf32, #tpu.memory_space<vmem>>, %arg11: memref<3x7x7xf32, #tpu.memory_space<vmem>>, %arg12: memref<3x448x448xf32, #tpu.memory_space<vmem>>, %arg13: memref<1x448xf32, #tpu.memory_space<vmem>>, %arg14: memref<3x4x7xf32, #tpu.memory_space<vmem>>, %arg15: memref<3x448x256xf32, #tpu.memory_space<vmem>>, %arg16: memref<1x256xf32, #tpu.memory_space<vmem>>, %arg17: memref<4x1x4xf32, #tpu.memory_space<vmem>>, %arg18: memref<4x256x8xf32, #tpu.memory_space<vmem>>, %arg19: memref<1x8xf32, #tpu.memory_space<vmem>>, %arg20: memref<1x1x8xf32, #tpu.memory_space<vmem>>) attributes {dimension_semantics = [#tpu.dimension_semantics<parallel>], iteration_bounds = array<i64: 2>, scalar_prefetch = 0 : i64, scratch_operands = 0 : i64, tpu.core_type = #tpu.core_type<tc>, window_params = [{transform_indices = @transform_0, window_bounds = array<i64: 1, 28, 28>}, {pipeline_mode = #tpu.pipeline_mode<synchronous>, transform_indices = @transform_1, window_bounds = array<i64: 3, 14, 28>}, {pipeline_mode = #tpu.pipeline_mode<synchronous>, transform_indices = @transform_2, window_bounds = array<i64: 3, 28, 448>}, {pipeline_mode = #tpu.pipeline_mode<synchronous>, transform_indices = @transform_3, window_bounds = array<i64: 1, 448>}, {pipeline_mode = #tpu.pipeline_mode<synchronous>, transform_indices = @transform_4, window_bounds = array<i64: 3, 14, 14>}, {pipeline_mode = #tpu.pipeline_mode<synchronous>, transform_indices = @transform_5, window_bounds = array<i64: 3, 448, 448>}, {pipeline_mode = #tpu.pipeline_mode<synchronous>, transform_indices = @transform_6, window_bounds = array<i64: 1, 448>}, {pipeline_mode = #tpu.pipeline_mode<synchronous>, transform_indices = @transform_7, window_bounds = array<i64: 3, 7, 14>}, {pipeline_mode = #tpu.pipeline_mode<synchronous>, transform_indices = @transform_8, window_bounds = array<i64: 3, 448, 448>}, {pipeline_mode = #tpu.pipeline_mode<synchronous>, transform_indices = @transform_9, window_bounds = array<i64: 1, 448>}, {pipeline_mode = #tpu.pipeline_mode<synchronous>, transform_indices = @transform_10, window_bounds = array<i64: 3, 7, 7>}, {pipeline_mode = #tpu.pipeline_mode<synchronous>, transform_indices = @transform_11, window_bounds = array<i64: 3, 448, 448>}, {pipeline_mode = #tpu.pipeline_mode<synchronous>, transform_indices = @transform_12, window_bounds = array<i64: 1, 448>}, {pipeline_mode = #tpu.pipeline_mode<synchronous>, transform_indices = @transform_13, window_bounds = array<i64: 3, 4, 7>}, {pipeline_mode = #tpu.pipeline_mode<synchronous>, transform_indices = @transform_14, window_bounds = array<i64: 3, 448, 256>}, {pipeline_mode = #tpu.pipeline_mode<synchronous>, transform_indices = @transform_15, window_bounds = array<i64: 1, 256>}, {pipeline_mode = #tpu.pipeline_mode<synchronous>, transform_indices = @transform_16, window_bounds = array<i64: 4, 1, 4>}, {pipeline_mode = #tpu.pipeline_mode<synchronous>, transform_indices = @transform_17, window_bounds = array<i64: 4, 256, 8>}, {pipeline_mode = #tpu.pipeline_mode<synchronous>, transform_indices = @transform_18, window_bounds = array<i64: 1, 8>}, {transform_indices = @transform_19, window_bounds = array<i64: 1, 1, 8>}]} {
    %c0 = arith.constant 0 : index
    %c0_0 = arith.constant 0 : index
    %c0_1 = arith.constant 0 : index
    %0 = vector.load %arg1[%c0, %c0_0, %c0_1] : memref<1x28x28xf32, #tpu.memory_space<vmem>>, vector<1x28x28xf32>
    %cst = arith.constant 1.500000e+01 : f32
    %1 = vector.broadcast %cst : f32 to vector<1x28x28xf32>
    %2 = arith.divf %0, %1 : vector<1x28x28xf32>
    %cst_2 = arith.constant 2.000000e+00 : f32
    %3 = vector.broadcast %cst_2 : f32 to vector<1x28x28xf32>
    %4 = arith.mulf %2, %3 : vector<1x28x28xf32>
    %cst_3 = arith.constant 1.000000e+00 : f32
    %5 = vector.broadcast %cst_3 : f32 to vector<1x28x28xf32>
    %6 = arith.subf %4, %5 : vector<1x28x28xf32>
    %7 = vector.shape_cast %6 : vector<1x28x28xf32> to vector<28x28xf32>
    %cst_4 = arith.constant 0.000000e+00 : f32
    %8 = vector.broadcast %cst_4 : f32 to vector<14x448xf32>
    %c0_5 = arith.constant 0 : index
    %c0_6 = arith.constant 0 : index
    %c0_7 = arith.constant 0 : index
    %9 = vector.load %arg2[%c0_5, %c0_6, %c0_7] : memref<3x14x28xf32, #tpu.memory_space<vmem>>, vector<1x14x28xf32>
    %10 = vector.shape_cast %9 : vector<1x14x28xf32> to vector<14x28xf32>
    %cst_8 = arith.constant dense<0.000000e+00> : vector<14x28xf32>
    %11 = tpu.matmul %10, %7, %cst_8 {dimension_numbers = #tpu.dot_dimension_numbers<[1], [0], [0], [1], [0, 0, 1, 1], [], []>} : vector<14x28xf32>, vector<28x28xf32>, vector<14x28xf32> -> vector<14x28xf32>
    %c0_9 = arith.constant 0 : index
    %c0_10 = arith.constant 0 : index
    %c0_11 = arith.constant 0 : index
    %12 = vector.load %arg3[%c0_9, %c0_10, %c0_11] : memref<3x28x448xf32, #tpu.memory_space<vmem>>, vector<1x28x448xf32>
    %13 = vector.shape_cast %12 : vector<1x28x448xf32> to vector<28x448xf32>
    %cst_12 = arith.constant dense<0.000000e+00> : vector<14x448xf32>
    %14 = tpu.matmul %11, %13, %cst_12 {dimension_numbers = #tpu.dot_dimension_numbers<[1], [0], [0], [1], [0, 0, 1, 1], [], []>} : vector<14x28xf32>, vector<28x448xf32>, vector<14x448xf32> -> vector<14x448xf32>
    %15 = arith.addf %8, %14 : vector<14x448xf32>
    %c1 = arith.constant 1 : index
    %c0_13 = arith.constant 0 : index
    %c0_14 = arith.constant 0 : index
    %16 = vector.load %arg2[%c1, %c0_13, %c0_14] : memref<3x14x28xf32, #tpu.memory_space<vmem>>, vector<1x14x28xf32>
    %17 = vector.shape_cast %16 : vector<1x14x28xf32> to vector<14x28xf32>
    %cst_15 = arith.constant dense<0.000000e+00> : vector<14x28xf32>
    %18 = tpu.matmul %17, %7, %cst_15 {dimension_numbers = #tpu.dot_dimension_numbers<[1], [0], [0], [1], [0, 0, 1, 1], [], []>} : vector<14x28xf32>, vector<28x28xf32>, vector<14x28xf32> -> vector<14x28xf32>
    %c1_16 = arith.constant 1 : index
    %c0_17 = arith.constant 0 : index
    %c0_18 = arith.constant 0 : index
    %19 = vector.load %arg3[%c1_16, %c0_17, %c0_18] : memref<3x28x448xf32, #tpu.memory_space<vmem>>, vector<1x28x448xf32>
    %20 = vector.shape_cast %19 : vector<1x28x448xf32> to vector<28x448xf32>
    %cst_19 = arith.constant dense<0.000000e+00> : vector<14x448xf32>
    %21 = tpu.matmul %18, %20, %cst_19 {dimension_numbers = #tpu.dot_dimension_numbers<[1], [0], [0], [1], [0, 0, 1, 1], [], []>} : vector<14x28xf32>, vector<28x448xf32>, vector<14x448xf32> -> vector<14x448xf32>
    %22 = arith.addf %15, %21 : vector<14x448xf32>
    %c2 = arith.constant 2 : index
    %c0_20 = arith.constant 0 : index
    %c0_21 = arith.constant 0 : index
    %23 = vector.load %arg2[%c2, %c0_20, %c0_21] : memref<3x14x28xf32, #tpu.memory_space<vmem>>, vector<1x14x28xf32>
    %24 = vector.shape_cast %23 : vector<1x14x28xf32> to vector<14x28xf32>
    %cst_22 = arith.constant dense<0.000000e+00> : vector<14x28xf32>
    %25 = tpu.matmul %24, %7, %cst_22 {dimension_numbers = #tpu.dot_dimension_numbers<[1], [0], [0], [1], [0, 0, 1, 1], [], []>} : vector<14x28xf32>, vector<28x28xf32>, vector<14x28xf32> -> vector<14x28xf32>
    %c2_23 = arith.constant 2 : index
    %c0_24 = arith.constant 0 : index
    %c0_25 = arith.constant 0 : index
    %26 = vector.load %arg3[%c2_23, %c0_24, %c0_25] : memref<3x28x448xf32, #tpu.memory_space<vmem>>, vector<1x28x448xf32>
    %27 = vector.shape_cast %26 : vector<1x28x448xf32> to vector<28x448xf32>
    %cst_26 = arith.constant dense<0.000000e+00> : vector<14x448xf32>
    %28 = tpu.matmul %25, %27, %cst_26 {dimension_numbers = #tpu.dot_dimension_numbers<[1], [0], [0], [1], [0, 0, 1, 1], [], []>} : vector<14x28xf32>, vector<28x448xf32>, vector<14x448xf32> -> vector<14x448xf32>
    %29 = arith.addf %22, %28 : vector<14x448xf32>
    %c0_27 = arith.constant 0 : index
    %c0_28 = arith.constant 0 : index
    %30 = vector.load %arg4[%c0_27, %c0_28] : memref<1x448xf32, #tpu.memory_space<vmem>>, vector<1x448xf32>
    %31 = vector.broadcast %30 : vector<1x448xf32> to vector<14x448xf32>
    %32 = arith.addf %29, %31 : vector<14x448xf32>
    %cst_29 = arith.constant 0.000000e+00 : f32
    %33 = vector.broadcast %cst_29 : f32 to vector<14x448xf32>
    %34 = arith.maximumf %32, %33 : vector<14x448xf32>
    %cst_30 = arith.constant 0.000000e+00 : f32
    %35 = vector.broadcast %cst_30 : f32 to vector<14x448xf32>
    %c0_31 = arith.constant 0 : index
    %c0_32 = arith.constant 0 : index
    %c0_33 = arith.constant 0 : index
    %36 = vector.load %arg5[%c0_31, %c0_32, %c0_33] : memref<3x14x14xf32, #tpu.memory_space<vmem>>, vector<1x14x14xf32>
    %37 = vector.shape_cast %36 : vector<1x14x14xf32> to vector<14x14xf32>
    %cst_34 = arith.constant dense<0.000000e+00> : vector<14x448xf32>
    %38 = tpu.matmul %37, %34, %cst_34 {dimension_numbers = #tpu.dot_dimension_numbers<[1], [0], [0], [1], [0, 0, 1, 1], [], []>} : vector<14x14xf32>, vector<14x448xf32>, vector<14x448xf32> -> vector<14x448xf32>
    %c0_35 = arith.constant 0 : index
    %c0_36 = arith.constant 0 : index
    %c0_37 = arith.constant 0 : index
    %39 = vector.load %arg6[%c0_35, %c0_36, %c0_37] : memref<3x448x448xf32, #tpu.memory_space<vmem>>, vector<1x448x448xf32>
    %40 = vector.shape_cast %39 : vector<1x448x448xf32> to vector<448x448xf32>
    %cst_38 = arith.constant dense<0.000000e+00> : vector<14x448xf32>
    %41 = tpu.matmul %38, %40, %cst_38 {dimension_numbers = #tpu.dot_dimension_numbers<[1], [0], [0], [1], [0, 0, 1, 1], [], []>} : vector<14x448xf32>, vector<448x448xf32>, vector<14x448xf32> -> vector<14x448xf32>
    %42 = arith.addf %35, %41 : vector<14x448xf32>
    %c1_39 = arith.constant 1 : index
    %c0_40 = arith.constant 0 : index
    %c0_41 = arith.constant 0 : index
    %43 = vector.load %arg5[%c1_39, %c0_40, %c0_41] : memref<3x14x14xf32, #tpu.memory_space<vmem>>, vector<1x14x14xf32>
    %44 = vector.shape_cast %43 : vector<1x14x14xf32> to vector<14x14xf32>
    %cst_42 = arith.constant dense<0.000000e+00> : vector<14x448xf32>
    %45 = tpu.matmul %44, %34, %cst_42 {dimension_numbers = #tpu.dot_dimension_numbers<[1], [0], [0], [1], [0, 0, 1, 1], [], []>} : vector<14x14xf32>, vector<14x448xf32>, vector<14x448xf32> -> vector<14x448xf32>
    %c1_43 = arith.constant 1 : index
    %c0_44 = arith.constant 0 : index
    %c0_45 = arith.constant 0 : index
    %46 = vector.load %arg6[%c1_43, %c0_44, %c0_45] : memref<3x448x448xf32, #tpu.memory_space<vmem>>, vector<1x448x448xf32>
    %47 = vector.shape_cast %46 : vector<1x448x448xf32> to vector<448x448xf32>
    %cst_46 = arith.constant dense<0.000000e+00> : vector<14x448xf32>
    %48 = tpu.matmul %45, %47, %cst_46 {dimension_numbers = #tpu.dot_dimension_numbers<[1], [0], [0], [1], [0, 0, 1, 1], [], []>} : vector<14x448xf32>, vector<448x448xf32>, vector<14x448xf32> -> vector<14x448xf32>
    %49 = arith.addf %42, %48 : vector<14x448xf32>
    %c2_47 = arith.constant 2 : index
    %c0_48 = arith.constant 0 : index
    %c0_49 = arith.constant 0 : index
    %50 = vector.load %arg5[%c2_47, %c0_48, %c0_49] : memref<3x14x14xf32, #tpu.memory_space<vmem>>, vector<1x14x14xf32>
    %51 = vector.shape_cast %50 : vector<1x14x14xf32> to vector<14x14xf32>
    %cst_50 = arith.constant dense<0.000000e+00> : vector<14x448xf32>
    %52 = tpu.matmul %51, %34, %cst_50 {dimension_numbers = #tpu.dot_dimension_numbers<[1], [0], [0], [1], [0, 0, 1, 1], [], []>} : vector<14x14xf32>, vector<14x448xf32>, vector<14x448xf32> -> vector<14x448xf32>
    %c2_51 = arith.constant 2 : index
    %c0_52 = arith.constant 0 : index
    %c0_53 = arith.constant 0 : index
    %53 = vector.load %arg6[%c2_51, %c0_52, %c0_53] : memref<3x448x448xf32, #tpu.memory_space<vmem>>, vector<1x448x448xf32>
    %54 = vector.shape_cast %53 : vector<1x448x448xf32> to vector<448x448xf32>
    %cst_54 = arith.constant dense<0.000000e+00> : vector<14x448xf32>
    %55 = tpu.matmul %52, %54, %cst_54 {dimension_numbers = #tpu.dot_dimension_numbers<[1], [0], [0], [1], [0, 0, 1, 1], [], []>} : vector<14x448xf32>, vector<448x448xf32>, vector<14x448xf32> -> vector<14x448xf32>
    %56 = arith.addf %49, %55 : vector<14x448xf32>
    %c0_55 = arith.constant 0 : index
    %c0_56 = arith.constant 0 : index
    %57 = vector.load %arg7[%c0_55, %c0_56] : memref<1x448xf32, #tpu.memory_space<vmem>>, vector<1x448xf32>
    %58 = vector.broadcast %57 : vector<1x448xf32> to vector<14x448xf32>
    %59 = arith.addf %56, %58 : vector<14x448xf32>
    %cst_57 = arith.constant 0.000000e+00 : f32
    %60 = vector.broadcast %cst_57 : f32 to vector<14x448xf32>
    %61 = arith.maximumf %59, %60 : vector<14x448xf32>
    %cst_58 = arith.constant 0.000000e+00 : f32
    %62 = vector.broadcast %cst_58 : f32 to vector<7x448xf32>
    %c0_59 = arith.constant 0 : index
    %c0_60 = arith.constant 0 : index
    %c0_61 = arith.constant 0 : index
    %63 = vector.load %arg8[%c0_59, %c0_60, %c0_61] : memref<3x7x14xf32, #tpu.memory_space<vmem>>, vector<1x7x14xf32>
    %64 = vector.shape_cast %63 : vector<1x7x14xf32> to vector<7x14xf32>
    %cst_62 = arith.constant dense<0.000000e+00> : vector<7x448xf32>
    %65 = tpu.matmul %64, %61, %cst_62 {dimension_numbers = #tpu.dot_dimension_numbers<[1], [0], [0], [1], [0, 0, 1, 1], [], []>} : vector<7x14xf32>, vector<14x448xf32>, vector<7x448xf32> -> vector<7x448xf32>
    %c0_63 = arith.constant 0 : index
    %c0_64 = arith.constant 0 : index
    %c0_65 = arith.constant 0 : index
    %66 = vector.load %arg9[%c0_63, %c0_64, %c0_65] : memref<3x448x448xf32, #tpu.memory_space<vmem>>, vector<1x448x448xf32>
    %67 = vector.shape_cast %66 : vector<1x448x448xf32> to vector<448x448xf32>
    %cst_66 = arith.constant dense<0.000000e+00> : vector<7x448xf32>
    %68 = tpu.matmul %65, %67, %cst_66 {dimension_numbers = #tpu.dot_dimension_numbers<[1], [0], [0], [1], [0, 0, 1, 1], [], []>} : vector<7x448xf32>, vector<448x448xf32>, vector<7x448xf32> -> vector<7x448xf32>
    %69 = arith.addf %62, %68 : vector<7x448xf32>
    %c1_67 = arith.constant 1 : index
    %c0_68 = arith.constant 0 : index
    %c0_69 = arith.constant 0 : index
    %70 = vector.load %arg8[%c1_67, %c0_68, %c0_69] : memref<3x7x14xf32, #tpu.memory_space<vmem>>, vector<1x7x14xf32>
    %71 = vector.shape_cast %70 : vector<1x7x14xf32> to vector<7x14xf32>
    %cst_70 = arith.constant dense<0.000000e+00> : vector<7x448xf32>
    %72 = tpu.matmul %71, %61, %cst_70 {dimension_numbers = #tpu.dot_dimension_numbers<[1], [0], [0], [1], [0, 0, 1, 1], [], []>} : vector<7x14xf32>, vector<14x448xf32>, vector<7x448xf32> -> vector<7x448xf32>
    %c1_71 = arith.constant 1 : index
    %c0_72 = arith.constant 0 : index
    %c0_73 = arith.constant 0 : index
    %73 = vector.load %arg9[%c1_71, %c0_72, %c0_73] : memref<3x448x448xf32, #tpu.memory_space<vmem>>, vector<1x448x448xf32>
    %74 = vector.shape_cast %73 : vector<1x448x448xf32> to vector<448x448xf32>
    %cst_74 = arith.constant dense<0.000000e+00> : vector<7x448xf32>
    %75 = tpu.matmul %72, %74, %cst_74 {dimension_numbers = #tpu.dot_dimension_numbers<[1], [0], [0], [1], [0, 0, 1, 1], [], []>} : vector<7x448xf32>, vector<448x448xf32>, vector<7x448xf32> -> vector<7x448xf32>
    %76 = arith.addf %69, %75 : vector<7x448xf32>
    %c2_75 = arith.constant 2 : index
    %c0_76 = arith.constant 0 : index
    %c0_77 = arith.constant 0 : index
    %77 = vector.load %arg8[%c2_75, %c0_76, %c0_77] : memref<3x7x14xf32, #tpu.memory_space<vmem>>, vector<1x7x14xf32>
    %78 = vector.shape_cast %77 : vector<1x7x14xf32> to vector<7x14xf32>
    %cst_78 = arith.constant dense<0.000000e+00> : vector<7x448xf32>
    %79 = tpu.matmul %78, %61, %cst_78 {dimension_numbers = #tpu.dot_dimension_numbers<[1], [0], [0], [1], [0, 0, 1, 1], [], []>} : vector<7x14xf32>, vector<14x448xf32>, vector<7x448xf32> -> vector<7x448xf32>
    %c2_79 = arith.constant 2 : index
    %c0_80 = arith.constant 0 : index
    %c0_81 = arith.constant 0 : index
    %80 = vector.load %arg9[%c2_79, %c0_80, %c0_81] : memref<3x448x448xf32, #tpu.memory_space<vmem>>, vector<1x448x448xf32>
    %81 = vector.shape_cast %80 : vector<1x448x448xf32> to vector<448x448xf32>
    %cst_82 = arith.constant dense<0.000000e+00> : vector<7x448xf32>
    %82 = tpu.matmul %79, %81, %cst_82 {dimension_numbers = #tpu.dot_dimension_numbers<[1], [0], [0], [1], [0, 0, 1, 1], [], []>} : vector<7x448xf32>, vector<448x448xf32>, vector<7x448xf32> -> vector<7x448xf32>
    %83 = arith.addf %76, %82 : vector<7x448xf32>
    %c0_83 = arith.constant 0 : index
    %c0_84 = arith.constant 0 : index
    %84 = vector.load %arg10[%c0_83, %c0_84] : memref<1x448xf32, #tpu.memory_space<vmem>>, vector<1x448xf32>
    %85 = vector.broadcast %84 : vector<1x448xf32> to vector<7x448xf32>
    %86 = arith.addf %83, %85 : vector<7x448xf32>
    %cst_85 = arith.constant 0.000000e+00 : f32
    %87 = vector.broadcast %cst_85 : f32 to vector<7x448xf32>
    %88 = arith.maximumf %86, %87 : vector<7x448xf32>
    %cst_86 = arith.constant 0.000000e+00 : f32
    %89 = vector.broadcast %cst_86 : f32 to vector<7x448xf32>
    %c0_87 = arith.constant 0 : index
    %c0_88 = arith.constant 0 : index
    %c0_89 = arith.constant 0 : index
    %90 = vector.load %arg11[%c0_87, %c0_88, %c0_89] : memref<3x7x7xf32, #tpu.memory_space<vmem>>, vector<1x7x7xf32>
    %91 = vector.shape_cast %90 : vector<1x7x7xf32> to vector<7x7xf32>
    %cst_90 = arith.constant dense<0.000000e+00> : vector<7x448xf32>
    %92 = tpu.matmul %91, %88, %cst_90 {dimension_numbers = #tpu.dot_dimension_numbers<[1], [0], [0], [1], [0, 0, 1, 1], [], []>} : vector<7x7xf32>, vector<7x448xf32>, vector<7x448xf32> -> vector<7x448xf32>
    %c0_91 = arith.constant 0 : index
    %c0_92 = arith.constant 0 : index
    %c0_93 = arith.constant 0 : index
    %93 = vector.load %arg12[%c0_91, %c0_92, %c0_93] : memref<3x448x448xf32, #tpu.memory_space<vmem>>, vector<1x448x448xf32>
    %94 = vector.shape_cast %93 : vector<1x448x448xf32> to vector<448x448xf32>
    %cst_94 = arith.constant dense<0.000000e+00> : vector<7x448xf32>
    %95 = tpu.matmul %92, %94, %cst_94 {dimension_numbers = #tpu.dot_dimension_numbers<[1], [0], [0], [1], [0, 0, 1, 1], [], []>} : vector<7x448xf32>, vector<448x448xf32>, vector<7x448xf32> -> vector<7x448xf32>
    %96 = arith.addf %89, %95 : vector<7x448xf32>
    %c1_95 = arith.constant 1 : index
    %c0_96 = arith.constant 0 : index
    %c0_97 = arith.constant 0 : index
    %97 = vector.load %arg11[%c1_95, %c0_96, %c0_97] : memref<3x7x7xf32, #tpu.memory_space<vmem>>, vector<1x7x7xf32>
    %98 = vector.shape_cast %97 : vector<1x7x7xf32> to vector<7x7xf32>
    %cst_98 = arith.constant dense<0.000000e+00> : vector<7x448xf32>
    %99 = tpu.matmul %98, %88, %cst_98 {dimension_numbers = #tpu.dot_dimension_numbers<[1], [0], [0], [1], [0, 0, 1, 1], [], []>} : vector<7x7xf32>, vector<7x448xf32>, vector<7x448xf32> -> vector<7x448xf32>
    %c1_99 = arith.constant 1 : index
    %c0_100 = arith.constant 0 : index
    %c0_101 = arith.constant 0 : index
    %100 = vector.load %arg12[%c1_99, %c0_100, %c0_101] : memref<3x448x448xf32, #tpu.memory_space<vmem>>, vector<1x448x448xf32>
    %101 = vector.shape_cast %100 : vector<1x448x448xf32> to vector<448x448xf32>
    %cst_102 = arith.constant dense<0.000000e+00> : vector<7x448xf32>
    %102 = tpu.matmul %99, %101, %cst_102 {dimension_numbers = #tpu.dot_dimension_numbers<[1], [0], [0], [1], [0, 0, 1, 1], [], []>} : vector<7x448xf32>, vector<448x448xf32>, vector<7x448xf32> -> vector<7x448xf32>
    %103 = arith.addf %96, %102 : vector<7x448xf32>
    %c2_103 = arith.constant 2 : index
    %c0_104 = arith.constant 0 : index
    %c0_105 = arith.constant 0 : index
    %104 = vector.load %arg11[%c2_103, %c0_104, %c0_105] : memref<3x7x7xf32, #tpu.memory_space<vmem>>, vector<1x7x7xf32>
    %105 = vector.shape_cast %104 : vector<1x7x7xf32> to vector<7x7xf32>
    %cst_106 = arith.constant dense<0.000000e+00> : vector<7x448xf32>
    %106 = tpu.matmul %105, %88, %cst_106 {dimension_numbers = #tpu.dot_dimension_numbers<[1], [0], [0], [1], [0, 0, 1, 1], [], []>} : vector<7x7xf32>, vector<7x448xf32>, vector<7x448xf32> -> vector<7x448xf32>
    %c2_107 = arith.constant 2 : index
    %c0_108 = arith.constant 0 : index
    %c0_109 = arith.constant 0 : index
    %107 = vector.load %arg12[%c2_107, %c0_108, %c0_109] : memref<3x448x448xf32, #tpu.memory_space<vmem>>, vector<1x448x448xf32>
    %108 = vector.shape_cast %107 : vector<1x448x448xf32> to vector<448x448xf32>
    %cst_110 = arith.constant dense<0.000000e+00> : vector<7x448xf32>
    %109 = tpu.matmul %106, %108, %cst_110 {dimension_numbers = #tpu.dot_dimension_numbers<[1], [0], [0], [1], [0, 0, 1, 1], [], []>} : vector<7x448xf32>, vector<448x448xf32>, vector<7x448xf32> -> vector<7x448xf32>
    %110 = arith.addf %103, %109 : vector<7x448xf32>
    %c0_111 = arith.constant 0 : index
    %c0_112 = arith.constant 0 : index
    %111 = vector.load %arg13[%c0_111, %c0_112] : memref<1x448xf32, #tpu.memory_space<vmem>>, vector<1x448xf32>
    %112 = vector.broadcast %111 : vector<1x448xf32> to vector<7x448xf32>
    %113 = arith.addf %110, %112 : vector<7x448xf32>
    %cst_113 = arith.constant 0.000000e+00 : f32
    %114 = vector.broadcast %cst_113 : f32 to vector<7x448xf32>
    %115 = arith.maximumf %113, %114 : vector<7x448xf32>
    %cst_114 = arith.constant 0.000000e+00 : f32
    %116 = vector.broadcast %cst_114 : f32 to vector<4x256xf32>
    %c0_115 = arith.constant 0 : index
    %c0_116 = arith.constant 0 : index
    %c0_117 = arith.constant 0 : index
    %117 = vector.load %arg14[%c0_115, %c0_116, %c0_117] : memref<3x4x7xf32, #tpu.memory_space<vmem>>, vector<1x4x7xf32>
    %118 = vector.shape_cast %117 : vector<1x4x7xf32> to vector<4x7xf32>
    %cst_118 = arith.constant dense<0.000000e+00> : vector<4x448xf32>
    %119 = tpu.matmul %118, %115, %cst_118 {dimension_numbers = #tpu.dot_dimension_numbers<[1], [0], [0], [1], [0, 0, 1, 1], [], []>} : vector<4x7xf32>, vector<7x448xf32>, vector<4x448xf32> -> vector<4x448xf32>
    %c0_119 = arith.constant 0 : index
    %c0_120 = arith.constant 0 : index
    %c0_121 = arith.constant 0 : index
    %120 = vector.load %arg15[%c0_119, %c0_120, %c0_121] : memref<3x448x256xf32, #tpu.memory_space<vmem>>, vector<1x448x256xf32>
    %121 = vector.shape_cast %120 : vector<1x448x256xf32> to vector<448x256xf32>
    %cst_122 = arith.constant dense<0.000000e+00> : vector<4x256xf32>
    %122 = tpu.matmul %119, %121, %cst_122 {dimension_numbers = #tpu.dot_dimension_numbers<[1], [0], [0], [1], [0, 0, 1, 1], [], []>} : vector<4x448xf32>, vector<448x256xf32>, vector<4x256xf32> -> vector<4x256xf32>
    %123 = arith.addf %116, %122 : vector<4x256xf32>
    %c1_123 = arith.constant 1 : index
    %c0_124 = arith.constant 0 : index
    %c0_125 = arith.constant 0 : index
    %124 = vector.load %arg14[%c1_123, %c0_124, %c0_125] : memref<3x4x7xf32, #tpu.memory_space<vmem>>, vector<1x4x7xf32>
    %125 = vector.shape_cast %124 : vector<1x4x7xf32> to vector<4x7xf32>
    %cst_126 = arith.constant dense<0.000000e+00> : vector<4x448xf32>
    %126 = tpu.matmul %125, %115, %cst_126 {dimension_numbers = #tpu.dot_dimension_numbers<[1], [0], [0], [1], [0, 0, 1, 1], [], []>} : vector<4x7xf32>, vector<7x448xf32>, vector<4x448xf32> -> vector<4x448xf32>
    %c1_127 = arith.constant 1 : index
    %c0_128 = arith.constant 0 : index
    %c0_129 = arith.constant 0 : index
    %127 = vector.load %arg15[%c1_127, %c0_128, %c0_129] : memref<3x448x256xf32, #tpu.memory_space<vmem>>, vector<1x448x256xf32>
    %128 = vector.shape_cast %127 : vector<1x448x256xf32> to vector<448x256xf32>
    %cst_130 = arith.constant dense<0.000000e+00> : vector<4x256xf32>
    %129 = tpu.matmul %126, %128, %cst_130 {dimension_numbers = #tpu.dot_dimension_numbers<[1], [0], [0], [1], [0, 0, 1, 1], [], []>} : vector<4x448xf32>, vector<448x256xf32>, vector<4x256xf32> -> vector<4x256xf32>
    %130 = arith.addf %123, %129 : vector<4x256xf32>
    %c2_131 = arith.constant 2 : index
    %c0_132 = arith.constant 0 : index
    %c0_133 = arith.constant 0 : index
    %131 = vector.load %arg14[%c2_131, %c0_132, %c0_133] : memref<3x4x7xf32, #tpu.memory_space<vmem>>, vector<1x4x7xf32>
    %132 = vector.shape_cast %131 : vector<1x4x7xf32> to vector<4x7xf32>
    %cst_134 = arith.constant dense<0.000000e+00> : vector<4x448xf32>
    %133 = tpu.matmul %132, %115, %cst_134 {dimension_numbers = #tpu.dot_dimension_numbers<[1], [0], [0], [1], [0, 0, 1, 1], [], []>} : vector<4x7xf32>, vector<7x448xf32>, vector<4x448xf32> -> vector<4x448xf32>
    %c2_135 = arith.constant 2 : index
    %c0_136 = arith.constant 0 : index
    %c0_137 = arith.constant 0 : index
    %134 = vector.load %arg15[%c2_135, %c0_136, %c0_137] : memref<3x448x256xf32, #tpu.memory_space<vmem>>, vector<1x448x256xf32>
    %135 = vector.shape_cast %134 : vector<1x448x256xf32> to vector<448x256xf32>
    %cst_138 = arith.constant dense<0.000000e+00> : vector<4x256xf32>
    %136 = tpu.matmul %133, %135, %cst_138 {dimension_numbers = #tpu.dot_dimension_numbers<[1], [0], [0], [1], [0, 0, 1, 1], [], []>} : vector<4x448xf32>, vector<448x256xf32>, vector<4x256xf32> -> vector<4x256xf32>
    %137 = arith.addf %130, %136 : vector<4x256xf32>
    %c0_139 = arith.constant 0 : index
    %c0_140 = arith.constant 0 : index
    %138 = vector.load %arg16[%c0_139, %c0_140] : memref<1x256xf32, #tpu.memory_space<vmem>>, vector<1x256xf32>
    %139 = vector.broadcast %138 : vector<1x256xf32> to vector<4x256xf32>
    %140 = arith.addf %137, %139 : vector<4x256xf32>
    %cst_141 = arith.constant 0.000000e+00 : f32
    %141 = vector.broadcast %cst_141 : f32 to vector<4x256xf32>
    %142 = arith.maximumf %140, %141 : vector<4x256xf32>
    %cst_142 = arith.constant 0.000000e+00 : f32
    %143 = vector.broadcast %cst_142 : f32 to vector<1x8xf32>
    %c0_143 = arith.constant 0 : index
    %c0_144 = arith.constant 0 : index
    %c0_145 = arith.constant 0 : index
    %144 = vector.load %arg17[%c0_143, %c0_144, %c0_145] : memref<4x1x4xf32, #tpu.memory_space<vmem>>, vector<1x1x4xf32>
    %145 = vector.shape_cast %144 : vector<1x1x4xf32> to vector<1x4xf32>
    %cst_146 = arith.constant dense<0.000000e+00> : vector<1x256xf32>
    %146 = tpu.matmul %145, %142, %cst_146 {dimension_numbers = #tpu.dot_dimension_numbers<[1], [0], [0], [1], [0, 0, 1, 1], [], []>} : vector<1x4xf32>, vector<4x256xf32>, vector<1x256xf32> -> vector<1x256xf32>
    %c0_147 = arith.constant 0 : index
    %c0_148 = arith.constant 0 : index
    %c0_149 = arith.constant 0 : index
    %147 = vector.load %arg18[%c0_147, %c0_148, %c0_149] : memref<4x256x8xf32, #tpu.memory_space<vmem>>, vector<1x256x8xf32>
    %148 = vector.shape_cast %147 : vector<1x256x8xf32> to vector<256x8xf32>
    %cst_150 = arith.constant dense<0.000000e+00> : vector<1x8xf32>
    %149 = tpu.matmul %146, %148, %cst_150 {dimension_numbers = #tpu.dot_dimension_numbers<[1], [0], [0], [1], [0, 0, 1, 1], [], []>} : vector<1x256xf32>, vector<256x8xf32>, vector<1x8xf32> -> vector<1x8xf32>
    %150 = arith.addf %143, %149 : vector<1x8xf32>
    %c1_151 = arith.constant 1 : index
    %c0_152 = arith.constant 0 : index
    %c0_153 = arith.constant 0 : index
    %151 = vector.load %arg17[%c1_151, %c0_152, %c0_153] : memref<4x1x4xf32, #tpu.memory_space<vmem>>, vector<1x1x4xf32>
    %152 = vector.shape_cast %151 : vector<1x1x4xf32> to vector<1x4xf32>
    %cst_154 = arith.constant dense<0.000000e+00> : vector<1x256xf32>
    %153 = tpu.matmul %152, %142, %cst_154 {dimension_numbers = #tpu.dot_dimension_numbers<[1], [0], [0], [1], [0, 0, 1, 1], [], []>} : vector<1x4xf32>, vector<4x256xf32>, vector<1x256xf32> -> vector<1x256xf32>
    %c1_155 = arith.constant 1 : index
    %c0_156 = arith.constant 0 : index
    %c0_157 = arith.constant 0 : index
    %154 = vector.load %arg18[%c1_155, %c0_156, %c0_157] : memref<4x256x8xf32, #tpu.memory_space<vmem>>, vector<1x256x8xf32>
    %155 = vector.shape_cast %154 : vector<1x256x8xf32> to vector<256x8xf32>
    %cst_158 = arith.constant dense<0.000000e+00> : vector<1x8xf32>
    %156 = tpu.matmul %153, %155, %cst_158 {dimension_numbers = #tpu.dot_dimension_numbers<[1], [0], [0], [1], [0, 0, 1, 1], [], []>} : vector<1x256xf32>, vector<256x8xf32>, vector<1x8xf32> -> vector<1x8xf32>
    %157 = arith.addf %150, %156 : vector<1x8xf32>
    %c2_159 = arith.constant 2 : index
    %c0_160 = arith.constant 0 : index
    %c0_161 = arith.constant 0 : index
    %158 = vector.load %arg17[%c2_159, %c0_160, %c0_161] : memref<4x1x4xf32, #tpu.memory_space<vmem>>, vector<1x1x4xf32>
    %159 = vector.shape_cast %158 : vector<1x1x4xf32> to vector<1x4xf32>
    %cst_162 = arith.constant dense<0.000000e+00> : vector<1x256xf32>
    %160 = tpu.matmul %159, %142, %cst_162 {dimension_numbers = #tpu.dot_dimension_numbers<[1], [0], [0], [1], [0, 0, 1, 1], [], []>} : vector<1x4xf32>, vector<4x256xf32>, vector<1x256xf32> -> vector<1x256xf32>
    %c2_163 = arith.constant 2 : index
    %c0_164 = arith.constant 0 : index
    %c0_165 = arith.constant 0 : index
    %161 = vector.load %arg18[%c2_163, %c0_164, %c0_165] : memref<4x256x8xf32, #tpu.memory_space<vmem>>, vector<1x256x8xf32>
    %162 = vector.shape_cast %161 : vector<1x256x8xf32> to vector<256x8xf32>
    %cst_166 = arith.constant dense<0.000000e+00> : vector<1x8xf32>
    %163 = tpu.matmul %160, %162, %cst_166 {dimension_numbers = #tpu.dot_dimension_numbers<[1], [0], [0], [1], [0, 0, 1, 1], [], []>} : vector<1x256xf32>, vector<256x8xf32>, vector<1x8xf32> -> vector<1x8xf32>
    %164 = arith.addf %157, %163 : vector<1x8xf32>
    %c3 = arith.constant 3 : index
    %c0_167 = arith.constant 0 : index
    %c0_168 = arith.constant 0 : index
    %165 = vector.load %arg17[%c3, %c0_167, %c0_168] : memref<4x1x4xf32, #tpu.memory_space<vmem>>, vector<1x1x4xf32>
    %166 = vector.shape_cast %165 : vector<1x1x4xf32> to vector<1x4xf32>
    %cst_169 = arith.constant dense<0.000000e+00> : vector<1x256xf32>
    %167 = tpu.matmul %166, %142, %cst_169 {dimension_numbers = #tpu.dot_dimension_numbers<[1], [0], [0], [1], [0, 0, 1, 1], [], []>} : vector<1x4xf32>, vector<4x256xf32>, vector<1x256xf32> -> vector<1x256xf32>
    %c3_170 = arith.constant 3 : index
    %c0_171 = arith.constant 0 : index
    %c0_172 = arith.constant 0 : index
    %168 = vector.load %arg18[%c3_170, %c0_171, %c0_172] : memref<4x256x8xf32, #tpu.memory_space<vmem>>, vector<1x256x8xf32>
    %169 = vector.shape_cast %168 : vector<1x256x8xf32> to vector<256x8xf32>
    %cst_173 = arith.constant dense<0.000000e+00> : vector<1x8xf32>
    %170 = tpu.matmul %167, %169, %cst_173 {dimension_numbers = #tpu.dot_dimension_numbers<[1], [0], [0], [1], [0, 0, 1, 1], [], []>} : vector<1x256xf32>, vector<256x8xf32>, vector<1x8xf32> -> vector<1x8xf32>
    %171 = arith.addf %164, %170 : vector<1x8xf32>
    %c0_174 = arith.constant 0 : index
    %c0_175 = arith.constant 0 : index
    %172 = vector.load %arg19[%c0_174, %c0_175] : memref<1x8xf32, #tpu.memory_space<vmem>>, vector<1x8xf32>
    %173 = arith.addf %171, %172 : vector<1x8xf32>
    %174 = vector.shape_cast %173 : vector<1x8xf32> to vector<1x1x8xf32>
    %c0_176 = arith.constant 0 : index
    %c0_177 = arith.constant 0 : index
    %c0_178 = arith.constant 0 : index
    %175 = vector.load %arg20[%c0_176, %c0_177, %c0_178] : memref<1x1x8xf32, #tpu.memory_space<vmem>>, vector<1x1x8xf32>
    tpu.vector_store %arg20[%c0_176, %c0_177, %c0_178], %174 {strides = array<i32>} : memref<1x1x8xf32, #tpu.memory_space<vmem>>, vector<1x1x8xf32>,
    return
  }
  func.func @transform_0(%arg0: i32) -> (i32, i32, i32) {
    %c0_i32 = arith.constant 0 : i32
    %c0_i32_0 = arith.constant 0 : i32
    %c0_i32_1 = arith.constant 0 : i32
    return %arg0, %c0_i32, %c0_i32_0 : i32, i32, i32
  }
  func.func @transform_1(%arg0: i32) -> (i32, i32, i32) {
    %c0_i32 = arith.constant 0 : i32
    %c0_i32_0 = arith.constant 0 : i32
    %c0_i32_1 = arith.constant 0 : i32
    %c0_i32_2 = arith.constant 0 : i32
    return %c0_i32, %c0_i32_0, %c0_i32_1 : i32, i32, i32
  }
  func.func @transform_2(%arg0: i32) -> (i32, i32, i32) {
    %c0_i32 = arith.constant 0 : i32
    %c0_i32_0 = arith.constant 0 : i32
    %c0_i32_1 = arith.constant 0 : i32
    %c0_i32_2 = arith.constant 0 : i32
    return %c0_i32, %c0_i32_0, %c0_i32_1 : i32, i32, i32
  }
  func.func @transform_3(%arg0: i32) -> (i32, i32) {
    %c0_i32 = arith.constant 0 : i32
    %c0_i32_0 = arith.constant 0 : i32
    %c0_i32_1 = arith.constant 0 : i32
    return %c0_i32, %c0_i32_0 : i32, i32
  }
  func.func @transform_4(%arg0: i32) -> (i32, i32, i32) {
    %c0_i32 = arith.constant 0 : i32
    %c0_i32_0 = arith.constant 0 : i32
    %c0_i32_1 = arith.constant 0 : i32
    %c0_i32_2 = arith.constant 0 : i32
    return %c0_i32, %c0_i32_0, %c0_i32_1 : i32, i32, i32
  }
  func.func @transform_5(%arg0: i32) -> (i32, i32, i32) {
    %c0_i32 = arith.constant 0 : i32
    %c0_i32_0 = arith.constant 0 : i32
    %c0_i32_1 = arith.constant 0 : i32
    %c0_i32_2 = arith.constant 0 : i32
    return %c0_i32, %c0_i32_0, %c0_i32_1 : i32, i32, i32
  }
  func.func @transform_6(%arg0: i32) -> (i32, i32) {
    %c0_i32 = arith.constant 0 : i32
    %c0_i32_0 = arith.constant 0 : i32
    %c0_i32_1 = arith.constant 0 : i32
    return %c0_i32, %c0_i32_0 : i32, i32
  }
  func.func @transform_7(%arg0: i32) -> (i32, i32, i32) {
    %c0_i32 = arith.constant 0 : i32
    %c0_i32_0 = arith.constant 0 : i32
    %c0_i32_1 = arith.constant 0 : i32
    %c0_i32_2 = arith.constant 0 : i32
    return %c0_i32, %c0_i32_0, %c0_i32_1 : i32, i32, i32
  }
  func.func @transform_8(%arg0: i32) -> (i32, i32, i32) {
    %c0_i32 = arith.constant 0 : i32
    %c0_i32_0 = arith.constant 0 : i32
    %c0_i32_1 = arith.constant 0 : i32
    %c0_i32_2 = arith.constant 0 : i32
    return %c0_i32, %c0_i32_0, %c0_i32_1 : i32, i32, i32
  }
  func.func @transform_9(%arg0: i32) -> (i32, i32) {
    %c0_i32 = arith.constant 0 : i32
    %c0_i32_0 = arith.constant 0 : i32
    %c0_i32_1 = arith.constant 0 : i32
    return %c0_i32, %c0_i32_0 : i32, i32
  }
  func.func @transform_10(%arg0: i32) -> (i32, i32, i32) {
    %c0_i32 = arith.constant 0 : i32
    %c0_i32_0 = arith.constant 0 : i32
    %c0_i32_1 = arith.constant 0 : i32
    %c0_i32_2 = arith.constant 0 : i32
    return %c0_i32, %c0_i32_0, %c0_i32_1 : i32, i32, i32
  }
  func.func @transform_11(%arg0: i32) -> (i32, i32, i32) {
    %c0_i32 = arith.constant 0 : i32
    %c0_i32_0 = arith.constant 0 : i32
    %c0_i32_1 = arith.constant 0 : i32
    %c0_i32_2 = arith.constant 0 : i32
    return %c0_i32, %c0_i32_0, %c0_i32_1 : i32, i32, i32
  }
  func.func @transform_12(%arg0: i32) -> (i32, i32) {
    %c0_i32 = arith.constant 0 : i32
    %c0_i32_0 = arith.constant 0 : i32
    %c0_i32_1 = arith.constant 0 : i32
    return %c0_i32, %c0_i32_0 : i32, i32
  }
  func.func @transform_13(%arg0: i32) -> (i32, i32, i32) {
    %c0_i32 = arith.constant 0 : i32
    %c0_i32_0 = arith.constant 0 : i32
    %c0_i32_1 = arith.constant 0 : i32
    %c0_i32_2 = arith.constant 0 : i32
    return %c0_i32, %c0_i32_0, %c0_i32_1 : i32, i32, i32
  }
  func.func @transform_14(%arg0: i32) -> (i32, i32, i32) {
    %c0_i32 = arith.constant 0 : i32
    %c0_i32_0 = arith.constant 0 : i32
    %c0_i32_1 = arith.constant 0 : i32
    %c0_i32_2 = arith.constant 0 : i32
    return %c0_i32, %c0_i32_0, %c0_i32_1 : i32, i32, i32
  }
  func.func @transform_15(%arg0: i32) -> (i32, i32) {
    %c0_i32 = arith.constant 0 : i32
    %c0_i32_0 = arith.constant 0 : i32
    %c0_i32_1 = arith.constant 0 : i32
    return %c0_i32, %c0_i32_0 : i32, i32
  }
  func.func @transform_16(%arg0: i32) -> (i32, i32, i32) {
    %c0_i32 = arith.constant 0 : i32
    %c0_i32_0 = arith.constant 0 : i32
    %c0_i32_1 = arith.constant 0 : i32
    %c0_i32_2 = arith.constant 0 : i32
    return %c0_i32, %c0_i32_0, %c0_i32_1 : i32, i32, i32
  }
  func.func @transform_17(%arg0: i32) -> (i32, i32, i32) {
    %c0_i32 = arith.constant 0 : i32
    %c0_i32_0 = arith.constant 0 : i32
    %c0_i32_1 = arith.constant 0 : i32
    %c0_i32_2 = arith.constant 0 : i32
    return %c0_i32, %c0_i32_0, %c0_i32_1 : i32, i32, i32
  }
  func.func @transform_18(%arg0: i32) -> (i32, i32) {
    %c0_i32 = arith.constant 0 : i32
    %c0_i32_0 = arith.constant 0 : i32
    %c0_i32_1 = arith.constant 0 : i32
    return %c0_i32, %c0_i32_0 : i32, i32
  }
  func.func @transform_19(%arg0: i32) -> (i32, i32, i32) {
    %c0_i32 = arith.constant 0 : i32
    %c0_i32_0 = arith.constant 0 : i32
    %c0_i32_1 = arith.constant 0 : i32
    return %arg0, %c0_i32, %c0_i32_0 : i32, i32, i32
  }
}

</mosaic_0001>

<llo_original>
// kernel: conv_encoder_forward.1
$region0: #{conv_encoder_forward.1}
  #allocation0 [shape = 'u32[]', space=smem, size = 0x4, offset = 0x4, fixed_abs, tag = 'smem constant byte address 0x4 - core index']
  #allocation1 [shape = 'u32[72,128]{1,0:T(1,128)}', space=vmem, size = 0x9000, scoped, tag = 'internal scratch']
  %s0 = inlined_call_operand.vmem [shape: f32[2,28,28], index: 0, kind: input, shape index: {}]
  %s1 = inlined_call_operand.hbm [shape: f32[3,14,28], index: 1, kind: input, shape index: {}]
  %s2 = inlined_call_operand.hbm [shape: f32[3,28,448], index: 2, kind: input, shape index: {}]
  %s3 = inlined_call_operand.hbm [shape: f32[1,448], index: 3, kind: input, shape index: {}]
  %s4 = inlined_call_operand.hbm [shape: f32[3,14,14], index: 4, kind: input, shape index: {}]
  %s5 = inlined_call_operand.hbm [shape: f32[3,448,448], index: 5, kind: input, shape index: {}]
  %s6 = inlined_call_operand.hbm [shape: f32[1,448], index: 6, kind: input, shape index: {}]
  %s7 = inlined_call_operand.hbm [shape: f32[3,7,14], index: 7, kind: input, shape index: {}]
  %s8 = inlined_call_operand.hbm [shape: f32[3,448,448], index: 8, kind: input, shape index: {}]
  %s9 = inlined_call_operand.hbm [shape: f32[1,448], index: 9, kind: input, shape index: {}]
  %s10 = inlined_call_operand.hbm [shape: f32[3,7,7], index: 10, kind: input, shape index: {}]
  %s11 = inlined_call_operand.hbm [shape: f32[3,448,448], index: 11, kind: input, shape index: {}]
  %s12 = inlined_call_operand.hbm [shape: f32[1,448], index: 12, kind: input, shape index: {}]
  %s13 = inlined_call_operand.hbm [shape: f32[3,4,7], index: 13, kind: input, shape index: {}]
  %s14 = inlined_call_operand.hbm [shape: f32[3,448,256], index: 14, kind: input, shape index: {}]
  %s15 = inlined_call_operand.hbm [shape: f32[1,256], index: 15, kind: input, shape index: {}]
  %s16 = inlined_call_operand.hbm [shape: f32[4,1,4], index: 16, kind: input, shape index: {}]
  %s17 = inlined_call_operand.vmem [shape: f32[4,256,8], index: 17, kind: input, shape index: {}]
  %s18 = inlined_call_operand.hbm [shape: f32[1,8], index: 18, kind: input, shape index: {}]
  %s19 = inlined_call_operand.hbm [shape: f32[2,1,8], index: 19, kind: output, shape index: {}]
  %s20 = sld [smem:[#allocation0]]
  $region177: #{conv_encoder_forward.1} parent=0
    _
  %s22 = ssub.s32 1, %s20
  %s23 = scalar_select 0, %s22, %s20
  $region1: #{conv_encoder_forward.1} parent=0
    #allocation2 [shape = 'u8[24576]{0}', space=vmem, size = 0x6000, scoped, tag = 'input window, operand 1, single buffered']
    #allocation3 [shape = 's32[2]{0}', space=sflag, size = 0x8, scoped, tag = 'scoped memory for conv_encoder_forward.1']
    #allocation4 [shape = 's32[2]{0}', space=sflag, size = 0x8, scoped, tag = 'scoped memory for conv_encoder_forward.1']
    #allocation5 [shape = 'u8[196608]{0}', space=vmem, size = 0x30000, scoped, tag = 'input window, operand 2, single buffered']
    #allocation6 [shape = 's32[1]{0}', space=sflag, size = 0x4, scoped, tag = 'scoped memory for conv_encoder_forward.1']
    #allocation7 [shape = 'u8[2048]{0}', space=vmem, size = 0x800, scoped, tag = 'input window, operand 3, single buffered']
    #allocation8 [shape = 'u8[24576]{0}', space=vmem, size = 0x6000, scoped, tag = 'input window, operand 4, single buffered']
    #allocation9 [shape = 's32[1]{0}', space=sflag, size = 0x4, scoped, tag = 'scoped memory for conv_encoder_forward.1']
    #allocation10 [shape = 'u8[2752512]{0}', space=vmem, size = 0x2a0000, scoped, tag = 'input window, operand 5, single buffered']
    #allocation11 [shape = 'u8[2048]{0}', space=vmem, size = 0x800, scoped, tag = 'input window, operand 6, single buffered']
    #allocation12 [shape = 's32[1]{0}', space=sflag, size = 0x4, scoped, tag = 'scoped memory for conv_encoder_forward.1']
    #allocation13 [shape = 'u8[12288]{0}', space=vmem, size = 0x3000, scoped, tag = 'input window, operand 7, single buffered']
    #allocation14 [shape = 'u8[2752512]{0}', space=vmem, size = 0x2a0000, scoped, tag = 'input window, operand 8, single buffered']
    #allocation15 [shape = 's32[1]{0}', space=sflag, size = 0x4, scoped, tag = 'scoped memory for conv_encoder_forward.1']
    #allocation16 [shape = 'u8[2048]{0}', space=vmem, size = 0x800, scoped, tag = 'input window, operand 9, single buffered']
    #allocation17 [shape = 'u8[12288]{0}', space=vmem, size = 0x3000, scoped, tag = 'input window, operand 10, single buffered']
    #allocation18 [shape = 's32[1]{0}', space=sflag, size = 0x4, scoped, tag = 'scoped memory for conv_encoder_forward.1']
    #allocation19 [shape = 'u8[2752512]{0}', space=vmem, size = 0x2a0000, scoped, tag = 'input window, operand 11, single buffered']
    #allocation20 [shape = 'u8[2048]{0}', space=vmem, size = 0x800, scoped, tag = 'input window, operand 12, single buffered']
    #allocation21 [shape = 's32[1]{0}', space=sflag, size = 0x4, scoped, tag = 'scoped memory for conv_encoder_forward.1']
    #allocation22 [shape = 'u8[6144]{0}', space=vmem, size = 0x1800, scoped, tag = 'input window, operand 13, single buffered']
    #allocation23 [shape = 'u8[1376256]{0}', space=vmem, size = 0x150000, scoped, tag = 'input window, operand 14, single buffered']
    #allocation24 [shape = 's32[1]{0}', space=sflag, size = 0x4, scoped, tag = 'scoped memory for conv_encoder_forward.1']
    #allocation25 [shape = 'u8[1024]{0}', space=vmem, size = 0x400, scoped, tag = 'input window, operand 15, single buffered']
    #allocation26 [shape = 'u8[2048]{0}', space=vmem, size = 0x800, scoped, tag = 'input window, operand 16, single buffered']
    #allocation27 [shape = 's32[1]{0}', space=sflag, size = 0x4, scoped, tag = 'scoped memory for conv_encoder_forward.1']
    #allocation28 [shape = 'u8[512]{0}', space=vmem, size = 0x400, scoped, tag = 'input window, operand 18, single buffered']
    #allocation29 [shape = 'u8[1024]{0}', space=vmem, size = 0x400, scoped, tag = 'output window, operand 0']
    %24 = vsyncpa [#allocation3], 0
    %25 = vsyncpa [#allocation6], 0
    %26 = vsyncpa [#allocation9], 0
    %27 = vsyncpa [#allocation12], 0
    %28 = vsyncpa [#allocation15], 0
    %29 = vsyncpa [#allocation18], 0
    %30 = vsyncpa [#allocation21], 0
    %31 = vsyncpa [#allocation24], 0
    %32 = vsyncpa [#allocation27], 0
    %33 = vsyncpa [#allocation4], 0
    %s34 = scalar_lea.sflag [#allocation4], 1
    %35 = vsyncpa %s34, 0
    loop: start=0, step=1, limit=4
    $region2: #{conv_encoder_forward.1} parent=1 // loop_pre_header
      _
    $region3: #{conv_encoder_forward.1} parent=1 // loop_header
      %s37 = sphi 0, %s41
      %p38 = scmp.ge.s32.totalorder %s37, 4
      %s47 = sphi 0, %s49
      %s50 = sphi 0, %s47
      %s51 = sphi 0, %s50
      %s67 = sphi 0, %s51
      %s71 = sphi 0, %s71
      %s73 = sphi 0, %s71
      %s74 = sphi 0, %s73
      %s88 = sphi 0, %s74
      %s92 = sphi 0, %s92
      %s94 = sphi 0, %s92
      %s95 = sphi 0, %s94
      %s109 = sphi 0, %s95
      %s113 = sphi 0, %s113
      %s115 = sphi 0, %s113
      %s116 = sphi 0, %s115
      %s130 = sphi 0, %s116
      %s134 = sphi 0, %s134
      %s136 = sphi 0, %s134
      %s137 = sphi 0, %s136
      %s151 = sphi 0, %s137
      %s155 = sphi 0, %s155
      %s157 = sphi 0, %s155
      %s158 = sphi 0, %s157
      %s172 = sphi 0, %s158
      %s176 = sphi 0, %s176
      %s178 = sphi 0, %s176
      %s179 = sphi 0, %s178
      %s193 = sphi 0, %s179
      %s197 = sphi 0, %s197
      %s199 = sphi 0, %s197
      %s200 = sphi 0, %s199
      %s214 = sphi 0, %s200
      %s218 = sphi 0, %s218
      %s220 = sphi 0, %s218
      %s221 = sphi 0, %s220
      %s235 = sphi 0, %s221
      %s239 = sphi 0, %s239
      %s241 = sphi 0, %s239
      %s242 = sphi 0, %s241
      %s256 = sphi 0, %s242
      %s260 = sphi 0, %s260
      %s262 = sphi 0, %s260
      %s263 = sphi 0, %s262
      %s277 = sphi 0, %s263
      %s281 = sphi 0, %s281
      %s283 = sphi 0, %s281
      %s284 = sphi 0, %s283
      %s298 = sphi 0, %s284
      %s302 = sphi 0, %s302
      %s304 = sphi 0, %s302
      %s305 = sphi 0, %s304
      %s319 = sphi 0, %s305
      %s323 = sphi 0, %s323
      %s325 = sphi 0, %s323
      %s326 = sphi 0, %s325
      %s340 = sphi 0, %s326
      %s344 = sphi 0, %s344
      %s346 = sphi 0, %s344
      %s347 = sphi 0, %s346
      %s361 = sphi 0, %s347
      %s365 = sphi 0, %s365
      %s367 = sphi 0, %s365
      %s368 = sphi 0, %s367
      %s382 = sphi 0, %s368
      %s386 = sphi 0, %s386
      %s388 = sphi 0, %s386
      %s389 = sphi 0, %s388
      %s403 = sphi 0, %s389
      %s407 = sphi 0, %s407
      %s409 = sphi 0, %s407
      %s410 = sphi 0, %s409
      %s424 = sphi 0, %s410
      %s428 = sphi 0, %s428
      %s430 = sphi 0, %s428
      %s431 = sphi 0, %s430
      %s445 = sphi 0, %s431
      %s451 = sphi 0, %s453
      %s454 = sphi 0, %s451
      %s455 = sphi 0, %s454
      %s471 = sphi 0, %s455
    $region4: #{conv_encoder_forward.1} parent=1 // loop_header_branch
      %40 = sbr.rel (%p38) target = $region8
    $region5: #{conv_encoder_forward.1} parent=1 // loop_body
      %s42 = ssub.s32 %s37, 1
      %s43 = ssub.s32 %s37, 2
      %s44 = sadd.s32 %s37, 1
      %s45 = ssub.s32 %s37, %s44
      %p46 = scmp.eq.s32.totalorder %s45, 0
      %s48 = sadd.s32 %s47, 1
      %s49 = scalar_select %p46, %s47, %s48
      %p52 = pneg %p46
      %p53 = scmp.eq.s32.totalorder %s37, 1
      %p54 = por %p52, %p53
      %p55 = scmp.ne.s32.totalorder %s47, %s50
      %p56 = scmp.eq.s32.totalorder %s37, 0
      %p57 = por %p55, %p56
      %p58 = scmp.ne.s32.totalorder %s47, %s50
      %p59 = scmp.eq.s32.totalorder %s42, 1
      %p60 = por %p58, %p59
      %p61 = scmp.ne.s32.totalorder %s50, %s51
      %p62 = scmp.eq.s32.totalorder %s42, 0
      %p63 = por %p61, %p62
      %p64 = scmp.ne.s32.totalorder %s50, %s51
      %p65 = scmp.eq.s32.totalorder %s43, 1
      %p66 = por %p64, %p65
      %p68 = scmp.ne.s32.totalorder %s51, %s67
      %p69 = scmp.eq.s32.totalorder %s43, 0
      %p70 = por %p68, %p69
      %s72 = sadd.s32 %s71, 1
      %p75 = scmp.eq.s32.totalorder %s37, 1
      %p76 = scmp.ne.s32.totalorder %s71, %s73
      %p77 = scmp.eq.s32.totalorder %s37, 0
      %p78 = por %p76, %p77
      %p79 = scmp.ne.s32.totalorder %s71, %s73
      %p80 = scmp.eq.s32.totalorder %s42, 1
      %p81 = por %p79, %p80
      %p82 = scmp.ne.s32.totalorder %s73, %s74
      %p83 = scmp.eq.s32.totalorder %s42, 0
      %p84 = por %p82, %p83
      %p85 = scmp.ne.s32.totalorder %s73, %s74
      %p86 = scmp.eq.s32.totalorder %s43, 1
      %p87 = por %p85, %p86
      %p89 = scmp.ne.s32.totalorder %s74, %s88
      %p90 = scmp.eq.s32.totalorder %s43, 0
      %p91 = por %p89, %p90
      %s93 = sadd.s32 %s92, 1
      %p96 = scmp.eq.s32.totalorder %s37, 1
      %p97 = scmp.ne.s32.totalorder %s92, %s94
      %p98 = scmp.eq.s32.totalorder %s37, 0
      %p99 = por %p97, %p98
      %p100 = scmp.ne.s32.totalorder %s92, %s94
      %p101 = scmp.eq.s32.totalorder %s42, 1
      %p102 = por %p100, %p101
      %p103 = scmp.ne.s32.totalorder %s94, %s95
      %p104 = scmp.eq.s32.totalorder %s42, 0
      %p105 = por %p103, %p104
      %p106 = scmp.ne.s32.totalorder %s94, %s95
      %p107 = scmp.eq.s32.totalorder %s43, 1
      %p108 = por %p106, %p107
      %p110 = scmp.ne.s32.totalorder %s95, %s109
      %p111 = scmp.eq.s32.totalorder %s43, 0
      %p112 = por %p110, %p111
      %s114 = sadd.s32 %s113, 1
      %p117 = scmp.eq.s32.totalorder %s37, 1
      %p118 = scmp.ne.s32.totalorder %s113, %s115
      %p119 = scmp.eq.s32.totalorder %s37, 0
      %p120 = por %p118, %p119
      %p121 = scmp.ne.s32.totalorder %s113, %s115
      %p122 = scmp.eq.s32.totalorder %s42, 1
      %p123 = por %p121, %p122
      %p124 = scmp.ne.s32.totalorder %s115, %s116
      %p125 = scmp.eq.s32.totalorder %s42, 0
      %p126 = por %p124, %p125
      %p127 = scmp.ne.s32.totalorder %s115, %s116
      %p128 = scmp.eq.s32.totalorder %s43, 1
      %p129 = por %p127, %p128
      %p131 = scmp.ne.s32.totalorder %s116, %s130
      %p132 = scmp.eq.s32.totalorder %s43, 0
      %p133 = por %p131, %p132
      %s135 = sadd.s32 %s134, 1
      %p138 = scmp.eq.s32.totalorder %s37, 1
      %p139 = scmp.ne.s32.totalorder %s134, %s136
      %p140 = scmp.eq.s32.totalorder %s37, 0
      %p141 = por %p139, %p140
      %p142 = scmp.ne.s32.totalorder %s134, %s136
      %p143 = scmp.eq.s32.totalorder %s42, 1
      %p144 = por %p142, %p143
      %p145 = scmp.ne.s32.totalorder %s136, %s137
      %p146 = scmp.eq.s32.totalorder %s42, 0
      %p147 = por %p145, %p146
      %p148 = scmp.ne.s32.totalorder %s136, %s137
      %p149 = scmp.eq.s32.totalorder %s43, 1
      %p150 = por %p148, %p149
      %p152 = scmp.ne.s32.totalorder %s137, %s151
      %p153 = scmp.eq.s32.totalorder %s43, 0
      %p154 = por %p152, %p153
      %s156 = sadd.s32 %s155, 1
      %p159 = scmp.eq.s32.totalorder %s37, 1
      %p160 = scmp.ne.s32.totalorder %s155, %s157
      %p161 = scmp.eq.s32.totalorder %s37, 0
      %p162 = por %p160, %p161
      %p163 = scmp.ne.s32.totalorder %s155, %s157
      %p164 = scmp.eq.s32.totalorder %s42, 1
      %p165 = por %p163, %p164
      %p166 = scmp.ne.s32.totalorder %s157, %s158
      %p167 = scmp.eq.s32.totalorder %s42, 0
      %p168 = por %p166, %p167
      %p169 = scmp.ne.s32.totalorder %s157, %s158
      %p170 = scmp.eq.s32.totalorder %s43, 1
      %p171 = por %p169, %p170
      %p173 = scmp.ne.s32.totalorder %s158, %s172
      %p174 = scmp.eq.s32.totalorder %s43, 0
      %p175 = por %p173, %p174
      %s177 = sadd.s32 %s176, 1
      %p180 = scmp.eq.s32.totalorder %s37, 1
      %p181 = scmp.ne.s32.totalorder %s176, %s178
      %p182 = scmp.eq.s32.totalorder %s37, 0
      %p183 = por %p181, %p182
      %p184 = scmp.ne.s32.totalorder %s176, %s178
      %p185 = scmp.eq.s32.totalorder %s42, 1
      %p186 = por %p184, %p185
      %p187 = scmp.ne.s32.totalorder %s178, %s179
      %p188 = scmp.eq.s32.totalorder %s42, 0
      %p189 = por %p187, %p188
      %p190 = scmp.ne.s32.totalorder %s178, %s179
      %p191 = scmp.eq.s32.totalorder %s43, 1
      %p192 = por %p190, %p191
      %p194 = scmp.ne.s32.totalorder %s179, %s193
      %p195 = scmp.eq.s32.totalorder %s43, 0
      %p196 = por %p194, %p195
      %s198 = sadd.s32 %s197, 1
      %p201 = scmp.eq.s32.totalorder %s37, 1
      %p202 = scmp.ne.s32.totalorder %s197, %s199
      %p203 = scmp.eq.s32.totalorder %s37, 0
      %p204 = por %p202, %p203
      %p205 = scmp.ne.s32.totalorder %s197, %s199
      %p206 = scmp.eq.s32.totalorder %s42, 1
      %p207 = por %p205, %p206
      %p208 = scmp.ne.s32.totalorder %s199, %s200
      %p209 = scmp.eq.s32.totalorder %s42, 0
      %p210 = por %p208, %p209
      %p211 = scmp.ne.s32.totalorder %s199, %s200
      %p212 = scmp.eq.s32.totalorder %s43, 1
      %p213 = por %p211, %p212
      %p215 = scmp.ne.s32.totalorder %s200, %s214
      %p216 = scmp.eq.s32.totalorder %s43, 0
      %p217 = por %p215, %p216
      %s219 = sadd.s32 %s218, 1
      %p222 = scmp.eq.s32.totalorder %s37, 1
      %p223 = scmp.ne.s32.totalorder %s218, %s220
      %p224 = scmp.eq.s32.totalorder %s37, 0
      %p225 = por %p223, %p224
      %p226 = scmp.ne.s32.totalorder %s218, %s220
      %p227 = scmp.eq.s32.totalorder %s42, 1
      %p228 = por %p226, %p227
      %p229 = scmp.ne.s32.totalorder %s220, %s221
      %p230 = scmp.eq.s32.totalorder %s42, 0
      %p231 = por %p229, %p230
      %p232 = scmp.ne.s32.totalorder %s220, %s221
      %p233 = scmp.eq.s32.totalorder %s43, 1
      %p234 = por %p232, %p233
      %p236 = scmp.ne.s32.totalorder %s221, %s235
      %p237 = scmp.eq.s32.totalorder %s43, 0
      %p238 = por %p236, %p237
      %s240 = sadd.s32 %s239, 1
      %p243 = scmp.eq.s32.totalorder %s37, 1
      %p244 = scmp.ne.s32.totalorder %s239, %s241
      %p245 = scmp.eq.s32.totalorder %s37, 0
      %p246 = por %p244, %p245
      %p247 = scmp.ne.s32.totalorder %s239, %s241
      %p248 = scmp.eq.s32.totalorder %s42, 1
      %p249 = por %p247, %p248
      %p250 = scmp.ne.s32.totalorder %s241, %s242
      %p251 = scmp.eq.s32.totalorder %s42, 0
      %p252 = por %p250, %p251
      %p253 = scmp.ne.s32.totalorder %s241, %s242
      %p254 = scmp.eq.s32.totalorder %s43, 1
      %p255 = por %p253, %p254
      %p257 = scmp.ne.s32.totalorder %s242, %s256
      %p258 = scmp.eq.s32.totalorder %s43, 0
      %p259 = por %p257, %p258
      %s261 = sadd.s32 %s260, 1
      %p264 = scmp.eq.s32.totalorder %s37, 1
      %p265 = scmp.ne.s32.totalorder %s260, %s262
      %p266 = scmp.eq.s32.totalorder %s37, 0
      %p267 = por %p265, %p266
      %p268 = scmp.ne.s32.totalorder %s260, %s262
      %p269 = scmp.eq.s32.totalorder %s42, 1
      %p270 = por %p268, %p269
      %p271 = scmp.ne.s32.totalorder %s262, %s263
      %p272 = scmp.eq.s32.totalorder %s42, 0
      %p273 = por %p271, %p272
      %p274 = scmp.ne.s32.totalorder %s262, %s263
      %p275 = scmp.eq.s32.totalorder %s43, 1
      %p276 = por %p274, %p275
      %p278 = scmp.ne.s32.totalorder %s263, %s277
      %p279 = scmp.eq.s32.totalorder %s43, 0
      %p280 = por %p278, %p279
      %s282 = sadd.s32 %s281, 1
      %p285 = scmp.eq.s32.totalorder %s37, 1
      %p286 = scmp.ne.s32.totalorder %s281, %s283
      %p287 = scmp.eq.s32.totalorder %s37, 0
      %p288 = por %p286, %p287
      %p289 = scmp.ne.s32.totalorder %s281, %s283
      %p290 = scmp.eq.s32.totalorder %s42, 1
      %p291 = por %p289, %p290
      %p292 = scmp.ne.s32.totalorder %s283, %s284
      %p293 = scmp.eq.s32.totalorder %s42, 0
      %p294 = por %p292, %p293
      %p295 = scmp.ne.s32.totalorder %s283, %s284
      %p296 = scmp.eq.s32.totalorder %s43, 1
      %p297 = por %p295, %p296
      %p299 = scmp.ne.s32.totalorder %s284, %s298
      %p300 = scmp.eq.s32.totalorder %s43, 0
      %p301 = por %p299, %p300
      %s303 = sadd.s32 %s302, 1
      %p306 = scmp.eq.s32.totalorder %s37, 1
      %p307 = scmp.ne.s32.totalorder %s302, %s304
      %p308 = scmp.eq.s32.totalorder %s37, 0
      %p309 = por %p307, %p308
      %p310 = scmp.ne.s32.totalorder %s302, %s304
      %p311 = scmp.eq.s32.totalorder %s42, 1
      %p312 = por %p310, %p311
      %p313 = scmp.ne.s32.totalorder %s304, %s305
      %p314 = scmp.eq.s32.totalorder %s42, 0
      %p315 = por %p313, %p314
      %p316 = scmp.ne.s32.totalorder %s304, %s305
      %p317 = scmp.eq.s32.totalorder %s43, 1
      %p318 = por %p316, %p317
      %p320 = scmp.ne.s32.totalorder %s305, %s319
      %p321 = scmp.eq.s32.totalorder %s43, 0
      %p322 = por %p320, %p321
      %s324 = sadd.s32 %s323, 1
      %p327 = scmp.eq.s32.totalorder %s37, 1
      %p328 = scmp.ne.s32.totalorder %s323, %s325
      %p329 = scmp.eq.s32.totalorder %s37, 0
      %p330 = por %p328, %p329
      %p331 = scmp.ne.s32.totalorder %s323, %s325
      %p332 = scmp.eq.s32.totalorder %s42, 1
      %p333 = por %p331, %p332
      %p334 = scmp.ne.s32.totalorder %s325, %s326
      %p335 = scmp.eq.s32.totalorder %s42, 0
      %p336 = por %p334, %p335
      %p337 = scmp.ne.s32.totalorder %s325, %s326
      %p338 = scmp.eq.s32.totalorder %s43, 1
      %p339 = por %p337, %p338
      %p341 = scmp.ne.s32.totalorder %s326, %s340
      %p342 = scmp.eq.s32.totalorder %s43, 0
      %p343 = por %p341, %p342
      %s345 = sadd.s32 %s344, 1
      %p348 = scmp.eq.s32.totalorder %s37, 1
      %p349 = scmp.ne.s32.totalorder %s344, %s346
      %p350 = scmp.eq.s32.totalorder %s37, 0
      %p351 = por %p349, %p350
      %p352 = scmp.ne.s32.totalorder %s344, %s346
      %p353 = scmp.eq.s32.totalorder %s42, 1
      %p354 = por %p352, %p353
      %p355 = scmp.ne.s32.totalorder %s346, %s347
      %p356 = scmp.eq.s32.totalorder %s42, 0
      %p357 = por %p355, %p356
      %p358 = scmp.ne.s32.totalorder %s346, %s347
      %p359 = scmp.eq.s32.totalorder %s43, 1
      %p360 = por %p358, %p359
      %p362 = scmp.ne.s32.totalorder %s347, %s361
      %p363 = scmp.eq.s32.totalorder %s43, 0
      %p364 = por %p362, %p363
      %s366 = sadd.s32 %s365, 1
      %p369 = scmp.eq.s32.totalorder %s37, 1
      %p370 = scmp.ne.s32.totalorder %s365, %s367
      %p371 = scmp.eq.s32.totalorder %s37, 0
      %p372 = por %p370, %p371
      %p373 = scmp.ne.s32.totalorder %s365, %s367
      %p374 = scmp.eq.s32.totalorder %s42, 1
      %p375 = por %p373, %p374
      %p376 = scmp.ne.s32.totalorder %s367, %s368
      %p377 = scmp.eq.s32.totalorder %s42, 0
      %p378 = por %p376, %p377
      %p379 = scmp.ne.s32.totalorder %s367, %s368
      %p380 = scmp.eq.s32.totalorder %s43, 1
      %p381 = por %p379, %p380
      %p383 = scmp.ne.s32.totalorder %s368, %s382
      %p384 = scmp.eq.s32.totalorder %s43, 0
      %p385 = por %p383, %p384
      %s387 = sadd.s32 %s386, 1
      %p390 = scmp.eq.s32.totalorder %s37, 1
      %p391 = scmp.ne.s32.totalorder %s386, %s388
      %p392 = scmp.eq.s32.totalorder %s37, 0
      %p393 = por %p391, %p392
      %p394 = scmp.ne.s32.totalorder %s386, %s388
      %p395 = scmp.eq.s32.totalorder %s42, 1
      %p396 = por %p394, %p395
      %p397 = scmp.ne.s32.totalorder %s388, %s389
      %p398 = scmp.eq.s32.totalorder %s42, 0
      %p399 = por %p397, %p398
      %p400 = scmp.ne.s32.totalorder %s388, %s389
      %p401 = scmp.eq.s32.totalorder %s43, 1
      %p402 = por %p400, %p401
      %p404 = scmp.ne.s32.totalorder %s389, %s403
      %p405 = scmp.eq.s32.totalorder %s43, 0
      %p406 = por %p404, %p405
      %s408 = sadd.s32 %s407, 1
      %p411 = scmp.eq.s32.totalorder %s37, 1
      %p412 = scmp.ne.s32.totalorder %s407, %s409
      %p413 = scmp.eq.s32.totalorder %s37, 0
      %p414 = por %p412, %p413
      %p415 = scmp.ne.s32.totalorder %s407, %s409
      %p416 = scmp.eq.s32.totalorder %s42, 1
      %p417 = por %p415, %p416
      %p418 = scmp.ne.s32.totalorder %s409, %s410
      %p419 = scmp.eq.s32.totalorder %s42, 0
      %p420 = por %p418, %p419
      %p421 = scmp.ne.s32.totalorder %s409, %s410
      %p422 = scmp.eq.s32.totalorder %s43, 1
      %p423 = por %p421, %p422
      %p425 = scmp.ne.s32.totalorder %s410, %s424
      %p426 = scmp.eq.s32.totalorder %s43, 0
      %p427 = por %p425, %p426
      %s429 = sadd.s32 %s428, 1
      %p432 = scmp.eq.s32.totalorder %s37, 1
      %p433 = scmp.ne.s32.totalorder %s428, %s430
      %p434 = scmp.eq.s32.totalorder %s37, 0
      %p435 = por %p433, %p434
      %p436 = scmp.ne.s32.totalorder %s428, %s430
      %p437 = scmp.eq.s32.totalorder %s42, 1
      %p438 = por %p436, %p437
      %p439 = scmp.ne.s32.totalorder %s430, %s431
      %p440 = scmp.eq.s32.totalorder %s42, 0
      %p441 = por %p439, %p440
      %p442 = scmp.ne.s32.totalorder %s430, %s431
      %p443 = scmp.eq.s32.totalorder %s43, 1
      %p444 = por %p442, %p443
      %p446 = scmp.ne.s32.totalorder %s431, %s445
      %p447 = scmp.eq.s32.totalorder %s43, 0
      %p448 = por %p446, %p447
      %s449 = ssub.s32 %s37, %s44
      %p450 = scmp.eq.s32.totalorder %s449, 0
      %s452 = sadd.s32 %s451, 1
      %s453 = scalar_select %p450, %s451, %s452
      %p456 = pneg %p450
      %p457 = scmp.eq.s32.totalorder %s37, 1
      %p458 = por %p456, %p457
      %p459 = scmp.ne.s32.totalorder %s451, %s454
      %p460 = scmp.eq.s32.totalorder %s37, 0
      %p461 = por %p459, %p460
      %p462 = scmp.ne.s32.totalorder %s451, %s454
      %p463 = scmp.eq.s32.totalorder %s42, 1
      %p464 = por %p462, %p463
      %p465 = scmp.ne.s32.totalorder %s454, %s455
      %p466 = scmp.eq.s32.totalorder %s42, 0
      %p467 = por %p465, %p466
      %p468 = scmp.ne.s32.totalorder %s454, %s455
      %p469 = scmp.eq.s32.totalorder %s43, 1
      %p470 = por %p468, %p469
      %p472 = scmp.ne.s32.totalorder %s455, %s471
      %p473 = scmp.eq.s32.totalorder %s43, 0
      %p474 = por %p472, %p473
      %p475 = scmp.le.s32.totalorder 1, %s37
      %p476 = scmp.lt.s32.totalorder %s37, 3
      %p477 = pnand %p475, %p476
      %p478 = pneg %p477
      // Predicated region
      $region9: #{conv_encoder_forward.1} parent=5 // pred_check
        _
      $region10: #{conv_encoder_forward.1} parent=5 // pred_check_branch
        %480 = sbr.rel (%p477) target = $region12
      $region11: #{conv_encoder_forward.1} parent=5 // pred_region
        %s481 = ssub.s32 %s37, 1
        // Predicated region
        $region13: #{conv_encoder_forward.1} parent=11 // pred_check
          %p482 = pneg %p84
        $region14: #{conv_encoder_forward.1} parent=11 // pred_check_branch
          %484 = sbr.rel (%p482) target = $region16
        $region15: #{conv_encoder_forward.1} parent=11 // pred_region
          %486 = vsyncadd [#allocation3], 0
          %s487 = sshll.u32 %s1, 4
          %s488 = int_to_ptr.hbm [resolvable:$true] %s487
          %s489 = sshll.u32 [#allocation2], 4
          %s490 = int_to_ptr.vmem [resolvable:$true] %s489
          %495 = dma.hbm_to_vmem [thread:$0]  %s488, 768, %s490, [#allocation3], 128, 128, 8
        $region16: #{conv_encoder_forward.1} parent=11 // pred_fallthru
          _
        // Predicated region
        $region17: #{conv_encoder_forward.1} parent=11 // pred_check
          %p496 = pneg %p105
        $region18: #{conv_encoder_forward.1} parent=11 // pred_check_branch
          %498 = sbr.rel (%p496) target = $region20
        $region19: #{conv_encoder_forward.1} parent=11 // pred_region
          %500 = vsyncadd [#allocation6], 0
          %s501 = sshll.u32 %s2, 4
          %s502 = int_to_ptr.hbm [resolvable:$true] %s501
          %s503 = sshll.u32 [#allocation5], 4
          %s504 = int_to_ptr.vmem [resolvable:$true] %s503
          %509 = dma.hbm_to_vmem [thread:$0]  %s502, 6144, %s504, [#allocation6], 512, 512, 32
        $region20: #{conv_encoder_forward.1} parent=11 // pred_fallthru
          _
        // Predicated region
        $region21: #{conv_encoder_forward.1} parent=11 // pred_check
          %p510 = pneg %p126
        $region22: #{conv_encoder_forward.1} parent=11 // pred_check_branch
          %512 = sbr.rel (%p510) target = $region24
        $region23: #{conv_encoder_forward.1} parent=11 // pred_region
          %514 = vsyncadd [#allocation6], 0
          %s516 = sshll.u32 %s3, 4
          %s517 = int_to_ptr.hbm [resolvable:$true] %s516
          %s518 = sshll.u32 [#allocation7], 4
          %s519 = int_to_ptr.vmem [resolvable:$true] %s518
          %521 = dma.hbm_to_vmem [thread:$0]  %s517, 64, %s519, [#allocation6]
        $region24: #{conv_encoder_forward.1} parent=11 // pred_fallthru
          _
        // Predicated region
        $region25: #{conv_encoder_forward.1} parent=11 // pred_check
          %p522 = pneg %p147
        $region26: #{conv_encoder_forward.1} parent=11 // pred_check_branch
          %524 = sbr.rel (%p522) target = $region28
        $region27: #{conv_encoder_forward.1} parent=11 // pred_region
          %526 = vsyncadd [#allocation9], 0
          %s527 = sshll.u32 %s4, 4
          %s528 = int_to_ptr.hbm [resolvable:$true] %s527
          %s529 = sshll.u32 [#allocation8], 4
          %s530 = int_to_ptr.vmem [resolvable:$true] %s529
          %535 = dma.hbm_to_vmem [thread:$0]  %s528, 768, %s530, [#allocation9], 128, 128, 8
        $region28: #{conv_encoder_forward.1} parent=11 // pred_fallthru
          _
        // Predicated region
        $region29: #{conv_encoder_forward.1} parent=11 // pred_check
          %p536 = pneg %p168
        $region30: #{conv_encoder_forward.1} parent=11 // pred_check_branch
          %538 = sbr.rel (%p536) target = $region32
        $region31: #{conv_encoder_forward.1} parent=11 // pred_region
          %540 = vsyncadd [#allocation9], 0
          %s541 = sshll.u32 %s5, 4
          %s542 = int_to_ptr.hbm [resolvable:$true] %s541
          %s543 = sshll.u32 [#allocation10], 4
          %s544 = int_to_ptr.vmem [resolvable:$true] %s543
          %549 = dma.hbm_to_vmem [thread:$0]  %s542, 86016, %s544, [#allocation9], 512, 512, 32
        $region32: #{conv_encoder_forward.1} parent=11 // pred_fallthru
          _
        // Predicated region
        $region33: #{conv_encoder_forward.1} parent=11 // pred_check
          %p550 = pneg %p189
        $region34: #{conv_encoder_forward.1} parent=11 // pred_check_branch
          %552 = sbr.rel (%p550) target = $region36
        $region35: #{conv_encoder_forward.1} parent=11 // pred_region
          %554 = vsyncadd [#allocation12], 0
          %s556 = sshll.u32 %s6, 4
          %s557 = int_to_ptr.hbm [resolvable:$true] %s556
          %s558 = sshll.u32 [#allocation11], 4
          %s559 = int_to_ptr.vmem [resolvable:$true] %s558
          %561 = dma.hbm_to_vmem [thread:$0]  %s557, 64, %s559, [#allocation12]
        $region36: #{conv_encoder_forward.1} parent=11 // pred_fallthru
          _
        // Predicated region
        $region37: #{conv_encoder_forward.1} parent=11 // pred_check
          %p562 = pneg %p210
        $region38: #{conv_encoder_forward.1} parent=11 // pred_check_branch
          %564 = sbr.rel (%p562) target = $region40
        $region39: #{conv_encoder_forward.1} parent=11 // pred_region
          %566 = vsyncadd [#allocation12], 0
          %s567 = sshll.u32 %s7, 4
          %s568 = int_to_ptr.hbm [resolvable:$true] %s567
          %s569 = sshll.u32 [#allocation13], 4
          %s570 = int_to_ptr.vmem [resolvable:$true] %s569
          %575 = dma.hbm_to_vmem [thread:$0]  %s568, 384, %s570, [#allocation12], 128, 128, 8
        $region40: #{conv_encoder_forward.1} parent=11 // pred_fallthru
          _
        // Predicated region
        $region41: #{conv_encoder_forward.1} parent=11 // pred_check
          %p576 = pneg %p231
        $region42: #{conv_encoder_forward.1} parent=11 // pred_check_branch
          %578 = sbr.rel (%p576) target = $region44
        $region43: #{conv_encoder_forward.1} parent=11 // pred_region
          %580 = vsyncadd [#allocation15], 0
          %s581 = sshll.u32 %s8, 4
          %s582 = int_to_ptr.hbm [resolvable:$true] %s581
          %s583 = sshll.u32 [#allocation14], 4
          %s584 = int_to_ptr.vmem [resolvable:$true] %s583
          %589 = dma.hbm_to_vmem [thread:$0]  %s582, 86016, %s584, [#allocation15], 512, 512, 32
        $region44: #{conv_encoder_forward.1} parent=11 // pred_fallthru
          _
        // Predicated region
        $region45: #{conv_encoder_forward.1} parent=11 // pred_check
          %p590 = pneg %p252
        $region46: #{conv_encoder_forward.1} parent=11 // pred_check_branch
          %592 = sbr.rel (%p590) target = $region48
        $region47: #{conv_encoder_forward.1} parent=11 // pred_region
          %594 = vsyncadd [#allocation15], 0
          %s596 = sshll.u32 %s9, 4
          %s597 = int_to_ptr.hbm [resolvable:$true] %s596
          %s598 = sshll.u32 [#allocation16], 4
          %s599 = int_to_ptr.vmem [resolvable:$true] %s598
          %601 = dma.hbm_to_vmem [thread:$0]  %s597, 64, %s599, [#allocation15]
        $region48: #{conv_encoder_forward.1} parent=11 // pred_fallthru
          _
        // Predicated region
        $region49: #{conv_encoder_forward.1} parent=11 // pred_check
          %p602 = pneg %p273
        $region50: #{conv_encoder_forward.1} parent=11 // pred_check_branch
          %604 = sbr.rel (%p602) target = $region52
        $region51: #{conv_encoder_forward.1} parent=11 // pred_region
          %606 = vsyncadd [#allocation18], 0
          %s607 = sshll.u32 %s10, 4
          %s608 = int_to_ptr.hbm [resolvable:$true] %s607
          %s609 = sshll.u32 [#allocation17], 4
          %s610 = int_to_ptr.vmem [resolvable:$true] %s609
          %615 = dma.hbm_to_vmem [thread:$0]  %s608, 384, %s610, [#allocation18], 128, 128, 8
        $region52: #{conv_encoder_forward.1} parent=11 // pred_fallthru
          _
        // Predicated region
        $region53: #{conv_encoder_forward.1} parent=11 // pred_check
          %p616 = pneg %p294
        $region54: #{conv_encoder_forward.1} parent=11 // pred_check_branch
          %618 = sbr.rel (%p616) target = $region56
        $region55: #{conv_encoder_forward.1} parent=11 // pred_region
          %620 = vsyncadd [#allocation18], 0
          %s621 = sshll.u32 %s11, 4
          %s622 = int_to_ptr.hbm [resolvable:$true] %s621
          %s623 = sshll.u32 [#allocation19], 4
          %s624 = int_to_ptr.vmem [resolvable:$true] %s623
          %629 = dma.hbm_to_vmem [thread:$0]  %s622, 86016, %s624, [#allocation18], 512, 512, 32
        $region56: #{conv_encoder_forward.1} parent=11 // pred_fallthru
          _
        // Predicated region
        $region57: #{conv_encoder_forward.1} parent=11 // pred_check
          %p630 = pneg %p315
        $region58: #{conv_encoder_forward.1} parent=11 // pred_check_branch
          %632 = sbr.rel (%p630) target = $region60
        $region59: #{conv_encoder_forward.1} parent=11 // pred_region
          %634 = vsyncadd [#allocation21], 0
          %s636 = sshll.u32 %s12, 4
          %s637 = int_to_ptr.hbm [resolvable:$true] %s636
          %s638 = sshll.u32 [#allocation20], 4
          %s639 = int_to_ptr.vmem [resolvable:$true] %s638
          %641 = dma.hbm_to_vmem [thread:$0]  %s637, 64, %s639, [#allocation21]
        $region60: #{conv_encoder_forward.1} parent=11 // pred_fallthru
          _
        // Predicated region
        $region61: #{conv_encoder_forward.1} parent=11 // pred_check
          %p642 = pneg %p336
        $region62: #{conv_encoder_forward.1} parent=11 // pred_check_branch
          %644 = sbr.rel (%p642) target = $region64
        $region63: #{conv_encoder_forward.1} parent=11 // pred_region
          %646 = vsyncadd [#allocation21], 0
          %s647 = sshll.u32 %s13, 4
          %s648 = int_to_ptr.hbm [resolvable:$true] %s647
          %s649 = sshll.u32 [#allocation22], 4
          %s650 = int_to_ptr.vmem [resolvable:$true] %s649
          %655 = dma.hbm_to_vmem [thread:$0]  %s648, 192, %s650, [#allocation21], 64, 64, 4
        $region64: #{conv_encoder_forward.1} parent=11 // pred_fallthru
          _
        // Predicated region
        $region65: #{conv_encoder_forward.1} parent=11 // pred_check
          %p656 = pneg %p357
        $region66: #{conv_encoder_forward.1} parent=11 // pred_check_branch
          %658 = sbr.rel (%p656) target = $region68
        $region67: #{conv_encoder_forward.1} parent=11 // pred_region
          %660 = vsyncadd [#allocation24], 0
          %s661 = sshll.u32 %s14, 4
          %s662 = int_to_ptr.hbm [resolvable:$true] %s661
          %s663 = sshll.u32 [#allocation23], 4
          %s664 = int_to_ptr.vmem [resolvable:$true] %s663
          %669 = dma.hbm_to_vmem [thread:$0]  %s662, 43008, %s664, [#allocation24], 256, 256, 16
        $region68: #{conv_encoder_forward.1} parent=11 // pred_fallthru
          _
        // Predicated region
        $region69: #{conv_encoder_forward.1} parent=11 // pred_check
          %p670 = pneg %p378
        $region70: #{conv_encoder_forward.1} parent=11 // pred_check_branch
          %672 = sbr.rel (%p670) target = $region72
        $region71: #{conv_encoder_forward.1} parent=11 // pred_region
          %674 = vsyncadd [#allocation24], 0
          %s676 = sshll.u32 %s15, 4
          %s677 = int_to_ptr.hbm [resolvable:$true] %s676
          %s678 = sshll.u32 [#allocation25], 4
          %s679 = int_to_ptr.vmem [resolvable:$true] %s678
          %681 = dma.hbm_to_vmem [thread:$0]  %s677, 32, %s679, [#allocation24]
        $region72: #{conv_encoder_forward.1} parent=11 // pred_fallthru
          _
        // Predicated region
        $region73: #{conv_encoder_forward.1} parent=11 // pred_check
          %p682 = pneg %p399
        $region74: #{conv_encoder_forward.1} parent=11 // pred_check_branch
          %684 = sbr.rel (%p682) target = $region76
        $region75: #{conv_encoder_forward.1} parent=11 // pred_region
          %686 = vsyncadd [#allocation27], 0
          %s687 = sshll.u32 %s16, 4
          %s688 = int_to_ptr.hbm [resolvable:$true] %s687
          %s689 = sshll.u32 [#allocation26], 4
          %s690 = int_to_ptr.vmem [resolvable:$true] %s689
          %695 = dma.hbm_to_vmem [thread:$0]  %s688, 64, %s690, [#allocation27], 16, 16, 1
        $region76: #{conv_encoder_forward.1} parent=11 // pred_fallthru
          _
        // Predicated region
        $region77: #{conv_encoder_forward.1} parent=11 // pred_check
          %p696 = pneg %p420
        $region78: #{conv_encoder_forward.1} parent=11 // pred_check_branch
          %698 = sbr.rel (%p696) target = $region80
        $region79: #{conv_encoder_forward.1} parent=11 // pred_region
          _
        $region80: #{conv_encoder_forward.1} parent=11 // pred_fallthru
          _
        // Predicated region
        $region81: #{conv_encoder_forward.1} parent=11 // pred_check
          %p699 = pneg %p441
        $region82: #{conv_encoder_forward.1} parent=11 // pred_check_branch
          %701 = sbr.rel (%p699) target = $region84
        $region83: #{conv_encoder_forward.1} parent=11 // pred_region
          %703 = vsyncadd [#allocation27], 0
          %s705 = sshll.u32 %s18, 4
          %s706 = int_to_ptr.hbm [resolvable:$true] %s705
          %s707 = sshll.u32 [#allocation28], 4
          %s708 = int_to_ptr.vmem [resolvable:$true] %s707
          %710 = dma.hbm_to_vmem [thread:$0]  %s706, 16, %s708, [#allocation27]
        $region84: #{conv_encoder_forward.1} parent=11 // pred_fallthru
          _
      $region12: #{conv_encoder_forward.1} parent=5 // pred_fallthru
        _
      %p711 = scmp.lt.s32.totalorder %s37, 2
      // Predicated region
      $region85: #{conv_encoder_forward.1} parent=5 // pred_check
        %p712 = pneg %p711
      $region86: #{conv_encoder_forward.1} parent=5 // pred_check_branch
        %714 = sbr.rel (%p712) target = $region88
      $region87: #{conv_encoder_forward.1} parent=5 // pred_region
        // Predicated region
        $region89: #{conv_encoder_forward.1} parent=87 // pred_check
          %p715 = pneg %p57
        $region90: #{conv_encoder_forward.1} parent=87 // pred_check_branch
          %717 = sbr.rel (%p715) target = $region92
        $region91: #{conv_encoder_forward.1} parent=87 // pred_region
          %p718 = scmp.lt.s32.totalorder %s37, 1
          %s719 = scalar_select %p718, %s37, 1
          %s720 = smul.addr %s719, 4
          %s721 = smul.addr %s720, 8
          %s722 = scalar_lea.vmem %s0, %s721
        $region92: #{conv_encoder_forward.1} parent=87 // pred_fallthru
          _
      $region88: #{conv_encoder_forward.1} parent=5 // pred_fallthru
        _
      %p723 = scmp.le.s32.totalorder 1, %s37
      %p724 = scmp.lt.s32.totalorder %s37, 3
      %p725 = pnand %p723, %p724
      %p726 = pneg %p725
      // Predicated region
      $region93: #{conv_encoder_forward.1} parent=5 // pred_check
        _
      $region94: #{conv_encoder_forward.1} parent=5 // pred_check_branch
        %728 = sbr.rel (%p725) target = $region96
      $region95: #{conv_encoder_forward.1} parent=5 // pred_region
        %s729 = ssub.s32 %s37, 1
        // Predicated region
        $region97: #{conv_encoder_forward.1} parent=95 // pred_check
          %p730 = pneg %p84
        $region98: #{conv_encoder_forward.1} parent=95 // pred_check_branch
          %732 = sbr.rel (%p730) target = $region100
        $region99: #{conv_encoder_forward.1} parent=95 // pred_region
          %734 = dma.done [#allocation3], 768
        $region100: #{conv_encoder_forward.1} parent=95 // pred_fallthru
          _
        // Predicated region
        $region101: #{conv_encoder_forward.1} parent=95 // pred_check
          %p735 = pneg %p105
        $region102: #{conv_encoder_forward.1} parent=95 // pred_check_branch
          %737 = sbr.rel (%p735) target = $region104
        $region103: #{conv_encoder_forward.1} parent=95 // pred_region
          %739 = dma.done [#allocation6], 6144
        $region104: #{conv_encoder_forward.1} parent=95 // pred_fallthru
          _
        // Predicated region
        $region105: #{conv_encoder_forward.1} parent=95 // pred_check
          %p740 = pneg %p126
        $region106: #{conv_encoder_forward.1} parent=95 // pred_check_branch
          %742 = sbr.rel (%p740) target = $region108
        $region107: #{conv_encoder_forward.1} parent=95 // pred_region
          %744 = dma.done [#allocation6], 64
        $region108: #{conv_encoder_forward.1} parent=95 // pred_fallthru
          _
        // Predicated region
        $region109: #{conv_encoder_forward.1} parent=95 // pred_check
          %p745 = pneg %p147
        $region110: #{conv_encoder_forward.1} parent=95 // pred_check_branch
          %747 = sbr.rel (%p745) target = $region112
        $region111: #{conv_encoder_forward.1} parent=95 // pred_region
          %749 = dma.done [#allocation9], 768
        $region112: #{conv_encoder_forward.1} parent=95 // pred_fallthru
          _
        // Predicated region
        $region113: #{conv_encoder_forward.1} parent=95 // pred_check
          %p750 = pneg %p168
        $region114: #{conv_encoder_forward.1} parent=95 // pred_check_branch
          %752 = sbr.rel (%p750) target = $region116
        $region115: #{conv_encoder_forward.1} parent=95 // pred_region
          %754 = dma.done [#allocation9], 86016
        $region116: #{conv_encoder_forward.1} parent=95 // pred_fallthru
          _
        // Predicated region
        $region117: #{conv_encoder_forward.1} parent=95 // pred_check
          %p755 = pneg %p189
        $region118: #{conv_encoder_forward.1} parent=95 // pred_check_branch
          %757 = sbr.rel (%p755) target = $region120
        $region119: #{conv_encoder_forward.1} parent=95 // pred_region
          %759 = dma.done [#allocation12], 64
        $region120: #{conv_encoder_forward.1} parent=95 // pred_fallthru
          _
        // Predicated region
        $region121: #{conv_encoder_forward.1} parent=95 // pred_check
          %p760 = pneg %p210
        $region122: #{conv_encoder_forward.1} parent=95 // pred_check_branch
          %762 = sbr.rel (%p760) target = $region124
        $region123: #{conv_encoder_forward.1} parent=95 // pred_region
          %764 = dma.done [#allocation12], 384
        $region124: #{conv_encoder_forward.1} parent=95 // pred_fallthru
          _
        // Predicated region
        $region125: #{conv_encoder_forward.1} parent=95 // pred_check
          %p765 = pneg %p231
        $region126: #{conv_encoder_forward.1} parent=95 // pred_check_branch
          %767 = sbr.rel (%p765) target = $region128
        $region127: #{conv_encoder_forward.1} parent=95 // pred_region
          %769 = dma.done [#allocation15], 86016
        $region128: #{conv_encoder_forward.1} parent=95 // pred_fallthru
          _
        // Predicated region
        $region129: #{conv_encoder_forward.1} parent=95 // pred_check
          %p770 = pneg %p252
        $region130: #{conv_encoder_forward.1} parent=95 // pred_check_branch
          %772 = sbr.rel (%p770) target = $region132
        $region131: #{conv_encoder_forward.1} parent=95 // pred_region
          %774 = dma.done [#allocation15], 64
        $region132: #{conv_encoder_forward.1} parent=95 // pred_fallthru
          _
        // Predicated region
        $region133: #{conv_encoder_forward.1} parent=95 // pred_check
          %p775 = pneg %p273
        $region134: #{conv_encoder_forward.1} parent=95 // pred_check_branch
          %777 = sbr.rel (%p775) target = $region136
        $region135: #{conv_encoder_forward.1} parent=95 // pred_region
          %779 = dma.done [#allocation18], 384
        $region136: #{conv_encoder_forward.1} parent=95 // pred_fallthru
          _
        // Predicated region
        $region137: #{conv_encoder_forward.1} parent=95 // pred_check
          %p780 = pneg %p294
        $region138: #{conv_encoder_forward.1} parent=95 // pred_check_branch
          %782 = sbr.rel (%p780) target = $region140
        $region139: #{conv_encoder_forward.1} parent=95 // pred_region
          %784 = dma.done [#allocation18], 86016
        $region140: #{conv_encoder_forward.1} parent=95 // pred_fallthru
          _
        // Predicated region
        $region141: #{conv_encoder_forward.1} parent=95 // pred_check
          %p785 = pneg %p315
        $region142: #{conv_encoder_forward.1} parent=95 // pred_check_branch
          %787 = sbr.rel (%p785) target = $region144
        $region143: #{conv_encoder_forward.1} parent=95 // pred_region
          %789 = dma.done [#allocation21], 64
        $region144: #{conv_encoder_forward.1} parent=95 // pred_fallthru
          _
        // Predicated region
        $region145: #{conv_encoder_forward.1} parent=95 // pred_check
          %p790 = pneg %p336
        $region146: #{conv_encoder_forward.1} parent=95 // pred_check_branch
          %792 = sbr.rel (%p790) target = $region148
        $region147: #{conv_encoder_forward.1} parent=95 // pred_region
          %794 = dma.done [#allocation21], 192
        $region148: #{conv_encoder_forward.1} parent=95 // pred_fallthru
          _
        // Predicated region
        $region149: #{conv_encoder_forward.1} parent=95 // pred_check
          %p795 = pneg %p357
        $region150: #{conv_encoder_forward.1} parent=95 // pred_check_branch
          %797 = sbr.rel (%p795) target = $region152
        $region151: #{conv_encoder_forward.1} parent=95 // pred_region
          %799 = dma.done [#allocation24], 43008
        $region152: #{conv_encoder_forward.1} parent=95 // pred_fallthru
          _
        // Predicated region
        $region153: #{conv_encoder_forward.1} parent=95 // pred_check
          %p800 = pneg %p378
        $region154: #{conv_encoder_forward.1} parent=95 // pred_check_branch
          %802 = sbr.rel (%p800) target = $region156
        $region155: #{conv_encoder_forward.1} parent=95 // pred_region
          %804 = dma.done [#allocation24], 32
        $region156: #{conv_encoder_forward.1} parent=95 // pred_fallthru
          _
        // Predicated region
        $region157: #{conv_encoder_forward.1} parent=95 // pred_check
          %p805 = pneg %p399
        $region158: #{conv_encoder_forward.1} parent=95 // pred_check_branch
          %807 = sbr.rel (%p805) target = $region160
        $region159: #{conv_encoder_forward.1} parent=95 // pred_region
          %809 = dma.done [#allocation27], 64
        $region160: #{conv_encoder_forward.1} parent=95 // pred_fallthru
          _
        // Predicated region
        $region161: #{conv_encoder_forward.1} parent=95 // pred_check
          %p810 = pneg %p441
        $region162: #{conv_encoder_forward.1} parent=95 // pred_check_branch
          %812 = sbr.rel (%p810) target = $region164
        $region163: #{conv_encoder_forward.1} parent=95 // pred_region
          %814 = dma.done [#allocation27], 16
        $region164: #{conv_encoder_forward.1} parent=95 // pred_fallthru
          _
        %p815 = scmp.lt.s32.totalorder %s42, 1
        %s816 = scalar_select %p815, %s42, 1
        %s817 = smul.addr %s816, 4
        %s818 = smul.addr %s817, 8
        %s819 = scalar_lea.vmem %s0, %s818
        %p820 = pneg %p63
        %p821 = pneg %p60
        %p822 = pneg %p84
        %p823 = pneg %p81
        %p824 = pneg %p105
        %p825 = pneg %p102
        %p826 = pneg %p126
        %p827 = pneg %p123
        %p828 = pneg %p147
        %p829 = pneg %p144
        %p830 = pneg %p168
        %p831 = pneg %p165
        %p832 = pneg %p189
        %p833 = pneg %p186
        %p834 = pneg %p210
        %p835 = pneg %p207
        %p836 = pneg %p231
        %p837 = pneg %p228
        %p838 = pneg %p252
        %p839 = pneg %p249
        %p840 = pneg %p273
        %p841 = pneg %p270
        %p842 = pneg %p294
        %p843 = pneg %p291
        %p844 = pneg %p315
        %p845 = pneg %p312
        %p846 = pneg %p336
        %p847 = pneg %p333
        %p848 = pneg %p357
        %p849 = pneg %p354
        %p850 = pneg %p378
        %p851 = pneg %p375
        %p852 = pneg %p399
        %p853 = pneg %p396
        %p854 = pneg %p420
        %p855 = pneg %p417
        %p856 = pneg %p441
        %p857 = pneg %p438
        %p858 = pneg %p467
        %p859 = pneg %p464
        %s860 = sand.u32 %s454, 1
        %s861 = scalar_lea.sflag [#allocation4], %s860
        %s862 = sand.u32 %s454, 1
        %s863 = scalar_lea.vmem [#allocation29], %s862
        %p864 = scmp.lt.s32.totalorder %s42, 1
        %s865 = scalar_select %p864, %s42, 1
        %s866 = smul.addr %s865, 4
        %s867 = smul.addr %s866, 8
        %s868 = scalar_lea.vmem %s0, %s867
        %v869 = vld [vmem:[%s868] sm:$0xff]
        %v870 = vld [vmem:[%s868 + $0x8] sm:$0xff]
        %v871 = vld [vmem:[%s868 + $0x10] sm:$0xff]
        %v872 = vld [vmem:[%s868 + $0x18] sm:$0xf]
        %v873 = vrcp.pop 15.0
        %v874 = vmul.f32 15.0, %v873
        %v875 = vsub.f32 1.0, %v874
        %v876 = vmul.f32 %v873, %v875
        %v877 = vadd.f32 %v873, %v876
        %vm878 = vweird.f32 %v873
        %v879 = vsel %vm878, %v873, %v877
        %v880 = vmul.f32 %v869, %v879
        %v881 = vmul.f32 %v870, %v879
        %v882 = vmul.f32 %v871, %v879
        %v883 = vmul.f32 %v872, %v879
        %v884 = vmul.f32 %v880, 2.0
        %v885 = vmul.f32 %v881, 2.0
        %v886 = vmul.f32 %v882, 2.0
        %v887 = vmul.f32 %v883, 2.0
        %v888 = vsub.f32 %v884, 1.0
        %v889 = vsub.f32 %v885, 1.0
        %v890 = vsub.f32 %v886, 1.0
        %v891 = vsub.f32 %v887, 1.0
        %v892 = vld [vmem:[#allocation2] sm:$0xff]
        %v893 = vld [vmem:[#allocation2 + $0x8] sm:$0x3f]
        %vm894 = vcmask 228352
        %v896 = vsel %vm894, %v892, 0
        %v899 = vsel %vm894, %v893, 0
        %vm901 = vcmask 1043456
        %v903 = vsel %vm901, %v891, 0
        %905 = vmatpush.msra.mxu0 0.0
        %906 = vmatpush.msra.mxu0 0.0
        %907 = vmatpush.msra.mxu0 0.0
        %908 = vmatpush.msra.mxu0 0.0
        %909 = vmatpush.msra.mxu0 0.0
        %910 = vmatpush.msra.mxu0 0.0
        %911 = vmatpush.msra.mxu0 0.0
        %912 = vmatpush.msra.mxu0 0.0
        %913 = vmatpush.msra.mxu0 0.0
        %914 = vmatpush.msra.mxu0 0.0
        %915 = vmatpush.msra.mxu0 0.0
        %916 = vmatpush.msra.mxu0 0.0
        %917 = vmatpush.msra.mxu0 %v903
        %918 = vmatpush.msra.mxu0 %v890
        %919 = vmatpush.msra.mxu0 %v889
        %920 = vmatpush.msra.mxu0 %v888
        %921 = vmatmul.f32.gmra.mxu0 %v896
        %v922 = vpop.f32.mrf.mxu0
        %v923 = vadd.f32 0.0, %v922
        %924 = vmatmul.f32.gmra.mxu0 %v899
        %v925 = vpop.f32.mrf.mxu0
        %v926 = vadd.f32 0.0, %v925
        %927 = vdwg.mxu0
        %v928 = vld [vmem:[#allocation5] sm:$0xff]
        %v929 = vld [vmem:[#allocation5 + $0x8] sm:$0xff]
        %v930 = vld [vmem:[#allocation5 + $0x10] sm:$0xff]
        %v931 = vld [vmem:[#allocation5 + $0x18] sm:$0xff]
        %v932 = vld [vmem:[#allocation5 + $0x20] sm:$0xff]
        %v933 = vld [vmem:[#allocation5 + $0x28] sm:$0xff]
        %v934 = vld [vmem:[#allocation5 + $0x30] sm:$0xff]
        %v935 = vld [vmem:[#allocation5 + $0x38] sm:$0xff]
        %v936 = vld [vmem:[#allocation5 + $0x40] sm:$0xff]
        %v937 = vld [vmem:[#allocation5 + $0x48] sm:$0xff]
        %v938 = vld [vmem:[#allocation5 + $0x50] sm:$0xff]
        %v939 = vld [vmem:[#allocation5 + $0x58] sm:$0xff]
        %v940 = vld [vmem:[#allocation5 + $0x60] sm:$0xf]
        %v941 = vld [vmem:[#allocation5 + $0x68] sm:$0xf]
        %v942 = vld [vmem:[#allocation5 + $0x70] sm:$0xf]
        %v943 = vld [vmem:[#allocation5 + $0x78] sm:$0xf]
        %s944 = scalar_lea.vmem [#allocation2], 16
        %v945 = vld [vmem:[%s944] sm:$0xff]
        %v946 = vld [vmem:[%s944 + $0x8] sm:$0x3f]
        %v948 = vsel %vm894, %v945, 0
        %v951 = vsel %vm894, %v946, 0
        %953 = vmatpush.msra.mxu0 0.0
        %954 = vmatpush.msra.mxu0 0.0
        %955 = vmatpush.msra.mxu0 0.0
        %956 = vmatpush.msra.mxu0 0.0
        %957 = vmatpush.msra.mxu0 0.0
        %958 = vmatpush.msra.mxu0 0.0
        %959 = vmatpush.msra.mxu0 0.0
        %960 = vmatpush.msra.mxu0 0.0
        %961 = vmatpush.msra.mxu0 0.0
        %962 = vmatpush.msra.mxu0 0.0
        %963 = vmatpush.msra.mxu0 0.0
        %964 = vmatpush.msra.mxu0 0.0
        %965 = vmatpush.msra.mxu0 %v903
        %966 = vmatpush.msra.mxu0 %v890
        %967 = vmatpush.msra.mxu0 %v889
        %968 = vmatpush.msra.mxu0 %v888
        %969 = vmatmul.f32.gmra.mxu0 %v948
        %v970 = vpop.f32.mrf.mxu0
        %v971 = vadd.f32 0.0, %v970
        %972 = vmatmul.f32.gmra.mxu0 %v951
        %v973 = vpop.f32.mrf.mxu0
        %v974 = vadd.f32 0.0, %v973
        %975 = vdwg.mxu0
        %s976 = scalar_lea.vmem [#allocation5], 128
        %v977 = vld [vmem:[%s976] sm:$0xff]
        %v978 = vld [vmem:[%s976 + $0x8] sm:$0xff]
        %v979 = vld [vmem:[%s976 + $0x10] sm:$0xff]
        %v980 = vld [vmem:[%s976 + $0x18] sm:$0xff]
        %v981 = vld [vmem:[%s976 + $0x20] sm:$0xff]
        %v982 = vld [vmem:[%s976 + $0x28] sm:$0xff]
        %v983 = vld [vmem:[%s976 + $0x30] sm:$0xff]
        %v984 = vld [vmem:[%s976 + $0x38] sm:$0xff]
        %v985 = vld [vmem:[%s976 + $0x40] sm:$0xff]
        %v986 = vld [vmem:[%s976 + $0x48] sm:$0xff]
        %v987 = vld [vmem:[%s976 + $0x50] sm:$0xff]
        %v988 = vld [vmem:[%s976 + $0x58] sm:$0xff]
        %v989 = vld [vmem:[%s976 + $0x60] sm:$0xf]
        %v990 = vld [vmem:[%s976 + $0x68] sm:$0xf]
        %v991 = vld [vmem:[%s976 + $0x70] sm:$0xf]
        %v992 = vld [vmem:[%s976 + $0x78] sm:$0xf]
        %v994 = vsel %vm894, %v971, 0
        %v997 = vsel %vm894, %v974, 0
        %v1000 = vsel %vm901, %v989, 0
        %v1003 = vsel %vm901, %v990, 0
        %v1006 = vsel %vm901, %v991, 0
        %v1009 = vsel %vm901, %v992, 0
        %1011 = vmatpush.msra.mxu0 0.0
        %1012 = vmatpush.msra.mxu0 0.0
        %1013 = vmatpush.msra.mxu0 0.0
        %1014 = vmatpush.msra.mxu0 0.0
        %1015 = vmatpush.msra.mxu0 0.0
        %1016 = vmatpush.msra.mxu0 0.0
        %1017 = vmatpush.msra.mxu0 0.0
        %1018 = vmatpush.msra.mxu0 0.0
        %1019 = vmatpush.msra.mxu0 0.0
        %1020 = vmatpush.msra.mxu0 0.0
        %1021 = vmatpush.msra.mxu0 0.0
        %1022 = vmatpush.msra.mxu0 0.0
        %1023 = vmatpush.msra.mxu0 %v1000
        %1024 = vmatpush.msra.mxu0 %v985
        %1025 = vmatpush.msra.mxu0 %v981
        %1026 = vmatpush.msra.mxu0 %v977
        %1027 = vmatmul.f32.gmra.mxu0 %v994
        %v1028 = vpop.f32.mrf.mxu0
        %v1029 = vadd.f32 0.0, %v1028
        %1030 = vmatmul.f32.gmra.mxu0 %v997
        %v1031 = vpop.f32.mrf.mxu0
        %v1032 = vadd.f32 0.0, %v1031
        %1033 = vdwg.mxu0
        %1034 = vmatpush.msra.mxu0 0.0
        %1035 = vmatpush.msra.mxu0 0.0
        %1036 = vmatpush.msra.mxu0 0.0
        %1037 = vmatpush.msra.mxu0 0.0
        %1038 = vmatpush.msra.mxu0 0.0
        %1039 = vmatpush.msra.mxu0 0.0
        %1040 = vmatpush.msra.mxu0 0.0
        %1041 = vmatpush.msra.mxu0 0.0
        %1042 = vmatpush.msra.mxu0 0.0
        %1043 = vmatpush.msra.mxu0 0.0
        %1044 = vmatpush.msra.mxu0 0.0
        %1045 = vmatpush.msra.mxu0 0.0
        %1046 = vmatpush.msra.mxu0 %v1003
        %1047 = vmatpush.msra.mxu0 %v986
        %1048 = vmatpush.msra.mxu0 %v982
        %1049 = vmatpush.msra.mxu0 %v978
        %1050 = vmatmul.f32.gmra.mxu0 %v994
        %v1051 = vpop.f32.mrf.mxu0
        %v1052 = vadd.f32 0.0, %v1051
        %1053 = vmatmul.f32.gmra.mxu0 %v997
        %v1054 = vpop.f32.mrf.mxu0
        %v1055 = vadd.f32 0.0, %v1054
        %1056 = vdwg.mxu0
        %1057 = vmatpush.msra.mxu0 0.0
        %1058 = vmatpush.msra.mxu0 0.0
        %1059 = vmatpush.msra.mxu0 0.0
        %1060 = vmatpush.msra.mxu0 0.0
        %1061 = vmatpush.msra.mxu0 0.0
        %1062 = vmatpush.msra.mxu0 0.0
        %1063 = vmatpush.msra.mxu0 0.0
        %1064 = vmatpush.msra.mxu0 0.0
        %1065 = vmatpush.msra.mxu0 0.0
        %1066 = vmatpush.msra.mxu0 0.0
        %1067 = vmatpush.msra.mxu0 0.0
        %1068 = vmatpush.msra.mxu0 0.0
        %1069 = vmatpush.msra.mxu0 %v1006
        %1070 = vmatpush.msra.mxu0 %v987
        %1071 = vmatpush.msra.mxu0 %v983
        %1072 = vmatpush.msra.mxu0 %v979
        %1073 = vmatmul.f32.gmra.mxu0 %v994
        %v1074 = vpop.f32.mrf.mxu0
        %v1075 = vadd.f32 0.0, %v1074
        %1076 = vmatmul.f32.gmra.mxu0 %v997
        %v1077 = vpop.f32.mrf.mxu0
        %v1078 = vadd.f32 0.0, %v1077
        %1079 = vdwg.mxu0
        %1080 = vmatpush.msra.mxu0 0.0
        %1081 = vmatpush.msra.mxu0 0.0
        %1082 = vmatpush.msra.mxu0 0.0
        %1083 = vmatpush.msra.mxu0 0.0
        %1084 = vmatpush.msra.mxu0 0.0
        %1085 = vmatpush.msra.mxu0 0.0
        %1086 = vmatpush.msra.mxu0 0.0
        %1087 = vmatpush.msra.mxu0 0.0
        %1088 = vmatpush.msra.mxu0 0.0
        %1089 = vmatpush.msra.mxu0 0.0
        %1090 = vmatpush.msra.mxu0 0.0
        %1091 = vmatpush.msra.mxu0 0.0
        %1092 = vmatpush.msra.mxu0 %v1009
        %1093 = vmatpush.msra.mxu0 %v988
        %1094 = vmatpush.msra.mxu0 %v984
        %1095 = vmatpush.msra.mxu0 %v980
        %1096 = vmatmul.f32.gmra.mxu0 %v994
        %v1097 = vpop.f32.mrf.mxu0
        %v1098 = vadd.f32 0.0, %v1097
        %1099 = vmatmul.f32.gmra.mxu0 %v997
        %v1100 = vpop.f32.mrf.mxu0
        %v1101 = vadd.f32 0.0, %v1100
        %1102 = vdwg.mxu0
        %v1104 = vsel %vm894, %v923, 0
        %v1107 = vsel %vm894, %v926, 0
        %v1110 = vsel %vm901, %v940, 0
        %v1113 = vsel %vm901, %v941, 0
        %v1116 = vsel %vm901, %v942, 0
        %v1119 = vsel %vm901, %v943, 0
        %1121 = vmatpush.msra.mxu0 0.0
        %1122 = vmatpush.msra.mxu0 0.0
        %1123 = vmatpush.msra.mxu0 0.0
        %1124 = vmatpush.msra.mxu0 0.0
        %1125 = vmatpush.msra.mxu0 0.0
        %1126 = vmatpush.msra.mxu0 0.0
        %1127 = vmatpush.msra.mxu0 0.0
        %1128 = vmatpush.msra.mxu0 0.0
        %1129 = vmatpush.msra.mxu0 0.0
        %1130 = vmatpush.msra.mxu0 0.0
        %1131 = vmatpush.msra.mxu0 0.0
        %1132 = vmatpush.msra.mxu0 0.0
        %1133 = vmatpush.msra.mxu0 %v1110
        %1134 = vmatpush.msra.mxu0 %v936
        %1135 = vmatpush.msra.mxu0 %v932
        %1136 = vmatpush.msra.mxu0 %v928
        %1137 = vmatmul.f32.gmra.mxu0 %v1104
        %v1138 = vpop.f32.mrf.mxu0
        %v1139 = vadd.f32 %v1029, %v1138
        %1140 = vmatmul.f32.gmra.mxu0 %v1107
        %v1141 = vpop.f32.mrf.mxu0
        %v1142 = vadd.f32 %v1032, %v1141
        %1143 = vdwg.mxu0
        %1144 = vmatpush.msra.mxu0 0.0
        %1145 = vmatpush.msra.mxu0 0.0
        %1146 = vmatpush.msra.mxu0 0.0
        %1147 = vmatpush.msra.mxu0 0.0
        %1148 = vmatpush.msra.mxu0 0.0
        %1149 = vmatpush.msra.mxu0 0.0
        %1150 = vmatpush.msra.mxu0 0.0
        %1151 = vmatpush.msra.mxu0 0.0
        %1152 = vmatpush.msra.mxu0 0.0
        %1153 = vmatpush.msra.mxu0 0.0
        %1154 = vmatpush.msra.mxu0 0.0
        %1155 = vmatpush.msra.mxu0 0.0
        %1156 = vmatpush.msra.mxu0 %v1113
        %1157 = vmatpush.msra.mxu0 %v937
        %1158 = vmatpush.msra.mxu0 %v933
        %1159 = vmatpush.msra.mxu0 %v929
        %1160 = vmatmul.f32.gmra.mxu0 %v1104
        %v1161 = vpop.f32.mrf.mxu0
        %v1162 = vadd.f32 %v1052, %v1161
        %1163 = vmatmul.f32.gmra.mxu0 %v1107
        %v1164 = vpop.f32.mrf.mxu0
        %v1165 = vadd.f32 %v1055, %v1164
        %1166 = vdwg.mxu0
        %1167 = vmatpush.msra.mxu0 0.0
        %1168 = vmatpush.msra.mxu0 0.0
        %1169 = vmatpush.msra.mxu0 0.0
        %1170 = vmatpush.msra.mxu0 0.0
        %1171 = vmatpush.msra.mxu0 0.0
        %1172 = vmatpush.msra.mxu0 0.0
        %1173 = vmatpush.msra.mxu0 0.0
        %1174 = vmatpush.msra.mxu0 0.0
        %1175 = vmatpush.msra.mxu0 0.0
        %1176 = vmatpush.msra.mxu0 0.0
        %1177 = vmatpush.msra.mxu0 0.0
        %1178 = vmatpush.msra.mxu0 0.0
        %1179 = vmatpush.msra.mxu0 %v1116
        %1180 = vmatpush.msra.mxu0 %v938
        %1181 = vmatpush.msra.mxu0 %v934
        %1182 = vmatpush.msra.mxu0 %v930
        %1183 = vmatmul.f32.gmra.mxu0 %v1104
        %v1184 = vpop.f32.mrf.mxu0
        %v1185 = vadd.f32 %v1075, %v1184
        %1186 = vmatmul.f32.gmra.mxu0 %v1107
        %v1187 = vpop.f32.mrf.mxu0
        %v1188 = vadd.f32 %v1078, %v1187
        %1189 = vdwg.mxu0
        %1190 = vmatpush.msra.mxu0 0.0
        %1191 = vmatpush.msra.mxu0 0.0
        %1192 = vmatpush.msra.mxu0 0.0
        %1193 = vmatpush.msra.mxu0 0.0
        %1194 = vmatpush.msra.mxu0 0.0
        %1195 = vmatpush.msra.mxu0 0.0
        %1196 = vmatpush.msra.mxu0 0.0
        %1197 = vmatpush.msra.mxu0 0.0
        %1198 = vmatpush.msra.mxu0 0.0
        %1199 = vmatpush.msra.mxu0 0.0
        %1200 = vmatpush.msra.mxu0 0.0
        %1201 = vmatpush.msra.mxu0 0.0
        %1202 = vmatpush.msra.mxu0 %v1119
        %1203 = vmatpush.msra.mxu0 %v939
        %1204 = vmatpush.msra.mxu0 %v935
        %1205 = vmatpush.msra.mxu0 %v931
        %1206 = vmatmul.f32.gmra.mxu0 %v1104
        %v1207 = vpop.f32.mrf.mxu0
        %v1208 = vadd.f32 %v1098, %v1207
        %1209 = vmatmul.f32.gmra.mxu0 %v1107
        %v1210 = vpop.f32.mrf.mxu0
        %v1211 = vadd.f32 %v1101, %v1210
        %1212 = vdwg.mxu0
        %s1213 = scalar_lea.vmem [#allocation2], 32
        %v1214 = vld [vmem:[%s1213] sm:$0xff]
        %v1215 = vld [vmem:[%s1213 + $0x8] sm:$0x3f]
        %v1217 = vsel %vm894, %v1214, 0
        %v1220 = vsel %vm894, %v1215, 0
        %1222 = vmatpush.msra.mxu0 0.0
        %1223 = vmatpush.msra.mxu0 0.0
        %1224 = vmatpush.msra.mxu0 0.0
        %1225 = vmatpush.msra.mxu0 0.0
        %1226 = vmatpush.msra.mxu0 0.0
        %1227 = vmatpush.msra.mxu0 0.0
        %1228 = vmatpush.msra.mxu0 0.0
        %1229 = vmatpush.msra.mxu0 0.0
        %1230 = vmatpush.msra.mxu0 0.0
        %1231 = vmatpush.msra.mxu0 0.0
        %1232 = vmatpush.msra.mxu0 0.0
        %1233 = vmatpush.msra.mxu0 0.0
        %1234 = vmatpush.msra.mxu0 %v903
        %1235 = vmatpush.msra.mxu0 %v890
        %1236 = vmatpush.msra.mxu0 %v889
        %1237 = vmatpush.msra.mxu0 %v888
        %1238 = vmatmul.f32.gmra.mxu0 %v1217
        %v1239 = vpop.f32.mrf.mxu0
        %v1240 = vadd.f32 0.0, %v1239
        %1241 = vmatmul.f32.gmra.mxu0 %v1220
        %v1242 = vpop.f32.mrf.mxu0
        %v1243 = vadd.f32 0.0, %v1242
        %1244 = vdwg.mxu0
        %s1245 = scalar_lea.vmem [#allocation5], 256
        %v1246 = vld [vmem:[%s1245] sm:$0xff]
        %v1247 = vld [vmem:[%s1245 + $0x8] sm:$0xff]
        %v1248 = vld [vmem:[%s1245 + $0x10] sm:$0xff]
        %v1249 = vld [vmem:[%s1245 + $0x18] sm:$0xff]
        %v1250 = vld [vmem:[%s1245 + $0x20] sm:$0xff]
        %v1251 = vld [vmem:[%s1245 + $0x28] sm:$0xff]
        %v1252 = vld [vmem:[%s1245 + $0x30] sm:$0xff]
        %v1253 = vld [vmem:[%s1245 + $0x38] sm:$0xff]
        %v1254 = vld [vmem:[%s1245 + $0x40] sm:$0xff]
        %v1255 = vld [vmem:[%s1245 + $0x48] sm:$0xff]
        %v1256 = vld [vmem:[%s1245 + $0x50] sm:$0xff]
        %v1257 = vld [vmem:[%s1245 + $0x58] sm:$0xff]
        %v1258 = vld [vmem:[%s1245 + $0x60] sm:$0xf]
        %v1259 = vld [vmem:[%s1245 + $0x68] sm:$0xf]
        %v1260 = vld [vmem:[%s1245 + $0x70] sm:$0xf]
        %v1261 = vld [vmem:[%s1245 + $0x78] sm:$0xf]
        %v1263 = vsel %vm894, %v1240, 0
        %v1266 = vsel %vm894, %v1243, 0
        %v1269 = vsel %vm901, %v1258, 0
        %v1272 = vsel %vm901, %v1259, 0
        %v1275 = vsel %vm901, %v1260, 0
        %v1278 = vsel %vm901, %v1261, 0
        %1280 = vmatpush.msra.mxu0 0.0
        %1281 = vmatpush.msra.mxu0 0.0
        %1282 = vmatpush.msra.mxu0 0.0
        %1283 = vmatpush.msra.mxu0 0.0
        %1284 = vmatpush.msra.mxu0 0.0
        %1285 = vmatpush.msra.mxu0 0.0
        %1286 = vmatpush.msra.mxu0 0.0
        %1287 = vmatpush.msra.mxu0 0.0
        %1288 = vmatpush.msra.mxu0 0.0
        %1289 = vmatpush.msra.mxu0 0.0
        %1290 = vmatpush.msra.mxu0 0.0
        %1291 = vmatpush.msra.mxu0 0.0
        %1292 = vmatpush.msra.mxu0 %v1269
        %1293 = vmatpush.msra.mxu0 %v1254
        %1294 = vmatpush.msra.mxu0 %v1250
        %1295 = vmatpush.msra.mxu0 %v1246
        %1296 = vmatmul.f32.gmra.mxu0 %v1263
        %v1297 = vpop.f32.mrf.mxu0
        %v1298 = vadd.f32 0.0, %v1297
        %1299 = vmatmul.f32.gmra.mxu0 %v1266
        %v1300 = vpop.f32.mrf.mxu0
        %v1301 = vadd.f32 0.0, %v1300
        %1302 = vdwg.mxu0
        %1303 = vmatpush.msra.mxu0 0.0
        %1304 = vmatpush.msra.mxu0 0.0
        %1305 = vmatpush.msra.mxu0 0.0
        %1306 = vmatpush.msra.mxu0 0.0
        %1307 = vmatpush.msra.mxu0 0.0
        %1308 = vmatpush.msra.mxu0 0.0
        %1309 = vmatpush.msra.mxu0 0.0
        %1310 = vmatpush.msra.mxu0 0.0
        %1311 = vmatpush.msra.mxu0 0.0
        %1312 = vmatpush.msra.mxu0 0.0
        %1313 = vmatpush.msra.mxu0 0.0
        %1314 = vmatpush.msra.mxu0 0.0
        %1315 = vmatpush.msra.mxu0 %v1272
        %1316 = vmatpush.msra.mxu0 %v1255
        %1317 = vmatpush.msra.mxu0 %v1251
        %1318 = vmatpush.msra.mxu0 %v1247
        %1319 = vmatmul.f32.gmra.mxu0 %v1263
        %v1320 = vpop.f32.mrf.mxu0
        %v1321 = vadd.f32 0.0, %v1320
        %1322 = vmatmul.f32.gmra.mxu0 %v1266
        %v1323 = vpop.f32.mrf.mxu0
        %v1324 = vadd.f32 0.0, %v1323
        %1325 = vdwg.mxu0
        %1326 = vmatpush.msra.mxu0 0.0
        %1327 = vmatpush.msra.mxu0 0.0
        %1328 = vmatpush.msra.mxu0 0.0
        %1329 = vmatpush.msra.mxu0 0.0
        %1330 = vmatpush.msra.mxu0 0.0
        %1331 = vmatpush.msra.mxu0 0.0
        %1332 = vmatpush.msra.mxu0 0.0
        %1333 = vmatpush.msra.mxu0 0.0
        %1334 = vmatpush.msra.mxu0 0.0
        %1335 = vmatpush.msra.mxu0 0.0
        %1336 = vmatpush.msra.mxu0 0.0
        %1337 = vmatpush.msra.mxu0 0.0
        %1338 = vmatpush.msra.mxu0 %v1275
        %1339 = vmatpush.msra.mxu0 %v1256
        %1340 = vmatpush.msra.mxu0 %v1252
        %1341 = vmatpush.msra.mxu0 %v1248
        %1342 = vmatmul.f32.gmra.mxu0 %v1263
        %v1343 = vpop.f32.mrf.mxu0
        %v1344 = vadd.f32 0.0, %v1343
        %1345 = vmatmul.f32.gmra.mxu0 %v1266
        %v1346 = vpop.f32.mrf.mxu0
        %v1347 = vadd.f32 0.0, %v1346
        %1348 = vdwg.mxu0
        %1349 = vmatpush.msra.mxu0 0.0
        %1350 = vmatpush.msra.mxu0 0.0
        %1351 = vmatpush.msra.mxu0 0.0
        %1352 = vmatpush.msra.mxu0 0.0
        %1353 = vmatpush.msra.mxu0 0.0
        %1354 = vmatpush.msra.mxu0 0.0
        %1355 = vmatpush.msra.mxu0 0.0
        %1356 = vmatpush.msra.mxu0 0.0
        %1357 = vmatpush.msra.mxu0 0.0
        %1358 = vmatpush.msra.mxu0 0.0
        %1359 = vmatpush.msra.mxu0 0.0
        %1360 = vmatpush.msra.mxu0 0.0
        %1361 = vmatpush.msra.mxu0 %v1278
        %1362 = vmatpush.msra.mxu0 %v1257
        %1363 = vmatpush.msra.mxu0 %v1253
        %1364 = vmatpush.msra.mxu0 %v1249
        %1365 = vmatmul.f32.gmra.mxu0 %v1263
        %v1366 = vpop.f32.mrf.mxu0
        %v1367 = vadd.f32 0.0, %v1366
        %1368 = vmatmul.f32.gmra.mxu0 %v1266
        %v1369 = vpop.f32.mrf.mxu0
        %v1370 = vadd.f32 0.0, %v1369
        %1371 = vdwg.mxu0
        %v1372 = vadd.f32 %v1139, %v1298
        %v1373 = vadd.f32 %v1162, %v1321
        %v1374 = vadd.f32 %v1185, %v1344
        %v1375 = vadd.f32 %v1208, %v1367
        %v1376 = vadd.f32 %v1142, %v1301
        %v1377 = vadd.f32 %v1165, %v1324
        %v1378 = vadd.f32 %v1188, %v1347
        %v1379 = vadd.f32 %v1211, %v1370
        %v1380 = vld [vmem:[#allocation7] sm:$0xf]
        %v1382 = vperm.slane %v1380, 0
        %v1383 = vperm.slane %v1380, 1
        %v1384 = vperm.slane %v1380, 2
        %v1385 = vperm.slane %v1380, 3
        %v1390 = vadd.f32 %v1372, %v1382
        %v1391 = vadd.f32 %v1373, %v1383
        %v1392 = vadd.f32 %v1374, %v1384
        %v1393 = vadd.f32 %v1375, %v1385
        %v1394 = vadd.f32 %v1376, %v1382
        %v1395 = vadd.f32 %v1377, %v1383
        %v1396 = vadd.f32 %v1378, %v1384
        %v1397 = vadd.f32 %v1379, %v1385
        %v1398 = vmax.f32 %v1390, 0.0
        %v1399 = vmax.f32 %v1391, 0.0
        %v1400 = vmax.f32 %v1392, 0.0
        %v1401 = vmax.f32 %v1393, 0.0
        %v1402 = vmax.f32 %v1394, 0.0
        %v1403 = vmax.f32 %v1395, 0.0
        %v1404 = vmax.f32 %v1396, 0.0
        %v1405 = vmax.f32 %v1397, 0.0
        %v1406 = vld [vmem:[#allocation8] sm:$0xff]
        %v1407 = vld [vmem:[#allocation8 + $0x8] sm:$0x3f]
        %vm1408 = vcmask 113664
        %v1410 = vsel %vm1408, %v1406, 0
        %v1413 = vsel %vm1408, %v1407, 0
        %vm1415 = vcmask 1045504
        %v1417 = vsel %vm1415, %v1402, 0
        %v1420 = vsel %vm1415, %v1403, 0
        %v1423 = vsel %vm1415, %v1404, 0
        %v1426 = vsel %vm1415, %v1405, 0
        %1428 = vmatpush.msra.mxu0 0.0
        %1429 = vmatpush.msra.mxu0 0.0
        %1430 = vmatpush.msra.mxu0 0.0
        %1431 = vmatpush.msra.mxu0 0.0
        %1432 = vmatpush.msra.mxu0 0.0
        %1433 = vmatpush.msra.mxu0 0.0
        %1434 = vmatpush.msra.mxu0 0.0
        %1435 = vmatpush.msra.mxu0 0.0
        %1436 = vmatpush.msra.mxu0 0.0
        %1437 = vmatpush.msra.mxu0 0.0
        %1438 = vmatpush.msra.mxu0 0.0
        %1439 = vmatpush.msra.mxu0 0.0
        %1440 = vmatpush.msra.mxu0 0.0
        %1441 = vmatpush.msra.mxu0 0.0
        %1442 = vmatpush.msra.mxu0 %v1417
        %1443 = vmatpush.msra.mxu0 %v1398
        %1444 = vmatmul.f32.gmra.mxu0 %v1410
        %v1445 = vpop.f32.mrf.mxu0
        %v1446 = vadd.f32 0.0, %v1445
        %1447 = vmatmul.f32.gmra.mxu0 %v1413
        %v1448 = vpop.f32.mrf.mxu0
        %v1449 = vadd.f32 0.0, %v1448
        %1450 = vdwg.mxu0
        %1451 = vmatpush.msra.mxu0 0.0
        %1452 = vmatpush.msra.mxu0 0.0
        %1453 = vmatpush.msra.mxu0 0.0
        %1454 = vmatpush.msra.mxu0 0.0
        %1455 = vmatpush.msra.mxu0 0.0
        %1456 = vmatpush.msra.mxu0 0.0
        %1457 = vmatpush.msra.mxu0 0.0
        %1458 = vmatpush.msra.mxu0 0.0
        %1459 = vmatpush.msra.mxu0 0.0
        %1460 = vmatpush.msra.mxu0 0.0
        %1461 = vmatpush.msra.mxu0 0.0
        %1462 = vmatpush.msra.mxu0 0.0
        %1463 = vmatpush.msra.mxu0 0.0
        %1464 = vmatpush.msra.mxu0 0.0
        %1465 = vmatpush.msra.mxu0 %v1420
        %1466 = vmatpush.msra.mxu0 %v1399
        %1467 = vmatmul.f32.gmra.mxu0 %v1410
        %v1468 = vpop.f32.mrf.mxu0
        %v1469 = vadd.f32 0.0, %v1468
        %1470 = vmatmul.f32.gmra.mxu0 %v1413
        %v1471 = vpop.f32.mrf.mxu0
        %v1472 = vadd.f32 0.0, %v1471
        %1473 = vdwg.mxu0
        %1474 = vmatpush.msra.mxu0 0.0
        %1475 = vmatpush.msra.mxu0 0.0
        %1476 = vmatpush.msra.mxu0 0.0
        %1477 = vmatpush.msra.mxu0 0.0
        %1478 = vmatpush.msra.mxu0 0.0
        %1479 = vmatpush.msra.mxu0 0.0
        %1480 = vmatpush.msra.mxu0 0.0
        %1481 = vmatpush.msra.mxu0 0.0
        %1482 = vmatpush.msra.mxu0 0.0
        %1483 = vmatpush.msra.mxu0 0.0
        %1484 = vmatpush.msra.mxu0 0.0
        %1485 = vmatpush.msra.mxu0 0.0
        %1486 = vmatpush.msra.mxu0 0.0
        %1487 = vmatpush.msra.mxu0 0.0
        %1488 = vmatpush.msra.mxu0 %v1423
        %1489 = vmatpush.msra.mxu0 %v1400
        %1490 = vmatmul.f32.gmra.mxu0 %v1410
        %v1491 = vpop.f32.mrf.mxu0
        %v1492 = vadd.f32 0.0, %v1491
        %1493 = vmatmul.f32.gmra.mxu0 %v1413
        %v1494 = vpop.f32.mrf.mxu0
        %v1495 = vadd.f32 0.0, %v1494
        %1496 = vdwg.mxu0
        %1497 = vmatpush.msra.mxu0 0.0
        %1498 = vmatpush.msra.mxu0 0.0
        %1499 = vmatpush.msra.mxu0 0.0
        %1500 = vmatpush.msra.mxu0 0.0
        %1501 = vmatpush.msra.mxu0 0.0
        %1502 = vmatpush.msra.mxu0 0.0
        %1503 = vmatpush.msra.mxu0 0.0
        %1504 = vmatpush.msra.mxu0 0.0
        %1505 = vmatpush.msra.mxu0 0.0
        %1506 = vmatpush.msra.mxu0 0.0
        %1507 = vmatpush.msra.mxu0 0.0
        %1508 = vmatpush.msra.mxu0 0.0
        %1509 = vmatpush.msra.mxu0 0.0
        %1510 = vmatpush.msra.mxu0 0.0
        %1511 = vmatpush.msra.mxu0 %v1426
        %1512 = vmatpush.msra.mxu0 %v1401
        %1513 = vmatmul.f32.gmra.mxu0 %v1410
        %v1514 = vpop.f32.mrf.mxu0
        %v1515 = vadd.f32 0.0, %v1514
        %1516 = vmatmul.f32.gmra.mxu0 %v1413
        %v1517 = vpop.f32.mrf.mxu0
        %v1518 = vadd.f32 0.0, %v1517
        %1519 = vdwg.mxu0
        %v1520 = vld [vmem:[#allocation10] sm:$0xff]
        %v1521 = vld [vmem:[#allocation10 + $0x8] sm:$0xff]
        %v1522 = vld [vmem:[#allocation10 + $0x10] sm:$0xff]
        %v1523 = vld [vmem:[#allocation10 + $0x18] sm:$0xff]
        %v1524 = vld [vmem:[#allocation10 + $0x20] sm:$0xff]
        %v1525 = vld [vmem:[#allocation10 + $0x28] sm:$0xff]
        %v1526 = vld [vmem:[#allocation10 + $0x30] sm:$0xff]
        %v1527 = vld [vmem:[#allocation10 + $0x38] sm:$0xff]
        %v1528 = vld [vmem:[#allocation10 + $0x40] sm:$0xff]
        %v1529 = vld [vmem:[#allocation10 + $0x48] sm:$0xff]
        %v1530 = vld [vmem:[#allocation10 + $0x50] sm:$0xff]
        %v1531 = vld [vmem:[#allocation10 + $0x58] sm:$0xff]
        %v1532 = vld [vmem:[#allocation10 + $0x60] sm:$0xff]
        %v1533 = vld [vmem:[#allocation10 + $0x68] sm:$0xff]
        %v1534 = vld [vmem:[#allocation10 + $0x70] sm:$0xff]
        %v1535 = vld [vmem:[#allocation10 + $0x78] sm:$0xff]
        %v1536 = vld [vmem:[#allocation10 + $0x80] sm:$0xff]
        %v1537 = vld [vmem:[#allocation10 + $0x88] sm:$0xff]
        %v1538 = vld [vmem:[#allocation10 + $0x90] sm:$0xff]
        %v1539 = vld [vmem:[#allocation10 + $0x98] sm:$0xff]
        %v1540 = vld [vmem:[#allocation10 + $0xa0] sm:$0xff]
        %v1541 = vld [vmem:[#allocation10 + $0xa8] sm:$0xff]
        %v1542 = vld [vmem:[#allocation10 + $0xb0] sm:$0xff]
        %v1543 = vld [vmem:[#allocation10 + $0xb8] sm:$0xff]
        %v1544 = vld [vmem:[#allocation10 + $0xc0] sm:$0xff]
        %v1545 = vld [vmem:[#allocation10 + $0xc8] sm:$0xff]
        %v1546 = vld [vmem:[#allocation10 + $0xd0] sm:$0xff]
        %v1547 = vld [vmem:[#allocation10 + $0xd8] sm:$0xff]
        %v1548 = vld [vmem:[#allocation10 + $0xe0] sm:$0xff]
        %v1549 = vld [vmem:[#allocation10 + $0xe8] sm:$0xff]
        %v1550 = vld [vmem:[#allocation10 + $0xf0] sm:$0xff]
        %v1551 = vld [vmem:[#allocation10 + $0xf8] sm:$0xff]
        %v1552 = vld [vmem:[#allocation10 + $0x100] sm:$0xff]
        %v1553 = vld [vmem:[#allocation10 + $0x108] sm:$0xff]
        %v1554 = vld [vmem:[#allocation10 + $0x110] sm:$0xff]
        %v1555 = vld [vmem:[#allocation10 + $0x118] sm:$0xff]
        %v1556 = vld [vmem:[#allocation10 + $0x120] sm:$0xff]
        %v1557 = vld [vmem:[#allocation10 + $0x128] sm:$0xff]
        %v1558 = vld [vmem:[#allocation10 + $0x130] sm:$0xff]
        %v1559 = vld [vmem:[#allocation10 + $0x138] sm:$0xff]
        %v1560 = vld [vmem:[#allocation10 + $0x140] sm:$0xff]
        %v1561 = vld [vmem:[#allocation10 + $0x148] sm:$0xff]
        %v1562 = vld [vmem:[#allocation10 + $0x150] sm:$0xff]
        %v1563 = vld [vmem:[#allocation10 + $0x158] sm:$0xff]
        %v1564 = vld [vmem:[#allocation10 + $0x160] sm:$0xff]
        %v1565 = vld [vmem:[#allocation10 + $0x168] sm:$0xff]
        %v1566 = vld [vmem:[#allocation10 + $0x170] sm:$0xff]
        %v1567 = vld [vmem:[#allocation10 + $0x178] sm:$0xff]
        %v1568 = vld [vmem:[#allocation10 + $0x180] sm:$0xff]
        %v1569 = vld [vmem:[#allocation10 + $0x188] sm:$0xff]
        %v1570 = vld [vmem:[#allocation10 + $0x190] sm:$0xff]
        %v1571 = vld [vmem:[#allocation10 + $0x198] sm:$0xff]
        %v1572 = vld [vmem:[#allocation10 + $0x1a0] sm:$0xff]
        %v1573 = vld [vmem:[#allocation10 + $0x1a8] sm:$0xff]
        %v1574 = vld [vmem:[#allocation10 + $0x1b0] sm:$0xff]
        %v1575 = vld [vmem:[#allocation10 + $0x1b8] sm:$0xff]
        %v1576 = vld [vmem:[#allocation10 + $0x1c0] sm:$0xff]
        %v1577 = vld [vmem:[#allocation10 + $0x1c8] sm:$0xff]
        %v1578 = vld [vmem:[#allocation10 + $0x1d0] sm:$0xff]
        %v1579 = vld [vmem:[#allocation10 + $0x1d8] sm:$0xff]
        %v1580 = vld [vmem:[#allocation10 + $0x1e0] sm:$0xff]
        %v1581 = vld [vmem:[#allocation10 + $0x1e8] sm:$0xff]
        %v1582 = vld [vmem:[#allocation10 + $0x1f0] sm:$0xff]
        %v1583 = vld [vmem:[#allocation10 + $0x1f8] sm:$0xff]
        %v1584 = vld [vmem:[#allocation10 + $0x200] sm:$0xff]
        %v1585 = vld [vmem:[#allocation10 + $0x208] sm:$0xff]
        %v1586 = vld [vmem:[#allocation10 + $0x210] sm:$0xff]
        %v1587 = vld [vmem:[#allocation10 + $0x218] sm:$0xff]
        %v1588 = vld [vmem:[#allocation10 + $0x220] sm:$0xff]
        %v1589 = vld [vmem:[#allocation10 + $0x228] sm:$0xff]
        %v1590 = vld [vmem:[#allocation10 + $0x230] sm:$0xff]
        %v1591 = vld [vmem:[#allocation10 + $0x238] sm:$0xff]
        %v1592 = vld [vmem:[#allocation10 + $0x240] sm:$0xff]
        %v1593 = vld [vmem:[#allocation10 + $0x248] sm:$0xff]
        %v1594 = vld [vmem:[#allocation10 + $0x250] sm:$0xff]
        %v1595 = vld [vmem:[#allocation10 + $0x258] sm:$0xff]
        %v1596 = vld [vmem:[#allocation10 + $0x260] sm:$0xff]
        %v1597 = vld [vmem:[#allocation10 + $0x268] sm:$0xff]
        %v1598 = vld [vmem:[#allocation10 + $0x270] sm:$0xff]
        %v1599 = vld [vmem:[#allocation10 + $0x278] sm:$0xff]
        %v1600 = vld [vmem:[#allocation10 + $0x280] sm:$0xff]
        %v1601 = vld [vmem:[#allocation10 + $0x288] sm:$0xff]
        %v1602 = vld [vmem:[#allocation10 + $0x290] sm:$0xff]
        %v1603 = vld [vmem:[#allocation10 + $0x298] sm:$0xff]
        %v1604 = vld [vmem:[#allocation10 + $0x2a0] sm:$0xff]
        %v1605 = vld [vmem:[#allocation10 + $0x2a8] sm:$0xff]
        %v1606 = vld [vmem:[#allocation10 + $0x2b0] sm:$0xff]
        %v1607 = vld [vmem:[#allocation10 + $0x2b8] sm:$0xff]
        %v1608 = vld [vmem:[#allocation10 + $0x2c0] sm:$0xff]
        %v1609 = vld [vmem:[#allocation10 + $0x2c8] sm:$0xff]
        %v1610 = vld [vmem:[#allocation10 + $0x2d0] sm:$0xff]
        %v1611 = vld [vmem:[#allocation10 + $0x2d8] sm:$0xff]
        %v1612 = vld [vmem:[#allocation10 + $0x2e0] sm:$0xff]
        %v1613 = vld [vmem:[#allocation10 + $0x2e8] sm:$0xff]
        %v1614 = vld [vmem:[#allocation10 + $0x2f0] sm:$0xff]
        %v1615 = vld [vmem:[#allocation10 + $0x2f8] sm:$0xff]
        %v1616 = vld [vmem:[#allocation10 + $0x300] sm:$0xff]
        %v1617 = vld [vmem:[#allocation10 + $0x308] sm:$0xff]
        %v1618 = vld [vmem:[#allocation10 + $0x310] sm:$0xff]
        %v1619 = vld [vmem:[#allocation10 + $0x318] sm:$0xff]
        %v1620 = vld [vmem:[#allocation10 + $0x320] sm:$0xff]
        %v1621 = vld [vmem:[#allocation10 + $0x328] sm:$0xff]
        %v1622 = vld [vmem:[#allocation10 + $0x330] sm:$0xff]
        %v1623 = vld [vmem:[#allocation10 + $0x338] sm:$0xff]
        %v1624 = vld [vmem:[#allocation10 + $0x340] sm:$0xff]
        %v1625 = vld [vmem:[#allocation10 + $0x348] sm:$0xff]
        %v1626 = vld [vmem:[#allocation10 + $0x350] sm:$0xff]
        %v1627 = vld [vmem:[#allocation10 + $0x358] sm:$0xff]
        %v1628 = vld [vmem:[#allocation10 + $0x360] sm:$0xff]
        %v1629 = vld [vmem:[#allocation10 + $0x368] sm:$0xff]
        %v1630 = vld [vmem:[#allocation10 + $0x370] sm:$0xff]
        %v1631 = vld [vmem:[#allocation10 + $0x378] sm:$0xff]
        %v1632 = vld [vmem:[#allocation10 + $0x380] sm:$0xff]
        %v1633 = vld [vmem:[#allocation10 + $0x388] sm:$0xff]
        %v1634 = vld [vmem:[#allocation10 + $0x390] sm:$0xff]
        %v1635 = vld [vmem:[#allocation10 + $0x398] sm:$0xff]
        %v1636 = vld [vmem:[#allocation10 + $0x3a0] sm:$0xff]
        %v1637 = vld [vmem:[#allocation10 + $0x3a8] sm:$0xff]
        %v1638 = vld [vmem:[#allocation10 + $0x3b0] sm:$0xff]
        %v1639 = vld [vmem:[#allocation10 + $0x3b8] sm:$0xff]
        %v1640 = vld [vmem:[#allocation10 + $0x3c0] sm:$0xff]
        %v1641 = vld [vmem:[#allocation10 + $0x3c8] sm:$0xff]
        %v1642 = vld [vmem:[#allocation10 + $0x3d0] sm:$0xff]
        %v1643 = vld [vmem:[#allocation10 + $0x3d8] sm:$0xff]
        %v1644 = vld [vmem:[#allocation10 + $0x3e0] sm:$0xff]
        %v1645 = vld [vmem:[#allocation10 + $0x3e8] sm:$0xff]
        %v1646 = vld [vmem:[#allocation10 + $0x3f0] sm:$0xff]
        %v1647 = vld [vmem:[#allocation10 + $0x3f8] sm:$0xff]
        %v1648 = vld [vmem:[#allocation10 + $0x400] sm:$0xff]
        %v1649 = vld [vmem:[#allocation10 + $0x408] sm:$0xff]
        %v1650 = vld [vmem:[#allocation10 + $0x410] sm:$0xff]
        %v1651 = vld [vmem:[#allocation10 + $0x418] sm:$0xff]
        %v1652 = vld [vmem:[#allocation10 + $0x420] sm:$0xff]
        %v1653 = vld [vmem:[#allocation10 + $0x428] sm:$0xff]
        %v1654 = vld [vmem:[#allocation10 + $0x430] sm:$0xff]
        %v1655 = vld [vmem:[#allocation10 + $0x438] sm:$0xff]
        %v1656 = vld [vmem:[#allocation10 + $0x440] sm:$0xff]
        %v1657 = vld [vmem:[#allocation10 + $0x448] sm:$0xff]
        %v1658 = vld [vmem:[#allocation10 + $0x450] sm:$0xff]
        %v1659 = vld [vmem:[#allocation10 + $0x458] sm:$0xff]
        %v1660 = vld [vmem:[#allocation10 + $0x460] sm:$0xff]
        %v1661 = vld [vmem:[#allocation10 + $0x468] sm:$0xff]
        %v1662 = vld [vmem:[#allocation10 + $0x470] sm:$0xff]
        %v1663 = vld [vmem:[#allocation10 + $0x478] sm:$0xff]
        %v1664 = vld [vmem:[#allocation10 + $0x480] sm:$0xff]
        %v1665 = vld [vmem:[#allocation10 + $0x488] sm:$0xff]
        %v1666 = vld [vmem:[#allocation10 + $0x490] sm:$0xff]
        %v1667 = vld [vmem:[#allocation10 + $0x498] sm:$0xff]
        %v1668 = vld [vmem:[#allocation10 + $0x4a0] sm:$0xff]
        %v1669 = vld [vmem:[#allocation10 + $0x4a8] sm:$0xff]
        %v1670 = vld [vmem:[#allocation10 + $0x4b0] sm:$0xff]
        %v1671 = vld [vmem:[#allocation10 + $0x4b8] sm:$0xff]
        %v1672 = vld [vmem:[#allocation10 + $0x4c0] sm:$0xff]
        %v1673 = vld [vmem:[#allocation10 + $0x4c8] sm:$0xff]
        %v1674 = vld [vmem:[#allocation10 + $0x4d0] sm:$0xff]
        %v1675 = vld [vmem:[#allocation10 + $0x4d8] sm:$0xff]
        %v1676 = vld [vmem:[#allocation10 + $0x4e0] sm:$0xff]
        %v1677 = vld [vmem:[#allocation10 + $0x4e8] sm:$0xff]
        %v1678 = vld [vmem:[#allocation10 + $0x4f0] sm:$0xff]
        %v1679 = vld [vmem:[#allocation10 + $0x4f8] sm:$0xff]
        %v1680 = vld [vmem:[#allocation10 + $0x500] sm:$0xff]
        %v1681 = vld [vmem:[#allocation10 + $0x508] sm:$0xff]
        %v1682 = vld [vmem:[#allocation10 + $0x510] sm:$0xff]
        %v1683 = vld [vmem:[#allocation10 + $0x518] sm:$0xff]
        %v1684 = vld [vmem:[#allocation10 + $0x520] sm:$0xff]
        %v1685 = vld [vmem:[#allocation10 + $0x528] sm:$0xff]
        %v1686 = vld [vmem:[#allocation10 + $0x530] sm:$0xff]
        %v1687 = vld [vmem:[#allocation10 + $0x538] sm:$0xff]
        %v1688 = vld [vmem:[#allocation10 + $0x540] sm:$0xff]
        %v1689 = vld [vmem:[#allocation10 + $0x548] sm:$0xff]
        %v1690 = vld [vmem:[#allocation10 + $0x550] sm:$0xff]
        %v1691 = vld [vmem:[#allocation10 + $0x558] sm:$0xff]
        %v1692 = vld [vmem:[#allocation10 + $0x560] sm:$0xff]
        %v1693 = vld [vmem:[#allocation10 + $0x568] sm:$0xff]
        %v1694 = vld [vmem:[#allocation10 + $0x570] sm:$0xff]
        %v1695 = vld [vmem:[#allocation10 + $0x578] sm:$0xff]
        %v1696 = vld [vmem:[#allocation10 + $0x580] sm:$0xff]
        %v1697 = vld [vmem:[#allocation10 + $0x588] sm:$0xff]
        %v1698 = vld [vmem:[#allocation10 + $0x590] sm:$0xff]
        %v1699 = vld [vmem:[#allocation10 + $0x598] sm:$0xff]
        %v1700 = vld [vmem:[#allocation10 + $0x5a0] sm:$0xff]
        %v1701 = vld [vmem:[#allocation10 + $0x5a8] sm:$0xff]
        %v1702 = vld [vmem:[#allocation10 + $0x5b0] sm:$0xff]
        %v1703 = vld [vmem:[#allocation10 + $0x5b8] sm:$0xff]
        %v1704 = vld [vmem:[#allocation10 + $0x5c0] sm:$0xff]
        %v1705 = vld [vmem:[#allocation10 + $0x5c8] sm:$0xff]
        %v1706 = vld [vmem:[#allocation10 + $0x5d0] sm:$0xff]
        %v1707 = vld [vmem:[#allocation10 + $0x5d8] sm:$0xff]
        %v1708 = vld [vmem:[#allocation10 + $0x5e0] sm:$0xff]
        %v1709 = vld [vmem:[#allocation10 + $0x5e8] sm:$0xff]
        %v1710 = vld [vmem:[#allocation10 + $0x5f0] sm:$0xff]
        %v1711 = vld [vmem:[#allocation10 + $0x5f8] sm:$0xff]
        %v1712 = vld [vmem:[#allocation10 + $0x600] sm:$0xff]
        %v1713 = vld [vmem:[#allocation10 + $0x608] sm:$0xff]
        %v1714 = vld [vmem:[#allocation10 + $0x610] sm:$0xff]
        %v1715 = vld [vmem:[#allocation10 + $0x618] sm:$0xff]
        %v1716 = vld [vmem:[#allocation10 + $0x620] sm:$0xff]
        %v1717 = vld [vmem:[#allocation10 + $0x628] sm:$0xff]
        %v1718 = vld [vmem:[#allocation10 + $0x630] sm:$0xff]
        %v1719 = vld [vmem:[#allocation10 + $0x638] sm:$0xff]
        %v1720 = vld [vmem:[#allocation10 + $0x640] sm:$0xff]
        %v1721 = vld [vmem:[#allocation10 + $0x648] sm:$0xff]
        %v1722 = vld [vmem:[#allocation10 + $0x650] sm:$0xff]
        %v1723 = vld [vmem:[#allocation10 + $0x658] sm:$0xff]
        %v1724 = vld [vmem:[#allocation10 + $0x660] sm:$0xff]
        %v1725 = vld [vmem:[#allocation10 + $0x668] sm:$0xff]
        %v1726 = vld [vmem:[#allocation10 + $0x670] sm:$0xff]
        %v1727 = vld [vmem:[#allocation10 + $0x678] sm:$0xff]
        %v1728 = vld [vmem:[#allocation10 + $0x680] sm:$0xff]
        %v1729 = vld [vmem:[#allocation10 + $0x688] sm:$0xff]
        %v1730 = vld [vmem:[#allocation10 + $0x690] sm:$0xff]
        %v1731 = vld [vmem:[#allocation10 + $0x698] sm:$0xff]
        %v1732 = vld [vmem:[#allocation10 + $0x6a0] sm:$0xff]
        %v1733 = vld [vmem:[#allocation10 + $0x6a8] sm:$0xff]
        %v1734 = vld [vmem:[#allocation10 + $0x6b0] sm:$0xff]
        %v1735 = vld [vmem:[#allocation10 + $0x6b8] sm:$0xff]
        %v1736 = vld [vmem:[#allocation10 + $0x6c0] sm:$0xff]
        %v1737 = vld [vmem:[#allocation10 + $0x6c8] sm:$0xff]
        %v1738 = vld [vmem:[#allocation10 + $0x6d0] sm:$0xff]
        %v1739 = vld [vmem:[#allocation10 + $0x6d8] sm:$0xff]
        %v1740 = vld [vmem:[#allocation10 + $0x6e0] sm:$0xff]
        %v1741 = vld [vmem:[#allocation10 + $0x6e8] sm:$0xff]
        %v1742 = vld [vmem:[#allocation10 + $0x6f0] sm:$0xff]
        %v1743 = vld [vmem:[#allocation10 + $0x6f8] sm:$0xff]
        %s1744 = scalar_lea.vmem [#allocation8], 16
        %v1745 = vld [vmem:[%s1744] sm:$0xff]
        %v1746 = vld [vmem:[%s1744 + $0x8] sm:$0x3f]
        %v1748 = vsel %vm1408, %v1745, 0
        %v1751 = vsel %vm1408, %v1746, 0
        %1753 = vmatpush.msra.mxu0 0.0
        %1754 = vmatpush.msra.mxu0 0.0
        %1755 = vmatpush.msra.mxu0 0.0
        %1756 = vmatpush.msra.mxu0 0.0
        %1757 = vmatpush.msra.mxu0 0.0
        %1758 = vmatpush.msra.mxu0 0.0
        %1759 = vmatpush.msra.mxu0 0.0
        %1760 = vmatpush.msra.mxu0 0.0
        %1761 = vmatpush.msra.mxu0 0.0
        %1762 = vmatpush.msra.mxu0 0.0
        %1763 = vmatpush.msra.mxu0 0.0
        %1764 = vmatpush.msra.mxu0 0.0
        %1765 = vmatpush.msra.mxu0 0.0
        %1766 = vmatpush.msra.mxu0 0.0
        %1767 = vmatpush.msra.mxu0 %v1417
        %1768 = vmatpush.msra.mxu0 %v1398
        %1769 = vmatmul.f32.gmra.mxu0 %v1748
        %v1770 = vpop.f32.mrf.mxu0
        %v1771 = vadd.f32 0.0, %v1770
        %1772 = vmatmul.f32.gmra.mxu0 %v1751
        %v1773 = vpop.f32.mrf.mxu0
        %v1774 = vadd.f32 0.0, %v1773
        %1775 = vdwg.mxu0
        %1776 = vmatpush.msra.mxu0 0.0
        %1777 = vmatpush.msra.mxu0 0.0
        %1778 = vmatpush.msra.mxu0 0.0
        %1779 = vmatpush.msra.mxu0 0.0
        %1780 = vmatpush.msra.mxu0 0.0
        %1781 = vmatpush.msra.mxu0 0.0
        %1782 = vmatpush.msra.mxu0 0.0
        %1783 = vmatpush.msra.mxu0 0.0
        %1784 = vmatpush.msra.mxu0 0.0
        %1785 = vmatpush.msra.mxu0 0.0
        %1786 = vmatpush.msra.mxu0 0.0
        %1787 = vmatpush.msra.mxu0 0.0
        %1788 = vmatpush.msra.mxu0 0.0
        %1789 = vmatpush.msra.mxu0 0.0
        %1790 = vmatpush.msra.mxu0 %v1420
        %1791 = vmatpush.msra.mxu0 %v1399
        %1792 = vmatmul.f32.gmra.mxu0 %v1748
        %v1793 = vpop.f32.mrf.mxu0
        %v1794 = vadd.f32 0.0, %v1793
        %1795 = vmatmul.f32.gmra.mxu0 %v1751
        %v1796 = vpop.f32.mrf.mxu0
        %v1797 = vadd.f32 0.0, %v1796
        %1798 = vdwg.mxu0
        %1799 = vmatpush.msra.mxu0 0.0
        %1800 = vmatpush.msra.mxu0 0.0
        %1801 = vmatpush.msra.mxu0 0.0
        %1802 = vmatpush.msra.mxu0 0.0
        %1803 = vmatpush.msra.mxu0 0.0
        %1804 = vmatpush.msra.mxu0 0.0
        %1805 = vmatpush.msra.mxu0 0.0
        %1806 = vmatpush.msra.mxu0 0.0
        %1807 = vmatpush.msra.mxu0 0.0
        %1808 = vmatpush.msra.mxu0 0.0
        %1809 = vmatpush.msra.mxu0 0.0
        %1810 = vmatpush.msra.mxu0 0.0
        %1811 = vmatpush.msra.mxu0 0.0
        %1812 = vmatpush.msra.mxu0 0.0
        %1813 = vmatpush.msra.mxu0 %v1423
        %1814 = vmatpush.msra.mxu0 %v1400
        %1815 = vmatmul.f32.gmra.mxu0 %v1748
        %v1816 = vpop.f32.mrf.mxu0
        %v1817 = vadd.f32 0.0, %v1816
        %1818 = vmatmul.f32.gmra.mxu0 %v1751
        %v1819 = vpop.f32.mrf.mxu0
        %v1820 = vadd.f32 0.0, %v1819
        %1821 = vdwg.mxu0
        %1822 = vmatpush.msra.mxu0 0.0
        %1823 = vmatpush.msra.mxu0 0.0
        %1824 = vmatpush.msra.mxu0 0.0
        %1825 = vmatpush.msra.mxu0 0.0
        %1826 = vmatpush.msra.mxu0 0.0
        %1827 = vmatpush.msra.mxu0 0.0
        %1828 = vmatpush.msra.mxu0 0.0
        %1829 = vmatpush.msra.mxu0 0.0
        %1830 = vmatpush.msra.mxu0 0.0
        %1831 = vmatpush.msra.mxu0 0.0
        %1832 = vmatpush.msra.mxu0 0.0
        %1833 = vmatpush.msra.mxu0 0.0
        %1834 = vmatpush.msra.mxu0 0.0
        %1835 = vmatpush.msra.mxu0 0.0
        %1836 = vmatpush.msra.mxu0 %v1426
        %1837 = vmatpush.msra.mxu0 %v1401
        %1838 = vmatmul.f32.gmra.mxu0 %v1748
        %v1839 = vpop.f32.mrf.mxu0
        %v1840 = vadd.f32 0.0, %v1839
        %1841 = vmatmul.f32.gmra.mxu0 %v1751
        %v1842 = vpop.f32.mrf.mxu0
        %v1843 = vadd.f32 0.0, %v1842
        %1844 = vdwg.mxu0
        %s1845 = scalar_lea.vmem [#allocation10], 1792
        %v1846 = vld [vmem:[%s1845] sm:$0xff]
        %v1847 = vld [vmem:[%s1845 + $0x8] sm:$0xff]
        %v1848 = vld [vmem:[%s1845 + $0x10] sm:$0xff]
        %v1849 = vld [vmem:[%s1845 + $0x18] sm:$0xff]
        %v1850 = vld [vmem:[%s1845 + $0x20] sm:$0xff]
        %v1851 = vld [vmem:[%s1845 + $0x28] sm:$0xff]
        %v1852 = vld [vmem:[%s1845 + $0x30] sm:$0xff]
        %v1853 = vld [vmem:[%s1845 + $0x38] sm:$0xff]
        %v1854 = vld [vmem:[%s1845 + $0x40] sm:$0xff]
        %v1855 = vld [vmem:[%s1845 + $0x48] sm:$0xff]
        %v1856 = vld [vmem:[%s1845 + $0x50] sm:$0xff]
        %v1857 = vld [vmem:[%s1845 + $0x58] sm:$0xff]
        %v1858 = vld [vmem:[%s1845 + $0x60] sm:$0xff]
        %v1859 = vld [vmem:[%s1845 + $0x68] sm:$0xff]
        %v1860 = vld [vmem:[%s1845 + $0x70] sm:$0xff]
        %v1861 = vld [vmem:[%s1845 + $0x78] sm:$0xff]
        %v1862 = vld [vmem:[%s1845 + $0x80] sm:$0xff]
        %v1863 = vld [vmem:[%s1845 + $0x88] sm:$0xff]
        %v1864 = vld [vmem:[%s1845 + $0x90] sm:$0xff]
        %v1865 = vld [vmem:[%s1845 + $0x98] sm:$0xff]
        %v1866 = vld [vmem:[%s1845 + $0xa0] sm:$0xff]
        %v1867 = vld [vmem:[%s1845 + $0xa8] sm:$0xff]
        %v1868 = vld [vmem:[%s1845 + $0xb0] sm:$0xff]
        %v1869 = vld [vmem:[%s1845 + $0xb8] sm:$0xff]
        %v1870 = vld [vmem:[%s1845 + $0xc0] sm:$0xff]
        %v1871 = vld [vmem:[%s1845 + $0xc8] sm:$0xff]
        %v1872 = vld [vmem:[%s1845 + $0xd0] sm:$0xff]
        %v1873 = vld [vmem:[%s1845 + $0xd8] sm:$0xff]
        %v1874 = vld [vmem:[%s1845 + $0xe0] sm:$0xff]
        %v1875 = vld [vmem:[%s1845 + $0xe8] sm:$0xff]
        %v1876 = vld [vmem:[%s1845 + $0xf0] sm:$0xff]
        %v1877 = vld [vmem:[%s1845 + $0xf8] sm:$0xff]
        %v1878 = vld [vmem:[%s1845 + $0x100] sm:$0xff]
        %v1879 = vld [vmem:[%s1845 + $0x108] sm:$0xff]
        %v1880 = vld [vmem:[%s1845 + $0x110] sm:$0xff]
        %v1881 = vld [vmem:[%s1845 + $0x118] sm:$0xff]
        %v1882 = vld [vmem:[%s1845 + $0x120] sm:$0xff]
        %v1883 = vld [vmem:[%s1845 + $0x128] sm:$0xff]
        %v1884 = vld [vmem:[%s1845 + $0x130] sm:$0xff]
        %v1885 = vld [vmem:[%s1845 + $0x138] sm:$0xff]
        %v1886 = vld [vmem:[%s1845 + $0x140] sm:$0xff]
        %v1887 = vld [vmem:[%s1845 + $0x148] sm:$0xff]
        %v1888 = vld [vmem:[%s1845 + $0x150] sm:$0xff]
        %v1889 = vld [vmem:[%s1845 + $0x158] sm:$0xff]
        %v1890 = vld [vmem:[%s1845 + $0x160] sm:$0xff]
        %v1891 = vld [vmem:[%s1845 + $0x168] sm:$0xff]
        %v1892 = vld [vmem:[%s1845 + $0x170] sm:$0xff]
        %v1893 = vld [vmem:[%s1845 + $0x178] sm:$0xff]
        %v1894 = vld [vmem:[%s1845 + $0x180] sm:$0xff]
        %v1895 = vld [vmem:[%s1845 + $0x188] sm:$0xff]
        %v1896 = vld [vmem:[%s1845 + $0x190] sm:$0xff]
        %v1897 = vld [vmem:[%s1845 + $0x198] sm:$0xff]
        %v1898 = vld [vmem:[%s1845 + $0x1a0] sm:$0xff]
        %v1899 = vld [vmem:[%s1845 + $0x1a8] sm:$0xff]
        %v1900 = vld [vmem:[%s1845 + $0x1b0] sm:$0xff]
        %v1901 = vld [vmem:[%s1845 + $0x1b8] sm:$0xff]
        %v1902 = vld [vmem:[%s1845 + $0x1c0] sm:$0xff]
        %v1903 = vld [vmem:[%s1845 + $0x1c8] sm:$0xff]
        %v1904 = vld [vmem:[%s1845 + $0x1d0] sm:$0xff]
        %v1905 = vld [vmem:[%s1845 + $0x1d8] sm:$0xff]
        %v1906 = vld [vmem:[%s1845 + $0x1e0] sm:$0xff]
        %v1907 = vld [vmem:[%s1845 + $0x1e8] sm:$0xff]
        %v1908 = vld [vmem:[%s1845 + $0x1f0] sm:$0xff]
        %v1909 = vld [vmem:[%s1845 + $0x1f8] sm:$0xff]
        %v1910 = vld [vmem:[%s1845 + $0x200] sm:$0xff]
        %v1911 = vld [vmem:[%s1845 + $0x208] sm:$0xff]
        %v1912 = vld [vmem:[%s1845 + $0x210] sm:$0xff]
        %v1913 = vld [vmem:[%s1845 + $0x218] sm:$0xff]
        %v1914 = vld [vmem:[%s1845 + $0x220] sm:$0xff]
        %v1915 = vld [vmem:[%s1845 + $0x228] sm:$0xff]
        %v1916 = vld [vmem:[%s1845 + $0x230] sm:$0xff]
        %v1917 = vld [vmem:[%s1845 + $0x238] sm:$0xff]
        %v1918 = vld [vmem:[%s1845 + $0x240] sm:$0xff]
        %v1919 = vld [vmem:[%s1845 + $0x248] sm:$0xff]
        %v1920 = vld [vmem:[%s1845 + $0x250] sm:$0xff]
        %v1921 = vld [vmem:[%s1845 + $0x258] sm:$0xff]
        %v1922 = vld [vmem:[%s1845 + $0x260] sm:$0xff]
        %v1923 = vld [vmem:[%s1845 + $0x268] sm:$0xff]
        %v1924 = vld [vmem:[%s1845 + $0x270] sm:$0xff]
        %v1925 = vld [vmem:[%s1845 + $0x278] sm:$0xff]
        %v1926 = vld [vmem:[%s1845 + $0x280] sm:$0xff]
        %v1927 = vld [vmem:[%s1845 + $0x288] sm:$0xff]
        %v1928 = vld [vmem:[%s1845 + $0x290] sm:$0xff]
        %v1929 = vld [vmem:[%s1845 + $0x298] sm:$0xff]
        %v1930 = vld [vmem:[%s1845 + $0x2a0] sm:$0xff]
        %v1931 = vld [vmem:[%s1845 + $0x2a8] sm:$0xff]
        %v1932 = vld [vmem:[%s1845 + $0x2b0] sm:$0xff]
        %v1933 = vld [vmem:[%s1845 + $0x2b8] sm:$0xff]
        %v1934 = vld [vmem:[%s1845 + $0x2c0] sm:$0xff]
        %v1935 = vld [vmem:[%s1845 + $0x2c8] sm:$0xff]
        %v1936 = vld [vmem:[%s1845 + $0x2d0] sm:$0xff]
        %v1937 = vld [vmem:[%s1845 + $0x2d8] sm:$0xff]
        %v1938 = vld [vmem:[%s1845 + $0x2e0] sm:$0xff]
        %v1939 = vld [vmem:[%s1845 + $0x2e8] sm:$0xff]
        %v1940 = vld [vmem:[%s1845 + $0x2f0] sm:$0xff]
        %v1941 = vld [vmem:[%s1845 + $0x2f8] sm:$0xff]
        %v1942 = vld [vmem:[%s1845 + $0x300] sm:$0xff]
        %v1943 = vld [vmem:[%s1845 + $0x308] sm:$0xff]
        %v1944 = vld [vmem:[%s1845 + $0x310] sm:$0xff]
        %v1945 = vld [vmem:[%s1845 + $0x318] sm:$0xff]
        %v1946 = vld [vmem:[%s1845 + $0x320] sm:$0xff]
        %v1947 = vld [vmem:[%s1845 + $0x328] sm:$0xff]
        %v1948 = vld [vmem:[%s1845 + $0x330] sm:$0xff]
        %v1949 = vld [vmem:[%s1845 + $0x338] sm:$0xff]
        %v1950 = vld [vmem:[%s1845 + $0x340] sm:$0xff]
        %v1951 = vld [vmem:[%s1845 + $0x348] sm:$0xff]
        %v1952 = vld [vmem:[%s1845 + $0x350] sm:$0xff]
        %v1953 = vld [vmem:[%s1845 + $0x358] sm:$0xff]
        %v1954 = vld [vmem:[%s1845 + $0x360] sm:$0xff]
        %v1955 = vld [vmem:[%s1845 + $0x368] sm:$0xff]
        %v1956 = vld [vmem:[%s1845 + $0x370] sm:$0xff]
        %v1957 = vld [vmem:[%s1845 + $0x378] sm:$0xff]
        %v1958 = vld [vmem:[%s1845 + $0x380] sm:$0xff]
        %v1959 = vld [vmem:[%s1845 + $0x388] sm:$0xff]
        %v1960 = vld [vmem:[%s1845 + $0x390] sm:$0xff]
        %v1961 = vld [vmem:[%s1845 + $0x398] sm:$0xff]
        %v1962 = vld [vmem:[%s1845 + $0x3a0] sm:$0xff]
        %v1963 = vld [vmem:[%s1845 + $0x3a8] sm:$0xff]
        %v1964 = vld [vmem:[%s1845 + $0x3b0] sm:$0xff]
        %v1965 = vld [vmem:[%s1845 + $0x3b8] sm:$0xff]
        %v1966 = vld [vmem:[%s1845 + $0x3c0] sm:$0xff]
        %v1967 = vld [vmem:[%s1845 + $0x3c8] sm:$0xff]
        %v1968 = vld [vmem:[%s1845 + $0x3d0] sm:$0xff]
        %v1969 = vld [vmem:[%s1845 + $0x3d8] sm:$0xff]
        %v1970 = vld [vmem:[%s1845 + $0x3e0] sm:$0xff]
        %v1971 = vld [vmem:[%s1845 + $0x3e8] sm:$0xff]
        %v1972 = vld [vmem:[%s1845 + $0x3f0] sm:$0xff]
        %v1973 = vld [vmem:[%s1845 + $0x3f8] sm:$0xff]
        %v1974 = vld [vmem:[%s1845 + $0x400] sm:$0xff]
        %v1975 = vld [vmem:[%s1845 + $0x408] sm:$0xff]
        %v1976 = vld [vmem:[%s1845 + $0x410] sm:$0xff]
        %v1977 = vld [vmem:[%s1845 + $0x418] sm:$0xff]
        %v1978 = vld [vmem:[%s1845 + $0x420] sm:$0xff]
        %v1979 = vld [vmem:[%s1845 + $0x428] sm:$0xff]
        %v1980 = vld [vmem:[%s1845 + $0x430] sm:$0xff]
        %v1981 = vld [vmem:[%s1845 + $0x438] sm:$0xff]
        %v1982 = vld [vmem:[%s1845 + $0x440] sm:$0xff]
        %v1983 = vld [vmem:[%s1845 + $0x448] sm:$0xff]
        %v1984 = vld [vmem:[%s1845 + $0x450] sm:$0xff]
        %v1985 = vld [vmem:[%s1845 + $0x458] sm:$0xff]
        %v1986 = vld [vmem:[%s1845 + $0x460] sm:$0xff]
        %v1987 = vld [vmem:[%s1845 + $0x468] sm:$0xff]
        %v1988 = vld [vmem:[%s1845 + $0x470] sm:$0xff]
        %v1989 = vld [vmem:[%s1845 + $0x478] sm:$0xff]
        %v1990 = vld [vmem:[%s1845 + $0x480] sm:$0xff]
        %v1991 = vld [vmem:[%s1845 + $0x488] sm:$0xff]
        %v1992 = vld [vmem:[%s1845 + $0x490] sm:$0xff]
        %v1993 = vld [vmem:[%s1845 + $0x498] sm:$0xff]
        %v1994 = vld [vmem:[%s1845 + $0x4a0] sm:$0xff]
        %v1995 = vld [vmem:[%s1845 + $0x4a8] sm:$0xff]
        %v1996 = vld [vmem:[%s1845 + $0x4b0] sm:$0xff]
        %v1997 = vld [vmem:[%s1845 + $0x4b8] sm:$0xff]
        %v1998 = vld [vmem:[%s1845 + $0x4c0] sm:$0xff]
        %v1999 = vld [vmem:[%s1845 + $0x4c8] sm:$0xff]
        %v2000 = vld [vmem:[%s1845 + $0x4d0] sm:$0xff]
        %v2001 = vld [vmem:[%s1845 + $0x4d8] sm:$0xff]
        %v2002 = vld [vmem:[%s1845 + $0x4e0] sm:$0xff]
        %v2003 = vld [vmem:[%s1845 + $0x4e8] sm:$0xff]
        %v2004 = vld [vmem:[%s1845 + $0x4f0] sm:$0xff]
        %v2005 = vld [vmem:[%s1845 + $0x4f8] sm:$0xff]
        %v2006 = vld [vmem:[%s1845 + $0x500] sm:$0xff]
        %v2007 = vld [vmem:[%s1845 + $0x508] sm:$0xff]
        %v2008 = vld [vmem:[%s1845 + $0x510] sm:$0xff]
        %v2009 = vld [vmem:[%s1845 + $0x518] sm:$0xff]
        %v2010 = vld [vmem:[%s1845 + $0x520] sm:$0xff]
        %v2011 = vld [vmem:[%s1845 + $0x528] sm:$0xff]
        %v2012 = vld [vmem:[%s1845 + $0x530] sm:$0xff]
        %v2013 = vld [vmem:[%s1845 + $0x538] sm:$0xff]
        %v2014 = vld [vmem:[%s1845 + $0x540] sm:$0xff]
        %v2015 = vld [vmem:[%s1845 + $0x548] sm:$0xff]
        %v2016 = vld [vmem:[%s1845 + $0x550] sm:$0xff]
        %v2017 = vld [vmem:[%s1845 + $0x558] sm:$0xff]
        %v2018 = vld [vmem:[%s1845 + $0x560] sm:$0xff]
        %v2019 = vld [vmem:[%s1845 + $0x568] sm:$0xff]
        %v2020 = vld [vmem:[%s1845 + $0x570] sm:$0xff]
        %v2021 = vld [vmem:[%s1845 + $0x578] sm:$0xff]
        %v2022 = vld [vmem:[%s1845 + $0x580] sm:$0xff]
        %v2023 = vld [vmem:[%s1845 + $0x588] sm:$0xff]
        %v2024 = vld [vmem:[%s1845 + $0x590] sm:$0xff]
        %v2025 = vld [vmem:[%s1845 + $0x598] sm:$0xff]
        %v2026 = vld [vmem:[%s1845 + $0x5a0] sm:$0xff]
        %v2027 = vld [vmem:[%s1845 + $0x5a8] sm:$0xff]
        %v2028 = vld [vmem:[%s1845 + $0x5b0] sm:$0xff]
        %v2029 = vld [vmem:[%s1845 + $0x5b8] sm:$0xff]
        %v2030 = vld [vmem:[%s1845 + $0x5c0] sm:$0xff]
        %v2031 = vld [vmem:[%s1845 + $0x5c8] sm:$0xff]
        %v2032 = vld [vmem:[%s1845 + $0x5d0] sm:$0xff]
        %v2033 = vld [vmem:[%s1845 + $0x5d8] sm:$0xff]
        %v2034 = vld [vmem:[%s1845 + $0x5e0] sm:$0xff]
        %v2035 = vld [vmem:[%s1845 + $0x5e8] sm:$0xff]
        %v2036 = vld [vmem:[%s1845 + $0x5f0] sm:$0xff]
        %v2037 = vld [vmem:[%s1845 + $0x5f8] sm:$0xff]
        %v2038 = vld [vmem:[%s1845 + $0x600] sm:$0xff]
        %v2039 = vld [vmem:[%s1845 + $0x608] sm:$0xff]
        %v2040 = vld [vmem:[%s1845 + $0x610] sm:$0xff]
        %v2041 = vld [vmem:[%s1845 + $0x618] sm:$0xff]
        %v2042 = vld [vmem:[%s1845 + $0x620] sm:$0xff]
        %v2043 = vld [vmem:[%s1845 + $0x628] sm:$0xff]
        %v2044 = vld [vmem:[%s1845 + $0x630] sm:$0xff]
        %v2045 = vld [vmem:[%s1845 + $0x638] sm:$0xff]
        %v2046 = vld [vmem:[%s1845 + $0x640] sm:$0xff]
        %v2047 = vld [vmem:[%s1845 + $0x648] sm:$0xff]
        %v2048 = vld [vmem:[%s1845 + $0x650] sm:$0xff]
        %v2049 = vld [vmem:[%s1845 + $0x658] sm:$0xff]
        %v2050 = vld [vmem:[%s1845 + $0x660] sm:$0xff]
        %v2051 = vld [vmem:[%s1845 + $0x668] sm:$0xff]
        %v2052 = vld [vmem:[%s1845 + $0x670] sm:$0xff]
        %v2053 = vld [vmem:[%s1845 + $0x678] sm:$0xff]
        %v2054 = vld [vmem:[%s1845 + $0x680] sm:$0xff]
        %v2055 = vld [vmem:[%s1845 + $0x688] sm:$0xff]
        %v2056 = vld [vmem:[%s1845 + $0x690] sm:$0xff]
        %v2057 = vld [vmem:[%s1845 + $0x698] sm:$0xff]
        %v2058 = vld [vmem:[%s1845 + $0x6a0] sm:$0xff]
        %v2059 = vld [vmem:[%s1845 + $0x6a8] sm:$0xff]
        %v2060 = vld [vmem:[%s1845 + $0x6b0] sm:$0xff]
        %v2061 = vld [vmem:[%s1845 + $0x6b8] sm:$0xff]
        %v2062 = vld [vmem:[%s1845 + $0x6c0] sm:$0xff]
        %v2063 = vld [vmem:[%s1845 + $0x6c8] sm:$0xff]
        %v2064 = vld [vmem:[%s1845 + $0x6d0] sm:$0xff]
        %v2065 = vld [vmem:[%s1845 + $0x6d8] sm:$0xff]
        %v2066 = vld [vmem:[%s1845 + $0x6e0] sm:$0xff]
        %v2067 = vld [vmem:[%s1845 + $0x6e8] sm:$0xff]
        %v2068 = vld [vmem:[%s1845 + $0x6f0] sm:$0xff]
        %v2069 = vld [vmem:[%s1845 + $0x6f8] sm:$0xff]
        %vm2070 = vcmask 523264
        %v2072 = vsel %vm2070, %v1840, 0
        %v2075 = vsel %vm2070, %v1843, 0
        %2077 = vmatpush.msra.mxu0 %v1906
        %2078 = vmatpush.msra.mxu0 %v1902
        %2079 = vmatpush.msra.mxu0 %v1898
        %2080 = vmatpush.msra.mxu0 %v1894
        %2081 = vmatpush.msra.mxu0 %v1890
        %2082 = vmatpush.msra.mxu0 %v1886
        %2083 = vmatpush.msra.mxu0 %v1882
        %2084 = vmatpush.msra.mxu0 %v1878
        %2085 = vmatpush.msra.mxu0 %v1874
        %2086 = vmatpush.msra.mxu0 %v1870
        %2087 = vmatpush.msra.mxu0 %v1866
        %2088 = vmatpush.msra.mxu0 %v1862
        %2089 = vmatpush.msra.mxu0 %v1858
        %2090 = vmatpush.msra.mxu0 %v1854
        %2091 = vmatpush.msra.mxu0 %v1850
        %2092 = vmatpush.msra.mxu0 %v1846
        %2093 = vmatmul.f32.gmra.mxu0 %v1771
        %v2094 = vpop.f32.mrf.mxu0
        %v2095 = vadd.f32 0.0, %v2094
        %2096 = vmatmul.f32.gmra.mxu0 %v1774
        %v2097 = vpop.f32.mrf.mxu0
        %v2098 = vadd.f32 0.0, %v2097
        %2099 = vdwg.mxu0
        %2100 = vmatpush.msra.mxu0 %v1970
        %2101 = vmatpush.msra.mxu0 %v1966
        %2102 = vmatpush.msra.mxu0 %v1962
        %2103 = vmatpush.msra.mxu0 %v1958
        %2104 = vmatpush.msra.mxu0 %v1954
        %2105 = vmatpush.msra.mxu0 %v1950
        %2106 = vmatpush.msra.mxu0 %v1946
        %2107 = vmatpush.msra.mxu0 %v1942
        %2108 = vmatpush.msra.mxu0 %v1938
        %2109 = vmatpush.msra.mxu0 %v1934
        %2110 = vmatpush.msra.mxu0 %v1930
        %2111 = vmatpush.msra.mxu0 %v1926
        %2112 = vmatpush.msra.mxu0 %v1922
        %2113 = vmatpush.msra.mxu0 %v1918
        %2114 = vmatpush.msra.mxu0 %v1914
        %2115 = vmatpush.msra.mxu0 %v1910
        %2116 = vmatmul.f32.gmra.mxu0 %v1794
        %v2117 = vpop.f32.mrf.mxu0
        %v2118 = vadd.f32 %v2095, %v2117
        %2119 = vmatmul.f32.gmra.mxu0 %v1797
        %v2120 = vpop.f32.mrf.mxu0
        %v2121 = vadd.f32 %v2098, %v2120
        %2122 = vdwg.mxu0
        %2123 = vmatpush.msra.mxu0 %v2034
        %2124 = vmatpush.msra.mxu0 %v2030
        %2125 = vmatpush.msra.mxu0 %v2026
        %2126 = vmatpush.msra.mxu0 %v2022
        %2127 = vmatpush.msra.mxu0 %v2018
        %2128 = vmatpush.msra.mxu0 %v2014
        %2129 = vmatpush.msra.mxu0 %v2010
        %2130 = vmatpush.msra.mxu0 %v2006
        %2131 = vmatpush.msra.mxu0 %v2002
        %2132 = vmatpush.msra.mxu0 %v1998
        %2133 = vmatpush.msra.mxu0 %v1994
        %2134 = vmatpush.msra.mxu0 %v1990
        %2135 = vmatpush.msra.mxu0 %v1986
        %2136 = vmatpush.msra.mxu0 %v1982
        %2137 = vmatpush.msra.mxu0 %v1978
        %2138 = vmatpush.msra.mxu0 %v1974
        %2139 = vmatmul.f32.gmra.mxu0 %v1817
        %v2140 = vpop.f32.mrf.mxu0
        %v2141 = vadd.f32 %v2118, %v2140
        %2142 = vmatmul.f32.gmra.mxu0 %v1820
        %v2143 = vpop.f32.mrf.mxu0
        %v2144 = vadd.f32 %v2121, %v2143
        %2145 = vdwg.mxu0
        %2146 = vmatpush.msra.mxu0 0.0
        %2147 = vmatpush.msra.mxu0 0.0
        %2148 = vmatpush.msra.mxu0 0.0
        %2149 = vmatpush.msra.mxu0 0.0
        %2150 = vmatpush.msra.mxu0 0.0
        %2151 = vmatpush.msra.mxu0 0.0
        %2152 = vmatpush.msra.mxu0 0.0
        %2153 = vmatpush.msra.mxu0 0.0
        %2154 = vmatpush.msra.mxu0 %v2066
        %2155 = vmatpush.msra.mxu0 %v2062
        %2156 = vmatpush.msra.mxu0 %v2058
        %2157 = vmatpush.msra.mxu0 %v2054
        %2158 = vmatpush.msra.mxu0 %v2050
        %2159 = vmatpush.msra.mxu0 %v2046
        %2160 = vmatpush.msra.mxu0 %v2042
        %2161 = vmatpush.msra.mxu0 %v2038
        %2162 = vmatmul.f32.gmra.mxu0 %v2072
        %v2163 = vpop.f32.mrf.mxu0
        %v2164 = vadd.f32 %v2141, %v2163
        %2165 = vmatmul.f32.gmra.mxu0 %v2075
        %v2166 = vpop.f32.mrf.mxu0
        %v2167 = vadd.f32 %v2144, %v2166
        %2168 = vdwg.mxu0
        %2169 = vmatpush.msra.mxu0 %v1907
        %2170 = vmatpush.msra.mxu0 %v1903
        %2171 = vmatpush.msra.mxu0 %v1899
        %2172 = vmatpush.msra.mxu0 %v1895
        %2173 = vmatpush.msra.mxu0 %v1891
        %2174 = vmatpush.msra.mxu0 %v1887
        %2175 = vmatpush.msra.mxu0 %v1883
        %2176 = vmatpush.msra.mxu0 %v1879
        %2177 = vmatpush.msra.mxu0 %v1875
        %2178 = vmatpush.msra.mxu0 %v1871
        %2179 = vmatpush.msra.mxu0 %v1867
        %2180 = vmatpush.msra.mxu0 %v1863
        %2181 = vmatpush.msra.mxu0 %v1859
        %2182 = vmatpush.msra.mxu0 %v1855
        %2183 = vmatpush.msra.mxu0 %v1851
        %2184 = vmatpush.msra.mxu0 %v1847
        %2185 = vmatmul.f32.gmra.mxu0 %v1771
        %v2186 = vpop.f32.mrf.mxu0
        %v2187 = vadd.f32 0.0, %v2186
        %2188 = vmatmul.f32.gmra.mxu0 %v1774
        %v2189 = vpop.f32.mrf.mxu0
        %v2190 = vadd.f32 0.0, %v2189
        %2191 = vdwg.mxu0
        %2192 = vmatpush.msra.mxu0 %v1971
        %2193 = vmatpush.msra.mxu0 %v1967
        %2194 = vmatpush.msra.mxu0 %v1963
        %2195 = vmatpush.msra.mxu0 %v1959
        %2196 = vmatpush.msra.mxu0 %v1955
        %2197 = vmatpush.msra.mxu0 %v1951
        %2198 = vmatpush.msra.mxu0 %v1947
        %2199 = vmatpush.msra.mxu0 %v1943
        %2200 = vmatpush.msra.mxu0 %v1939
        %2201 = vmatpush.msra.mxu0 %v1935
        %2202 = vmatpush.msra.mxu0 %v1931
        %2203 = vmatpush.msra.mxu0 %v1927
        %2204 = vmatpush.msra.mxu0 %v1923
        %2205 = vmatpush.msra.mxu0 %v1919
        %2206 = vmatpush.msra.mxu0 %v1915
        %2207 = vmatpush.msra.mxu0 %v1911
        %2208 = vmatmul.f32.gmra.mxu0 %v1794
        %v2209 = vpop.f32.mrf.mxu0
        %v2210 = vadd.f32 %v2187, %v2209
        %2211 = vmatmul.f32.gmra.mxu0 %v1797
        %v2212 = vpop.f32.mrf.mxu0
        %v2213 = vadd.f32 %v2190, %v2212
        %2214 = vdwg.mxu0
        %2215 = vmatpush.msra.mxu0 %v2035
        %2216 = vmatpush.msra.mxu0 %v2031
        %2217 = vmatpush.msra.mxu0 %v2027
        %2218 = vmatpush.msra.mxu0 %v2023
        %2219 = vmatpush.msra.mxu0 %v2019
        %2220 = vmatpush.msra.mxu0 %v2015
        %2221 = vmatpush.msra.mxu0 %v2011
        %2222 = vmatpush.msra.mxu0 %v2007
        %2223 = vmatpush.msra.mxu0 %v2003
        %2224 = vmatpush.msra.mxu0 %v1999
        %2225 = vmatpush.msra.mxu0 %v1995
        %2226 = vmatpush.msra.mxu0 %v1991
        %2227 = vmatpush.msra.mxu0 %v1987
        %2228 = vmatpush.msra.mxu0 %v1983
        %2229 = vmatpush.msra.mxu0 %v1979
        %2230 = vmatpush.msra.mxu0 %v1975
        %2231 = vmatmul.f32.gmra.mxu0 %v1817
        %v2232 = vpop.f32.mrf.mxu0
        %v2233 = vadd.f32 %v2210, %v2232
        %2234 = vmatmul.f32.gmra.mxu0 %v1820
        %v2235 = vpop.f32.mrf.mxu0
        %v2236 = vadd.f32 %v2213, %v2235
        %2237 = vdwg.mxu0
        %2238 = vmatpush.msra.mxu0 0.0
        %2239 = vmatpush.msra.mxu0 0.0
        %2240 = vmatpush.msra.mxu0 0.0
        %2241 = vmatpush.msra.mxu0 0.0
        %2242 = vmatpush.msra.mxu0 0.0
        %2243 = vmatpush.msra.mxu0 0.0
        %2244 = vmatpush.msra.mxu0 0.0
        %2245 = vmatpush.msra.mxu0 0.0
        %2246 = vmatpush.msra.mxu0 %v2067
        %2247 = vmatpush.msra.mxu0 %v2063
        %2248 = vmatpush.msra.mxu0 %v2059
        %2249 = vmatpush.msra.mxu0 %v2055
        %2250 = vmatpush.msra.mxu0 %v2051
        %2251 = vmatpush.msra.mxu0 %v2047
        %2252 = vmatpush.msra.mxu0 %v2043
        %2253 = vmatpush.msra.mxu0 %v2039
        %2254 = vmatmul.f32.gmra.mxu0 %v2072
        %v2255 = vpop.f32.mrf.mxu0
        %v2256 = vadd.f32 %v2233, %v2255
        %2257 = vmatmul.f32.gmra.mxu0 %v2075
        %v2258 = vpop.f32.mrf.mxu0
        %v2259 = vadd.f32 %v2236, %v2258
        %2260 = vdwg.mxu0
        %2261 = vmatpush.msra.mxu0 %v1908
        %2262 = vmatpush.msra.mxu0 %v1904
        %2263 = vmatpush.msra.mxu0 %v1900
        %2264 = vmatpush.msra.mxu0 %v1896
        %2265 = vmatpush.msra.mxu0 %v1892
        %2266 = vmatpush.msra.mxu0 %v1888
        %2267 = vmatpush.msra.mxu0 %v1884
        %2268 = vmatpush.msra.mxu0 %v1880
        %2269 = vmatpush.msra.mxu0 %v1876
        %2270 = vmatpush.msra.mxu0 %v1872
        %2271 = vmatpush.msra.mxu0 %v1868
        %2272 = vmatpush.msra.mxu0 %v1864
        %2273 = vmatpush.msra.mxu0 %v1860
        %2274 = vmatpush.msra.mxu0 %v1856
        %2275 = vmatpush.msra.mxu0 %v1852
        %2276 = vmatpush.msra.mxu0 %v1848
        %2277 = vmatmul.f32.gmra.mxu0 %v1771
        %v2278 = vpop.f32.mrf.mxu0
        %v2279 = vadd.f32 0.0, %v2278
        %2280 = vmatmul.f32.gmra.mxu0 %v1774
        %v2281 = vpop.f32.mrf.mxu0
        %v2282 = vadd.f32 0.0, %v2281
        %2283 = vdwg.mxu0
        %2284 = vmatpush.msra.mxu0 %v1972
        %2285 = vmatpush.msra.mxu0 %v1968
        %2286 = vmatpush.msra.mxu0 %v1964
        %2287 = vmatpush.msra.mxu0 %v1960
        %2288 = vmatpush.msra.mxu0 %v1956
        %2289 = vmatpush.msra.mxu0 %v1952
        %2290 = vmatpush.msra.mxu0 %v1948
        %2291 = vmatpush.msra.mxu0 %v1944
        %2292 = vmatpush.msra.mxu0 %v1940
        %2293 = vmatpush.msra.mxu0 %v1936
        %2294 = vmatpush.msra.mxu0 %v1932
        %2295 = vmatpush.msra.mxu0 %v1928
        %2296 = vmatpush.msra.mxu0 %v1924
        %2297 = vmatpush.msra.mxu0 %v1920
        %2298 = vmatpush.msra.mxu0 %v1916
        %2299 = vmatpush.msra.mxu0 %v1912
        %2300 = vmatmul.f32.gmra.mxu0 %v1794
        %v2301 = vpop.f32.mrf.mxu0
        %v2302 = vadd.f32 %v2279, %v2301
        %2303 = vmatmul.f32.gmra.mxu0 %v1797
        %v2304 = vpop.f32.mrf.mxu0
        %v2305 = vadd.f32 %v2282, %v2304
        %2306 = vdwg.mxu0
        %2307 = vmatpush.msra.mxu0 %v2036
        %2308 = vmatpush.msra.mxu0 %v2032
        %2309 = vmatpush.msra.mxu0 %v2028
        %2310 = vmatpush.msra.mxu0 %v2024
        %2311 = vmatpush.msra.mxu0 %v2020
        %2312 = vmatpush.msra.mxu0 %v2016
        %2313 = vmatpush.msra.mxu0 %v2012
        %2314 = vmatpush.msra.mxu0 %v2008
        %2315 = vmatpush.msra.mxu0 %v2004
        %2316 = vmatpush.msra.mxu0 %v2000
        %2317 = vmatpush.msra.mxu0 %v1996
        %2318 = vmatpush.msra.mxu0 %v1992
        %2319 = vmatpush.msra.mxu0 %v1988
        %2320 = vmatpush.msra.mxu0 %v1984
        %2321 = vmatpush.msra.mxu0 %v1980
        %2322 = vmatpush.msra.mxu0 %v1976
        %2323 = vmatmul.f32.gmra.mxu0 %v1817
        %v2324 = vpop.f32.mrf.mxu0
        %v2325 = vadd.f32 %v2302, %v2324
        %2326 = vmatmul.f32.gmra.mxu0 %v1820
        %v2327 = vpop.f32.mrf.mxu0
        %v2328 = vadd.f32 %v2305, %v2327
        %2329 = vdwg.mxu0
        %2330 = vmatpush.msra.mxu0 0.0
        %2331 = vmatpush.msra.mxu0 0.0
        %2332 = vmatpush.msra.mxu0 0.0
        %2333 = vmatpush.msra.mxu0 0.0
        %2334 = vmatpush.msra.mxu0 0.0
        %2335 = vmatpush.msra.mxu0 0.0
        %2336 = vmatpush.msra.mxu0 0.0
        %2337 = vmatpush.msra.mxu0 0.0
        %2338 = vmatpush.msra.mxu0 %v2068
        %2339 = vmatpush.msra.mxu0 %v2064
        %2340 = vmatpush.msra.mxu0 %v2060
        %2341 = vmatpush.msra.mxu0 %v2056
        %2342 = vmatpush.msra.mxu0 %v2052
        %2343 = vmatpush.msra.mxu0 %v2048
        %2344 = vmatpush.msra.mxu0 %v2044
        %2345 = vmatpush.msra.mxu0 %v2040
        %2346 = vmatmul.f32.gmra.mxu0 %v2072
        %v2347 = vpop.f32.mrf.mxu0
        %v2348 = vadd.f32 %v2325, %v2347
        %2349 = vmatmul.f32.gmra.mxu0 %v2075
        %v2350 = vpop.f32.mrf.mxu0
        %v2351 = vadd.f32 %v2328, %v2350
        %2352 = vdwg.mxu0
        %2353 = vmatpush.msra.mxu0 %v1909
        %2354 = vmatpush.msra.mxu0 %v1905
        %2355 = vmatpush.msra.mxu0 %v1901
        %2356 = vmatpush.msra.mxu0 %v1897
        %2357 = vmatpush.msra.mxu0 %v1893
        %2358 = vmatpush.msra.mxu0 %v1889
        %2359 = vmatpush.msra.mxu0 %v1885
        %2360 = vmatpush.msra.mxu0 %v1881
        %2361 = vmatpush.msra.mxu0 %v1877
        %2362 = vmatpush.msra.mxu0 %v1873
        %2363 = vmatpush.msra.mxu0 %v1869
        %2364 = vmatpush.msra.mxu0 %v1865
        %2365 = vmatpush.msra.mxu0 %v1861
        %2366 = vmatpush.msra.mxu0 %v1857
        %2367 = vmatpush.msra.mxu0 %v1853
        %2368 = vmatpush.msra.mxu0 %v1849
        %2369 = vmatmul.f32.gmra.mxu0 %v1771
        %v2370 = vpop.f32.mrf.mxu0
        %v2371 = vadd.f32 0.0, %v2370
        %2372 = vmatmul.f32.gmra.mxu0 %v1774
        %v2373 = vpop.f32.mrf.mxu0
        %v2374 = vadd.f32 0.0, %v2373
        %2375 = vdwg.mxu0
        %2376 = vmatpush.msra.mxu0 %v1973
        %2377 = vmatpush.msra.mxu0 %v1969
        %2378 = vmatpush.msra.mxu0 %v1965
        %2379 = vmatpush.msra.mxu0 %v1961
        %2380 = vmatpush.msra.mxu0 %v1957
        %2381 = vmatpush.msra.mxu0 %v1953
        %2382 = vmatpush.msra.mxu0 %v1949
        %2383 = vmatpush.msra.mxu0 %v1945
        %2384 = vmatpush.msra.mxu0 %v1941
        %2385 = vmatpush.msra.mxu0 %v1937
        %2386 = vmatpush.msra.mxu0 %v1933
        %2387 = vmatpush.msra.mxu0 %v1929
        %2388 = vmatpush.msra.mxu0 %v1925
        %2389 = vmatpush.msra.mxu0 %v1921
        %2390 = vmatpush.msra.mxu0 %v1917
        %2391 = vmatpush.msra.mxu0 %v1913
        %2392 = vmatmul.f32.gmra.mxu0 %v1794
        %v2393 = vpop.f32.mrf.mxu0
        %v2394 = vadd.f32 %v2371, %v2393
        %2395 = vmatmul.f32.gmra.mxu0 %v1797
        %v2396 = vpop.f32.mrf.mxu0
        %v2397 = vadd.f32 %v2374, %v2396
        %2398 = vdwg.mxu0
        %2399 = vmatpush.msra.mxu0 %v2037
        %2400 = vmatpush.msra.mxu0 %v2033
        %2401 = vmatpush.msra.mxu0 %v2029
        %2402 = vmatpush.msra.mxu0 %v2025
        %2403 = vmatpush.msra.mxu0 %v2021
        %2404 = vmatpush.msra.mxu0 %v2017
        %2405 = vmatpush.msra.mxu0 %v2013
        %2406 = vmatpush.msra.mxu0 %v2009
        %2407 = vmatpush.msra.mxu0 %v2005
        %2408 = vmatpush.msra.mxu0 %v2001
        %2409 = vmatpush.msra.mxu0 %v1997
        %2410 = vmatpush.msra.mxu0 %v1993
        %2411 = vmatpush.msra.mxu0 %v1989
        %2412 = vmatpush.msra.mxu0 %v1985
        %2413 = vmatpush.msra.mxu0 %v1981
        %2414 = vmatpush.msra.mxu0 %v1977
        %2415 = vmatmul.f32.gmra.mxu0 %v1817
        %v2416 = vpop.f32.mrf.mxu0
        %v2417 = vadd.f32 %v2394, %v2416
        %2418 = vmatmul.f32.gmra.mxu0 %v1820
        %v2419 = vpop.f32.mrf.mxu0
        %v2420 = vadd.f32 %v2397, %v2419
        %2421 = vdwg.mxu0
        %2422 = vmatpush.msra.mxu0 0.0
        %2423 = vmatpush.msra.mxu0 0.0
        %2424 = vmatpush.msra.mxu0 0.0
        %2425 = vmatpush.msra.mxu0 0.0
        %2426 = vmatpush.msra.mxu0 0.0
        %2427 = vmatpush.msra.mxu0 0.0
        %2428 = vmatpush.msra.mxu0 0.0
        %2429 = vmatpush.msra.mxu0 0.0
        %2430 = vmatpush.msra.mxu0 %v2069
        %2431 = vmatpush.msra.mxu0 %v2065
        %2432 = vmatpush.msra.mxu0 %v2061
        %2433 = vmatpush.msra.mxu0 %v2057
        %2434 = vmatpush.msra.mxu0 %v2053
        %2435 = vmatpush.msra.mxu0 %v2049
        %2436 = vmatpush.msra.mxu0 %v2045
        %2437 = vmatpush.msra.mxu0 %v2041
        %2438 = vmatmul.f32.gmra.mxu0 %v2072
        %v2439 = vpop.f32.mrf.mxu0
        %v2440 = vadd.f32 %v2417, %v2439
        %2441 = vmatmul.f32.gmra.mxu0 %v2075
        %v2442 = vpop.f32.mrf.mxu0
        %v2443 = vadd.f32 %v2420, %v2442
        %2444 = vdwg.mxu0
        %v2446 = vsel %vm2070, %v1515, 0
        %v2449 = vsel %vm2070, %v1518, 0
        %2451 = vmatpush.msra.mxu0 %v1580
        %2452 = vmatpush.msra.mxu0 %v1576
        %2453 = vmatpush.msra.mxu0 %v1572
        %2454 = vmatpush.msra.mxu0 %v1568
        %2455 = vmatpush.msra.mxu0 %v1564
        %2456 = vmatpush.msra.mxu0 %v1560
        %2457 = vmatpush.msra.mxu0 %v1556
        %2458 = vmatpush.msra.mxu0 %v1552
        %2459 = vmatpush.msra.mxu0 %v1548
        %2460 = vmatpush.msra.mxu0 %v1544
        %2461 = vmatpush.msra.mxu0 %v1540
        %2462 = vmatpush.msra.mxu0 %v1536
        %2463 = vmatpush.msra.mxu0 %v1532
        %2464 = vmatpush.msra.mxu0 %v1528
        %2465 = vmatpush.msra.mxu0 %v1524
        %2466 = vmatpush.msra.mxu0 %v1520
        %2467 = vmatmul.f32.gmra.mxu0 %v1446
        %v2468 = vpop.f32.mrf.mxu0
        %v2469 = vadd.f32 %v2164, %v2468
        %2470 = vmatmul.f32.gmra.mxu0 %v1449
        %v2471 = vpop.f32.mrf.mxu0
        %v2472 = vadd.f32 %v2167, %v2471
        %2473 = vdwg.mxu0
        %2474 = vmatpush.msra.mxu0 %v1644
        %2475 = vmatpush.msra.mxu0 %v1640
        %2476 = vmatpush.msra.mxu0 %v1636
        %2477 = vmatpush.msra.mxu0 %v1632
        %2478 = vmatpush.msra.mxu0 %v1628
        %2479 = vmatpush.msra.mxu0 %v1624
        %2480 = vmatpush.msra.mxu0 %v1620
        %2481 = vmatpush.msra.mxu0 %v1616
        %2482 = vmatpush.msra.mxu0 %v1612
        %2483 = vmatpush.msra.mxu0 %v1608
        %2484 = vmatpush.msra.mxu0 %v1604
        %2485 = vmatpush.msra.mxu0 %v1600
        %2486 = vmatpush.msra.mxu0 %v1596
        %2487 = vmatpush.msra.mxu0 %v1592
        %2488 = vmatpush.msra.mxu0 %v1588
        %2489 = vmatpush.msra.mxu0 %v1584
        %2490 = vmatmul.f32.gmra.mxu0 %v1469
        %v2491 = vpop.f32.mrf.mxu0
        %v2492 = vadd.f32 %v2469, %v2491
        %2493 = vmatmul.f32.gmra.mxu0 %v1472
        %v2494 = vpop.f32.mrf.mxu0
        %v2495 = vadd.f32 %v2472, %v2494
        %2496 = vdwg.mxu0
        %2497 = vmatpush.msra.mxu0 %v1708
        %2498 = vmatpush.msra.mxu0 %v1704
        %2499 = vmatpush.msra.mxu0 %v1700
        %2500 = vmatpush.msra.mxu0 %v1696
        %2501 = vmatpush.msra.mxu0 %v1692
        %2502 = vmatpush.msra.mxu0 %v1688
        %2503 = vmatpush.msra.mxu0 %v1684
        %2504 = vmatpush.msra.mxu0 %v1680
        %2505 = vmatpush.msra.mxu0 %v1676
        %2506 = vmatpush.msra.mxu0 %v1672
        %2507 = vmatpush.msra.mxu0 %v1668
        %2508 = vmatpush.msra.mxu0 %v1664
        %2509 = vmatpush.msra.mxu0 %v1660
        %2510 = vmatpush.msra.mxu0 %v1656
        %2511 = vmatpush.msra.mxu0 %v1652
        %2512 = vmatpush.msra.mxu0 %v1648
        %2513 = vmatmul.f32.gmra.mxu0 %v1492
        %v2514 = vpop.f32.mrf.mxu0
        %v2515 = vadd.f32 %v2492, %v2514
        %2516 = vmatmul.f32.gmra.mxu0 %v1495
        %v2517 = vpop.f32.mrf.mxu0
        %v2518 = vadd.f32 %v2495, %v2517
        %2519 = vdwg.mxu0
        %2520 = vmatpush.msra.mxu0 0.0
        %2521 = vmatpush.msra.mxu0 0.0
        %2522 = vmatpush.msra.mxu0 0.0
        %2523 = vmatpush.msra.mxu0 0.0
        %2524 = vmatpush.msra.mxu0 0.0
        %2525 = vmatpush.msra.mxu0 0.0
        %2526 = vmatpush.msra.mxu0 0.0
        %2527 = vmatpush.msra.mxu0 0.0
        %2528 = vmatpush.msra.mxu0 %v1740
        %2529 = vmatpush.msra.mxu0 %v1736
        %2530 = vmatpush.msra.mxu0 %v1732
        %2531 = vmatpush.msra.mxu0 %v1728
        %2532 = vmatpush.msra.mxu0 %v1724
        %2533 = vmatpush.msra.mxu0 %v1720
        %2534 = vmatpush.msra.mxu0 %v1716
        %2535 = vmatpush.msra.mxu0 %v1712
        %2536 = vmatmul.f32.gmra.mxu0 %v2446
        %v2537 = vpop.f32.mrf.mxu0
        %v2538 = vadd.f32 %v2515, %v2537
        %2539 = vmatmul.f32.gmra.mxu0 %v2449
        %v2540 = vpop.f32.mrf.mxu0
        %v2541 = vadd.f32 %v2518, %v2540
        %2542 = vdwg.mxu0
        %2543 = vmatpush.msra.mxu0 %v1581
        %2544 = vmatpush.msra.mxu0 %v1577
        %2545 = vmatpush.msra.mxu0 %v1573
        %2546 = vmatpush.msra.mxu0 %v1569
        %2547 = vmatpush.msra.mxu0 %v1565
        %2548 = vmatpush.msra.mxu0 %v1561
        %2549 = vmatpush.msra.mxu0 %v1557
        %2550 = vmatpush.msra.mxu0 %v1553
        %2551 = vmatpush.msra.mxu0 %v1549
        %2552 = vmatpush.msra.mxu0 %v1545
        %2553 = vmatpush.msra.mxu0 %v1541
        %2554 = vmatpush.msra.mxu0 %v1537
        %2555 = vmatpush.msra.mxu0 %v1533
        %2556 = vmatpush.msra.mxu0 %v1529
        %2557 = vmatpush.msra.mxu0 %v1525
        %2558 = vmatpush.msra.mxu0 %v1521
        %2559 = vmatmul.f32.gmra.mxu0 %v1446
        %v2560 = vpop.f32.mrf.mxu0
        %v2561 = vadd.f32 %v2256, %v2560
        %2562 = vmatmul.f32.gmra.mxu0 %v1449
        %v2563 = vpop.f32.mrf.mxu0
        %v2564 = vadd.f32 %v2259, %v2563
        %2565 = vdwg.mxu0
        %2566 = vmatpush.msra.mxu0 %v1645
        %2567 = vmatpush.msra.mxu0 %v1641
        %2568 = vmatpush.msra.mxu0 %v1637
        %2569 = vmatpush.msra.mxu0 %v1633
        %2570 = vmatpush.msra.mxu0 %v1629
        %2571 = vmatpush.msra.mxu0 %v1625
        %2572 = vmatpush.msra.mxu0 %v1621
        %2573 = vmatpush.msra.mxu0 %v1617
        %2574 = vmatpush.msra.mxu0 %v1613
        %2575 = vmatpush.msra.mxu0 %v1609
        %2576 = vmatpush.msra.mxu0 %v1605
        %2577 = vmatpush.msra.mxu0 %v1601
        %2578 = vmatpush.msra.mxu0 %v1597
        %2579 = vmatpush.msra.mxu0 %v1593
        %2580 = vmatpush.msra.mxu0 %v1589
        %2581 = vmatpush.msra.mxu0 %v1585
        %2582 = vmatmul.f32.gmra.mxu0 %v1469
        %v2583 = vpop.f32.mrf.mxu0
        %v2584 = vadd.f32 %v2561, %v2583
        %2585 = vmatmul.f32.gmra.mxu0 %v1472
        %v2586 = vpop.f32.mrf.mxu0
        %v2587 = vadd.f32 %v2564, %v2586
        %2588 = vdwg.mxu0
        %2589 = vmatpush.msra.mxu0 %v1709
        %2590 = vmatpush.msra.mxu0 %v1705
        %2591 = vmatpush.msra.mxu0 %v1701
        %2592 = vmatpush.msra.mxu0 %v1697
        %2593 = vmatpush.msra.mxu0 %v1693
        %2594 = vmatpush.msra.mxu0 %v1689
        %2595 = vmatpush.msra.mxu0 %v1685
        %2596 = vmatpush.msra.mxu0 %v1681
        %2597 = vmatpush.msra.mxu0 %v1677
        %2598 = vmatpush.msra.mxu0 %v1673
        %2599 = vmatpush.msra.mxu0 %v1669
        %2600 = vmatpush.msra.mxu0 %v1665
        %2601 = vmatpush.msra.mxu0 %v1661
        %2602 = vmatpush.msra.mxu0 %v1657
        %2603 = vmatpush.msra.mxu0 %v1653
        %2604 = vmatpush.msra.mxu0 %v1649
        %2605 = vmatmul.f32.gmra.mxu0 %v1492
        %v2606 = vpop.f32.mrf.mxu0
        %v2607 = vadd.f32 %v2584, %v2606
        %2608 = vmatmul.f32.gmra.mxu0 %v1495
        %v2609 = vpop.f32.mrf.mxu0
        %v2610 = vadd.f32 %v2587, %v2609
        %2611 = vdwg.mxu0
        %2612 = vmatpush.msra.mxu0 0.0
        %2613 = vmatpush.msra.mxu0 0.0
        %2614 = vmatpush.msra.mxu0 0.0
        %2615 = vmatpush.msra.mxu0 0.0
        %2616 = vmatpush.msra.mxu0 0.0
        %2617 = vmatpush.msra.mxu0 0.0
        %2618 = vmatpush.msra.mxu0 0.0
        %2619 = vmatpush.msra.mxu0 0.0
        %2620 = vmatpush.msra.mxu0 %v1741
        %2621 = vmatpush.msra.mxu0 %v1737
        %2622 = vmatpush.msra.mxu0 %v1733
        %2623 = vmatpush.msra.mxu0 %v1729
        %2624 = vmatpush.msra.mxu0 %v1725
        %2625 = vmatpush.msra.mxu0 %v1721
        %2626 = vmatpush.msra.mxu0 %v1717
        %2627 = vmatpush.msra.mxu0 %v1713
        %2628 = vmatmul.f32.gmra.mxu0 %v2446
        %v2629 = vpop.f32.mrf.mxu0
        %v2630 = vadd.f32 %v2607, %v2629
        %2631 = vmatmul.f32.gmra.mxu0 %v2449
        %v2632 = vpop.f32.mrf.mxu0
        %v2633 = vadd.f32 %v2610, %v2632
        %2634 = vdwg.mxu0
        %2635 = vmatpush.msra.mxu0 %v1582
        %2636 = vmatpush.msra.mxu0 %v1578
        %2637 = vmatpush.msra.mxu0 %v1574
        %2638 = vmatpush.msra.mxu0 %v1570
        %2639 = vmatpush.msra.mxu0 %v1566
        %2640 = vmatpush.msra.mxu0 %v1562
        %2641 = vmatpush.msra.mxu0 %v1558
        %2642 = vmatpush.msra.mxu0 %v1554
        %2643 = vmatpush.msra.mxu0 %v1550
        %2644 = vmatpush.msra.mxu0 %v1546
        %2645 = vmatpush.msra.mxu0 %v1542
        %2646 = vmatpush.msra.mxu0 %v1538
        %2647 = vmatpush.msra.mxu0 %v1534
        %2648 = vmatpush.msra.mxu0 %v1530
        %2649 = vmatpush.msra.mxu0 %v1526
        %2650 = vmatpush.msra.mxu0 %v1522
        %2651 = vmatmul.f32.gmra.mxu0 %v1446
        %v2652 = vpop.f32.mrf.mxu0
        %v2653 = vadd.f32 %v2348, %v2652
        %2654 = vmatmul.f32.gmra.mxu0 %v1449
        %v2655 = vpop.f32.mrf.mxu0
        %v2656 = vadd.f32 %v2351, %v2655
        %2657 = vdwg.mxu0
        %2658 = vmatpush.msra.mxu0 %v1646
        %2659 = vmatpush.msra.mxu0 %v1642
        %2660 = vmatpush.msra.mxu0 %v1638
        %2661 = vmatpush.msra.mxu0 %v1634
        %2662 = vmatpush.msra.mxu0 %v1630
        %2663 = vmatpush.msra.mxu0 %v1626
        %2664 = vmatpush.msra.mxu0 %v1622
        %2665 = vmatpush.msra.mxu0 %v1618
        %2666 = vmatpush.msra.mxu0 %v1614
        %2667 = vmatpush.msra.mxu0 %v1610
        %2668 = vmatpush.msra.mxu0 %v1606
        %2669 = vmatpush.msra.mxu0 %v1602
        %2670 = vmatpush.msra.mxu0 %v1598
        %2671 = vmatpush.msra.mxu0 %v1594
        %2672 = vmatpush.msra.mxu0 %v1590
        %2673 = vmatpush.msra.mxu0 %v1586
        %2674 = vmatmul.f32.gmra.mxu0 %v1469
        %v2675 = vpop.f32.mrf.mxu0
        %v2676 = vadd.f32 %v2653, %v2675
        %2677 = vmatmul.f32.gmra.mxu0 %v1472
        %v2678 = vpop.f32.mrf.mxu0
        %v2679 = vadd.f32 %v2656, %v2678
        %2680 = vdwg.mxu0
        %2681 = vmatpush.msra.mxu0 %v1710
        %2682 = vmatpush.msra.mxu0 %v1706
        %2683 = vmatpush.msra.mxu0 %v1702
        %2684 = vmatpush.msra.mxu0 %v1698
        %2685 = vmatpush.msra.mxu0 %v1694
        %2686 = vmatpush.msra.mxu0 %v1690
        %2687 = vmatpush.msra.mxu0 %v1686
        %2688 = vmatpush.msra.mxu0 %v1682
        %2689 = vmatpush.msra.mxu0 %v1678
        %2690 = vmatpush.msra.mxu0 %v1674
        %2691 = vmatpush.msra.mxu0 %v1670
        %2692 = vmatpush.msra.mxu0 %v1666
        %2693 = vmatpush.msra.mxu0 %v1662
        %2694 = vmatpush.msra.mxu0 %v1658
        %2695 = vmatpush.msra.mxu0 %v1654
        %2696 = vmatpush.msra.mxu0 %v1650
        %2697 = vmatmul.f32.gmra.mxu0 %v1492
        %v2698 = vpop.f32.mrf.mxu0
        %v2699 = vadd.f32 %v2676, %v2698
        %2700 = vmatmul.f32.gmra.mxu0 %v1495
        %v2701 = vpop.f32.mrf.mxu0
        %v2702 = vadd.f32 %v2679, %v2701
        %2703 = vdwg.mxu0
        %2704 = vmatpush.msra.mxu0 0.0
        %2705 = vmatpush.msra.mxu0 0.0
        %2706 = vmatpush.msra.mxu0 0.0
        %2707 = vmatpush.msra.mxu0 0.0
        %2708 = vmatpush.msra.mxu0 0.0
        %2709 = vmatpush.msra.mxu0 0.0
        %2710 = vmatpush.msra.mxu0 0.0
        %2711 = vmatpush.msra.mxu0 0.0
        %2712 = vmatpush.msra.mxu0 %v1742
        %2713 = vmatpush.msra.mxu0 %v1738
        %2714 = vmatpush.msra.mxu0 %v1734
        %2715 = vmatpush.msra.mxu0 %v1730
        %2716 = vmatpush.msra.mxu0 %v1726
        %2717 = vmatpush.msra.mxu0 %v1722
        %2718 = vmatpush.msra.mxu0 %v1718
        %2719 = vmatpush.msra.mxu0 %v1714
        %2720 = vmatmul.f32.gmra.mxu0 %v2446
        %v2721 = vpop.f32.mrf.mxu0
        %v2722 = vadd.f32 %v2699, %v2721
        %2723 = vmatmul.f32.gmra.mxu0 %v2449
        %v2724 = vpop.f32.mrf.mxu0
        %v2725 = vadd.f32 %v2702, %v2724
        %2726 = vdwg.mxu0
        %2727 = vmatpush.msra.mxu0 %v1583
        %2728 = vmatpush.msra.mxu0 %v1579
        %2729 = vmatpush.msra.mxu0 %v1575
        %2730 = vmatpush.msra.mxu0 %v1571
        %2731 = vmatpush.msra.mxu0 %v1567
        %2732 = vmatpush.msra.mxu0 %v1563
        %2733 = vmatpush.msra.mxu0 %v1559
        %2734 = vmatpush.msra.mxu0 %v1555
        %2735 = vmatpush.msra.mxu0 %v1551
        %2736 = vmatpush.msra.mxu0 %v1547
        %2737 = vmatpush.msra.mxu0 %v1543
        %2738 = vmatpush.msra.mxu0 %v1539
        %2739 = vmatpush.msra.mxu0 %v1535
        %2740 = vmatpush.msra.mxu0 %v1531
        %2741 = vmatpush.msra.mxu0 %v1527
        %2742 = vmatpush.msra.mxu0 %v1523
        %2743 = vmatmul.f32.gmra.mxu0 %v1446
        %v2744 = vpop.f32.mrf.mxu0
        %v2745 = vadd.f32 %v2440, %v2744
        %2746 = vmatmul.f32.gmra.mxu0 %v1449
        %v2747 = vpop.f32.mrf.mxu0
        %v2748 = vadd.f32 %v2443, %v2747
        %2749 = vdwg.mxu0
        %2750 = vmatpush.msra.mxu0 %v1647
        %2751 = vmatpush.msra.mxu0 %v1643
        %2752 = vmatpush.msra.mxu0 %v1639
        %2753 = vmatpush.msra.mxu0 %v1635
        %2754 = vmatpush.msra.mxu0 %v1631
        %2755 = vmatpush.msra.mxu0 %v1627
        %2756 = vmatpush.msra.mxu0 %v1623
        %2757 = vmatpush.msra.mxu0 %v1619
        %2758 = vmatpush.msra.mxu0 %v1615
        %2759 = vmatpush.msra.mxu0 %v1611
        %2760 = vmatpush.msra.mxu0 %v1607
        %2761 = vmatpush.msra.mxu0 %v1603
        %2762 = vmatpush.msra.mxu0 %v1599
        %2763 = vmatpush.msra.mxu0 %v1595
        %2764 = vmatpush.msra.mxu0 %v1591
        %2765 = vmatpush.msra.mxu0 %v1587
        %2766 = vmatmul.f32.gmra.mxu0 %v1469
        %v2767 = vpop.f32.mrf.mxu0
        %v2768 = vadd.f32 %v2745, %v2767
        %2769 = vmatmul.f32.gmra.mxu0 %v1472
        %v2770 = vpop.f32.mrf.mxu0
        %v2771 = vadd.f32 %v2748, %v2770
        %2772 = vdwg.mxu0
        %2773 = vmatpush.msra.mxu0 %v1711
        %2774 = vmatpush.msra.mxu0 %v1707
        %2775 = vmatpush.msra.mxu0 %v1703
        %2776 = vmatpush.msra.mxu0 %v1699
        %2777 = vmatpush.msra.mxu0 %v1695
        %2778 = vmatpush.msra.mxu0 %v1691
        %2779 = vmatpush.msra.mxu0 %v1687
        %2780 = vmatpush.msra.mxu0 %v1683
        %2781 = vmatpush.msra.mxu0 %v1679
        %2782 = vmatpush.msra.mxu0 %v1675
        %2783 = vmatpush.msra.mxu0 %v1671
        %2784 = vmatpush.msra.mxu0 %v1667
        %2785 = vmatpush.msra.mxu0 %v1663
        %2786 = vmatpush.msra.mxu0 %v1659
        %2787 = vmatpush.msra.mxu0 %v1655
        %2788 = vmatpush.msra.mxu0 %v1651
        %2789 = vmatmul.f32.gmra.mxu0 %v1492
        %v2790 = vpop.f32.mrf.mxu0
        %v2791 = vadd.f32 %v2768, %v2790
        %2792 = vmatmul.f32.gmra.mxu0 %v1495
        %v2793 = vpop.f32.mrf.mxu0
        %v2794 = vadd.f32 %v2771, %v2793
        %2795 = vdwg.mxu0
        %2796 = vmatpush.msra.mxu0 0.0
        %2797 = vmatpush.msra.mxu0 0.0
        %2798 = vmatpush.msra.mxu0 0.0
        %2799 = vmatpush.msra.mxu0 0.0
        %2800 = vmatpush.msra.mxu0 0.0
        %2801 = vmatpush.msra.mxu0 0.0
        %2802 = vmatpush.msra.mxu0 0.0
        %2803 = vmatpush.msra.mxu0 0.0
        %2804 = vmatpush.msra.mxu0 %v1743
        %2805 = vmatpush.msra.mxu0 %v1739
        %2806 = vmatpush.msra.mxu0 %v1735
        %2807 = vmatpush.msra.mxu0 %v1731
        %2808 = vmatpush.msra.mxu0 %v1727
        %2809 = vmatpush.msra.mxu0 %v1723
        %2810 = vmatpush.msra.mxu0 %v1719
        %2811 = vmatpush.msra.mxu0 %v1715
        %2812 = vmatmul.f32.gmra.mxu0 %v2446
        %v2813 = vpop.f32.mrf.mxu0
        %v2814 = vadd.f32 %v2791, %v2813
        %2815 = vmatmul.f32.gmra.mxu0 %v2449
        %v2816 = vpop.f32.mrf.mxu0
        %v2817 = vadd.f32 %v2794, %v2816
        %2818 = vdwg.mxu0
        %s2819 = scalar_lea.vmem [#allocation8], 32
        %v2820 = vld [vmem:[%s2819] sm:$0xff]
        %v2821 = vld [vmem:[%s2819 + $0x8] sm:$0x3f]
        %v2823 = vsel %vm1408, %v2820, 0
        %v2826 = vsel %vm1408, %v2821, 0
        %2828 = vmatpush.msra.mxu0 0.0
        %2829 = vmatpush.msra.mxu0 0.0
        %2830 = vmatpush.msra.mxu0 0.0
        %2831 = vmatpush.msra.mxu0 0.0
        %2832 = vmatpush.msra.mxu0 0.0
        %2833 = vmatpush.msra.mxu0 0.0
        %2834 = vmatpush.msra.mxu0 0.0
        %2835 = vmatpush.msra.mxu0 0.0
        %2836 = vmatpush.msra.mxu0 0.0
        %2837 = vmatpush.msra.mxu0 0.0
        %2838 = vmatpush.msra.mxu0 0.0
        %2839 = vmatpush.msra.mxu0 0.0
        %2840 = vmatpush.msra.mxu0 0.0
        %2841 = vmatpush.msra.mxu0 0.0
        %2842 = vmatpush.msra.mxu0 %v1417
        %2843 = vmatpush.msra.mxu0 %v1398
        %2844 = vmatmul.f32.gmra.mxu0 %v2823
        %v2845 = vpop.f32.mrf.mxu0
        %v2846 = vadd.f32 0.0, %v2845
        %2847 = vmatmul.f32.gmra.mxu0 %v2826
        %v2848 = vpop.f32.mrf.mxu0
        %v2849 = vadd.f32 0.0, %v2848
        %2850 = vdwg.mxu0
        %2851 = vmatpush.msra.mxu0 0.0
        %2852 = vmatpush.msra.mxu0 0.0
        %2853 = vmatpush.msra.mxu0 0.0
        %2854 = vmatpush.msra.mxu0 0.0
        %2855 = vmatpush.msra.mxu0 0.0
        %2856 = vmatpush.msra.mxu0 0.0
        %2857 = vmatpush.msra.mxu0 0.0
        %2858 = vmatpush.msra.mxu0 0.0
        %2859 = vmatpush.msra.mxu0 0.0
        %2860 = vmatpush.msra.mxu0 0.0
        %2861 = vmatpush.msra.mxu0 0.0
        %2862 = vmatpush.msra.mxu0 0.0
        %2863 = vmatpush.msra.mxu0 0.0
        %2864 = vmatpush.msra.mxu0 0.0
        %2865 = vmatpush.msra.mxu0 %v1420
        %2866 = vmatpush.msra.mxu0 %v1399
        %2867 = vmatmul.f32.gmra.mxu0 %v2823
        %v2868 = vpop.f32.mrf.mxu0
        %v2869 = vadd.f32 0.0, %v2868
        %2870 = vmatmul.f32.gmra.mxu0 %v2826
        %v2871 = vpop.f32.mrf.mxu0
        %v2872 = vadd.f32 0.0, %v2871
        %2873 = vdwg.mxu0
        %2874 = vmatpush.msra.mxu0 0.0
        %2875 = vmatpush.msra.mxu0 0.0
        %2876 = vmatpush.msra.mxu0 0.0
        %2877 = vmatpush.msra.mxu0 0.0
        %2878 = vmatpush.msra.mxu0 0.0
        %2879 = vmatpush.msra.mxu0 0.0
        %2880 = vmatpush.msra.mxu0 0.0
        %2881 = vmatpush.msra.mxu0 0.0
        %2882 = vmatpush.msra.mxu0 0.0
        %2883 = vmatpush.msra.mxu0 0.0
        %2884 = vmatpush.msra.mxu0 0.0
        %2885 = vmatpush.msra.mxu0 0.0
        %2886 = vmatpush.msra.mxu0 0.0
        %2887 = vmatpush.msra.mxu0 0.0
        %2888 = vmatpush.msra.mxu0 %v1423
        %2889 = vmatpush.msra.mxu0 %v1400
        %2890 = vmatmul.f32.gmra.mxu0 %v2823
        %v2891 = vpop.f32.mrf.mxu0
        %v2892 = vadd.f32 0.0, %v2891
        %2893 = vmatmul.f32.gmra.mxu0 %v2826
        %v2894 = vpop.f32.mrf.mxu0
        %v2895 = vadd.f32 0.0, %v2894
        %2896 = vdwg.mxu0
        %2897 = vmatpush.msra.mxu0 0.0
        %2898 = vmatpush.msra.mxu0 0.0
        %2899 = vmatpush.msra.mxu0 0.0
        %2900 = vmatpush.msra.mxu0 0.0
        %2901 = vmatpush.msra.mxu0 0.0
        %2902 = vmatpush.msra.mxu0 0.0
        %2903 = vmatpush.msra.mxu0 0.0
        %2904 = vmatpush.msra.mxu0 0.0
        %2905 = vmatpush.msra.mxu0 0.0
        %2906 = vmatpush.msra.mxu0 0.0
        %2907 = vmatpush.msra.mxu0 0.0
        %2908 = vmatpush.msra.mxu0 0.0
        %2909 = vmatpush.msra.mxu0 0.0
        %2910 = vmatpush.msra.mxu0 0.0
        %2911 = vmatpush.msra.mxu0 %v1426
        %2912 = vmatpush.msra.mxu0 %v1401
        %2913 = vmatmul.f32.gmra.mxu0 %v2823
        %v2914 = vpop.f32.mrf.mxu0
        %v2915 = vadd.f32 0.0, %v2914
        %2916 = vmatmul.f32.gmra.mxu0 %v2826
        %v2917 = vpop.f32.mrf.mxu0
        %v2918 = vadd.f32 0.0, %v2917
        %2919 = vdwg.mxu0
        %s2920 = scalar_lea.vmem [#allocation10], 3584
        %v2921 = vld [vmem:[%s2920] sm:$0xff]
        %v2922 = vld [vmem:[%s2920 + $0x8] sm:$0xff]
        %v2923 = vld [vmem:[%s2920 + $0x10] sm:$0xff]
        %v2924 = vld [vmem:[%s2920 + $0x18] sm:$0xff]
        %v2925 = vld [vmem:[%s2920 + $0x20] sm:$0xff]
        %v2926 = vld [vmem:[%s2920 + $0x28] sm:$0xff]
        %v2927 = vld [vmem:[%s2920 + $0x30] sm:$0xff]
        %v2928 = vld [vmem:[%s2920 + $0x38] sm:$0xff]
        %v2929 = vld [vmem:[%s2920 + $0x40] sm:$0xff]
        %v2930 = vld [vmem:[%s2920 + $0x48] sm:$0xff]
        %v2931 = vld [vmem:[%s2920 + $0x50] sm:$0xff]
        %v2932 = vld [vmem:[%s2920 + $0x58] sm:$0xff]
        %v2933 = vld [vmem:[%s2920 + $0x60] sm:$0xff]
        %v2934 = vld [vmem:[%s2920 + $0x68] sm:$0xff]
        %v2935 = vld [vmem:[%s2920 + $0x70] sm:$0xff]
        %v2936 = vld [vmem:[%s2920 + $0x78] sm:$0xff]
        %v2937 = vld [vmem:[%s2920 + $0x80] sm:$0xff]
        %v2938 = vld [vmem:[%s2920 + $0x88] sm:$0xff]
        %v2939 = vld [vmem:[%s2920 + $0x90] sm:$0xff]
        %v2940 = vld [vmem:[%s2920 + $0x98] sm:$0xff]
        %v2941 = vld [vmem:[%s2920 + $0xa0] sm:$0xff]
        %v2942 = vld [vmem:[%s2920 + $0xa8] sm:$0xff]
        %v2943 = vld [vmem:[%s2920 + $0xb0] sm:$0xff]
        %v2944 = vld [vmem:[%s2920 + $0xb8] sm:$0xff]
        %v2945 = vld [vmem:[%s2920 + $0xc0] sm:$0xff]
        %v2946 = vld [vmem:[%s2920 + $0xc8] sm:$0xff]
        %v2947 = vld [vmem:[%s2920 + $0xd0] sm:$0xff]
        %v2948 = vld [vmem:[%s2920 + $0xd8] sm:$0xff]
        %v2949 = vld [vmem:[%s2920 + $0xe0] sm:$0xff]
        %v2950 = vld [vmem:[%s2920 + $0xe8] sm:$0xff]
        %v2951 = vld [vmem:[%s2920 + $0xf0] sm:$0xff]
        %v2952 = vld [vmem:[%s2920 + $0xf8] sm:$0xff]
        %v2953 = vld [vmem:[%s2920 + $0x100] sm:$0xff]
        %v2954 = vld [vmem:[%s2920 + $0x108] sm:$0xff]
        %v2955 = vld [vmem:[%s2920 + $0x110] sm:$0xff]
        %v2956 = vld [vmem:[%s2920 + $0x118] sm:$0xff]
        %v2957 = vld [vmem:[%s2920 + $0x120] sm:$0xff]
        %v2958 = vld [vmem:[%s2920 + $0x128] sm:$0xff]
        %v2959 = vld [vmem:[%s2920 + $0x130] sm:$0xff]
        %v2960 = vld [vmem:[%s2920 + $0x138] sm:$0xff]
        %v2961 = vld [vmem:[%s2920 + $0x140] sm:$0xff]
        %v2962 = vld [vmem:[%s2920 + $0x148] sm:$0xff]
        %v2963 = vld [vmem:[%s2920 + $0x150] sm:$0xff]
        %v2964 = vld [vmem:[%s2920 + $0x158] sm:$0xff]
        %v2965 = vld [vmem:[%s2920 + $0x160] sm:$0xff]
        %v2966 = vld [vmem:[%s2920 + $0x168] sm:$0xff]
        %v2967 = vld [vmem:[%s2920 + $0x170] sm:$0xff]
        %v2968 = vld [vmem:[%s2920 + $0x178] sm:$0xff]
        %v2969 = vld [vmem:[%s2920 + $0x180] sm:$0xff]
        %v2970 = vld [vmem:[%s2920 + $0x188] sm:$0xff]
        %v2971 = vld [vmem:[%s2920 + $0x190] sm:$0xff]
        %v2972 = vld [vmem:[%s2920 + $0x198] sm:$0xff]
        %v2973 = vld [vmem:[%s2920 + $0x1a0] sm:$0xff]
        %v2974 = vld [vmem:[%s2920 + $0x1a8] sm:$0xff]
        %v2975 = vld [vmem:[%s2920 + $0x1b0] sm:$0xff]
        %v2976 = vld [vmem:[%s2920 + $0x1b8] sm:$0xff]
        %v2977 = vld [vmem:[%s2920 + $0x1c0] sm:$0xff]
        %v2978 = vld [vmem:[%s2920 + $0x1c8] sm:$0xff]
        %v2979 = vld [vmem:[%s2920 + $0x1d0] sm:$0xff]
        %v2980 = vld [vmem:[%s2920 + $0x1d8] sm:$0xff]
        %v2981 = vld [vmem:[%s2920 + $0x1e0] sm:$0xff]
        %v2982 = vld [vmem:[%s2920 + $0x1e8] sm:$0xff]
        %v2983 = vld [vmem:[%s2920 + $0x1f0] sm:$0xff]
        %v2984 = vld [vmem:[%s2920 + $0x1f8] sm:$0xff]
        %v2985 = vld [vmem:[%s2920 + $0x200] sm:$0xff]
        %v2986 = vld [vmem:[%s2920 + $0x208] sm:$0xff]
        %v2987 = vld [vmem:[%s2920 + $0x210] sm:$0xff]
        %v2988 = vld [vmem:[%s2920 + $0x218] sm:$0xff]
        %v2989 = vld [vmem:[%s2920 + $0x220] sm:$0xff]
        %v2990 = vld [vmem:[%s2920 + $0x228] sm:$0xff]
        %v2991 = vld [vmem:[%s2920 + $0x230] sm:$0xff]
        %v2992 = vld [vmem:[%s2920 + $0x238] sm:$0xff]
        %v2993 = vld [vmem:[%s2920 + $0x240] sm:$0xff]
        %v2994 = vld [vmem:[%s2920 + $0x248] sm:$0xff]
        %v2995 = vld [vmem:[%s2920 + $0x250] sm:$0xff]
        %v2996 = vld [vmem:[%s2920 + $0x258] sm:$0xff]
        %v2997 = vld [vmem:[%s2920 + $0x260] sm:$0xff]
        %v2998 = vld [vmem:[%s2920 + $0x268] sm:$0xff]
        %v2999 = vld [vmem:[%s2920 + $0x270] sm:$0xff]
        %v3000 = vld [vmem:[%s2920 + $0x278] sm:$0xff]
        %v3001 = vld [vmem:[%s2920 + $0x280] sm:$0xff]
        %v3002 = vld [vmem:[%s2920 + $0x288] sm:$0xff]
        %v3003 = vld [vmem:[%s2920 + $0x290] sm:$0xff]
        %v3004 = vld [vmem:[%s2920 + $0x298] sm:$0xff]
        %v3005 = vld [vmem:[%s2920 + $0x2a0] sm:$0xff]
        %v3006 = vld [vmem:[%s2920 + $0x2a8] sm:$0xff]
        %v3007 = vld [vmem:[%s2920 + $0x2b0] sm:$0xff]
        %v3008 = vld [vmem:[%s2920 + $0x2b8] sm:$0xff]
        %v3009 = vld [vmem:[%s2920 + $0x2c0] sm:$0xff]
        %v3010 = vld [vmem:[%s2920 + $0x2c8] sm:$0xff]
        %v3011 = vld [vmem:[%s2920 + $0x2d0] sm:$0xff]
        %v3012 = vld [vmem:[%s2920 + $0x2d8] sm:$0xff]
        %v3013 = vld [vmem:[%s2920 + $0x2e0] sm:$0xff]
        %v3014 = vld [vmem:[%s2920 + $0x2e8] sm:$0xff]
        %v3015 = vld [vmem:[%s2920 + $0x2f0] sm:$0xff]
        %v3016 = vld [vmem:[%s2920 + $0x2f8] sm:$0xff]
        %v3017 = vld [vmem:[%s2920 + $0x300] sm:$0xff]
        %v3018 = vld [vmem:[%s2920 + $0x308] sm:$0xff]
        %v3019 = vld [vmem:[%s2920 + $0x310] sm:$0xff]
        %v3020 = vld [vmem:[%s2920 + $0x318] sm:$0xff]
        %v3021 = vld [vmem:[%s2920 + $0x320] sm:$0xff]
        %v3022 = vld [vmem:[%s2920 + $0x328] sm:$0xff]
        %v3023 = vld [vmem:[%s2920 + $0x330] sm:$0xff]
        %v3024 = vld [vmem:[%s2920 + $0x338] sm:$0xff]
        %v3025 = vld [vmem:[%s2920 + $0x340] sm:$0xff]
        %v3026 = vld [vmem:[%s2920 + $0x348] sm:$0xff]
        %v3027 = vld [vmem:[%s2920 + $0x350] sm:$0xff]
        %v3028 = vld [vmem:[%s2920 + $0x358] sm:$0xff]
        %v3029 = vld [vmem:[%s2920 + $0x360] sm:$0xff]
        %v3030 = vld [vmem:[%s2920 + $0x368] sm:$0xff]
        %v3031 = vld [vmem:[%s2920 + $0x370] sm:$0xff]
        %v3032 = vld [vmem:[%s2920 + $0x378] sm:$0xff]
        %v3033 = vld [vmem:[%s2920 + $0x380] sm:$0xff]
        %v3034 = vld [vmem:[%s2920 + $0x388] sm:$0xff]
        %v3035 = vld [vmem:[%s2920 + $0x390] sm:$0xff]
        %v3036 = vld [vmem:[%s2920 + $0x398] sm:$0xff]
        %v3037 = vld [vmem:[%s2920 + $0x3a0] sm:$0xff]
        %v3038 = vld [vmem:[%s2920 + $0x3a8] sm:$0xff]
        %v3039 = vld [vmem:[%s2920 + $0x3b0] sm:$0xff]
        %v3040 = vld [vmem:[%s2920 + $0x3b8] sm:$0xff]
        %v3041 = vld [vmem:[%s2920 + $0x3c0] sm:$0xff]
        %v3042 = vld [vmem:[%s2920 + $0x3c8] sm:$0xff]
        %v3043 = vld [vmem:[%s2920 + $0x3d0] sm:$0xff]
        %v3044 = vld [vmem:[%s2920 + $0x3d8] sm:$0xff]
        %v3045 = vld [vmem:[%s2920 + $0x3e0] sm:$0xff]
        %v3046 = vld [vmem:[%s2920 + $0x3e8] sm:$0xff]
        %v3047 = vld [vmem:[%s2920 + $0x3f0] sm:$0xff]
        %v3048 = vld [vmem:[%s2920 + $0x3f8] sm:$0xff]
        %v3049 = vld [vmem:[%s2920 + $0x400] sm:$0xff]
        %v3050 = vld [vmem:[%s2920 + $0x408] sm:$0xff]
        %v3051 = vld [vmem:[%s2920 + $0x410] sm:$0xff]
        %v3052 = vld [vmem:[%s2920 + $0x418] sm:$0xff]
        %v3053 = vld [vmem:[%s2920 + $0x420] sm:$0xff]
        %v3054 = vld [vmem:[%s2920 + $0x428] sm:$0xff]
        %v3055 = vld [vmem:[%s2920 + $0x430] sm:$0xff]
        %v3056 = vld [vmem:[%s2920 + $0x438] sm:$0xff]
        %v3057 = vld [vmem:[%s2920 + $0x440] sm:$0xff]
        %v3058 = vld [vmem:[%s2920 + $0x448] sm:$0xff]
        %v3059 = vld [vmem:[%s2920 + $0x450] sm:$0xff]
        %v3060 = vld [vmem:[%s2920 + $0x458] sm:$0xff]
        %v3061 = vld [vmem:[%s2920 + $0x460] sm:$0xff]
        %v3062 = vld [vmem:[%s2920 + $0x468] sm:$0xff]
        %v3063 = vld [vmem:[%s2920 + $0x470] sm:$0xff]
        %v3064 = vld [vmem:[%s2920 + $0x478] sm:$0xff]
        %v3065 = vld [vmem:[%s2920 + $0x480] sm:$0xff]
        %v3066 = vld [vmem:[%s2920 + $0x488] sm:$0xff]
        %v3067 = vld [vmem:[%s2920 + $0x490] sm:$0xff]
        %v3068 = vld [vmem:[%s2920 + $0x498] sm:$0xff]
        %v3069 = vld [vmem:[%s2920 + $0x4a0] sm:$0xff]
        %v3070 = vld [vmem:[%s2920 + $0x4a8] sm:$0xff]
        %v3071 = vld [vmem:[%s2920 + $0x4b0] sm:$0xff]
        %v3072 = vld [vmem:[%s2920 + $0x4b8] sm:$0xff]
        %v3073 = vld [vmem:[%s2920 + $0x4c0] sm:$0xff]
        %v3074 = vld [vmem:[%s2920 + $0x4c8] sm:$0xff]
        %v3075 = vld [vmem:[%s2920 + $0x4d0] sm:$0xff]
        %v3076 = vld [vmem:[%s2920 + $0x4d8] sm:$0xff]
        %v3077 = vld [vmem:[%s2920 + $0x4e0] sm:$0xff]
        %v3078 = vld [vmem:[%s2920 + $0x4e8] sm:$0xff]
        %v3079 = vld [vmem:[%s2920 + $0x4f0] sm:$0xff]
        %v3080 = vld [vmem:[%s2920 + $0x4f8] sm:$0xff]
        %v3081 = vld [vmem:[%s2920 + $0x500] sm:$0xff]
        %v3082 = vld [vmem:[%s2920 + $0x508] sm:$0xff]
        %v3083 = vld [vmem:[%s2920 + $0x510] sm:$0xff]
        %v3084 = vld [vmem:[%s2920 + $0x518] sm:$0xff]
        %v3085 = vld [vmem:[%s2920 + $0x520] sm:$0xff]
        %v3086 = vld [vmem:[%s2920 + $0x528] sm:$0xff]
        %v3087 = vld [vmem:[%s2920 + $0x530] sm:$0xff]
        %v3088 = vld [vmem:[%s2920 + $0x538] sm:$0xff]
        %v3089 = vld [vmem:[%s2920 + $0x540] sm:$0xff]
        %v3090 = vld [vmem:[%s2920 + $0x548] sm:$0xff]
        %v3091 = vld [vmem:[%s2920 + $0x550] sm:$0xff]
        %v3092 = vld [vmem:[%s2920 + $0x558] sm:$0xff]
        %v3093 = vld [vmem:[%s2920 + $0x560] sm:$0xff]
        %v3094 = vld [vmem:[%s2920 + $0x568] sm:$0xff]
        %v3095 = vld [vmem:[%s2920 + $0x570] sm:$0xff]
        %v3096 = vld [vmem:[%s2920 + $0x578] sm:$0xff]
        %v3097 = vld [vmem:[%s2920 + $0x580] sm:$0xff]
        %v3098 = vld [vmem:[%s2920 + $0x588] sm:$0xff]
        %v3099 = vld [vmem:[%s2920 + $0x590] sm:$0xff]
        %v3100 = vld [vmem:[%s2920 + $0x598] sm:$0xff]
        %v3101 = vld [vmem:[%s2920 + $0x5a0] sm:$0xff]
        %v3102 = vld [vmem:[%s2920 + $0x5a8] sm:$0xff]
        %v3103 = vld [vmem:[%s2920 + $0x5b0] sm:$0xff]
        %v3104 = vld [vmem:[%s2920 + $0x5b8] sm:$0xff]
        %v3105 = vld [vmem:[%s2920 + $0x5c0] sm:$0xff]
        %v3106 = vld [vmem:[%s2920 + $0x5c8] sm:$0xff]
        %v3107 = vld [vmem:[%s2920 + $0x5d0] sm:$0xff]
        %v3108 = vld [vmem:[%s2920 + $0x5d8] sm:$0xff]
        %v3109 = vld [vmem:[%s2920 + $0x5e0] sm:$0xff]
        %v3110 = vld [vmem:[%s2920 + $0x5e8] sm:$0xff]
        %v3111 = vld [vmem:[%s2920 + $0x5f0] sm:$0xff]
        %v3112 = vld [vmem:[%s2920 + $0x5f8] sm:$0xff]
        %v3113 = vld [vmem:[%s2920 + $0x600] sm:$0xff]
        %v3114 = vld [vmem:[%s2920 + $0x608] sm:$0xff]
        %v3115 = vld [vmem:[%s2920 + $0x610] sm:$0xff]
        %v3116 = vld [vmem:[%s2920 + $0x618] sm:$0xff]
        %v3117 = vld [vmem:[%s2920 + $0x620] sm:$0xff]
        %v3118 = vld [vmem:[%s2920 + $0x628] sm:$0xff]
        %v3119 = vld [vmem:[%s2920 + $0x630] sm:$0xff]
        %v3120 = vld [vmem:[%s2920 + $0x638] sm:$0xff]
        %v3121 = vld [vmem:[%s2920 + $0x640] sm:$0xff]
        %v3122 = vld [vmem:[%s2920 + $0x648] sm:$0xff]
        %v3123 = vld [vmem:[%s2920 + $0x650] sm:$0xff]
        %v3124 = vld [vmem:[%s2920 + $0x658] sm:$0xff]
        %v3125 = vld [vmem:[%s2920 + $0x660] sm:$0xff]
        %v3126 = vld [vmem:[%s2920 + $0x668] sm:$0xff]
        %v3127 = vld [vmem:[%s2920 + $0x670] sm:$0xff]
        %v3128 = vld [vmem:[%s2920 + $0x678] sm:$0xff]
        %v3129 = vld [vmem:[%s2920 + $0x680] sm:$0xff]
        %v3130 = vld [vmem:[%s2920 + $0x688] sm:$0xff]
        %v3131 = vld [vmem:[%s2920 + $0x690] sm:$0xff]
        %v3132 = vld [vmem:[%s2920 + $0x698] sm:$0xff]
        %v3133 = vld [vmem:[%s2920 + $0x6a0] sm:$0xff]
        %v3134 = vld [vmem:[%s2920 + $0x6a8] sm:$0xff]
        %v3135 = vld [vmem:[%s2920 + $0x6b0] sm:$0xff]
        %v3136 = vld [vmem:[%s2920 + $0x6b8] sm:$0xff]
        %v3137 = vld [vmem:[%s2920 + $0x6c0] sm:$0xff]
        %v3138 = vld [vmem:[%s2920 + $0x6c8] sm:$0xff]
        %v3139 = vld [vmem:[%s2920 + $0x6d0] sm:$0xff]
        %v3140 = vld [vmem:[%s2920 + $0x6d8] sm:$0xff]
        %v3141 = vld [vmem:[%s2920 + $0x6e0] sm:$0xff]
        %v3142 = vld [vmem:[%s2920 + $0x6e8] sm:$0xff]
        %v3143 = vld [vmem:[%s2920 + $0x6f0] sm:$0xff]
        %v3144 = vld [vmem:[%s2920 + $0x6f8] sm:$0xff]
        %v3146 = vsel %vm2070, %v2915, 0
        %v3149 = vsel %vm2070, %v2918, 0
        %3151 = vmatpush.msra.mxu0 %v2981
        %3152 = vmatpush.msra.mxu0 %v2977
        %3153 = vmatpush.msra.mxu0 %v2973
        %3154 = vmatpush.msra.mxu0 %v2969
        %3155 = vmatpush.msra.mxu0 %v2965
        %3156 = vmatpush.msra.mxu0 %v2961
        %3157 = vmatpush.msra.mxu0 %v2957
        %3158 = vmatpush.msra.mxu0 %v2953
        %3159 = vmatpush.msra.mxu0 %v2949
        %3160 = vmatpush.msra.mxu0 %v2945
        %3161 = vmatpush.msra.mxu0 %v2941
        %3162 = vmatpush.msra.mxu0 %v2937
        %3163 = vmatpush.msra.mxu0 %v2933
        %3164 = vmatpush.msra.mxu0 %v2929
        %3165 = vmatpush.msra.mxu0 %v2925
        %3166 = vmatpush.msra.mxu0 %v2921
        %3167 = vmatmul.f32.gmra.mxu0 %v2846
        %v3168 = vpop.f32.mrf.mxu0
        %v3169 = vadd.f32 0.0, %v3168
        %3170 = vmatmul.f32.gmra.mxu0 %v2849
        %v3171 = vpop.f32.mrf.mxu0
        %v3172 = vadd.f32 0.0, %v3171
        %3173 = vdwg.mxu0
        %3174 = vmatpush.msra.mxu0 %v3045
        %3175 = vmatpush.msra.mxu0 %v3041
        %3176 = vmatpush.msra.mxu0 %v3037
        %3177 = vmatpush.msra.mxu0 %v3033
        %3178 = vmatpush.msra.mxu0 %v3029
        %3179 = vmatpush.msra.mxu0 %v3025
        %3180 = vmatpush.msra.mxu0 %v3021
        %3181 = vmatpush.msra.mxu0 %v3017
        %3182 = vmatpush.msra.mxu0 %v3013
        %3183 = vmatpush.msra.mxu0 %v3009
        %3184 = vmatpush.msra.mxu0 %v3005
        %3185 = vmatpush.msra.mxu0 %v3001
        %3186 = vmatpush.msra.mxu0 %v2997
        %3187 = vmatpush.msra.mxu0 %v2993
        %3188 = vmatpush.msra.mxu0 %v2989
        %3189 = vmatpush.msra.mxu0 %v2985
        %3190 = vmatmul.f32.gmra.mxu0 %v2869
        %v3191 = vpop.f32.mrf.mxu0
        %v3192 = vadd.f32 %v3169, %v3191
        %3193 = vmatmul.f32.gmra.mxu0 %v2872
        %v3194 = vpop.f32.mrf.mxu0
        %v3195 = vadd.f32 %v3172, %v3194
        %3196 = vdwg.mxu0
        %3197 = vmatpush.msra.mxu0 %v3109
        %3198 = vmatpush.msra.mxu0 %v3105
        %3199 = vmatpush.msra.mxu0 %v3101
        %3200 = vmatpush.msra.mxu0 %v3097
        %3201 = vmatpush.msra.mxu0 %v3093
        %3202 = vmatpush.msra.mxu0 %v3089
        %3203 = vmatpush.msra.mxu0 %v3085
        %3204 = vmatpush.msra.mxu0 %v3081
        %3205 = vmatpush.msra.mxu0 %v3077
        %3206 = vmatpush.msra.mxu0 %v3073
        %3207 = vmatpush.msra.mxu0 %v3069
        %3208 = vmatpush.msra.mxu0 %v3065
        %3209 = vmatpush.msra.mxu0 %v3061
        %3210 = vmatpush.msra.mxu0 %v3057
        %3211 = vmatpush.msra.mxu0 %v3053
        %3212 = vmatpush.msra.mxu0 %v3049
        %3213 = vmatmul.f32.gmra.mxu0 %v2892
        %v3214 = vpop.f32.mrf.mxu0
        %v3215 = vadd.f32 %v3192, %v3214
        %3216 = vmatmul.f32.gmra.mxu0 %v2895
        %v3217 = vpop.f32.mrf.mxu0
        %v3218 = vadd.f32 %v3195, %v3217
        %3219 = vdwg.mxu0
        %3220 = vmatpush.msra.mxu0 0.0
        %3221 = vmatpush.msra.mxu0 0.0
        %3222 = vmatpush.msra.mxu0 0.0
        %3223 = vmatpush.msra.mxu0 0.0
        %3224 = vmatpush.msra.mxu0 0.0
        %3225 = vmatpush.msra.mxu0 0.0
        %3226 = vmatpush.msra.mxu0 0.0
        %3227 = vmatpush.msra.mxu0 0.0
        %3228 = vmatpush.msra.mxu0 %v3141
        %3229 = vmatpush.msra.mxu0 %v3137
        %3230 = vmatpush.msra.mxu0 %v3133
        %3231 = vmatpush.msra.mxu0 %v3129
        %3232 = vmatpush.msra.mxu0 %v3125
        %3233 = vmatpush.msra.mxu0 %v3121
        %3234 = vmatpush.msra.mxu0 %v3117
        %3235 = vmatpush.msra.mxu0 %v3113
        %3236 = vmatmul.f32.gmra.mxu0 %v3146
        %v3237 = vpop.f32.mrf.mxu0
        %v3238 = vadd.f32 %v3215, %v3237
        %3239 = vmatmul.f32.gmra.mxu0 %v3149
        %v3240 = vpop.f32.mrf.mxu0
        %v3241 = vadd.f32 %v3218, %v3240
        %3242 = vdwg.mxu0
        %3243 = vmatpush.msra.mxu0 %v2982
        %3244 = vmatpush.msra.mxu0 %v2978
        %3245 = vmatpush.msra.mxu0 %v2974
        %3246 = vmatpush.msra.mxu0 %v2970
        %3247 = vmatpush.msra.mxu0 %v2966
        %3248 = vmatpush.msra.mxu0 %v2962
        %3249 = vmatpush.msra.mxu0 %v2958
        %3250 = vmatpush.msra.mxu0 %v2954
        %3251 = vmatpush.msra.mxu0 %v2950
        %3252 = vmatpush.msra.mxu0 %v2946
        %3253 = vmatpush.msra.mxu0 %v2942
        %3254 = vmatpush.msra.mxu0 %v2938
        %3255 = vmatpush.msra.mxu0 %v2934
        %3256 = vmatpush.msra.mxu0 %v2930
        %3257 = vmatpush.msra.mxu0 %v2926
        %3258 = vmatpush.msra.mxu0 %v2922
        %3259 = vmatmul.f32.gmra.mxu0 %v2846
        %v3260 = vpop.f32.mrf.mxu0
        %v3261 = vadd.f32 0.0, %v3260
        %3262 = vmatmul.f32.gmra.mxu0 %v2849
        %v3263 = vpop.f32.mrf.mxu0
        %v3264 = vadd.f32 0.0, %v3263
        %3265 = vdwg.mxu0
        %3266 = vmatpush.msra.mxu0 %v3046
        %3267 = vmatpush.msra.mxu0 %v3042
        %3268 = vmatpush.msra.mxu0 %v3038
        %3269 = vmatpush.msra.mxu0 %v3034
        %3270 = vmatpush.msra.mxu0 %v3030
        %3271 = vmatpush.msra.mxu0 %v3026
        %3272 = vmatpush.msra.mxu0 %v3022
        %3273 = vmatpush.msra.mxu0 %v3018
        %3274 = vmatpush.msra.mxu0 %v3014
        %3275 = vmatpush.msra.mxu0 %v3010
        %3276 = vmatpush.msra.mxu0 %v3006
        %3277 = vmatpush.msra.mxu0 %v3002
        %3278 = vmatpush.msra.mxu0 %v2998
        %3279 = vmatpush.msra.mxu0 %v2994
        %3280 = vmatpush.msra.mxu0 %v2990
        %3281 = vmatpush.msra.mxu0 %v2986
        %3282 = vmatmul.f32.gmra.mxu0 %v2869
        %v3283 = vpop.f32.mrf.mxu0
        %v3284 = vadd.f32 %v3261, %v3283
        %3285 = vmatmul.f32.gmra.mxu0 %v2872
        %v3286 = vpop.f32.mrf.mxu0
        %v3287 = vadd.f32 %v3264, %v3286
        %3288 = vdwg.mxu0
        %3289 = vmatpush.msra.mxu0 %v3110
        %3290 = vmatpush.msra.mxu0 %v3106
        %3291 = vmatpush.msra.mxu0 %v3102
        %3292 = vmatpush.msra.mxu0 %v3098
        %3293 = vmatpush.msra.mxu0 %v3094
        %3294 = vmatpush.msra.mxu0 %v3090
        %3295 = vmatpush.msra.mxu0 %v3086
        %3296 = vmatpush.msra.mxu0 %v3082
        %3297 = vmatpush.msra.mxu0 %v3078
        %3298 = vmatpush.msra.mxu0 %v3074
        %3299 = vmatpush.msra.mxu0 %v3070
        %3300 = vmatpush.msra.mxu0 %v3066
        %3301 = vmatpush.msra.mxu0 %v3062
        %3302 = vmatpush.msra.mxu0 %v3058
        %3303 = vmatpush.msra.mxu0 %v3054
        %3304 = vmatpush.msra.mxu0 %v3050
        %3305 = vmatmul.f32.gmra.mxu0 %v2892
        %v3306 = vpop.f32.mrf.mxu0
        %v3307 = vadd.f32 %v3284, %v3306
        %3308 = vmatmul.f32.gmra.mxu0 %v2895
        %v3309 = vpop.f32.mrf.mxu0
        %v3310 = vadd.f32 %v3287, %v3309
        %3311 = vdwg.mxu0
        %3312 = vmatpush.msra.mxu0 0.0
        %3313 = vmatpush.msra.mxu0 0.0
        %3314 = vmatpush.msra.mxu0 0.0
        %3315 = vmatpush.msra.mxu0 0.0
        %3316 = vmatpush.msra.mxu0 0.0
        %3317 = vmatpush.msra.mxu0 0.0
        %3318 = vmatpush.msra.mxu0 0.0
        %3319 = vmatpush.msra.mxu0 0.0
        %3320 = vmatpush.msra.mxu0 %v3142
        %3321 = vmatpush.msra.mxu0 %v3138
        %3322 = vmatpush.msra.mxu0 %v3134
        %3323 = vmatpush.msra.mxu0 %v3130
        %3324 = vmatpush.msra.mxu0 %v3126
        %3325 = vmatpush.msra.mxu0 %v3122
        %3326 = vmatpush.msra.mxu0 %v3118
        %3327 = vmatpush.msra.mxu0 %v3114
        %3328 = vmatmul.f32.gmra.mxu0 %v3146
        %v3329 = vpop.f32.mrf.mxu0
        %v3330 = vadd.f32 %v3307, %v3329
        %3331 = vmatmul.f32.gmra.mxu0 %v3149
        %v3332 = vpop.f32.mrf.mxu0
        %v3333 = vadd.f32 %v3310, %v3332
        %3334 = vdwg.mxu0
        %3335 = vmatpush.msra.mxu0 %v2983
        %3336 = vmatpush.msra.mxu0 %v2979
        %3337 = vmatpush.msra.mxu0 %v2975
        %3338 = vmatpush.msra.mxu0 %v2971
        %3339 = vmatpush.msra.mxu0 %v2967
        %3340 = vmatpush.msra.mxu0 %v2963
        %3341 = vmatpush.msra.mxu0 %v2959
        %3342 = vmatpush.msra.mxu0 %v2955
        %3343 = vmatpush.msra.mxu0 %v2951
        %3344 = vmatpush.msra.mxu0 %v2947
        %3345 = vmatpush.msra.mxu0 %v2943
        %3346 = vmatpush.msra.mxu0 %v2939
        %3347 = vmatpush.msra.mxu0 %v2935
        %3348 = vmatpush.msra.mxu0 %v2931
        %3349 = vmatpush.msra.mxu0 %v2927
        %3350 = vmatpush.msra.mxu0 %v2923
        %3351 = vmatmul.f32.gmra.mxu0 %v2846
        %v3352 = vpop.f32.mrf.mxu0
        %v3353 = vadd.f32 0.0, %v3352
        %3354 = vmatmul.f32.gmra.mxu0 %v2849
        %v3355 = vpop.f32.mrf.mxu0
        %v3356 = vadd.f32 0.0, %v3355
        %3357 = vdwg.mxu0
        %3358 = vmatpush.msra.mxu0 %v3047
        %3359 = vmatpush.msra.mxu0 %v3043
        %3360 = vmatpush.msra.mxu0 %v3039
        %3361 = vmatpush.msra.mxu0 %v3035
        %3362 = vmatpush.msra.mxu0 %v3031
        %3363 = vmatpush.msra.mxu0 %v3027
        %3364 = vmatpush.msra.mxu0 %v3023
        %3365 = vmatpush.msra.mxu0 %v3019
        %3366 = vmatpush.msra.mxu0 %v3015
        %3367 = vmatpush.msra.mxu0 %v3011
        %3368 = vmatpush.msra.mxu0 %v3007
        %3369 = vmatpush.msra.mxu0 %v3003
        %3370 = vmatpush.msra.mxu0 %v2999
        %3371 = vmatpush.msra.mxu0 %v2995
        %3372 = vmatpush.msra.mxu0 %v2991
        %3373 = vmatpush.msra.mxu0 %v2987
        %3374 = vmatmul.f32.gmra.mxu0 %v2869
        %v3375 = vpop.f32.mrf.mxu0
        %v3376 = vadd.f32 %v3353, %v3375
        %3377 = vmatmul.f32.gmra.mxu0 %v2872
        %v3378 = vpop.f32.mrf.mxu0
        %v3379 = vadd.f32 %v3356, %v3378
        %3380 = vdwg.mxu0
        %3381 = vmatpush.msra.mxu0 %v3111
        %3382 = vmatpush.msra.mxu0 %v3107
        %3383 = vmatpush.msra.mxu0 %v3103
        %3384 = vmatpush.msra.mxu0 %v3099
        %3385 = vmatpush.msra.mxu0 %v3095
        %3386 = vmatpush.msra.mxu0 %v3091
        %3387 = vmatpush.msra.mxu0 %v3087
        %3388 = vmatpush.msra.mxu0 %v3083
        %3389 = vmatpush.msra.mxu0 %v3079
        %3390 = vmatpush.msra.mxu0 %v3075
        %3391 = vmatpush.msra.mxu0 %v3071
        %3392 = vmatpush.msra.mxu0 %v3067
        %3393 = vmatpush.msra.mxu0 %v3063
        %3394 = vmatpush.msra.mxu0 %v3059
        %3395 = vmatpush.msra.mxu0 %v3055
        %3396 = vmatpush.msra.mxu0 %v3051
        %3397 = vmatmul.f32.gmra.mxu0 %v2892
        %v3398 = vpop.f32.mrf.mxu0
        %v3399 = vadd.f32 %v3376, %v3398
        %3400 = vmatmul.f32.gmra.mxu0 %v2895
        %v3401 = vpop.f32.mrf.mxu0
        %v3402 = vadd.f32 %v3379, %v3401
        %3403 = vdwg.mxu0
        %3404 = vmatpush.msra.mxu0 0.0
        %3405 = vmatpush.msra.mxu0 0.0
        %3406 = vmatpush.msra.mxu0 0.0
        %3407 = vmatpush.msra.mxu0 0.0
        %3408 = vmatpush.msra.mxu0 0.0
        %3409 = vmatpush.msra.mxu0 0.0
        %3410 = vmatpush.msra.mxu0 0.0
        %3411 = vmatpush.msra.mxu0 0.0
        %3412 = vmatpush.msra.mxu0 %v3143
        %3413 = vmatpush.msra.mxu0 %v3139
        %3414 = vmatpush.msra.mxu0 %v3135
        %3415 = vmatpush.msra.mxu0 %v3131
        %3416 = vmatpush.msra.mxu0 %v3127
        %3417 = vmatpush.msra.mxu0 %v3123
        %3418 = vmatpush.msra.mxu0 %v3119
        %3419 = vmatpush.msra.mxu0 %v3115
        %3420 = vmatmul.f32.gmra.mxu0 %v3146
        %v3421 = vpop.f32.mrf.mxu0
        %v3422 = vadd.f32 %v3399, %v3421
        %3423 = vmatmul.f32.gmra.mxu0 %v3149
        %v3424 = vpop.f32.mrf.mxu0
        %v3425 = vadd.f32 %v3402, %v3424
        %3426 = vdwg.mxu0
        %3427 = vmatpush.msra.mxu0 %v2984
        %3428 = vmatpush.msra.mxu0 %v2980
        %3429 = vmatpush.msra.mxu0 %v2976
        %3430 = vmatpush.msra.mxu0 %v2972
        %3431 = vmatpush.msra.mxu0 %v2968
        %3432 = vmatpush.msra.mxu0 %v2964
        %3433 = vmatpush.msra.mxu0 %v2960
        %3434 = vmatpush.msra.mxu0 %v2956
        %3435 = vmatpush.msra.mxu0 %v2952
        %3436 = vmatpush.msra.mxu0 %v2948
        %3437 = vmatpush.msra.mxu0 %v2944
        %3438 = vmatpush.msra.mxu0 %v2940
        %3439 = vmatpush.msra.mxu0 %v2936
        %3440 = vmatpush.msra.mxu0 %v2932
        %3441 = vmatpush.msra.mxu0 %v2928
        %3442 = vmatpush.msra.mxu0 %v2924
        %3443 = vmatmul.f32.gmra.mxu0 %v2846
        %v3444 = vpop.f32.mrf.mxu0
        %v3445 = vadd.f32 0.0, %v3444
        %3446 = vmatmul.f32.gmra.mxu0 %v2849
        %v3447 = vpop.f32.mrf.mxu0
        %v3448 = vadd.f32 0.0, %v3447
        %3449 = vdwg.mxu0
        %3450 = vmatpush.msra.mxu0 %v3048
        %3451 = vmatpush.msra.mxu0 %v3044
        %3452 = vmatpush.msra.mxu0 %v3040
        %3453 = vmatpush.msra.mxu0 %v3036
        %3454 = vmatpush.msra.mxu0 %v3032
        %3455 = vmatpush.msra.mxu0 %v3028
        %3456 = vmatpush.msra.mxu0 %v3024
        %3457 = vmatpush.msra.mxu0 %v3020
        %3458 = vmatpush.msra.mxu0 %v3016
        %3459 = vmatpush.msra.mxu0 %v3012
        %3460 = vmatpush.msra.mxu0 %v3008
        %3461 = vmatpush.msra.mxu0 %v3004
        %3462 = vmatpush.msra.mxu0 %v3000
        %3463 = vmatpush.msra.mxu0 %v2996
        %3464 = vmatpush.msra.mxu0 %v2992
        %3465 = vmatpush.msra.mxu0 %v2988
        %3466 = vmatmul.f32.gmra.mxu0 %v2869
        %v3467 = vpop.f32.mrf.mxu0
        %v3468 = vadd.f32 %v3445, %v3467
        %3469 = vmatmul.f32.gmra.mxu0 %v2872
        %v3470 = vpop.f32.mrf.mxu0
        %v3471 = vadd.f32 %v3448, %v3470
        %3472 = vdwg.mxu0
        %3473 = vmatpush.msra.mxu0 %v3112
        %3474 = vmatpush.msra.mxu0 %v3108
        %3475 = vmatpush.msra.mxu0 %v3104
        %3476 = vmatpush.msra.mxu0 %v3100
        %3477 = vmatpush.msra.mxu0 %v3096
        %3478 = vmatpush.msra.mxu0 %v3092
        %3479 = vmatpush.msra.mxu0 %v3088
        %3480 = vmatpush.msra.mxu0 %v3084
        %3481 = vmatpush.msra.mxu0 %v3080
        %3482 = vmatpush.msra.mxu0 %v3076
        %3483 = vmatpush.msra.mxu0 %v3072
        %3484 = vmatpush.msra.mxu0 %v3068
        %3485 = vmatpush.msra.mxu0 %v3064
        %3486 = vmatpush.msra.mxu0 %v3060
        %3487 = vmatpush.msra.mxu0 %v3056
        %3488 = vmatpush.msra.mxu0 %v3052
        %3489 = vmatmul.f32.gmra.mxu0 %v2892
        %v3490 = vpop.f32.mrf.mxu0
        %v3491 = vadd.f32 %v3468, %v3490
        %3492 = vmatmul.f32.gmra.mxu0 %v2895
        %v3493 = vpop.f32.mrf.mxu0
        %v3494 = vadd.f32 %v3471, %v3493
        %3495 = vdwg.mxu0
        %3496 = vmatpush.msra.mxu0 0.0
        %3497 = vmatpush.msra.mxu0 0.0
        %3498 = vmatpush.msra.mxu0 0.0
        %3499 = vmatpush.msra.mxu0 0.0
        %3500 = vmatpush.msra.mxu0 0.0
        %3501 = vmatpush.msra.mxu0 0.0
        %3502 = vmatpush.msra.mxu0 0.0
        %3503 = vmatpush.msra.mxu0 0.0
        %3504 = vmatpush.msra.mxu0 %v3144
        %3505 = vmatpush.msra.mxu0 %v3140
        %3506 = vmatpush.msra.mxu0 %v3136
        %3507 = vmatpush.msra.mxu0 %v3132
        %3508 = vmatpush.msra.mxu0 %v3128
        %3509 = vmatpush.msra.mxu0 %v3124
        %3510 = vmatpush.msra.mxu0 %v3120
        %3511 = vmatpush.msra.mxu0 %v3116
        %3512 = vmatmul.f32.gmra.mxu0 %v3146
        %v3513 = vpop.f32.mrf.mxu0
        %v3514 = vadd.f32 %v3491, %v3513
        %3515 = vmatmul.f32.gmra.mxu0 %v3149
        %v3516 = vpop.f32.mrf.mxu0
        %v3517 = vadd.f32 %v3494, %v3516
        %3518 = vdwg.mxu0
        %v3519 = vadd.f32 %v2538, %v3238
        %v3520 = vadd.f32 %v2630, %v3330
        %v3521 = vadd.f32 %v2722, %v3422
        %v3522 = vadd.f32 %v2814, %v3514
        %v3523 = vadd.f32 %v2541, %v3241
        %v3524 = vadd.f32 %v2633, %v3333
        %v3525 = vadd.f32 %v2725, %v3425
        %v3526 = vadd.f32 %v2817, %v3517
        %v3527 = vld [vmem:[#allocation11] sm:$0xf]
        %v3529 = vperm.slane %v3527, 0
        %v3530 = vperm.slane %v3527, 1
        %v3531 = vperm.slane %v3527, 2
        %v3532 = vperm.slane %v3527, 3
        %v3537 = vadd.f32 %v3519, %v3529
        %v3538 = vadd.f32 %v3520, %v3530
        %v3539 = vadd.f32 %v3521, %v3531
        %v3540 = vadd.f32 %v3522, %v3532
        %v3541 = vadd.f32 %v3523, %v3529
        %v3542 = vadd.f32 %v3524, %v3530
        %v3543 = vadd.f32 %v3525, %v3531
        %v3544 = vadd.f32 %v3526, %v3532
        %v3545 = vmax.f32 %v3537, 0.0
        %v3546 = vmax.f32 %v3538, 0.0
        %v3547 = vmax.f32 %v3539, 0.0
        %v3548 = vmax.f32 %v3540, 0.0
        %v3549 = vmax.f32 %v3541, 0.0
        %v3550 = vmax.f32 %v3542, 0.0
        %v3551 = vmax.f32 %v3543, 0.0
        %v3552 = vmax.f32 %v3544, 0.0
        %v3553 = vld [vmem:[#allocation13] sm:$0x7f]
        %v3555 = vsel %vm1408, %v3553, 0
        %v3558 = vsel %vm1415, %v3549, 0
        %v3561 = vsel %vm1415, %v3550, 0
        %v3564 = vsel %vm1415, %v3551, 0
        %v3567 = vsel %vm1415, %v3552, 0
        %3569 = vmatpush.msra.mxu0 0.0
        %3570 = vmatpush.msra.mxu0 0.0
        %3571 = vmatpush.msra.mxu0 0.0
        %3572 = vmatpush.msra.mxu0 0.0
        %3573 = vmatpush.msra.mxu0 0.0
        %3574 = vmatpush.msra.mxu0 0.0
        %3575 = vmatpush.msra.mxu0 0.0
        %3576 = vmatpush.msra.mxu0 0.0
        %3577 = vmatpush.msra.mxu0 0.0
        %3578 = vmatpush.msra.mxu0 0.0
        %3579 = vmatpush.msra.mxu0 0.0
        %3580 = vmatpush.msra.mxu0 0.0
        %3581 = vmatpush.msra.mxu0 0.0
        %3582 = vmatpush.msra.mxu0 0.0
        %3583 = vmatpush.msra.mxu0 %v3558
        %3584 = vmatpush.msra.mxu0 %v3545
        %3585 = vmatmul.f32.gmra.mxu0 %v3555
        %v3586 = vpop.f32.mrf.mxu0
        %v3587 = vadd.f32 0.0, %v3586
        %3588 = vdwg.mxu0
        %3589 = vmatpush.msra.mxu0 0.0
        %3590 = vmatpush.msra.mxu0 0.0
        %3591 = vmatpush.msra.mxu0 0.0
        %3592 = vmatpush.msra.mxu0 0.0
        %3593 = vmatpush.msra.mxu0 0.0
        %3594 = vmatpush.msra.mxu0 0.0
        %3595 = vmatpush.msra.mxu0 0.0
        %3596 = vmatpush.msra.mxu0 0.0
        %3597 = vmatpush.msra.mxu0 0.0
        %3598 = vmatpush.msra.mxu0 0.0
        %3599 = vmatpush.msra.mxu0 0.0
        %3600 = vmatpush.msra.mxu0 0.0
        %3601 = vmatpush.msra.mxu0 0.0
        %3602 = vmatpush.msra.mxu0 0.0
        %3603 = vmatpush.msra.mxu0 %v3561
        %3604 = vmatpush.msra.mxu0 %v3546
        %3605 = vmatmul.f32.gmra.mxu0 %v3555
        %v3606 = vpop.f32.mrf.mxu0
        %v3607 = vadd.f32 0.0, %v3606
        %3608 = vdwg.mxu0
        %3609 = vmatpush.msra.mxu0 0.0
        %3610 = vmatpush.msra.mxu0 0.0
        %3611 = vmatpush.msra.mxu0 0.0
        %3612 = vmatpush.msra.mxu0 0.0
        %3613 = vmatpush.msra.mxu0 0.0
        %3614 = vmatpush.msra.mxu0 0.0
        %3615 = vmatpush.msra.mxu0 0.0
        %3616 = vmatpush.msra.mxu0 0.0
        %3617 = vmatpush.msra.mxu0 0.0
        %3618 = vmatpush.msra.mxu0 0.0
        %3619 = vmatpush.msra.mxu0 0.0
        %3620 = vmatpush.msra.mxu0 0.0
        %3621 = vmatpush.msra.mxu0 0.0
        %3622 = vmatpush.msra.mxu0 0.0
        %3623 = vmatpush.msra.mxu0 %v3564
        %3624 = vmatpush.msra.mxu0 %v3547
        %3625 = vmatmul.f32.gmra.mxu0 %v3555
        %v3626 = vpop.f32.mrf.mxu0
        %v3627 = vadd.f32 0.0, %v3626
        %3628 = vdwg.mxu0
        %3629 = vmatpush.msra.mxu0 0.0
        %3630 = vmatpush.msra.mxu0 0.0
        %3631 = vmatpush.msra.mxu0 0.0
        %3632 = vmatpush.msra.mxu0 0.0
        %3633 = vmatpush.msra.mxu0 0.0
        %3634 = vmatpush.msra.mxu0 0.0
        %3635 = vmatpush.msra.mxu0 0.0
        %3636 = vmatpush.msra.mxu0 0.0
        %3637 = vmatpush.msra.mxu0 0.0
        %3638 = vmatpush.msra.mxu0 0.0
        %3639 = vmatpush.msra.mxu0 0.0
        %3640 = vmatpush.msra.mxu0 0.0
        %3641 = vmatpush.msra.mxu0 0.0
        %3642 = vmatpush.msra.mxu0 0.0
        %3643 = vmatpush.msra.mxu0 %v3567
        %3644 = vmatpush.msra.mxu0 %v3548
        %3645 = vmatmul.f32.gmra.mxu0 %v3555
        %v3646 = vpop.f32.mrf.mxu0
        %v3647 = vadd.f32 0.0, %v3646
        %3648 = vdwg.mxu0
        %v3649 = vld [vmem:[#allocation14] sm:$0xff]
        %v3650 = vld [vmem:[#allocation14 + $0x8] sm:$0xff]
        %v3651 = vld [vmem:[#allocation14 + $0x10] sm:$0xff]
        %v3652 = vld [vmem:[#allocation14 + $0x18] sm:$0xff]
        %v3653 = vld [vmem:[#allocation14 + $0x20] sm:$0xff]
        %v3654 = vld [vmem:[#allocation14 + $0x28] sm:$0xff]
        %v3655 = vld [vmem:[#allocation14 + $0x30] sm:$0xff]
        %v3656 = vld [vmem:[#allocation14 + $0x38] sm:$0xff]
        %v3657 = vld [vmem:[#allocation14 + $0x40] sm:$0xff]
        %v3658 = vld [vmem:[#allocation14 + $0x48] sm:$0xff]
        %v3659 = vld [vmem:[#allocation14 + $0x50] sm:$0xff]
        %v3660 = vld [vmem:[#allocation14 + $0x58] sm:$0xff]
        %v3661 = vld [vmem:[#allocation14 + $0x60] sm:$0xff]
        %v3662 = vld [vmem:[#allocation14 + $0x68] sm:$0xff]
        %v3663 = vld [vmem:[#allocation14 + $0x70] sm:$0xff]
        %v3664 = vld [vmem:[#allocation14 + $0x78] sm:$0xff]
        %v3665 = vld [vmem:[#allocation14 + $0x80] sm:$0xff]
        %v3666 = vld [vmem:[#allocation14 + $0x88] sm:$0xff]
        %v3667 = vld [vmem:[#allocation14 + $0x90] sm:$0xff]
        %v3668 = vld [vmem:[#allocation14 + $0x98] sm:$0xff]
        %v3669 = vld [vmem:[#allocation14 + $0xa0] sm:$0xff]
        %v3670 = vld [vmem:[#allocation14 + $0xa8] sm:$0xff]
        %v3671 = vld [vmem:[#allocation14 + $0xb0] sm:$0xff]
        %v3672 = vld [vmem:[#allocation14 + $0xb8] sm:$0xff]
        %v3673 = vld [vmem:[#allocation14 + $0xc0] sm:$0xff]
        %v3674 = vld [vmem:[#allocation14 + $0xc8] sm:$0xff]
        %v3675 = vld [vmem:[#allocation14 + $0xd0] sm:$0xff]
        %v3676 = vld [vmem:[#allocation14 + $0xd8] sm:$0xff]
        %v3677 = vld [vmem:[#allocation14 + $0xe0] sm:$0xff]
        %v3678 = vld [vmem:[#allocation14 + $0xe8] sm:$0xff]
        %v3679 = vld [vmem:[#allocation14 + $0xf0] sm:$0xff]
        %v3680 = vld [vmem:[#allocation14 + $0xf8] sm:$0xff]
        %v3681 = vld [vmem:[#allocation14 + $0x100] sm:$0xff]
        %v3682 = vld [vmem:[#allocation14 + $0x108] sm:$0xff]
        %v3683 = vld [vmem:[#allocation14 + $0x110] sm:$0xff]
        %v3684 = vld [vmem:[#allocation14 + $0x118] sm:$0xff]
        %v3685 = vld [vmem:[#allocation14 + $0x120] sm:$0xff]
        %v3686 = vld [vmem:[#allocation14 + $0x128] sm:$0xff]
        %v3687 = vld [vmem:[#allocation14 + $0x130] sm:$0xff]
        %v3688 = vld [vmem:[#allocation14 + $0x138] sm:$0xff]
        %v3689 = vld [vmem:[#allocation14 + $0x140] sm:$0xff]
        %v3690 = vld [vmem:[#allocation14 + $0x148] sm:$0xff]
        %v3691 = vld [vmem:[#allocation14 + $0x150] sm:$0xff]
        %v3692 = vld [vmem:[#allocation14 + $0x158] sm:$0xff]
        %v3693 = vld [vmem:[#allocation14 + $0x160] sm:$0xff]
        %v3694 = vld [vmem:[#allocation14 + $0x168] sm:$0xff]
        %v3695 = vld [vmem:[#allocation14 + $0x170] sm:$0xff]
        %v3696 = vld [vmem:[#allocation14 + $0x178] sm:$0xff]
        %v3697 = vld [vmem:[#allocation14 + $0x180] sm:$0xff]
        %v3698 = vld [vmem:[#allocation14 + $0x188] sm:$0xff]
        %v3699 = vld [vmem:[#allocation14 + $0x190] sm:$0xff]
        %v3700 = vld [vmem:[#allocation14 + $0x198] sm:$0xff]
        %v3701 = vld [vmem:[#allocation14 + $0x1a0] sm:$0xff]
        %v3702 = vld [vmem:[#allocation14 + $0x1a8] sm:$0xff]
        %v3703 = vld [vmem:[#allocation14 + $0x1b0] sm:$0xff]
        %v3704 = vld [vmem:[#allocation14 + $0x1b8] sm:$0xff]
        %v3705 = vld [vmem:[#allocation14 + $0x1c0] sm:$0xff]
        %v3706 = vld [vmem:[#allocation14 + $0x1c8] sm:$0xff]
        %v3707 = vld [vmem:[#allocation14 + $0x1d0] sm:$0xff]
        %v3708 = vld [vmem:[#allocation14 + $0x1d8] sm:$0xff]
        %v3709 = vld [vmem:[#allocation14 + $0x1e0] sm:$0xff]
        %v3710 = vld [vmem:[#allocation14 + $0x1e8] sm:$0xff]
        %v3711 = vld [vmem:[#allocation14 + $0x1f0] sm:$0xff]
        %v3712 = vld [vmem:[#allocation14 + $0x1f8] sm:$0xff]
        %v3713 = vld [vmem:[#allocation14 + $0x200] sm:$0xff]
        %v3714 = vld [vmem:[#allocation14 + $0x208] sm:$0xff]
        %v3715 = vld [vmem:[#allocation14 + $0x210] sm:$0xff]
        %v3716 = vld [vmem:[#allocation14 + $0x218] sm:$0xff]
        %v3717 = vld [vmem:[#allocation14 + $0x220] sm:$0xff]
        %v3718 = vld [vmem:[#allocation14 + $0x228] sm:$0xff]
        %v3719 = vld [vmem:[#allocation14 + $0x230] sm:$0xff]
        %v3720 = vld [vmem:[#allocation14 + $0x238] sm:$0xff]
        %v3721 = vld [vmem:[#allocation14 + $0x240] sm:$0xff]
        %v3722 = vld [vmem:[#allocation14 + $0x248] sm:$0xff]
        %v3723 = vld [vmem:[#allocation14 + $0x250] sm:$0xff]
        %v3724 = vld [vmem:[#allocation14 + $0x258] sm:$0xff]
        %v3725 = vld [vmem:[#allocation14 + $0x260] sm:$0xff]
        %v3726 = vld [vmem:[#allocation14 + $0x268] sm:$0xff]
        %v3727 = vld [vmem:[#allocation14 + $0x270] sm:$0xff]
        %v3728 = vld [vmem:[#allocation14 + $0x278] sm:$0xff]
        %v3729 = vld [vmem:[#allocation14 + $0x280] sm:$0xff]
        %v3730 = vld [vmem:[#allocation14 + $0x288] sm:$0xff]
        %v3731 = vld [vmem:[#allocation14 + $0x290] sm:$0xff]
        %v3732 = vld [vmem:[#allocation14 + $0x298] sm:$0xff]
        %v3733 = vld [vmem:[#allocation14 + $0x2a0] sm:$0xff]
        %v3734 = vld [vmem:[#allocation14 + $0x2a8] sm:$0xff]
        %v3735 = vld [vmem:[#allocation14 + $0x2b0] sm:$0xff]
        %v3736 = vld [vmem:[#allocation14 + $0x2b8] sm:$0xff]
        %v3737 = vld [vmem:[#allocation14 + $0x2c0] sm:$0xff]
        %v3738 = vld [vmem:[#allocation14 + $0x2c8] sm:$0xff]
        %v3739 = vld [vmem:[#allocation14 + $0x2d0] sm:$0xff]
        %v3740 = vld [vmem:[#allocation14 + $0x2d8] sm:$0xff]
        %v3741 = vld [vmem:[#allocation14 + $0x2e0] sm:$0xff]
        %v3742 = vld [vmem:[#allocation14 + $0x2e8] sm:$0xff]
        %v3743 = vld [vmem:[#allocation14 + $0x2f0] sm:$0xff]
        %v3744 = vld [vmem:[#allocation14 + $0x2f8] sm:$0xff]
        %v3745 = vld [vmem:[#allocation14 + $0x300] sm:$0xff]
        %v3746 = vld [vmem:[#allocation14 + $0x308] sm:$0xff]
        %v3747 = vld [vmem:[#allocation14 + $0x310] sm:$0xff]
        %v3748 = vld [vmem:[#allocation14 + $0x318] sm:$0xff]
        %v3749 = vld [vmem:[#allocation14 + $0x320] sm:$0xff]
        %v3750 = vld [vmem:[#allocation14 + $0x328] sm:$0xff]
        %v3751 = vld [vmem:[#allocation14 + $0x330] sm:$0xff]
        %v3752 = vld [vmem:[#allocation14 + $0x338] sm:$0xff]
        %v3753 = vld [vmem:[#allocation14 + $0x340] sm:$0xff]
        %v3754 = vld [vmem:[#allocation14 + $0x348] sm:$0xff]
        %v3755 = vld [vmem:[#allocation14 + $0x350] sm:$0xff]
        %v3756 = vld [vmem:[#allocation14 + $0x358] sm:$0xff]
        %v3757 = vld [vmem:[#allocation14 + $0x360] sm:$0xff]
        %v3758 = vld [vmem:[#allocation14 + $0x368] sm:$0xff]
        %v3759 = vld [vmem:[#allocation14 + $0x370] sm:$0xff]
        %v3760 = vld [vmem:[#allocation14 + $0x378] sm:$0xff]
        %v3761 = vld [vmem:[#allocation14 + $0x380] sm:$0xff]
        %v3762 = vld [vmem:[#allocation14 + $0x388] sm:$0xff]
        %v3763 = vld [vmem:[#allocation14 + $0x390] sm:$0xff]
        %v3764 = vld [vmem:[#allocation14 + $0x398] sm:$0xff]
        %v3765 = vld [vmem:[#allocation14 + $0x3a0] sm:$0xff]
        %v3766 = vld [vmem:[#allocation14 + $0x3a8] sm:$0xff]
        %v3767 = vld [vmem:[#allocation14 + $0x3b0] sm:$0xff]
        %v3768 = vld [vmem:[#allocation14 + $0x3b8] sm:$0xff]
        %v3769 = vld [vmem:[#allocation14 + $0x3c0] sm:$0xff]
        %v3770 = vld [vmem:[#allocation14 + $0x3c8] sm:$0xff]
        %v3771 = vld [vmem:[#allocation14 + $0x3d0] sm:$0xff]
        %v3772 = vld [vmem:[#allocation14 + $0x3d8] sm:$0xff]
        %v3773 = vld [vmem:[#allocation14 + $0x3e0] sm:$0xff]
        %v3774 = vld [vmem:[#allocation14 + $0x3e8] sm:$0xff]
        %v3775 = vld [vmem:[#allocation14 + $0x3f0] sm:$0xff]
        %v3776 = vld [vmem:[#allocation14 + $0x3f8] sm:$0xff]
        %v3777 = vld [vmem:[#allocation14 + $0x400] sm:$0xff]
        %v3778 = vld [vmem:[#allocation14 + $0x408] sm:$0xff]
        %v3779 = vld [vmem:[#allocation14 + $0x410] sm:$0xff]
        %v3780 = vld [vmem:[#allocation14 + $0x418] sm:$0xff]
        %v3781 = vld [vmem:[#allocation14 + $0x420] sm:$0xff]
        %v3782 = vld [vmem:[#allocation14 + $0x428] sm:$0xff]
        %v3783 = vld [vmem:[#allocation14 + $0x430] sm:$0xff]
        %v3784 = vld [vmem:[#allocation14 + $0x438] sm:$0xff]
        %v3785 = vld [vmem:[#allocation14 + $0x440] sm:$0xff]
        %v3786 = vld [vmem:[#allocation14 + $0x448] sm:$0xff]
        %v3787 = vld [vmem:[#allocation14 + $0x450] sm:$0xff]
        %v3788 = vld [vmem:[#allocation14 + $0x458] sm:$0xff]
        %v3789 = vld [vmem:[#allocation14 + $0x460] sm:$0xff]
        %v3790 = vld [vmem:[#allocation14 + $0x468] sm:$0xff]
        %v3791 = vld [vmem:[#allocation14 + $0x470] sm:$0xff]
        %v3792 = vld [vmem:[#allocation14 + $0x478] sm:$0xff]
        %v3793 = vld [vmem:[#allocation14 + $0x480] sm:$0xff]
        %v3794 = vld [vmem:[#allocation14 + $0x488] sm:$0xff]
        %v3795 = vld [vmem:[#allocation14 + $0x490] sm:$0xff]
        %v3796 = vld [vmem:[#allocation14 + $0x498] sm:$0xff]
        %v3797 = vld [vmem:[#allocation14 + $0x4a0] sm:$0xff]
        %v3798 = vld [vmem:[#allocation14 + $0x4a8] sm:$0xff]
        %v3799 = vld [vmem:[#allocation14 + $0x4b0] sm:$0xff]
        %v3800 = vld [vmem:[#allocation14 + $0x4b8] sm:$0xff]
        %v3801 = vld [vmem:[#allocation14 + $0x4c0] sm:$0xff]
        %v3802 = vld [vmem:[#allocation14 + $0x4c8] sm:$0xff]
        %v3803 = vld [vmem:[#allocation14 + $0x4d0] sm:$0xff]
        %v3804 = vld [vmem:[#allocation14 + $0x4d8] sm:$0xff]
        %v3805 = vld [vmem:[#allocation14 + $0x4e0] sm:$0xff]
        %v3806 = vld [vmem:[#allocation14 + $0x4e8] sm:$0xff]
        %v3807 = vld [vmem:[#allocation14 + $0x4f0] sm:$0xff]
        %v3808 = vld [vmem:[#allocation14 + $0x4f8] sm:$0xff]
        %v3809 = vld [vmem:[#allocation14 + $0x500] sm:$0xff]
        %v3810 = vld [vmem:[#allocation14 + $0x508] sm:$0xff]
        %v3811 = vld [vmem:[#allocation14 + $0x510] sm:$0xff]
        %v3812 = vld [vmem:[#allocation14 + $0x518] sm:$0xff]
        %v3813 = vld [vmem:[#allocation14 + $0x520] sm:$0xff]
        %v3814 = vld [vmem:[#allocation14 + $0x528] sm:$0xff]
        %v3815 = vld [vmem:[#allocation14 + $0x530] sm:$0xff]
        %v3816 = vld [vmem:[#allocation14 + $0x538] sm:$0xff]
        %v3817 = vld [vmem:[#allocation14 + $0x540] sm:$0xff]
        %v3818 = vld [vmem:[#allocation14 + $0x548] sm:$0xff]
        %v3819 = vld [vmem:[#allocation14 + $0x550] sm:$0xff]
        %v3820 = vld [vmem:[#allocation14 + $0x558] sm:$0xff]
        %v3821 = vld [vmem:[#allocation14 + $0x560] sm:$0xff]
        %v3822 = vld [vmem:[#allocation14 + $0x568] sm:$0xff]
        %v3823 = vld [vmem:[#allocation14 + $0x570] sm:$0xff]
        %v3824 = vld [vmem:[#allocation14 + $0x578] sm:$0xff]
        %v3825 = vld [vmem:[#allocation14 + $0x580] sm:$0xff]
        %v3826 = vld [vmem:[#allocation14 + $0x588] sm:$0xff]
        %v3827 = vld [vmem:[#allocation14 + $0x590] sm:$0xff]
        %v3828 = vld [vmem:[#allocation14 + $0x598] sm:$0xff]
        %v3829 = vld [vmem:[#allocation14 + $0x5a0] sm:$0xff]
        %v3830 = vld [vmem:[#allocation14 + $0x5a8] sm:$0xff]
        %v3831 = vld [vmem:[#allocation14 + $0x5b0] sm:$0xff]
        %v3832 = vld [vmem:[#allocation14 + $0x5b8] sm:$0xff]
        %v3833 = vld [vmem:[#allocation14 + $0x5c0] sm:$0xff]
        %v3834 = vld [vmem:[#allocation14 + $0x5c8] sm:$0xff]
        %v3835 = vld [vmem:[#allocation14 + $0x5d0] sm:$0xff]
        %v3836 = vld [vmem:[#allocation14 + $0x5d8] sm:$0xff]
        %v3837 = vld [vmem:[#allocation14 + $0x5e0] sm:$0xff]
        %v3838 = vld [vmem:[#allocation14 + $0x5e8] sm:$0xff]
        %v3839 = vld [vmem:[#allocation14 + $0x5f0] sm:$0xff]
        %v3840 = vld [vmem:[#allocation14 + $0x5f8] sm:$0xff]
        %v3841 = vld [vmem:[#allocation14 + $0x600] sm:$0xff]
        %v3842 = vld [vmem:[#allocation14 + $0x608] sm:$0xff]
        %v3843 = vld [vmem:[#allocation14 + $0x610] sm:$0xff]
        %v3844 = vld [vmem:[#allocation14 + $0x618] sm:$0xff]
        %v3845 = vld [vmem:[#allocation14 + $0x620] sm:$0xff]
        %v3846 = vld [vmem:[#allocation14 + $0x628] sm:$0xff]
        %v3847 = vld [vmem:[#allocation14 + $0x630] sm:$0xff]
        %v3848 = vld [vmem:[#allocation14 + $0x638] sm:$0xff]
        %v3849 = vld [vmem:[#allocation14 + $0x640] sm:$0xff]
        %v3850 = vld [vmem:[#allocation14 + $0x648] sm:$0xff]
        %v3851 = vld [vmem:[#allocation14 + $0x650] sm:$0xff]
        %v3852 = vld [vmem:[#allocation14 + $0x658] sm:$0xff]
        %v3853 = vld [vmem:[#allocation14 + $0x660] sm:$0xff]
        %v3854 = vld [vmem:[#allocation14 + $0x668] sm:$0xff]
        %v3855 = vld [vmem:[#allocation14 + $0x670] sm:$0xff]
        %v3856 = vld [vmem:[#allocation14 + $0x678] sm:$0xff]
        %v3857 = vld [vmem:[#allocation14 + $0x680] sm:$0xff]
        %v3858 = vld [vmem:[#allocation14 + $0x688] sm:$0xff]
        %v3859 = vld [vmem:[#allocation14 + $0x690] sm:$0xff]
        %v3860 = vld [vmem:[#allocation14 + $0x698] sm:$0xff]
        %v3861 = vld [vmem:[#allocation14 + $0x6a0] sm:$0xff]
        %v3862 = vld [vmem:[#allocation14 + $0x6a8] sm:$0xff]
        %v3863 = vld [vmem:[#allocation14 + $0x6b0] sm:$0xff]
        %v3864 = vld [vmem:[#allocation14 + $0x6b8] sm:$0xff]
        %v3865 = vld [vmem:[#allocation14 + $0x6c0] sm:$0xff]
        %v3866 = vld [vmem:[#allocation14 + $0x6c8] sm:$0xff]
        %v3867 = vld [vmem:[#allocation14 + $0x6d0] sm:$0xff]
        %v3868 = vld [vmem:[#allocation14 + $0x6d8] sm:$0xff]
        %v3869 = vld [vmem:[#allocation14 + $0x6e0] sm:$0xff]
        %v3870 = vld [vmem:[#allocation14 + $0x6e8] sm:$0xff]
        %v3871 = vld [vmem:[#allocation14 + $0x6f0] sm:$0xff]
        %v3872 = vld [vmem:[#allocation14 + $0x6f8] sm:$0xff]
        %s3873 = scalar_lea.vmem [#allocation13], 8
        %v3874 = vld [vmem:[%s3873] sm:$0x7f]
        %v3876 = vsel %vm1408, %v3874, 0
        %3878 = vmatpush.msra.mxu0 0.0
        %3879 = vmatpush.msra.mxu0 0.0
        %3880 = vmatpush.msra.mxu0 0.0
        %3881 = vmatpush.msra.mxu0 0.0
        %3882 = vmatpush.msra.mxu0 0.0
        %3883 = vmatpush.msra.mxu0 0.0
        %3884 = vmatpush.msra.mxu0 0.0
        %3885 = vmatpush.msra.mxu0 0.0
        %3886 = vmatpush.msra.mxu0 0.0
        %3887 = vmatpush.msra.mxu0 0.0
        %3888 = vmatpush.msra.mxu0 0.0
        %3889 = vmatpush.msra.mxu0 0.0
        %3890 = vmatpush.msra.mxu0 0.0
        %3891 = vmatpush.msra.mxu0 0.0
        %3892 = vmatpush.msra.mxu0 %v3558
        %3893 = vmatpush.msra.mxu0 %v3545
        %3894 = vmatmul.f32.gmra.mxu0 %v3876
        %v3895 = vpop.f32.mrf.mxu0
        %v3896 = vadd.f32 0.0, %v3895
        %3897 = vdwg.mxu0
        %3898 = vmatpush.msra.mxu0 0.0
        %3899 = vmatpush.msra.mxu0 0.0
        %3900 = vmatpush.msra.mxu0 0.0
        %3901 = vmatpush.msra.mxu0 0.0
        %3902 = vmatpush.msra.mxu0 0.0
        %3903 = vmatpush.msra.mxu0 0.0
        %3904 = vmatpush.msra.mxu0 0.0
        %3905 = vmatpush.msra.mxu0 0.0
        %3906 = vmatpush.msra.mxu0 0.0
        %3907 = vmatpush.msra.mxu0 0.0
        %3908 = vmatpush.msra.mxu0 0.0
        %3909 = vmatpush.msra.mxu0 0.0
        %3910 = vmatpush.msra.mxu0 0.0
        %3911 = vmatpush.msra.mxu0 0.0
        %3912 = vmatpush.msra.mxu0 %v3561
        %3913 = vmatpush.msra.mxu0 %v3546
        %3914 = vmatmul.f32.gmra.mxu0 %v3876
        %v3915 = vpop.f32.mrf.mxu0
        %v3916 = vadd.f32 0.0, %v3915
        %3917 = vdwg.mxu0
        %3918 = vmatpush.msra.mxu0 0.0
        %3919 = vmatpush.msra.mxu0 0.0
        %3920 = vmatpush.msra.mxu0 0.0
        %3921 = vmatpush.msra.mxu0 0.0
        %3922 = vmatpush.msra.mxu0 0.0
        %3923 = vmatpush.msra.mxu0 0.0
        %3924 = vmatpush.msra.mxu0 0.0
        %3925 = vmatpush.msra.mxu0 0.0
        %3926 = vmatpush.msra.mxu0 0.0
        %3927 = vmatpush.msra.mxu0 0.0
        %3928 = vmatpush.msra.mxu0 0.0
        %3929 = vmatpush.msra.mxu0 0.0
        %3930 = vmatpush.msra.mxu0 0.0
        %3931 = vmatpush.msra.mxu0 0.0
        %3932 = vmatpush.msra.mxu0 %v3564
        %3933 = vmatpush.msra.mxu0 %v3547
        %3934 = vmatmul.f32.gmra.mxu0 %v3876
        %v3935 = vpop.f32.mrf.mxu0
        %v3936 = vadd.f32 0.0, %v3935
        %3937 = vdwg.mxu0
        %3938 = vmatpush.msra.mxu0 0.0
        %3939 = vmatpush.msra.mxu0 0.0
        %3940 = vmatpush.msra.mxu0 0.0
        %3941 = vmatpush.msra.mxu0 0.0
        %3942 = vmatpush.msra.mxu0 0.0
        %3943 = vmatpush.msra.mxu0 0.0
        %3944 = vmatpush.msra.mxu0 0.0
        %3945 = vmatpush.msra.mxu0 0.0
        %3946 = vmatpush.msra.mxu0 0.0
        %3947 = vmatpush.msra.mxu0 0.0
        %3948 = vmatpush.msra.mxu0 0.0
        %3949 = vmatpush.msra.mxu0 0.0
        %3950 = vmatpush.msra.mxu0 0.0
        %3951 = vmatpush.msra.mxu0 0.0
        %3952 = vmatpush.msra.mxu0 %v3567
        %3953 = vmatpush.msra.mxu0 %v3548
        %3954 = vmatmul.f32.gmra.mxu0 %v3876
        %v3955 = vpop.f32.mrf.mxu0
        %v3956 = vadd.f32 0.0, %v3955
        %3957 = vdwg.mxu0
        %s3958 = scalar_lea.vmem [#allocation14], 1792
        %v3959 = vld [vmem:[%s3958] sm:$0xff]
        %v3960 = vld [vmem:[%s3958 + $0x8] sm:$0xff]
        %v3961 = vld [vmem:[%s3958 + $0x10] sm:$0xff]
        %v3962 = vld [vmem:[%s3958 + $0x18] sm:$0xff]
        %v3963 = vld [vmem:[%s3958 + $0x20] sm:$0xff]
        %v3964 = vld [vmem:[%s3958 + $0x28] sm:$0xff]
        %v3965 = vld [vmem:[%s3958 + $0x30] sm:$0xff]
        %v3966 = vld [vmem:[%s3958 + $0x38] sm:$0xff]
        %v3967 = vld [vmem:[%s3958 + $0x40] sm:$0xff]
        %v3968 = vld [vmem:[%s3958 + $0x48] sm:$0xff]
        %v3969 = vld [vmem:[%s3958 + $0x50] sm:$0xff]
        %v3970 = vld [vmem:[%s3958 + $0x58] sm:$0xff]
        %v3971 = vld [vmem:[%s3958 + $0x60] sm:$0xff]
        %v3972 = vld [vmem:[%s3958 + $0x68] sm:$0xff]
        %v3973 = vld [vmem:[%s3958 + $0x70] sm:$0xff]
        %v3974 = vld [vmem:[%s3958 + $0x78] sm:$0xff]
        %v3975 = vld [vmem:[%s3958 + $0x80] sm:$0xff]
        %v3976 = vld [vmem:[%s3958 + $0x88] sm:$0xff]
        %v3977 = vld [vmem:[%s3958 + $0x90] sm:$0xff]
        %v3978 = vld [vmem:[%s3958 + $0x98] sm:$0xff]
        %v3979 = vld [vmem:[%s3958 + $0xa0] sm:$0xff]
        %v3980 = vld [vmem:[%s3958 + $0xa8] sm:$0xff]
        %v3981 = vld [vmem:[%s3958 + $0xb0] sm:$0xff]
        %v3982 = vld [vmem:[%s3958 + $0xb8] sm:$0xff]
        %v3983 = vld [vmem:[%s3958 + $0xc0] sm:$0xff]
        %v3984 = vld [vmem:[%s3958 + $0xc8] sm:$0xff]
        %v3985 = vld [vmem:[%s3958 + $0xd0] sm:$0xff]
        %v3986 = vld [vmem:[%s3958 + $0xd8] sm:$0xff]
        %v3987 = vld [vmem:[%s3958 + $0xe0] sm:$0xff]
        %v3988 = vld [vmem:[%s3958 + $0xe8] sm:$0xff]
        %v3989 = vld [vmem:[%s3958 + $0xf0] sm:$0xff]
        %v3990 = vld [vmem:[%s3958 + $0xf8] sm:$0xff]
        %v3991 = vld [vmem:[%s3958 + $0x100] sm:$0xff]
        %v3992 = vld [vmem:[%s3958 + $0x108] sm:$0xff]
        %v3993 = vld [vmem:[%s3958 + $0x110] sm:$0xff]
        %v3994 = vld [vmem:[%s3958 + $0x118] sm:$0xff]
        %v3995 = vld [vmem:[%s3958 + $0x120] sm:$0xff]
        %v3996 = vld [vmem:[%s3958 + $0x128] sm:$0xff]
        %v3997 = vld [vmem:[%s3958 + $0x130] sm:$0xff]
        %v3998 = vld [vmem:[%s3958 + $0x138] sm:$0xff]
        %v3999 = vld [vmem:[%s3958 + $0x140] sm:$0xff]
        %v4000 = vld [vmem:[%s3958 + $0x148] sm:$0xff]
        %v4001 = vld [vmem:[%s3958 + $0x150] sm:$0xff]
        %v4002 = vld [vmem:[%s3958 + $0x158] sm:$0xff]
        %v4003 = vld [vmem:[%s3958 + $0x160] sm:$0xff]
        %v4004 = vld [vmem:[%s3958 + $0x168] sm:$0xff]
        %v4005 = vld [vmem:[%s3958 + $0x170] sm:$0xff]
        %v4006 = vld [vmem:[%s3958 + $0x178] sm:$0xff]
        %v4007 = vld [vmem:[%s3958 + $0x180] sm:$0xff]
        %v4008 = vld [vmem:[%s3958 + $0x188] sm:$0xff]
        %v4009 = vld [vmem:[%s3958 + $0x190] sm:$0xff]
        %v4010 = vld [vmem:[%s3958 + $0x198] sm:$0xff]
        %v4011 = vld [vmem:[%s3958 + $0x1a0] sm:$0xff]
        %v4012 = vld [vmem:[%s3958 + $0x1a8] sm:$0xff]
        %v4013 = vld [vmem:[%s3958 + $0x1b0] sm:$0xff]
        %v4014 = vld [vmem:[%s3958 + $0x1b8] sm:$0xff]
        %v4015 = vld [vmem:[%s3958 + $0x1c0] sm:$0xff]
        %v4016 = vld [vmem:[%s3958 + $0x1c8] sm:$0xff]
        %v4017 = vld [vmem:[%s3958 + $0x1d0] sm:$0xff]
        %v4018 = vld [vmem:[%s3958 + $0x1d8] sm:$0xff]
        %v4019 = vld [vmem:[%s3958 + $0x1e0] sm:$0xff]
        %v4020 = vld [vmem:[%s3958 + $0x1e8] sm:$0xff]
        %v4021 = vld [vmem:[%s3958 + $0x1f0] sm:$0xff]
        %v4022 = vld [vmem:[%s3958 + $0x1f8] sm:$0xff]
        %v4023 = vld [vmem:[%s3958 + $0x200] sm:$0xff]
        %v4024 = vld [vmem:[%s3958 + $0x208] sm:$0xff]
        %v4025 = vld [vmem:[%s3958 + $0x210] sm:$0xff]
        %v4026 = vld [vmem:[%s3958 + $0x218] sm:$0xff]
        %v4027 = vld [vmem:[%s3958 + $0x220] sm:$0xff]
        %v4028 = vld [vmem:[%s3958 + $0x228] sm:$0xff]
        %v4029 = vld [vmem:[%s3958 + $0x230] sm:$0xff]
        %v4030 = vld [vmem:[%s3958 + $0x238] sm:$0xff]
        %v4031 = vld [vmem:[%s3958 + $0x240] sm:$0xff]
        %v4032 = vld [vmem:[%s3958 + $0x248] sm:$0xff]
        %v4033 = vld [vmem:[%s3958 + $0x250] sm:$0xff]
        %v4034 = vld [vmem:[%s3958 + $0x258] sm:$0xff]
        %v4035 = vld [vmem:[%s3958 + $0x260] sm:$0xff]
        %v4036 = vld [vmem:[%s3958 + $0x268] sm:$0xff]
        %v4037 = vld [vmem:[%s3958 + $0x270] sm:$0xff]
        %v4038 = vld [vmem:[%s3958 + $0x278] sm:$0xff]
        %v4039 = vld [vmem:[%s3958 + $0x280] sm:$0xff]
        %v4040 = vld [vmem:[%s3958 + $0x288] sm:$0xff]
        %v4041 = vld [vmem:[%s3958 + $0x290] sm:$0xff]
        %v4042 = vld [vmem:[%s3958 + $0x298] sm:$0xff]
        %v4043 = vld [vmem:[%s3958 + $0x2a0] sm:$0xff]
        %v4044 = vld [vmem:[%s3958 + $0x2a8] sm:$0xff]
        %v4045 = vld [vmem:[%s3958 + $0x2b0] sm:$0xff]
        %v4046 = vld [vmem:[%s3958 + $0x2b8] sm:$0xff]
        %v4047 = vld [vmem:[%s3958 + $0x2c0] sm:$0xff]
        %v4048 = vld [vmem:[%s3958 + $0x2c8] sm:$0xff]
        %v4049 = vld [vmem:[%s3958 + $0x2d0] sm:$0xff]
        %v4050 = vld [vmem:[%s3958 + $0x2d8] sm:$0xff]
        %v4051 = vld [vmem:[%s3958 + $0x2e0] sm:$0xff]
        %v4052 = vld [vmem:[%s3958 + $0x2e8] sm:$0xff]
        %v4053 = vld [vmem:[%s3958 + $0x2f0] sm:$0xff]
        %v4054 = vld [vmem:[%s3958 + $0x2f8] sm:$0xff]
        %v4055 = vld [vmem:[%s3958 + $0x300] sm:$0xff]
        %v4056 = vld [vmem:[%s3958 + $0x308] sm:$0xff]
        %v4057 = vld [vmem:[%s3958 + $0x310] sm:$0xff]
        %v4058 = vld [vmem:[%s3958 + $0x318] sm:$0xff]
        %v4059 = vld [vmem:[%s3958 + $0x320] sm:$0xff]
        %v4060 = vld [vmem:[%s3958 + $0x328] sm:$0xff]
        %v4061 = vld [vmem:[%s3958 + $0x330] sm:$0xff]
        %v4062 = vld [vmem:[%s3958 + $0x338] sm:$0xff]
        %v4063 = vld [vmem:[%s3958 + $0x340] sm:$0xff]
        %v4064 = vld [vmem:[%s3958 + $0x348] sm:$0xff]
        %v4065 = vld [vmem:[%s3958 + $0x350] sm:$0xff]
        %v4066 = vld [vmem:[%s3958 + $0x358] sm:$0xff]
        %v4067 = vld [vmem:[%s3958 + $0x360] sm:$0xff]
        %v4068 = vld [vmem:[%s3958 + $0x368] sm:$0xff]
        %v4069 = vld [vmem:[%s3958 + $0x370] sm:$0xff]
        %v4070 = vld [vmem:[%s3958 + $0x378] sm:$0xff]
        %v4071 = vld [vmem:[%s3958 + $0x380] sm:$0xff]
        %v4072 = vld [vmem:[%s3958 + $0x388] sm:$0xff]
        %v4073 = vld [vmem:[%s3958 + $0x390] sm:$0xff]
        %v4074 = vld [vmem:[%s3958 + $0x398] sm:$0xff]
        %v4075 = vld [vmem:[%s3958 + $0x3a0] sm:$0xff]
        %v4076 = vld [vmem:[%s3958 + $0x3a8] sm:$0xff]
        %v4077 = vld [vmem:[%s3958 + $0x3b0] sm:$0xff]
        %v4078 = vld [vmem:[%s3958 + $0x3b8] sm:$0xff]
        %v4079 = vld [vmem:[%s3958 + $0x3c0] sm:$0xff]
        %v4080 = vld [vmem:[%s3958 + $0x3c8] sm:$0xff]
        %v4081 = vld [vmem:[%s3958 + $0x3d0] sm:$0xff]
        %v4082 = vld [vmem:[%s3958 + $0x3d8] sm:$0xff]
        %v4083 = vld [vmem:[%s3958 + $0x3e0] sm:$0xff]
        %v4084 = vld [vmem:[%s3958 + $0x3e8] sm:$0xff]
        %v4085 = vld [vmem:[%s3958 + $0x3f0] sm:$0xff]
        %v4086 = vld [vmem:[%s3958 + $0x3f8] sm:$0xff]
        %v4087 = vld [vmem:[%s3958 + $0x400] sm:$0xff]
        %v4088 = vld [vmem:[%s3958 + $0x408] sm:$0xff]
        %v4089 = vld [vmem:[%s3958 + $0x410] sm:$0xff]
        %v4090 = vld [vmem:[%s3958 + $0x418] sm:$0xff]
        %v4091 = vld [vmem:[%s3958 + $0x420] sm:$0xff]
        %v4092 = vld [vmem:[%s3958 + $0x428] sm:$0xff]
        %v4093 = vld [vmem:[%s3958 + $0x430] sm:$0xff]
        %v4094 = vld [vmem:[%s3958 + $0x438] sm:$0xff]
        %v4095 = vld [vmem:[%s3958 + $0x440] sm:$0xff]
        %v4096 = vld [vmem:[%s3958 + $0x448] sm:$0xff]
        %v4097 = vld [vmem:[%s3958 + $0x450] sm:$0xff]
        %v4098 = vld [vmem:[%s3958 + $0x458] sm:$0xff]
        %v4099 = vld [vmem:[%s3958 + $0x460] sm:$0xff]
        %v4100 = vld [vmem:[%s3958 + $0x468] sm:$0xff]
        %v4101 = vld [vmem:[%s3958 + $0x470] sm:$0xff]
        %v4102 = vld [vmem:[%s3958 + $0x478] sm:$0xff]
        %v4103 = vld [vmem:[%s3958 + $0x480] sm:$0xff]
        %v4104 = vld [vmem:[%s3958 + $0x488] sm:$0xff]
        %v4105 = vld [vmem:[%s3958 + $0x490] sm:$0xff]
        %v4106 = vld [vmem:[%s3958 + $0x498] sm:$0xff]
        %v4107 = vld [vmem:[%s3958 + $0x4a0] sm:$0xff]
        %v4108 = vld [vmem:[%s3958 + $0x4a8] sm:$0xff]
        %v4109 = vld [vmem:[%s3958 + $0x4b0] sm:$0xff]
        %v4110 = vld [vmem:[%s3958 + $0x4b8] sm:$0xff]
        %v4111 = vld [vmem:[%s3958 + $0x4c0] sm:$0xff]
        %v4112 = vld [vmem:[%s3958 + $0x4c8] sm:$0xff]
        %v4113 = vld [vmem:[%s3958 + $0x4d0] sm:$0xff]
        %v4114 = vld [vmem:[%s3958 + $0x4d8] sm:$0xff]
        %v4115 = vld [vmem:[%s3958 + $0x4e0] sm:$0xff]
        %v4116 = vld [vmem:[%s3958 + $0x4e8] sm:$0xff]
        %v4117 = vld [vmem:[%s3958 + $0x4f0] sm:$0xff]
        %v4118 = vld [vmem:[%s3958 + $0x4f8] sm:$0xff]
        %v4119 = vld [vmem:[%s3958 + $0x500] sm:$0xff]
        %v4120 = vld [vmem:[%s3958 + $0x508] sm:$0xff]
        %v4121 = vld [vmem:[%s3958 + $0x510] sm:$0xff]
        %v4122 = vld [vmem:[%s3958 + $0x518] sm:$0xff]
        %v4123 = vld [vmem:[%s3958 + $0x520] sm:$0xff]
        %v4124 = vld [vmem:[%s3958 + $0x528] sm:$0xff]
        %v4125 = vld [vmem:[%s3958 + $0x530] sm:$0xff]
        %v4126 = vld [vmem:[%s3958 + $0x538] sm:$0xff]
        %v4127 = vld [vmem:[%s3958 + $0x540] sm:$0xff]
        %v4128 = vld [vmem:[%s3958 + $0x548] sm:$0xff]
        %v4129 = vld [vmem:[%s3958 + $0x550] sm:$0xff]
        %v4130 = vld [vmem:[%s3958 + $0x558] sm:$0xff]
        %v4131 = vld [vmem:[%s3958 + $0x560] sm:$0xff]
        %v4132 = vld [vmem:[%s3958 + $0x568] sm:$0xff]
        %v4133 = vld [vmem:[%s3958 + $0x570] sm:$0xff]
        %v4134 = vld [vmem:[%s3958 + $0x578] sm:$0xff]
        %v4135 = vld [vmem:[%s3958 + $0x580] sm:$0xff]
        %v4136 = vld [vmem:[%s3958 + $0x588] sm:$0xff]
        %v4137 = vld [vmem:[%s3958 + $0x590] sm:$0xff]
        %v4138 = vld [vmem:[%s3958 + $0x598] sm:$0xff]
        %v4139 = vld [vmem:[%s3958 + $0x5a0] sm:$0xff]
        %v4140 = vld [vmem:[%s3958 + $0x5a8] sm:$0xff]
        %v4141 = vld [vmem:[%s3958 + $0x5b0] sm:$0xff]
        %v4142 = vld [vmem:[%s3958 + $0x5b8] sm:$0xff]
        %v4143 = vld [vmem:[%s3958 + $0x5c0] sm:$0xff]
        %v4144 = vld [vmem:[%s3958 + $0x5c8] sm:$0xff]
        %v4145 = vld [vmem:[%s3958 + $0x5d0] sm:$0xff]
        %v4146 = vld [vmem:[%s3958 + $0x5d8] sm:$0xff]
        %v4147 = vld [vmem:[%s3958 + $0x5e0] sm:$0xff]
        %v4148 = vld [vmem:[%s3958 + $0x5e8] sm:$0xff]
        %v4149 = vld [vmem:[%s3958 + $0x5f0] sm:$0xff]
        %v4150 = vld [vmem:[%s3958 + $0x5f8] sm:$0xff]
        %v4151 = vld [vmem:[%s3958 + $0x600] sm:$0xff]
        %v4152 = vld [vmem:[%s3958 + $0x608] sm:$0xff]
        %v4153 = vld [vmem:[%s3958 + $0x610] sm:$0xff]
        %v4154 = vld [vmem:[%s3958 + $0x618] sm:$0xff]
        %v4155 = vld [vmem:[%s3958 + $0x620] sm:$0xff]
        %v4156 = vld [vmem:[%s3958 + $0x628] sm:$0xff]
        %v4157 = vld [vmem:[%s3958 + $0x630] sm:$0xff]
        %v4158 = vld [vmem:[%s3958 + $0x638] sm:$0xff]
        %v4159 = vld [vmem:[%s3958 + $0x640] sm:$0xff]
        %v4160 = vld [vmem:[%s3958 + $0x648] sm:$0xff]
        %v4161 = vld [vmem:[%s3958 + $0x650] sm:$0xff]
        %v4162 = vld [vmem:[%s3958 + $0x658] sm:$0xff]
        %v4163 = vld [vmem:[%s3958 + $0x660] sm:$0xff]
        %v4164 = vld [vmem:[%s3958 + $0x668] sm:$0xff]
        %v4165 = vld [vmem:[%s3958 + $0x670] sm:$0xff]
        %v4166 = vld [vmem:[%s3958 + $0x678] sm:$0xff]
        %v4167 = vld [vmem:[%s3958 + $0x680] sm:$0xff]
        %v4168 = vld [vmem:[%s3958 + $0x688] sm:$0xff]
        %v4169 = vld [vmem:[%s3958 + $0x690] sm:$0xff]
        %v4170 = vld [vmem:[%s3958 + $0x698] sm:$0xff]
        %v4171 = vld [vmem:[%s3958 + $0x6a0] sm:$0xff]
        %v4172 = vld [vmem:[%s3958 + $0x6a8] sm:$0xff]
        %v4173 = vld [vmem:[%s3958 + $0x6b0] sm:$0xff]
        %v4174 = vld [vmem:[%s3958 + $0x6b8] sm:$0xff]
        %v4175 = vld [vmem:[%s3958 + $0x6c0] sm:$0xff]
        %v4176 = vld [vmem:[%s3958 + $0x6c8] sm:$0xff]
        %v4177 = vld [vmem:[%s3958 + $0x6d0] sm:$0xff]
        %v4178 = vld [vmem:[%s3958 + $0x6d8] sm:$0xff]
        %v4179 = vld [vmem:[%s3958 + $0x6e0] sm:$0xff]
        %v4180 = vld [vmem:[%s3958 + $0x6e8] sm:$0xff]
        %v4181 = vld [vmem:[%s3958 + $0x6f0] sm:$0xff]
        %v4182 = vld [vmem:[%s3958 + $0x6f8] sm:$0xff]
        %v4184 = vsel %vm2070, %v3956, 0
        %4186 = vmatpush.msra.mxu0 %v4019
        %4187 = vmatpush.msra.mxu0 %v4015
        %4188 = vmatpush.msra.mxu0 %v4011
        %4189 = vmatpush.msra.mxu0 %v4007
        %4190 = vmatpush.msra.mxu0 %v4003
        %4191 = vmatpush.msra.mxu0 %v3999
        %4192 = vmatpush.msra.mxu0 %v3995
        %4193 = vmatpush.msra.mxu0 %v3991
        %4194 = vmatpush.msra.mxu0 %v3987
        %4195 = vmatpush.msra.mxu0 %v3983
        %4196 = vmatpush.msra.mxu0 %v3979
        %4197 = vmatpush.msra.mxu0 %v3975
        %4198 = vmatpush.msra.mxu0 %v3971
        %4199 = vmatpush.msra.mxu0 %v3967
        %4200 = vmatpush.msra.mxu0 %v3963
        %4201 = vmatpush.msra.mxu0 %v3959
        %4202 = vmatmul.f32.gmra.mxu0 %v3896
        %v4203 = vpop.f32.mrf.mxu0
        %v4204 = vadd.f32 0.0, %v4203
        %4205 = vdwg.mxu0
        %4206 = vmatpush.msra.mxu0 %v4083
        %4207 = vmatpush.msra.mxu0 %v4079
        %4208 = vmatpush.msra.mxu0 %v4075
        %4209 = vmatpush.msra.mxu0 %v4071
        %4210 = vmatpush.msra.mxu0 %v4067
        %4211 = vmatpush.msra.mxu0 %v4063
        %4212 = vmatpush.msra.mxu0 %v4059
        %4213 = vmatpush.msra.mxu0 %v4055
        %4214 = vmatpush.msra.mxu0 %v4051
        %4215 = vmatpush.msra.mxu0 %v4047
        %4216 = vmatpush.msra.mxu0 %v4043
        %4217 = vmatpush.msra.mxu0 %v4039
        %4218 = vmatpush.msra.mxu0 %v4035
        %4219 = vmatpush.msra.mxu0 %v4031
        %4220 = vmatpush.msra.mxu0 %v4027
        %4221 = vmatpush.msra.mxu0 %v4023
        %4222 = vmatmul.f32.gmra.mxu0 %v3916
        %v4223 = vpop.f32.mrf.mxu0
        %v4224 = vadd.f32 %v4204, %v4223
        %4225 = vdwg.mxu0
        %4226 = vmatpush.msra.mxu0 %v4147
        %4227 = vmatpush.msra.mxu0 %v4143
        %4228 = vmatpush.msra.mxu0 %v4139
        %4229 = vmatpush.msra.mxu0 %v4135
        %4230 = vmatpush.msra.mxu0 %v4131
        %4231 = vmatpush.msra.mxu0 %v4127
        %4232 = vmatpush.msra.mxu0 %v4123
        %4233 = vmatpush.msra.mxu0 %v4119
        %4234 = vmatpush.msra.mxu0 %v4115
        %4235 = vmatpush.msra.mxu0 %v4111
        %4236 = vmatpush.msra.mxu0 %v4107
        %4237 = vmatpush.msra.mxu0 %v4103
        %4238 = vmatpush.msra.mxu0 %v4099
        %4239 = vmatpush.msra.mxu0 %v4095
        %4240 = vmatpush.msra.mxu0 %v4091
        %4241 = vmatpush.msra.mxu0 %v4087
        %4242 = vmatmul.f32.gmra.mxu0 %v3936
        %v4243 = vpop.f32.mrf.mxu0
        %v4244 = vadd.f32 %v4224, %v4243
        %4245 = vdwg.mxu0
        %4246 = vmatpush.msra.mxu0 0.0
        %4247 = vmatpush.msra.mxu0 0.0
        %4248 = vmatpush.msra.mxu0 0.0
        %4249 = vmatpush.msra.mxu0 0.0
        %4250 = vmatpush.msra.mxu0 0.0
        %4251 = vmatpush.msra.mxu0 0.0
        %4252 = vmatpush.msra.mxu0 0.0
        %4253 = vmatpush.msra.mxu0 0.0
        %4254 = vmatpush.msra.mxu0 %v4179
        %4255 = vmatpush.msra.mxu0 %v4175
        %4256 = vmatpush.msra.mxu0 %v4171
        %4257 = vmatpush.msra.mxu0 %v4167
        %4258 = vmatpush.msra.mxu0 %v4163
        %4259 = vmatpush.msra.mxu0 %v4159
        %4260 = vmatpush.msra.mxu0 %v4155
        %4261 = vmatpush.msra.mxu0 %v4151
        %4262 = vmatmul.f32.gmra.mxu0 %v4184
        %v4263 = vpop.f32.mrf.mxu0
        %v4264 = vadd.f32 %v4244, %v4263
        %4265 = vdwg.mxu0
        %4266 = vmatpush.msra.mxu0 %v4020
        %4267 = vmatpush.msra.mxu0 %v4016
        %4268 = vmatpush.msra.mxu0 %v4012
        %4269 = vmatpush.msra.mxu0 %v4008
        %4270 = vmatpush.msra.mxu0 %v4004
        %4271 = vmatpush.msra.mxu0 %v4000
        %4272 = vmatpush.msra.mxu0 %v3996
        %4273 = vmatpush.msra.mxu0 %v3992
        %4274 = vmatpush.msra.mxu0 %v3988
        %4275 = vmatpush.msra.mxu0 %v3984
        %4276 = vmatpush.msra.mxu0 %v3980
        %4277 = vmatpush.msra.mxu0 %v3976
        %4278 = vmatpush.msra.mxu0 %v3972
        %4279 = vmatpush.msra.mxu0 %v3968
        %4280 = vmatpush.msra.mxu0 %v3964
        %4281 = vmatpush.msra.mxu0 %v3960
        %4282 = vmatmul.f32.gmra.mxu0 %v3896
        %v4283 = vpop.f32.mrf.mxu0
        %v4284 = vadd.f32 0.0, %v4283
        %4285 = vdwg.mxu0
        %4286 = vmatpush.msra.mxu0 %v4084
        %4287 = vmatpush.msra.mxu0 %v4080
        %4288 = vmatpush.msra.mxu0 %v4076
        %4289 = vmatpush.msra.mxu0 %v4072
        %4290 = vmatpush.msra.mxu0 %v4068
        %4291 = vmatpush.msra.mxu0 %v4064
        %4292 = vmatpush.msra.mxu0 %v4060
        %4293 = vmatpush.msra.mxu0 %v4056
        %4294 = vmatpush.msra.mxu0 %v4052
        %4295 = vmatpush.msra.mxu0 %v4048
        %4296 = vmatpush.msra.mxu0 %v4044
        %4297 = vmatpush.msra.mxu0 %v4040
        %4298 = vmatpush.msra.mxu0 %v4036
        %4299 = vmatpush.msra.mxu0 %v4032
        %4300 = vmatpush.msra.mxu0 %v4028
        %4301 = vmatpush.msra.mxu0 %v4024
        %4302 = vmatmul.f32.gmra.mxu0 %v3916
        %v4303 = vpop.f32.mrf.mxu0
        %v4304 = vadd.f32 %v4284, %v4303
        %4305 = vdwg.mxu0
        %4306 = vmatpush.msra.mxu0 %v4148
        %4307 = vmatpush.msra.mxu0 %v4144
        %4308 = vmatpush.msra.mxu0 %v4140
        %4309 = vmatpush.msra.mxu0 %v4136
        %4310 = vmatpush.msra.mxu0 %v4132
        %4311 = vmatpush.msra.mxu0 %v4128
        %4312 = vmatpush.msra.mxu0 %v4124
        %4313 = vmatpush.msra.mxu0 %v4120
        %4314 = vmatpush.msra.mxu0 %v4116
        %4315 = vmatpush.msra.mxu0 %v4112
        %4316 = vmatpush.msra.mxu0 %v4108
        %4317 = vmatpush.msra.mxu0 %v4104
        %4318 = vmatpush.msra.mxu0 %v4100
        %4319 = vmatpush.msra.mxu0 %v4096
        %4320 = vmatpush.msra.mxu0 %v4092
        %4321 = vmatpush.msra.mxu0 %v4088
        %4322 = vmatmul.f32.gmra.mxu0 %v3936
        %v4323 = vpop.f32.mrf.mxu0
        %v4324 = vadd.f32 %v4304, %v4323
        %4325 = vdwg.mxu0
        %4326 = vmatpush.msra.mxu0 0.0
        %4327 = vmatpush.msra.mxu0 0.0
        %4328 = vmatpush.msra.mxu0 0.0
        %4329 = vmatpush.msra.mxu0 0.0
        %4330 = vmatpush.msra.mxu0 0.0
        %4331 = vmatpush.msra.mxu0 0.0
        %4332 = vmatpush.msra.mxu0 0.0
        %4333 = vmatpush.msra.mxu0 0.0
        %4334 = vmatpush.msra.mxu0 %v4180
        %4335 = vmatpush.msra.mxu0 %v4176
        %4336 = vmatpush.msra.mxu0 %v4172
        %4337 = vmatpush.msra.mxu0 %v4168
        %4338 = vmatpush.msra.mxu0 %v4164
        %4339 = vmatpush.msra.mxu0 %v4160
        %4340 = vmatpush.msra.mxu0 %v4156
        %4341 = vmatpush.msra.mxu0 %v4152
        %4342 = vmatmul.f32.gmra.mxu0 %v4184
        %v4343 = vpop.f32.mrf.mxu0
        %v4344 = vadd.f32 %v4324, %v4343
        %4345 = vdwg.mxu0
        %4346 = vmatpush.msra.mxu0 %v4021
        %4347 = vmatpush.msra.mxu0 %v4017
        %4348 = vmatpush.msra.mxu0 %v4013
        %4349 = vmatpush.msra.mxu0 %v4009
        %4350 = vmatpush.msra.mxu0 %v4005
        %4351 = vmatpush.msra.mxu0 %v4001
        %4352 = vmatpush.msra.mxu0 %v3997
        %4353 = vmatpush.msra.mxu0 %v3993
        %4354 = vmatpush.msra.mxu0 %v3989
        %4355 = vmatpush.msra.mxu0 %v3985
        %4356 = vmatpush.msra.mxu0 %v3981
        %4357 = vmatpush.msra.mxu0 %v3977
        %4358 = vmatpush.msra.mxu0 %v3973
        %4359 = vmatpush.msra.mxu0 %v3969
        %4360 = vmatpush.msra.mxu0 %v3965
        %4361 = vmatpush.msra.mxu0 %v3961
        %4362 = vmatmul.f32.gmra.mxu0 %v3896
        %v4363 = vpop.f32.mrf.mxu0
        %v4364 = vadd.f32 0.0, %v4363
        %4365 = vdwg.mxu0
        %4366 = vmatpush.msra.mxu0 %v4085
        %4367 = vmatpush.msra.mxu0 %v4081
        %4368 = vmatpush.msra.mxu0 %v4077
        %4369 = vmatpush.msra.mxu0 %v4073
        %4370 = vmatpush.msra.mxu0 %v4069
        %4371 = vmatpush.msra.mxu0 %v4065
        %4372 = vmatpush.msra.mxu0 %v4061
        %4373 = vmatpush.msra.mxu0 %v4057
        %4374 = vmatpush.msra.mxu0 %v4053
        %4375 = vmatpush.msra.mxu0 %v4049
        %4376 = vmatpush.msra.mxu0 %v4045
        %4377 = vmatpush.msra.mxu0 %v4041
        %4378 = vmatpush.msra.mxu0 %v4037
        %4379 = vmatpush.msra.mxu0 %v4033
        %4380 = vmatpush.msra.mxu0 %v4029
        %4381 = vmatpush.msra.mxu0 %v4025
        %4382 = vmatmul.f32.gmra.mxu0 %v3916
        %v4383 = vpop.f32.mrf.mxu0
        %v4384 = vadd.f32 %v4364, %v4383
        %4385 = vdwg.mxu0
        %4386 = vmatpush.msra.mxu0 %v4149
        %4387 = vmatpush.msra.mxu0 %v4145
        %4388 = vmatpush.msra.mxu0 %v4141
        %4389 = vmatpush.msra.mxu0 %v4137
        %4390 = vmatpush.msra.mxu0 %v4133
        %4391 = vmatpush.msra.mxu0 %v4129
        %4392 = vmatpush.msra.mxu0 %v4125
        %4393 = vmatpush.msra.mxu0 %v4121
        %4394 = vmatpush.msra.mxu0 %v4117
        %4395 = vmatpush.msra.mxu0 %v4113
        %4396 = vmatpush.msra.mxu0 %v4109
        %4397 = vmatpush.msra.mxu0 %v4105
        %4398 = vmatpush.msra.mxu0 %v4101
        %4399 = vmatpush.msra.mxu0 %v4097
        %4400 = vmatpush.msra.mxu0 %v4093
        %4401 = vmatpush.msra.mxu0 %v4089
        %4402 = vmatmul.f32.gmra.mxu0 %v3936
        %v4403 = vpop.f32.mrf.mxu0
        %v4404 = vadd.f32 %v4384, %v4403
        %4405 = vdwg.mxu0
        %4406 = vmatpush.msra.mxu0 0.0
        %4407 = vmatpush.msra.mxu0 0.0
        %4408 = vmatpush.msra.mxu0 0.0
        %4409 = vmatpush.msra.mxu0 0.0
        %4410 = vmatpush.msra.mxu0 0.0
        %4411 = vmatpush.msra.mxu0 0.0
        %4412 = vmatpush.msra.mxu0 0.0
        %4413 = vmatpush.msra.mxu0 0.0
        %4414 = vmatpush.msra.mxu0 %v4181
        %4415 = vmatpush.msra.mxu0 %v4177
        %4416 = vmatpush.msra.mxu0 %v4173
        %4417 = vmatpush.msra.mxu0 %v4169
        %4418 = vmatpush.msra.mxu0 %v4165
        %4419 = vmatpush.msra.mxu0 %v4161
        %4420 = vmatpush.msra.mxu0 %v4157
        %4421 = vmatpush.msra.mxu0 %v4153
        %4422 = vmatmul.f32.gmra.mxu0 %v4184
        %v4423 = vpop.f32.mrf.mxu0
        %v4424 = vadd.f32 %v4404, %v4423
        %4425 = vdwg.mxu0
        %4426 = vmatpush.msra.mxu0 %v4022
        %4427 = vmatpush.msra.mxu0 %v4018
        %4428 = vmatpush.msra.mxu0 %v4014
        %4429 = vmatpush.msra.mxu0 %v4010
        %4430 = vmatpush.msra.mxu0 %v4006
        %4431 = vmatpush.msra.mxu0 %v4002
        %4432 = vmatpush.msra.mxu0 %v3998
        %4433 = vmatpush.msra.mxu0 %v3994
        %4434 = vmatpush.msra.mxu0 %v3990
        %4435 = vmatpush.msra.mxu0 %v3986
        %4436 = vmatpush.msra.mxu0 %v3982
        %4437 = vmatpush.msra.mxu0 %v3978
        %4438 = vmatpush.msra.mxu0 %v3974
        %4439 = vmatpush.msra.mxu0 %v3970
        %4440 = vmatpush.msra.mxu0 %v3966
        %4441 = vmatpush.msra.mxu0 %v3962
        %4442 = vmatmul.f32.gmra.mxu0 %v3896
        %v4443 = vpop.f32.mrf.mxu0
        %v4444 = vadd.f32 0.0, %v4443
        %4445 = vdwg.mxu0
        %4446 = vmatpush.msra.mxu0 %v4086
        %4447 = vmatpush.msra.mxu0 %v4082
        %4448 = vmatpush.msra.mxu0 %v4078
        %4449 = vmatpush.msra.mxu0 %v4074
        %4450 = vmatpush.msra.mxu0 %v4070
        %4451 = vmatpush.msra.mxu0 %v4066
        %4452 = vmatpush.msra.mxu0 %v4062
        %4453 = vmatpush.msra.mxu0 %v4058
        %4454 = vmatpush.msra.mxu0 %v4054
        %4455 = vmatpush.msra.mxu0 %v4050
        %4456 = vmatpush.msra.mxu0 %v4046
        %4457 = vmatpush.msra.mxu0 %v4042
        %4458 = vmatpush.msra.mxu0 %v4038
        %4459 = vmatpush.msra.mxu0 %v4034
        %4460 = vmatpush.msra.mxu0 %v4030
        %4461 = vmatpush.msra.mxu0 %v4026
        %4462 = vmatmul.f32.gmra.mxu0 %v3916
        %v4463 = vpop.f32.mrf.mxu0
        %v4464 = vadd.f32 %v4444, %v4463
        %4465 = vdwg.mxu0
        %4466 = vmatpush.msra.mxu0 %v4150
        %4467 = vmatpush.msra.mxu0 %v4146
        %4468 = vmatpush.msra.mxu0 %v4142
        %4469 = vmatpush.msra.mxu0 %v4138
        %4470 = vmatpush.msra.mxu0 %v4134
        %4471 = vmatpush.msra.mxu0 %v4130
        %4472 = vmatpush.msra.mxu0 %v4126
        %4473 = vmatpush.msra.mxu0 %v4122
        %4474 = vmatpush.msra.mxu0 %v4118
        %4475 = vmatpush.msra.mxu0 %v4114
        %4476 = vmatpush.msra.mxu0 %v4110
        %4477 = vmatpush.msra.mxu0 %v4106
        %4478 = vmatpush.msra.mxu0 %v4102
        %4479 = vmatpush.msra.mxu0 %v4098
        %4480 = vmatpush.msra.mxu0 %v4094
        %4481 = vmatpush.msra.mxu0 %v4090
        %4482 = vmatmul.f32.gmra.mxu0 %v3936
        %v4483 = vpop.f32.mrf.mxu0
        %v4484 = vadd.f32 %v4464, %v4483
        %4485 = vdwg.mxu0
        %4486 = vmatpush.msra.mxu0 0.0
        %4487 = vmatpush.msra.mxu0 0.0
        %4488 = vmatpush.msra.mxu0 0.0
        %4489 = vmatpush.msra.mxu0 0.0
        %4490 = vmatpush.msra.mxu0 0.0
        %4491 = vmatpush.msra.mxu0 0.0
        %4492 = vmatpush.msra.mxu0 0.0
        %4493 = vmatpush.msra.mxu0 0.0
        %4494 = vmatpush.msra.mxu0 %v4182
        %4495 = vmatpush.msra.mxu0 %v4178
        %4496 = vmatpush.msra.mxu0 %v4174
        %4497 = vmatpush.msra.mxu0 %v4170
        %4498 = vmatpush.msra.mxu0 %v4166
        %4499 = vmatpush.msra.mxu0 %v4162
        %4500 = vmatpush.msra.mxu0 %v4158
        %4501 = vmatpush.msra.mxu0 %v4154
        %4502 = vmatmul.f32.gmra.mxu0 %v4184
        %v4503 = vpop.f32.mrf.mxu0
        %v4504 = vadd.f32 %v4484, %v4503
        %4505 = vdwg.mxu0
        %v4507 = vsel %vm2070, %v3647, 0
        %4509 = vmatpush.msra.mxu0 %v3709
        %4510 = vmatpush.msra.mxu0 %v3705
        %4511 = vmatpush.msra.mxu0 %v3701
        %4512 = vmatpush.msra.mxu0 %v3697
        %4513 = vmatpush.msra.mxu0 %v3693
        %4514 = vmatpush.msra.mxu0 %v3689
        %4515 = vmatpush.msra.mxu0 %v3685
        %4516 = vmatpush.msra.mxu0 %v3681
        %4517 = vmatpush.msra.mxu0 %v3677
        %4518 = vmatpush.msra.mxu0 %v3673
        %4519 = vmatpush.msra.mxu0 %v3669
        %4520 = vmatpush.msra.mxu0 %v3665
        %4521 = vmatpush.msra.mxu0 %v3661
        %4522 = vmatpush.msra.mxu0 %v3657
        %4523 = vmatpush.msra.mxu0 %v3653
        %4524 = vmatpush.msra.mxu0 %v3649
        %4525 = vmatmul.f32.gmra.mxu0 %v3587
        %v4526 = vpop.f32.mrf.mxu0
        %v4527 = vadd.f32 %v4264, %v4526
        %4528 = vdwg.mxu0
        %4529 = vmatpush.msra.mxu0 %v3773
        %4530 = vmatpush.msra.mxu0 %v3769
        %4531 = vmatpush.msra.mxu0 %v3765
        %4532 = vmatpush.msra.mxu0 %v3761
        %4533 = vmatpush.msra.mxu0 %v3757
        %4534 = vmatpush.msra.mxu0 %v3753
        %4535 = vmatpush.msra.mxu0 %v3749
        %4536 = vmatpush.msra.mxu0 %v3745
        %4537 = vmatpush.msra.mxu0 %v3741
        %4538 = vmatpush.msra.mxu0 %v3737
        %4539 = vmatpush.msra.mxu0 %v3733
        %4540 = vmatpush.msra.mxu0 %v3729
        %4541 = vmatpush.msra.mxu0 %v3725
        %4542 = vmatpush.msra.mxu0 %v3721
        %4543 = vmatpush.msra.mxu0 %v3717
        %4544 = vmatpush.msra.mxu0 %v3713
        %4545 = vmatmul.f32.gmra.mxu0 %v3607
        %v4546 = vpop.f32.mrf.mxu0
        %v4547 = vadd.f32 %v4527, %v4546
        %4548 = vdwg.mxu0
        %4549 = vmatpush.msra.mxu0 %v3837
        %4550 = vmatpush.msra.mxu0 %v3833
        %4551 = vmatpush.msra.mxu0 %v3829
        %4552 = vmatpush.msra.mxu0 %v3825
        %4553 = vmatpush.msra.mxu0 %v3821
        %4554 = vmatpush.msra.mxu0 %v3817
        %4555 = vmatpush.msra.mxu0 %v3813
        %4556 = vmatpush.msra.mxu0 %v3809
        %4557 = vmatpush.msra.mxu0 %v3805
        %4558 = vmatpush.msra.mxu0 %v3801
        %4559 = vmatpush.msra.mxu0 %v3797
        %4560 = vmatpush.msra.mxu0 %v3793
        %4561 = vmatpush.msra.mxu0 %v3789
        %4562 = vmatpush.msra.mxu0 %v3785
        %4563 = vmatpush.msra.mxu0 %v3781
        %4564 = vmatpush.msra.mxu0 %v3777
        %4565 = vmatmul.f32.gmra.mxu0 %v3627
        %v4566 = vpop.f32.mrf.mxu0
        %v4567 = vadd.f32 %v4547, %v4566
        %4568 = vdwg.mxu0
        %4569 = vmatpush.msra.mxu0 0.0
        %4570 = vmatpush.msra.mxu0 0.0
        %4571 = vmatpush.msra.mxu0 0.0
        %4572 = vmatpush.msra.mxu0 0.0
        %4573 = vmatpush.msra.mxu0 0.0
        %4574 = vmatpush.msra.mxu0 0.0
        %4575 = vmatpush.msra.mxu0 0.0
        %4576 = vmatpush.msra.mxu0 0.0
        %4577 = vmatpush.msra.mxu0 %v3869
        %4578 = vmatpush.msra.mxu0 %v3865
        %4579 = vmatpush.msra.mxu0 %v3861
        %4580 = vmatpush.msra.mxu0 %v3857
        %4581 = vmatpush.msra.mxu0 %v3853
        %4582 = vmatpush.msra.mxu0 %v3849
        %4583 = vmatpush.msra.mxu0 %v3845
        %4584 = vmatpush.msra.mxu0 %v3841
        %4585 = vmatmul.f32.gmra.mxu0 %v4507
        %v4586 = vpop.f32.mrf.mxu0
        %v4587 = vadd.f32 %v4567, %v4586
        %4588 = vdwg.mxu0
        %4589 = vmatpush.msra.mxu0 %v3710
        %4590 = vmatpush.msra.mxu0 %v3706
        %4591 = vmatpush.msra.mxu0 %v3702
        %4592 = vmatpush.msra.mxu0 %v3698
        %4593 = vmatpush.msra.mxu0 %v3694
        %4594 = vmatpush.msra.mxu0 %v3690
        %4595 = vmatpush.msra.mxu0 %v3686
        %4596 = vmatpush.msra.mxu0 %v3682
        %4597 = vmatpush.msra.mxu0 %v3678
        %4598 = vmatpush.msra.mxu0 %v3674
        %4599 = vmatpush.msra.mxu0 %v3670
        %4600 = vmatpush.msra.mxu0 %v3666
        %4601 = vmatpush.msra.mxu0 %v3662
        %4602 = vmatpush.msra.mxu0 %v3658
        %4603 = vmatpush.msra.mxu0 %v3654
        %4604 = vmatpush.msra.mxu0 %v3650
        %4605 = vmatmul.f32.gmra.mxu0 %v3587
        %v4606 = vpop.f32.mrf.mxu0
        %v4607 = vadd.f32 %v4344, %v4606
        %4608 = vdwg.mxu0
        %4609 = vmatpush.msra.mxu0 %v3774
        %4610 = vmatpush.msra.mxu0 %v3770
        %4611 = vmatpush.msra.mxu0 %v3766
        %4612 = vmatpush.msra.mxu0 %v3762
        %4613 = vmatpush.msra.mxu0 %v3758
        %4614 = vmatpush.msra.mxu0 %v3754
        %4615 = vmatpush.msra.mxu0 %v3750
        %4616 = vmatpush.msra.mxu0 %v3746
        %4617 = vmatpush.msra.mxu0 %v3742
        %4618 = vmatpush.msra.mxu0 %v3738
        %4619 = vmatpush.msra.mxu0 %v3734
        %4620 = vmatpush.msra.mxu0 %v3730
        %4621 = vmatpush.msra.mxu0 %v3726
        %4622 = vmatpush.msra.mxu0 %v3722
        %4623 = vmatpush.msra.mxu0 %v3718
        %4624 = vmatpush.msra.mxu0 %v3714
        %4625 = vmatmul.f32.gmra.mxu0 %v3607
        %v4626 = vpop.f32.mrf.mxu0
        %v4627 = vadd.f32 %v4607, %v4626
        %4628 = vdwg.mxu0
        %4629 = vmatpush.msra.mxu0 %v3838
        %4630 = vmatpush.msra.mxu0 %v3834
        %4631 = vmatpush.msra.mxu0 %v3830
        %4632 = vmatpush.msra.mxu0 %v3826
        %4633 = vmatpush.msra.mxu0 %v3822
        %4634 = vmatpush.msra.mxu0 %v3818
        %4635 = vmatpush.msra.mxu0 %v3814
        %4636 = vmatpush.msra.mxu0 %v3810
        %4637 = vmatpush.msra.mxu0 %v3806
        %4638 = vmatpush.msra.mxu0 %v3802
        %4639 = vmatpush.msra.mxu0 %v3798
        %4640 = vmatpush.msra.mxu0 %v3794
        %4641 = vmatpush.msra.mxu0 %v3790
        %4642 = vmatpush.msra.mxu0 %v3786
        %4643 = vmatpush.msra.mxu0 %v3782
        %4644 = vmatpush.msra.mxu0 %v3778
        %4645 = vmatmul.f32.gmra.mxu0 %v3627
        %v4646 = vpop.f32.mrf.mxu0
        %v4647 = vadd.f32 %v4627, %v4646
        %4648 = vdwg.mxu0
        %4649 = vmatpush.msra.mxu0 0.0
        %4650 = vmatpush.msra.mxu0 0.0
        %4651 = vmatpush.msra.mxu0 0.0
        %4652 = vmatpush.msra.mxu0 0.0
        %4653 = vmatpush.msra.mxu0 0.0
        %4654 = vmatpush.msra.mxu0 0.0
        %4655 = vmatpush.msra.mxu0 0.0
        %4656 = vmatpush.msra.mxu0 0.0
        %4657 = vmatpush.msra.mxu0 %v3870
        %4658 = vmatpush.msra.mxu0 %v3866
        %4659 = vmatpush.msra.mxu0 %v3862
        %4660 = vmatpush.msra.mxu0 %v3858
        %4661 = vmatpush.msra.mxu0 %v3854
        %4662 = vmatpush.msra.mxu0 %v3850
        %4663 = vmatpush.msra.mxu0 %v3846
        %4664 = vmatpush.msra.mxu0 %v3842
        %4665 = vmatmul.f32.gmra.mxu0 %v4507
        %v4666 = vpop.f32.mrf.mxu0
        %v4667 = vadd.f32 %v4647, %v4666
        %4668 = vdwg.mxu0
        %4669 = vmatpush.msra.mxu0 %v3711
        %4670 = vmatpush.msra.mxu0 %v3707
        %4671 = vmatpush.msra.mxu0 %v3703
        %4672 = vmatpush.msra.mxu0 %v3699
        %4673 = vmatpush.msra.mxu0 %v3695
        %4674 = vmatpush.msra.mxu0 %v3691
        %4675 = vmatpush.msra.mxu0 %v3687
        %4676 = vmatpush.msra.mxu0 %v3683
        %4677 = vmatpush.msra.mxu0 %v3679
        %4678 = vmatpush.msra.mxu0 %v3675
        %4679 = vmatpush.msra.mxu0 %v3671
        %4680 = vmatpush.msra.mxu0 %v3667
        %4681 = vmatpush.msra.mxu0 %v3663
        %4682 = vmatpush.msra.mxu0 %v3659
        %4683 = vmatpush.msra.mxu0 %v3655
        %4684 = vmatpush.msra.mxu0 %v3651
        %4685 = vmatmul.f32.gmra.mxu0 %v3587
        %v4686 = vpop.f32.mrf.mxu0
        %v4687 = vadd.f32 %v4424, %v4686
        %4688 = vdwg.mxu0
        %4689 = vmatpush.msra.mxu0 %v3775
        %4690 = vmatpush.msra.mxu0 %v3771
        %4691 = vmatpush.msra.mxu0 %v3767
        %4692 = vmatpush.msra.mxu0 %v3763
        %4693 = vmatpush.msra.mxu0 %v3759
        %4694 = vmatpush.msra.mxu0 %v3755
        %4695 = vmatpush.msra.mxu0 %v3751
        %4696 = vmatpush.msra.mxu0 %v3747
        %4697 = vmatpush.msra.mxu0 %v3743
        %4698 = vmatpush.msra.mxu0 %v3739
        %4699 = vmatpush.msra.mxu0 %v3735
        %4700 = vmatpush.msra.mxu0 %v3731
        %4701 = vmatpush.msra.mxu0 %v3727
        %4702 = vmatpush.msra.mxu0 %v3723
        %4703 = vmatpush.msra.mxu0 %v3719
        %4704 = vmatpush.msra.mxu0 %v3715
        %4705 = vmatmul.f32.gmra.mxu0 %v3607
        %v4706 = vpop.f32.mrf.mxu0
        %v4707 = vadd.f32 %v4687, %v4706
        %4708 = vdwg.mxu0
        %4709 = vmatpush.msra.mxu0 %v3839
        %4710 = vmatpush.msra.mxu0 %v3835
        %4711 = vmatpush.msra.mxu0 %v3831
        %4712 = vmatpush.msra.mxu0 %v3827
        %4713 = vmatpush.msra.mxu0 %v3823
        %4714 = vmatpush.msra.mxu0 %v3819
        %4715 = vmatpush.msra.mxu0 %v3815
        %4716 = vmatpush.msra.mxu0 %v3811
        %4717 = vmatpush.msra.mxu0 %v3807
        %4718 = vmatpush.msra.mxu0 %v3803
        %4719 = vmatpush.msra.mxu0 %v3799
        %4720 = vmatpush.msra.mxu0 %v3795
        %4721 = vmatpush.msra.mxu0 %v3791
        %4722 = vmatpush.msra.mxu0 %v3787
        %4723 = vmatpush.msra.mxu0 %v3783
        %4724 = vmatpush.msra.mxu0 %v3779
        %4725 = vmatmul.f32.gmra.mxu0 %v3627
        %v4726 = vpop.f32.mrf.mxu0
        %v4727 = vadd.f32 %v4707, %v4726
        %4728 = vdwg.mxu0
        %4729 = vmatpush.msra.mxu0 0.0
        %4730 = vmatpush.msra.mxu0 0.0
        %4731 = vmatpush.msra.mxu0 0.0
        %4732 = vmatpush.msra.mxu0 0.0
        %4733 = vmatpush.msra.mxu0 0.0
        %4734 = vmatpush.msra.mxu0 0.0
        %4735 = vmatpush.msra.mxu0 0.0
        %4736 = vmatpush.msra.mxu0 0.0
        %4737 = vmatpush.msra.mxu0 %v3871
        %4738 = vmatpush.msra.mxu0 %v3867
        %4739 = vmatpush.msra.mxu0 %v3863
        %4740 = vmatpush.msra.mxu0 %v3859
        %4741 = vmatpush.msra.mxu0 %v3855
        %4742 = vmatpush.msra.mxu0 %v3851
        %4743 = vmatpush.msra.mxu0 %v3847
        %4744 = vmatpush.msra.mxu0 %v3843
        %4745 = vmatmul.f32.gmra.mxu0 %v4507
        %v4746 = vpop.f32.mrf.mxu0
        %v4747 = vadd.f32 %v4727, %v4746
        %4748 = vdwg.mxu0
        %4749 = vmatpush.msra.mxu0 %v3712
        %4750 = vmatpush.msra.mxu0 %v3708
        %4751 = vmatpush.msra.mxu0 %v3704
        %4752 = vmatpush.msra.mxu0 %v3700
        %4753 = vmatpush.msra.mxu0 %v3696
        %4754 = vmatpush.msra.mxu0 %v3692
        %4755 = vmatpush.msra.mxu0 %v3688
        %4756 = vmatpush.msra.mxu0 %v3684
        %4757 = vmatpush.msra.mxu0 %v3680
        %4758 = vmatpush.msra.mxu0 %v3676
        %4759 = vmatpush.msra.mxu0 %v3672
        %4760 = vmatpush.msra.mxu0 %v3668
        %4761 = vmatpush.msra.mxu0 %v3664
        %4762 = vmatpush.msra.mxu0 %v3660
        %4763 = vmatpush.msra.mxu0 %v3656
        %4764 = vmatpush.msra.mxu0 %v3652
        %4765 = vmatmul.f32.gmra.mxu0 %v3587
        %v4766 = vpop.f32.mrf.mxu0
        %v4767 = vadd.f32 %v4504, %v4766
        %4768 = vdwg.mxu0
        %4769 = vmatpush.msra.mxu0 %v3776
        %4770 = vmatpush.msra.mxu0 %v3772
        %4771 = vmatpush.msra.mxu0 %v3768
        %4772 = vmatpush.msra.mxu0 %v3764
        %4773 = vmatpush.msra.mxu0 %v3760
        %4774 = vmatpush.msra.mxu0 %v3756
        %4775 = vmatpush.msra.mxu0 %v3752
        %4776 = vmatpush.msra.mxu0 %v3748
        %4777 = vmatpush.msra.mxu0 %v3744
        %4778 = vmatpush.msra.mxu0 %v3740
        %4779 = vmatpush.msra.mxu0 %v3736
        %4780 = vmatpush.msra.mxu0 %v3732
        %4781 = vmatpush.msra.mxu0 %v3728
        %4782 = vmatpush.msra.mxu0 %v3724
        %4783 = vmatpush.msra.mxu0 %v3720
        %4784 = vmatpush.msra.mxu0 %v3716
        %4785 = vmatmul.f32.gmra.mxu0 %v3607
        %v4786 = vpop.f32.mrf.mxu0
        %v4787 = vadd.f32 %v4767, %v4786
        %4788 = vdwg.mxu0
        %4789 = vmatpush.msra.mxu0 %v3840
        %4790 = vmatpush.msra.mxu0 %v3836
        %4791 = vmatpush.msra.mxu0 %v3832
        %4792 = vmatpush.msra.mxu0 %v3828
        %4793 = vmatpush.msra.mxu0 %v3824
        %4794 = vmatpush.msra.mxu0 %v3820
        %4795 = vmatpush.msra.mxu0 %v3816
        %4796 = vmatpush.msra.mxu0 %v3812
        %4797 = vmatpush.msra.mxu0 %v3808
        %4798 = vmatpush.msra.mxu0 %v3804
        %4799 = vmatpush.msra.mxu0 %v3800
        %4800 = vmatpush.msra.mxu0 %v3796
        %4801 = vmatpush.msra.mxu0 %v3792
        %4802 = vmatpush.msra.mxu0 %v3788
        %4803 = vmatpush.msra.mxu0 %v3784
        %4804 = vmatpush.msra.mxu0 %v3780
        %4805 = vmatmul.f32.gmra.mxu0 %v3627
        %v4806 = vpop.f32.mrf.mxu0
        %v4807 = vadd.f32 %v4787, %v4806
        %4808 = vdwg.mxu0
        %4809 = vmatpush.msra.mxu0 0.0
        %4810 = vmatpush.msra.mxu0 0.0
        %4811 = vmatpush.msra.mxu0 0.0
        %4812 = vmatpush.msra.mxu0 0.0
        %4813 = vmatpush.msra.mxu0 0.0
        %4814 = vmatpush.msra.mxu0 0.0
        %4815 = vmatpush.msra.mxu0 0.0
        %4816 = vmatpush.msra.mxu0 0.0
        %4817 = vmatpush.msra.mxu0 %v3872
        %4818 = vmatpush.msra.mxu0 %v3868
        %4819 = vmatpush.msra.mxu0 %v3864
        %4820 = vmatpush.msra.mxu0 %v3860
        %4821 = vmatpush.msra.mxu0 %v3856
        %4822 = vmatpush.msra.mxu0 %v3852
        %4823 = vmatpush.msra.mxu0 %v3848
        %4824 = vmatpush.msra.mxu0 %v3844
        %4825 = vmatmul.f32.gmra.mxu0 %v4507
        %v4826 = vpop.f32.mrf.mxu0
        %v4827 = vadd.f32 %v4807, %v4826
        %4828 = vdwg.mxu0
        %s4829 = scalar_lea.vmem [#allocation13], 16
        %v4830 = vld [vmem:[%s4829] sm:$0x7f]
        %v4832 = vsel %vm1408, %v4830, 0
        %4834 = vmatpush.msra.mxu0 0.0
        %4835 = vmatpush.msra.mxu0 0.0
        %4836 = vmatpush.msra.mxu0 0.0
        %4837 = vmatpush.msra.mxu0 0.0
        %4838 = vmatpush.msra.mxu0 0.0
        %4839 = vmatpush.msra.mxu0 0.0
        %4840 = vmatpush.msra.mxu0 0.0
        %4841 = vmatpush.msra.mxu0 0.0
        %4842 = vmatpush.msra.mxu0 0.0
        %4843 = vmatpush.msra.mxu0 0.0
        %4844 = vmatpush.msra.mxu0 0.0
        %4845 = vmatpush.msra.mxu0 0.0
        %4846 = vmatpush.msra.mxu0 0.0
        %4847 = vmatpush.msra.mxu0 0.0
        %4848 = vmatpush.msra.mxu0 %v3558
        %4849 = vmatpush.msra.mxu0 %v3545
        %4850 = vmatmul.f32.gmra.mxu0 %v4832
        %v4851 = vpop.f32.mrf.mxu0
        %v4852 = vadd.f32 0.0, %v4851
        %4853 = vdwg.mxu0
        %4854 = vmatpush.msra.mxu0 0.0
        %4855 = vmatpush.msra.mxu0 0.0
        %4856 = vmatpush.msra.mxu0 0.0
        %4857 = vmatpush.msra.mxu0 0.0
        %4858 = vmatpush.msra.mxu0 0.0
        %4859 = vmatpush.msra.mxu0 0.0
        %4860 = vmatpush.msra.mxu0 0.0
        %4861 = vmatpush.msra.mxu0 0.0
        %4862 = vmatpush.msra.mxu0 0.0
        %4863 = vmatpush.msra.mxu0 0.0
        %4864 = vmatpush.msra.mxu0 0.0
        %4865 = vmatpush.msra.mxu0 0.0
        %4866 = vmatpush.msra.mxu0 0.0
        %4867 = vmatpush.msra.mxu0 0.0
        %4868 = vmatpush.msra.mxu0 %v3561
        %4869 = vmatpush.msra.mxu0 %v3546
        %4870 = vmatmul.f32.gmra.mxu0 %v4832
        %v4871 = vpop.f32.mrf.mxu0
        %v4872 = vadd.f32 0.0, %v4871
        %4873 = vdwg.mxu0
        %4874 = vmatpush.msra.mxu0 0.0
        %4875 = vmatpush.msra.mxu0 0.0
        %4876 = vmatpush.msra.mxu0 0.0
        %4877 = vmatpush.msra.mxu0 0.0
        %4878 = vmatpush.msra.mxu0 0.0
        %4879 = vmatpush.msra.mxu0 0.0
        %4880 = vmatpush.msra.mxu0 0.0
        %4881 = vmatpush.msra.mxu0 0.0
        %4882 = vmatpush.msra.mxu0 0.0
        %4883 = vmatpush.msra.mxu0 0.0
        %4884 = vmatpush.msra.mxu0 0.0
        %4885 = vmatpush.msra.mxu0 0.0
        %4886 = vmatpush.msra.mxu0 0.0
        %4887 = vmatpush.msra.mxu0 0.0
        %4888 = vmatpush.msra.mxu0 %v3564
        %4889 = vmatpush.msra.mxu0 %v3547
        %4890 = vmatmul.f32.gmra.mxu0 %v4832
        %v4891 = vpop.f32.mrf.mxu0
        %v4892 = vadd.f32 0.0, %v4891
        %4893 = vdwg.mxu0
        %4894 = vmatpush.msra.mxu0 0.0
        %4895 = vmatpush.msra.mxu0 0.0
        %4896 = vmatpush.msra.mxu0 0.0
        %4897 = vmatpush.msra.mxu0 0.0
        %4898 = vmatpush.msra.mxu0 0.0
        %4899 = vmatpush.msra.mxu0 0.0
        %4900 = vmatpush.msra.mxu0 0.0
        %4901 = vmatpush.msra.mxu0 0.0
        %4902 = vmatpush.msra.mxu0 0.0
        %4903 = vmatpush.msra.mxu0 0.0
        %4904 = vmatpush.msra.mxu0 0.0
        %4905 = vmatpush.msra.mxu0 0.0
        %4906 = vmatpush.msra.mxu0 0.0
        %4907 = vmatpush.msra.mxu0 0.0
        %4908 = vmatpush.msra.mxu0 %v3567
        %4909 = vmatpush.msra.mxu0 %v3548
        %4910 = vmatmul.f32.gmra.mxu0 %v4832
        %v4911 = vpop.f32.mrf.mxu0
        %v4912 = vadd.f32 0.0, %v4911
        %4913 = vdwg.mxu0
        %s4914 = scalar_lea.vmem [#allocation14], 3584
        %v4915 = vld [vmem:[%s4914] sm:$0xff]
        %v4916 = vld [vmem:[%s4914 + $0x8] sm:$0xff]
        %v4917 = vld [vmem:[%s4914 + $0x10] sm:$0xff]
        %v4918 = vld [vmem:[%s4914 + $0x18] sm:$0xff]
        %v4919 = vld [vmem:[%s4914 + $0x20] sm:$0xff]
        %v4920 = vld [vmem:[%s4914 + $0x28] sm:$0xff]
        %v4921 = vld [vmem:[%s4914 + $0x30] sm:$0xff]
        %v4922 = vld [vmem:[%s4914 + $0x38] sm:$0xff]
        %v4923 = vld [vmem:[%s4914 + $0x40] sm:$0xff]
        %v4924 = vld [vmem:[%s4914 + $0x48] sm:$0xff]
        %v4925 = vld [vmem:[%s4914 + $0x50] sm:$0xff]
        %v4926 = vld [vmem:[%s4914 + $0x58] sm:$0xff]
        %v4927 = vld [vmem:[%s4914 + $0x60] sm:$0xff]
        %v4928 = vld [vmem:[%s4914 + $0x68] sm:$0xff]
        %v4929 = vld [vmem:[%s4914 + $0x70] sm:$0xff]
        %v4930 = vld [vmem:[%s4914 + $0x78] sm:$0xff]
        %v4931 = vld [vmem:[%s4914 + $0x80] sm:$0xff]
        %v4932 = vld [vmem:[%s4914 + $0x88] sm:$0xff]
        %v4933 = vld [vmem:[%s4914 + $0x90] sm:$0xff]
        %v4934 = vld [vmem:[%s4914 + $0x98] sm:$0xff]
        %v4935 = vld [vmem:[%s4914 + $0xa0] sm:$0xff]
        %v4936 = vld [vmem:[%s4914 + $0xa8] sm:$0xff]
        %v4937 = vld [vmem:[%s4914 + $0xb0] sm:$0xff]
        %v4938 = vld [vmem:[%s4914 + $0xb8] sm:$0xff]
        %v4939 = vld [vmem:[%s4914 + $0xc0] sm:$0xff]
        %v4940 = vld [vmem:[%s4914 + $0xc8] sm:$0xff]
        %v4941 = vld [vmem:[%s4914 + $0xd0] sm:$0xff]
        %v4942 = vld [vmem:[%s4914 + $0xd8] sm:$0xff]
        %v4943 = vld [vmem:[%s4914 + $0xe0] sm:$0xff]
        %v4944 = vld [vmem:[%s4914 + $0xe8] sm:$0xff]
        %v4945 = vld [vmem:[%s4914 + $0xf0] sm:$0xff]
        %v4946 = vld [vmem:[%s4914 + $0xf8] sm:$0xff]
        %v4947 = vld [vmem:[%s4914 + $0x100] sm:$0xff]
        %v4948 = vld [vmem:[%s4914 + $0x108] sm:$0xff]
        %v4949 = vld [vmem:[%s4914 + $0x110] sm:$0xff]
        %v4950 = vld [vmem:[%s4914 + $0x118] sm:$0xff]
        %v4951 = vld [vmem:[%s4914 + $0x120] sm:$0xff]
        %v4952 = vld [vmem:[%s4914 + $0x128] sm:$0xff]
        %v4953 = vld [vmem:[%s4914 + $0x130] sm:$0xff]
        %v4954 = vld [vmem:[%s4914 + $0x138] sm:$0xff]
        %v4955 = vld [vmem:[%s4914 + $0x140] sm:$0xff]
        %v4956 = vld [vmem:[%s4914 + $0x148] sm:$0xff]
        %v4957 = vld [vmem:[%s4914 + $0x150] sm:$0xff]
        %v4958 = vld [vmem:[%s4914 + $0x158] sm:$0xff]
        %v4959 = vld [vmem:[%s4914 + $0x160] sm:$0xff]
        %v4960 = vld [vmem:[%s4914 + $0x168] sm:$0xff]
        %v4961 = vld [vmem:[%s4914 + $0x170] sm:$0xff]
        %v4962 = vld [vmem:[%s4914 + $0x178] sm:$0xff]
        %v4963 = vld [vmem:[%s4914 + $0x180] sm:$0xff]
        %v4964 = vld [vmem:[%s4914 + $0x188] sm:$0xff]
        %v4965 = vld [vmem:[%s4914 + $0x190] sm:$0xff]
        %v4966 = vld [vmem:[%s4914 + $0x198] sm:$0xff]
        %v4967 = vld [vmem:[%s4914 + $0x1a0] sm:$0xff]
        %v4968 = vld [vmem:[%s4914 + $0x1a8] sm:$0xff]
        %v4969 = vld [vmem:[%s4914 + $0x1b0] sm:$0xff]
        %v4970 = vld [vmem:[%s4914 + $0x1b8] sm:$0xff]
        %v4971 = vld [vmem:[%s4914 + $0x1c0] sm:$0xff]
        %v4972 = vld [vmem:[%s4914 + $0x1c8] sm:$0xff]
        %v4973 = vld [vmem:[%s4914 + $0x1d0] sm:$0xff]
        %v4974 = vld [vmem:[%s4914 + $0x1d8] sm:$0xff]
        %v4975 = vld [vmem:[%s4914 + $0x1e0] sm:$0xff]
        %v4976 = vld [vmem:[%s4914 + $0x1e8] sm:$0xff]
        %v4977 = vld [vmem:[%s4914 + $0x1f0] sm:$0xff]
        %v4978 = vld [vmem:[%s4914 + $0x1f8] sm:$0xff]
        %v4979 = vld [vmem:[%s4914 + $0x200] sm:$0xff]
        %v4980 = vld [vmem:[%s4914 + $0x208] sm:$0xff]
        %v4981 = vld [vmem:[%s4914 + $0x210] sm:$0xff]
        %v4982 = vld [vmem:[%s4914 + $0x218] sm:$0xff]
        %v4983 = vld [vmem:[%s4914 + $0x220] sm:$0xff]
        %v4984 = vld [vmem:[%s4914 + $0x228] sm:$0xff]
        %v4985 = vld [vmem:[%s4914 + $0x230] sm:$0xff]
        %v4986 = vld [vmem:[%s4914 + $0x238] sm:$0xff]
        %v4987 = vld [vmem:[%s4914 + $0x240] sm:$0xff]
        %v4988 = vld [vmem:[%s4914 + $0x248] sm:$0xff]
        %v4989 = vld [vmem:[%s4914 + $0x250] sm:$0xff]
        %v4990 = vld [vmem:[%s4914 + $0x258] sm:$0xff]
        %v4991 = vld [vmem:[%s4914 + $0x260] sm:$0xff]
        %v4992 = vld [vmem:[%s4914 + $0x268] sm:$0xff]
        %v4993 = vld [vmem:[%s4914 + $0x270] sm:$0xff]
        %v4994 = vld [vmem:[%s4914 + $0x278] sm:$0xff]
        %v4995 = vld [vmem:[%s4914 + $0x280] sm:$0xff]
        %v4996 = vld [vmem:[%s4914 + $0x288] sm:$0xff]
        %v4997 = vld [vmem:[%s4914 + $0x290] sm:$0xff]
        %v4998 = vld [vmem:[%s4914 + $0x298] sm:$0xff]
        %v4999 = vld [vmem:[%s4914 + $0x2a0] sm:$0xff]
        %v5000 = vld [vmem:[%s4914 + $0x2a8] sm:$0xff]
        %v5001 = vld [vmem:[%s4914 + $0x2b0] sm:$0xff]
        %v5002 = vld [vmem:[%s4914 + $0x2b8] sm:$0xff]
        %v5003 = vld [vmem:[%s4914 + $0x2c0] sm:$0xff]
        %v5004 = vld [vmem:[%s4914 + $0x2c8] sm:$0xff]
        %v5005 = vld [vmem:[%s4914 + $0x2d0] sm:$0xff]
        %v5006 = vld [vmem:[%s4914 + $0x2d8] sm:$0xff]
        %v5007 = vld [vmem:[%s4914 + $0x2e0] sm:$0xff]
        %v5008 = vld [vmem:[%s4914 + $0x2e8] sm:$0xff]
        %v5009 = vld [vmem:[%s4914 + $0x2f0] sm:$0xff]
        %v5010 = vld [vmem:[%s4914 + $0x2f8] sm:$0xff]
        %v5011 = vld [vmem:[%s4914 + $0x300] sm:$0xff]
        %v5012 = vld [vmem:[%s4914 + $0x308] sm:$0xff]
        %v5013 = vld [vmem:[%s4914 + $0x310] sm:$0xff]
        %v5014 = vld [vmem:[%s4914 + $0x318] sm:$0xff]
        %v5015 = vld [vmem:[%s4914 + $0x320] sm:$0xff]
        %v5016 = vld [vmem:[%s4914 + $0x328] sm:$0xff]
        %v5017 = vld [vmem:[%s4914 + $0x330] sm:$0xff]
        %v5018 = vld [vmem:[%s4914 + $0x338] sm:$0xff]
        %v5019 = vld [vmem:[%s4914 + $0x340] sm:$0xff]
        %v5020 = vld [vmem:[%s4914 + $0x348] sm:$0xff]
        %v5021 = vld [vmem:[%s4914 + $0x350] sm:$0xff]
        %v5022 = vld [vmem:[%s4914 + $0x358] sm:$0xff]
        %v5023 = vld [vmem:[%s4914 + $0x360] sm:$0xff]
        %v5024 = vld [vmem:[%s4914 + $0x368] sm:$0xff]
        %v5025 = vld [vmem:[%s4914 + $0x370] sm:$0xff]
        %v5026 = vld [vmem:[%s4914 + $0x378] sm:$0xff]
        %v5027 = vld [vmem:[%s4914 + $0x380] sm:$0xff]
        %v5028 = vld [vmem:[%s4914 + $0x388] sm:$0xff]
        %v5029 = vld [vmem:[%s4914 + $0x390] sm:$0xff]
        %v5030 = vld [vmem:[%s4914 + $0x398] sm:$0xff]
        %v5031 = vld [vmem:[%s4914 + $0x3a0] sm:$0xff]
        %v5032 = vld [vmem:[%s4914 + $0x3a8] sm:$0xff]
        %v5033 = vld [vmem:[%s4914 + $0x3b0] sm:$0xff]
        %v5034 = vld [vmem:[%s4914 + $0x3b8] sm:$0xff]
        %v5035 = vld [vmem:[%s4914 + $0x3c0] sm:$0xff]
        %v5036 = vld [vmem:[%s4914 + $0x3c8] sm:$0xff]
        %v5037 = vld [vmem:[%s4914 + $0x3d0] sm:$0xff]
        %v5038 = vld [vmem:[%s4914 + $0x3d8] sm:$0xff]
        %v5039 = vld [vmem:[%s4914 + $0x3e0] sm:$0xff]
        %v5040 = vld [vmem:[%s4914 + $0x3e8] sm:$0xff]
        %v5041 = vld [vmem:[%s4914 + $0x3f0] sm:$0xff]
        %v5042 = vld [vmem:[%s4914 + $0x3f8] sm:$0xff]
        %v5043 = vld [vmem:[%s4914 + $0x400] sm:$0xff]
        %v5044 = vld [vmem:[%s4914 + $0x408] sm:$0xff]
        %v5045 = vld [vmem:[%s4914 + $0x410] sm:$0xff]
        %v5046 = vld [vmem:[%s4914 + $0x418] sm:$0xff]
        %v5047 = vld [vmem:[%s4914 + $0x420] sm:$0xff]
        %v5048 = vld [vmem:[%s4914 + $0x428] sm:$0xff]
        %v5049 = vld [vmem:[%s4914 + $0x430] sm:$0xff]
        %v5050 = vld [vmem:[%s4914 + $0x438] sm:$0xff]
        %v5051 = vld [vmem:[%s4914 + $0x440] sm:$0xff]
        %v5052 = vld [vmem:[%s4914 + $0x448] sm:$0xff]
        %v5053 = vld [vmem:[%s4914 + $0x450] sm:$0xff]
        %v5054 = vld [vmem:[%s4914 + $0x458] sm:$0xff]
        %v5055 = vld [vmem:[%s4914 + $0x460] sm:$0xff]
        %v5056 = vld [vmem:[%s4914 + $0x468] sm:$0xff]
        %v5057 = vld [vmem:[%s4914 + $0x470] sm:$0xff]
        %v5058 = vld [vmem:[%s4914 + $0x478] sm:$0xff]
        %v5059 = vld [vmem:[%s4914 + $0x480] sm:$0xff]
        %v5060 = vld [vmem:[%s4914 + $0x488] sm:$0xff]
        %v5061 = vld [vmem:[%s4914 + $0x490] sm:$0xff]
        %v5062 = vld [vmem:[%s4914 + $0x498] sm:$0xff]
        %v5063 = vld [vmem:[%s4914 + $0x4a0] sm:$0xff]
        %v5064 = vld [vmem:[%s4914 + $0x4a8] sm:$0xff]
        %v5065 = vld [vmem:[%s4914 + $0x4b0] sm:$0xff]
        %v5066 = vld [vmem:[%s4914 + $0x4b8] sm:$0xff]
        %v5067 = vld [vmem:[%s4914 + $0x4c0] sm:$0xff]
        %v5068 = vld [vmem:[%s4914 + $0x4c8] sm:$0xff]
        %v5069 = vld [vmem:[%s4914 + $0x4d0] sm:$0xff]
        %v5070 = vld [vmem:[%s4914 + $0x4d8] sm:$0xff]
        %v5071 = vld [vmem:[%s4914 + $0x4e0] sm:$0xff]
        %v5072 = vld [vmem:[%s4914 + $0x4e8] sm:$0xff]
        %v5073 = vld [vmem:[%s4914 + $0x4f0] sm:$0xff]
        %v5074 = vld [vmem:[%s4914 + $0x4f8] sm:$0xff]
        %v5075 = vld [vmem:[%s4914 + $0x500] sm:$0xff]
        %v5076 = vld [vmem:[%s4914 + $0x508] sm:$0xff]
        %v5077 = vld [vmem:[%s4914 + $0x510] sm:$0xff]
        %v5078 = vld [vmem:[%s4914 + $0x518] sm:$0xff]
        %v5079 = vld [vmem:[%s4914 + $0x520] sm:$0xff]
        %v5080 = vld [vmem:[%s4914 + $0x528] sm:$0xff]
        %v5081 = vld [vmem:[%s4914 + $0x530] sm:$0xff]
        %v5082 = vld [vmem:[%s4914 + $0x538] sm:$0xff]
        %v5083 = vld [vmem:[%s4914 + $0x540] sm:$0xff]
        %v5084 = vld [vmem:[%s4914 + $0x548] sm:$0xff]
        %v5085 = vld [vmem:[%s4914 + $0x550] sm:$0xff]
        %v5086 = vld [vmem:[%s4914 + $0x558] sm:$0xff]
        %v5087 = vld [vmem:[%s4914 + $0x560] sm:$0xff]
        %v5088 = vld [vmem:[%s4914 + $0x568] sm:$0xff]
        %v5089 = vld [vmem:[%s4914 + $0x570] sm:$0xff]
        %v5090 = vld [vmem:[%s4914 + $0x578] sm:$0xff]
        %v5091 = vld [vmem:[%s4914 + $0x580] sm:$0xff]
        %v5092 = vld [vmem:[%s4914 + $0x588] sm:$0xff]
        %v5093 = vld [vmem:[%s4914 + $0x590] sm:$0xff]
        %v5094 = vld [vmem:[%s4914 + $0x598] sm:$0xff]
        %v5095 = vld [vmem:[%s4914 + $0x5a0] sm:$0xff]
        %v5096 = vld [vmem:[%s4914 + $0x5a8] sm:$0xff]
        %v5097 = vld [vmem:[%s4914 + $0x5b0] sm:$0xff]
        %v5098 = vld [vmem:[%s4914 + $0x5b8] sm:$0xff]
        %v5099 = vld [vmem:[%s4914 + $0x5c0] sm:$0xff]
        %v5100 = vld [vmem:[%s4914 + $0x5c8] sm:$0xff]
        %v5101 = vld [vmem:[%s4914 + $0x5d0] sm:$0xff]
        %v5102 = vld [vmem:[%s4914 + $0x5d8] sm:$0xff]
        %v5103 = vld [vmem:[%s4914 + $0x5e0] sm:$0xff]
        %v5104 = vld [vmem:[%s4914 + $0x5e8] sm:$0xff]
        %v5105 = vld [vmem:[%s4914 + $0x5f0] sm:$0xff]
        %v5106 = vld [vmem:[%s4914 + $0x5f8] sm:$0xff]
        %v5107 = vld [vmem:[%s4914 + $0x600] sm:$0xff]
        %v5108 = vld [vmem:[%s4914 + $0x608] sm:$0xff]
        %v5109 = vld [vmem:[%s4914 + $0x610] sm:$0xff]
        %v5110 = vld [vmem:[%s4914 + $0x618] sm:$0xff]
        %v5111 = vld [vmem:[%s4914 + $0x620] sm:$0xff]
        %v5112 = vld [vmem:[%s4914 + $0x628] sm:$0xff]
        %v5113 = vld [vmem:[%s4914 + $0x630] sm:$0xff]
        %v5114 = vld [vmem:[%s4914 + $0x638] sm:$0xff]
        %v5115 = vld [vmem:[%s4914 + $0x640] sm:$0xff]
        %v5116 = vld [vmem:[%s4914 + $0x648] sm:$0xff]
        %v5117 = vld [vmem:[%s4914 + $0x650] sm:$0xff]
        %v5118 = vld [vmem:[%s4914 + $0x658] sm:$0xff]
        %v5119 = vld [vmem:[%s4914 + $0x660] sm:$0xff]
        %v5120 = vld [vmem:[%s4914 + $0x668] sm:$0xff]
        %v5121 = vld [vmem:[%s4914 + $0x670] sm:$0xff]
        %v5122 = vld [vmem:[%s4914 + $0x678] sm:$0xff]
        %v5123 = vld [vmem:[%s4914 + $0x680] sm:$0xff]
        %v5124 = vld [vmem:[%s4914 + $0x688] sm:$0xff]
        %v5125 = vld [vmem:[%s4914 + $0x690] sm:$0xff]
        %v5126 = vld [vmem:[%s4914 + $0x698] sm:$0xff]
        %v5127 = vld [vmem:[%s4914 + $0x6a0] sm:$0xff]
        %v5128 = vld [vmem:[%s4914 + $0x6a8] sm:$0xff]
        %v5129 = vld [vmem:[%s4914 + $0x6b0] sm:$0xff]
        %v5130 = vld [vmem:[%s4914 + $0x6b8] sm:$0xff]
        %v5131 = vld [vmem:[%s4914 + $0x6c0] sm:$0xff]
        %v5132 = vld [vmem:[%s4914 + $0x6c8] sm:$0xff]
        %v5133 = vld [vmem:[%s4914 + $0x6d0] sm:$0xff]
        %v5134 = vld [vmem:[%s4914 + $0x6d8] sm:$0xff]
        %v5135 = vld [vmem:[%s4914 + $0x6e0] sm:$0xff]
        %v5136 = vld [vmem:[%s4914 + $0x6e8] sm:$0xff]
        %v5137 = vld [vmem:[%s4914 + $0x6f0] sm:$0xff]
        %v5138 = vld [vmem:[%s4914 + $0x6f8] sm:$0xff]
        %v5140 = vsel %vm2070, %v4912, 0
        %5142 = vmatpush.msra.mxu0 %v4975
        %5143 = vmatpush.msra.mxu0 %v4971
        %5144 = vmatpush.msra.mxu0 %v4967
        %5145 = vmatpush.msra.mxu0 %v4963
        %5146 = vmatpush.msra.mxu0 %v4959
        %5147 = vmatpush.msra.mxu0 %v4955
        %5148 = vmatpush.msra.mxu0 %v4951
        %5149 = vmatpush.msra.mxu0 %v4947
        %5150 = vmatpush.msra.mxu0 %v4943
        %5151 = vmatpush.msra.mxu0 %v4939
        %5152 = vmatpush.msra.mxu0 %v4935
        %5153 = vmatpush.msra.mxu0 %v4931
        %5154 = vmatpush.msra.mxu0 %v4927
        %5155 = vmatpush.msra.mxu0 %v4923
        %5156 = vmatpush.msra.mxu0 %v4919
        %5157 = vmatpush.msra.mxu0 %v4915
        %5158 = vmatmul.f32.gmra.mxu0 %v4852
        %v5159 = vpop.f32.mrf.mxu0
        %v5160 = vadd.f32 0.0, %v5159
        %5161 = vdwg.mxu0
        %5162 = vmatpush.msra.mxu0 %v5039
        %5163 = vmatpush.msra.mxu0 %v5035
        %5164 = vmatpush.msra.mxu0 %v5031
        %5165 = vmatpush.msra.mxu0 %v5027
        %5166 = vmatpush.msra.mxu0 %v5023
        %5167 = vmatpush.msra.mxu0 %v5019
        %5168 = vmatpush.msra.mxu0 %v5015
        %5169 = vmatpush.msra.mxu0 %v5011
        %5170 = vmatpush.msra.mxu0 %v5007
        %5171 = vmatpush.msra.mxu0 %v5003
        %5172 = vmatpush.msra.mxu0 %v4999
        %5173 = vmatpush.msra.mxu0 %v4995
        %5174 = vmatpush.msra.mxu0 %v4991
        %5175 = vmatpush.msra.mxu0 %v4987
        %5176 = vmatpush.msra.mxu0 %v4983
        %5177 = vmatpush.msra.mxu0 %v4979
        %5178 = vmatmul.f32.gmra.mxu0 %v4872
        %v5179 = vpop.f32.mrf.mxu0
        %v5180 = vadd.f32 %v5160, %v5179
        %5181 = vdwg.mxu0
        %5182 = vmatpush.msra.mxu0 %v5103
        %5183 = vmatpush.msra.mxu0 %v5099
        %5184 = vmatpush.msra.mxu0 %v5095
        %5185 = vmatpush.msra.mxu0 %v5091
        %5186 = vmatpush.msra.mxu0 %v5087
        %5187 = vmatpush.msra.mxu0 %v5083
        %5188 = vmatpush.msra.mxu0 %v5079
        %5189 = vmatpush.msra.mxu0 %v5075
        %5190 = vmatpush.msra.mxu0 %v5071
        %5191 = vmatpush.msra.mxu0 %v5067
        %5192 = vmatpush.msra.mxu0 %v5063
        %5193 = vmatpush.msra.mxu0 %v5059
        %5194 = vmatpush.msra.mxu0 %v5055
        %5195 = vmatpush.msra.mxu0 %v5051
        %5196 = vmatpush.msra.mxu0 %v5047
        %5197 = vmatpush.msra.mxu0 %v5043
        %5198 = vmatmul.f32.gmra.mxu0 %v4892
        %v5199 = vpop.f32.mrf.mxu0
        %v5200 = vadd.f32 %v5180, %v5199
        %5201 = vdwg.mxu0
        %5202 = vmatpush.msra.mxu0 0.0
        %5203 = vmatpush.msra.mxu0 0.0
        %5204 = vmatpush.msra.mxu0 0.0
        %5205 = vmatpush.msra.mxu0 0.0
        %5206 = vmatpush.msra.mxu0 0.0
        %5207 = vmatpush.msra.mxu0 0.0
        %5208 = vmatpush.msra.mxu0 0.0
        %5209 = vmatpush.msra.mxu0 0.0
        %5210 = vmatpush.msra.mxu0 %v5135
        %5211 = vmatpush.msra.mxu0 %v5131
        %5212 = vmatpush.msra.mxu0 %v5127
        %5213 = vmatpush.msra.mxu0 %v5123
        %5214 = vmatpush.msra.mxu0 %v5119
        %5215 = vmatpush.msra.mxu0 %v5115
        %5216 = vmatpush.msra.mxu0 %v5111
        %5217 = vmatpush.msra.mxu0 %v5107
        %5218 = vmatmul.f32.gmra.mxu0 %v5140
        %v5219 = vpop.f32.mrf.mxu0
        %v5220 = vadd.f32 %v5200, %v5219
        %5221 = vdwg.mxu0
        %5222 = vmatpush.msra.mxu0 %v4976
        %5223 = vmatpush.msra.mxu0 %v4972
        %5224 = vmatpush.msra.mxu0 %v4968
        %5225 = vmatpush.msra.mxu0 %v4964
        %5226 = vmatpush.msra.mxu0 %v4960
        %5227 = vmatpush.msra.mxu0 %v4956
        %5228 = vmatpush.msra.mxu0 %v4952
        %5229 = vmatpush.msra.mxu0 %v4948
        %5230 = vmatpush.msra.mxu0 %v4944
        %5231 = vmatpush.msra.mxu0 %v4940
        %5232 = vmatpush.msra.mxu0 %v4936
        %5233 = vmatpush.msra.mxu0 %v4932
        %5234 = vmatpush.msra.mxu0 %v4928
        %5235 = vmatpush.msra.mxu0 %v4924
        %5236 = vmatpush.msra.mxu0 %v4920
        %5237 = vmatpush.msra.mxu0 %v4916
        %5238 = vmatmul.f32.gmra.mxu0 %v4852
        %v5239 = vpop.f32.mrf.mxu0
        %v5240 = vadd.f32 0.0, %v5239
        %5241 = vdwg.mxu0
        %5242 = vmatpush.msra.mxu0 %v5040
        %5243 = vmatpush.msra.mxu0 %v5036
        %5244 = vmatpush.msra.mxu0 %v5032
        %5245 = vmatpush.msra.mxu0 %v5028
        %5246 = vmatpush.msra.mxu0 %v5024
        %5247 = vmatpush.msra.mxu0 %v5020
        %5248 = vmatpush.msra.mxu0 %v5016
        %5249 = vmatpush.msra.mxu0 %v5012
        %5250 = vmatpush.msra.mxu0 %v5008
        %5251 = vmatpush.msra.mxu0 %v5004
        %5252 = vmatpush.msra.mxu0 %v5000
        %5253 = vmatpush.msra.mxu0 %v4996
        %5254 = vmatpush.msra.mxu0 %v4992
        %5255 = vmatpush.msra.mxu0 %v4988
        %5256 = vmatpush.msra.mxu0 %v4984
        %5257 = vmatpush.msra.mxu0 %v4980
        %5258 = vmatmul.f32.gmra.mxu0 %v4872
        %v5259 = vpop.f32.mrf.mxu0
        %v5260 = vadd.f32 %v5240, %v5259
        %5261 = vdwg.mxu0
        %5262 = vmatpush.msra.mxu0 %v5104
        %5263 = vmatpush.msra.mxu0 %v5100
        %5264 = vmatpush.msra.mxu0 %v5096
        %5265 = vmatpush.msra.mxu0 %v5092
        %5266 = vmatpush.msra.mxu0 %v5088
        %5267 = vmatpush.msra.mxu0 %v5084
        %5268 = vmatpush.msra.mxu0 %v5080
        %5269 = vmatpush.msra.mxu0 %v5076
        %5270 = vmatpush.msra.mxu0 %v5072
        %5271 = vmatpush.msra.mxu0 %v5068
        %5272 = vmatpush.msra.mxu0 %v5064
        %5273 = vmatpush.msra.mxu0 %v5060
        %5274 = vmatpush.msra.mxu0 %v5056
        %5275 = vmatpush.msra.mxu0 %v5052
        %5276 = vmatpush.msra.mxu0 %v5048
        %5277 = vmatpush.msra.mxu0 %v5044
        %5278 = vmatmul.f32.gmra.mxu0 %v4892
        %v5279 = vpop.f32.mrf.mxu0
        %v5280 = vadd.f32 %v5260, %v5279
        %5281 = vdwg.mxu0
        %5282 = vmatpush.msra.mxu0 0.0
        %5283 = vmatpush.msra.mxu0 0.0
        %5284 = vmatpush.msra.mxu0 0.0
        %5285 = vmatpush.msra.mxu0 0.0
        %5286 = vmatpush.msra.mxu0 0.0
        %5287 = vmatpush.msra.mxu0 0.0
        %5288 = vmatpush.msra.mxu0 0.0
        %5289 = vmatpush.msra.mxu0 0.0
        %5290 = vmatpush.msra.mxu0 %v5136
        %5291 = vmatpush.msra.mxu0 %v5132
        %5292 = vmatpush.msra.mxu0 %v5128
        %5293 = vmatpush.msra.mxu0 %v5124
        %5294 = vmatpush.msra.mxu0 %v5120
        %5295 = vmatpush.msra.mxu0 %v5116
        %5296 = vmatpush.msra.mxu0 %v5112
        %5297 = vmatpush.msra.mxu0 %v5108
        %5298 = vmatmul.f32.gmra.mxu0 %v5140
        %v5299 = vpop.f32.mrf.mxu0
        %v5300 = vadd.f32 %v5280, %v5299
        %5301 = vdwg.mxu0
        %5302 = vmatpush.msra.mxu0 %v4977
        %5303 = vmatpush.msra.mxu0 %v4973
        %5304 = vmatpush.msra.mxu0 %v4969
        %5305 = vmatpush.msra.mxu0 %v4965
        %5306 = vmatpush.msra.mxu0 %v4961
        %5307 = vmatpush.msra.mxu0 %v4957
        %5308 = vmatpush.msra.mxu0 %v4953
        %5309 = vmatpush.msra.mxu0 %v4949
        %5310 = vmatpush.msra.mxu0 %v4945
        %5311 = vmatpush.msra.mxu0 %v4941
        %5312 = vmatpush.msra.mxu0 %v4937
        %5313 = vmatpush.msra.mxu0 %v4933
        %5314 = vmatpush.msra.mxu0 %v4929
        %5315 = vmatpush.msra.mxu0 %v4925
        %5316 = vmatpush.msra.mxu0 %v4921
        %5317 = vmatpush.msra.mxu0 %v4917
        %5318 = vmatmul.f32.gmra.mxu0 %v4852
        %v5319 = vpop.f32.mrf.mxu0
        %v5320 = vadd.f32 0.0, %v5319
        %5321 = vdwg.mxu0
        %5322 = vmatpush.msra.mxu0 %v5041
        %5323 = vmatpush.msra.mxu0 %v5037
        %5324 = vmatpush.msra.mxu0 %v5033
        %5325 = vmatpush.msra.mxu0 %v5029
        %5326 = vmatpush.msra.mxu0 %v5025
        %5327 = vmatpush.msra.mxu0 %v5021
        %5328 = vmatpush.msra.mxu0 %v5017
        %5329 = vmatpush.msra.mxu0 %v5013
        %5330 = vmatpush.msra.mxu0 %v5009
        %5331 = vmatpush.msra.mxu0 %v5005
        %5332 = vmatpush.msra.mxu0 %v5001
        %5333 = vmatpush.msra.mxu0 %v4997
        %5334 = vmatpush.msra.mxu0 %v4993
        %5335 = vmatpush.msra.mxu0 %v4989
        %5336 = vmatpush.msra.mxu0 %v4985
        %5337 = vmatpush.msra.mxu0 %v4981
        %5338 = vmatmul.f32.gmra.mxu0 %v4872
        %v5339 = vpop.f32.mrf.mxu0
        %v5340 = vadd.f32 %v5320, %v5339
        %5341 = vdwg.mxu0
        %5342 = vmatpush.msra.mxu0 %v5105
        %5343 = vmatpush.msra.mxu0 %v5101
        %5344 = vmatpush.msra.mxu0 %v5097
        %5345 = vmatpush.msra.mxu0 %v5093
        %5346 = vmatpush.msra.mxu0 %v5089
        %5347 = vmatpush.msra.mxu0 %v5085
        %5348 = vmatpush.msra.mxu0 %v5081
        %5349 = vmatpush.msra.mxu0 %v5077
        %5350 = vmatpush.msra.mxu0 %v5073
        %5351 = vmatpush.msra.mxu0 %v5069
        %5352 = vmatpush.msra.mxu0 %v5065
        %5353 = vmatpush.msra.mxu0 %v5061
        %5354 = vmatpush.msra.mxu0 %v5057
        %5355 = vmatpush.msra.mxu0 %v5053
        %5356 = vmatpush.msra.mxu0 %v5049
        %5357 = vmatpush.msra.mxu0 %v5045
        %5358 = vmatmul.f32.gmra.mxu0 %v4892
        %v5359 = vpop.f32.mrf.mxu0
        %v5360 = vadd.f32 %v5340, %v5359
        %5361 = vdwg.mxu0
        %5362 = vmatpush.msra.mxu0 0.0
        %5363 = vmatpush.msra.mxu0 0.0
        %5364 = vmatpush.msra.mxu0 0.0
        %5365 = vmatpush.msra.mxu0 0.0
        %5366 = vmatpush.msra.mxu0 0.0
        %5367 = vmatpush.msra.mxu0 0.0
        %5368 = vmatpush.msra.mxu0 0.0
        %5369 = vmatpush.msra.mxu0 0.0
        %5370 = vmatpush.msra.mxu0 %v5137
        %5371 = vmatpush.msra.mxu0 %v5133
        %5372 = vmatpush.msra.mxu0 %v5129
        %5373 = vmatpush.msra.mxu0 %v5125
        %5374 = vmatpush.msra.mxu0 %v5121
        %5375 = vmatpush.msra.mxu0 %v5117
        %5376 = vmatpush.msra.mxu0 %v5113
        %5377 = vmatpush.msra.mxu0 %v5109
        %5378 = vmatmul.f32.gmra.mxu0 %v5140
        %v5379 = vpop.f32.mrf.mxu0
        %v5380 = vadd.f32 %v5360, %v5379
        %5381 = vdwg.mxu0
        %5382 = vmatpush.msra.mxu0 %v4978
        %5383 = vmatpush.msra.mxu0 %v4974
        %5384 = vmatpush.msra.mxu0 %v4970
        %5385 = vmatpush.msra.mxu0 %v4966
        %5386 = vmatpush.msra.mxu0 %v4962
        %5387 = vmatpush.msra.mxu0 %v4958
        %5388 = vmatpush.msra.mxu0 %v4954
        %5389 = vmatpush.msra.mxu0 %v4950
        %5390 = vmatpush.msra.mxu0 %v4946
        %5391 = vmatpush.msra.mxu0 %v4942
        %5392 = vmatpush.msra.mxu0 %v4938
        %5393 = vmatpush.msra.mxu0 %v4934
        %5394 = vmatpush.msra.mxu0 %v4930
        %5395 = vmatpush.msra.mxu0 %v4926
        %5396 = vmatpush.msra.mxu0 %v4922
        %5397 = vmatpush.msra.mxu0 %v4918
        %5398 = vmatmul.f32.gmra.mxu0 %v4852
        %v5399 = vpop.f32.mrf.mxu0
        %v5400 = vadd.f32 0.0, %v5399
        %5401 = vdwg.mxu0
        %5402 = vmatpush.msra.mxu0 %v5042
        %5403 = vmatpush.msra.mxu0 %v5038
        %5404 = vmatpush.msra.mxu0 %v5034
        %5405 = vmatpush.msra.mxu0 %v5030
        %5406 = vmatpush.msra.mxu0 %v5026
        %5407 = vmatpush.msra.mxu0 %v5022
        %5408 = vmatpush.msra.mxu0 %v5018
        %5409 = vmatpush.msra.mxu0 %v5014
        %5410 = vmatpush.msra.mxu0 %v5010
        %5411 = vmatpush.msra.mxu0 %v5006
        %5412 = vmatpush.msra.mxu0 %v5002
        %5413 = vmatpush.msra.mxu0 %v4998
        %5414 = vmatpush.msra.mxu0 %v4994
        %5415 = vmatpush.msra.mxu0 %v4990
        %5416 = vmatpush.msra.mxu0 %v4986
        %5417 = vmatpush.msra.mxu0 %v4982
        %5418 = vmatmul.f32.gmra.mxu0 %v4872
        %v5419 = vpop.f32.mrf.mxu0
        %v5420 = vadd.f32 %v5400, %v5419
        %5421 = vdwg.mxu0
        %5422 = vmatpush.msra.mxu0 %v5106
        %5423 = vmatpush.msra.mxu0 %v5102
        %5424 = vmatpush.msra.mxu0 %v5098
        %5425 = vmatpush.msra.mxu0 %v5094
        %5426 = vmatpush.msra.mxu0 %v5090
        %5427 = vmatpush.msra.mxu0 %v5086
        %5428 = vmatpush.msra.mxu0 %v5082
        %5429 = vmatpush.msra.mxu0 %v5078
        %5430 = vmatpush.msra.mxu0 %v5074
        %5431 = vmatpush.msra.mxu0 %v5070
        %5432 = vmatpush.msra.mxu0 %v5066
        %5433 = vmatpush.msra.mxu0 %v5062
        %5434 = vmatpush.msra.mxu0 %v5058
        %5435 = vmatpush.msra.mxu0 %v5054
        %5436 = vmatpush.msra.mxu0 %v5050
        %5437 = vmatpush.msra.mxu0 %v5046
        %5438 = vmatmul.f32.gmra.mxu0 %v4892
        %v5439 = vpop.f32.mrf.mxu0
        %v5440 = vadd.f32 %v5420, %v5439
        %5441 = vdwg.mxu0
        %5442 = vmatpush.msra.mxu0 0.0
        %5443 = vmatpush.msra.mxu0 0.0
        %5444 = vmatpush.msra.mxu0 0.0
        %5445 = vmatpush.msra.mxu0 0.0
        %5446 = vmatpush.msra.mxu0 0.0
        %5447 = vmatpush.msra.mxu0 0.0
        %5448 = vmatpush.msra.mxu0 0.0
        %5449 = vmatpush.msra.mxu0 0.0
        %5450 = vmatpush.msra.mxu0 %v5138
        %5451 = vmatpush.msra.mxu0 %v5134
        %5452 = vmatpush.msra.mxu0 %v5130
        %5453 = vmatpush.msra.mxu0 %v5126
        %5454 = vmatpush.msra.mxu0 %v5122
        %5455 = vmatpush.msra.mxu0 %v5118
        %5456 = vmatpush.msra.mxu0 %v5114
        %5457 = vmatpush.msra.mxu0 %v5110
        %5458 = vmatmul.f32.gmra.mxu0 %v5140
        %v5459 = vpop.f32.mrf.mxu0
        %v5460 = vadd.f32 %v5440, %v5459
        %5461 = vdwg.mxu0
        %v5462 = vadd.f32 %v4587, %v5220
        %v5463 = vadd.f32 %v4667, %v5300
        %v5464 = vadd.f32 %v4747, %v5380
        %v5465 = vadd.f32 %v4827, %v5460
        %v5466 = vld [vmem:[#allocation16] sm:$0xf]
        %v5468 = vperm.slane %v5466, 0
        %v5469 = vperm.slane %v5466, 1
        %v5470 = vperm.slane %v5466, 2
        %v5471 = vperm.slane %v5466, 3
        %v5476 = vadd.f32 %v5462, %v5468
        %v5477 = vadd.f32 %v5463, %v5469
        %v5478 = vadd.f32 %v5464, %v5470
        %v5479 = vadd.f32 %v5465, %v5471
        %v5480 = vmax.f32 %v5476, 0.0
        %v5481 = vmax.f32 %v5477, 0.0
        %v5482 = vmax.f32 %v5478, 0.0
        %v5483 = vmax.f32 %v5479, 0.0
        %v5484 = vld [vmem:[#allocation17] sm:$0x7f]
        %vm5485 = vcmask 56320
        %v5487 = vsel %vm5485, %v5484, 0
        %vm5489 = vcmask 1046528
        %v5491 = vsel %vm5489, %v5480, 0
        %v5494 = vsel %vm5489, %v5481, 0
        %v5497 = vsel %vm5489, %v5482, 0
        %v5500 = vsel %vm5489, %v5483, 0
        %5502 = vmatpush.msra.mxu0 0.0
        %5503 = vmatpush.msra.mxu0 0.0
        %5504 = vmatpush.msra.mxu0 0.0
        %5505 = vmatpush.msra.mxu0 0.0
        %5506 = vmatpush.msra.mxu0 0.0
        %5507 = vmatpush.msra.mxu0 0.0
        %5508 = vmatpush.msra.mxu0 0.0
        %5509 = vmatpush.msra.mxu0 0.0
        %5510 = vmatpush.msra.mxu0 0.0
        %5511 = vmatpush.msra.mxu0 0.0
        %5512 = vmatpush.msra.mxu0 0.0
        %5513 = vmatpush.msra.mxu0 0.0
        %5514 = vmatpush.msra.mxu0 0.0
        %5515 = vmatpush.msra.mxu0 0.0
        %5516 = vmatpush.msra.mxu0 0.0
        %5517 = vmatpush.msra.mxu0 %v5491
        %5518 = vmatmul.f32.gmra.mxu0 %v5487
        %v5519 = vpop.f32.mrf.mxu0
        %v5520 = vadd.f32 0.0, %v5519
        %5521 = vdwg.mxu0
        %5522 = vmatpush.msra.mxu0 0.0
        %5523 = vmatpush.msra.mxu0 0.0
        %5524 = vmatpush.msra.mxu0 0.0
        %5525 = vmatpush.msra.mxu0 0.0
        %5526 = vmatpush.msra.mxu0 0.0
        %5527 = vmatpush.msra.mxu0 0.0
        %5528 = vmatpush.msra.mxu0 0.0
        %5529 = vmatpush.msra.mxu0 0.0
        %5530 = vmatpush.msra.mxu0 0.0
        %5531 = vmatpush.msra.mxu0 0.0
        %5532 = vmatpush.msra.mxu0 0.0
        %5533 = vmatpush.msra.mxu0 0.0
        %5534 = vmatpush.msra.mxu0 0.0
        %5535 = vmatpush.msra.mxu0 0.0
        %5536 = vmatpush.msra.mxu0 0.0
        %5537 = vmatpush.msra.mxu0 %v5494
        %5538 = vmatmul.f32.gmra.mxu0 %v5487
        %v5539 = vpop.f32.mrf.mxu0
        %v5540 = vadd.f32 0.0, %v5539
        %5541 = vdwg.mxu0
        %5542 = vmatpush.msra.mxu0 0.0
        %5543 = vmatpush.msra.mxu0 0.0
        %5544 = vmatpush.msra.mxu0 0.0
        %5545 = vmatpush.msra.mxu0 0.0
        %5546 = vmatpush.msra.mxu0 0.0
        %5547 = vmatpush.msra.mxu0 0.0
        %5548 = vmatpush.msra.mxu0 0.0
        %5549 = vmatpush.msra.mxu0 0.0
        %5550 = vmatpush.msra.mxu0 0.0
        %5551 = vmatpush.msra.mxu0 0.0
        %5552 = vmatpush.msra.mxu0 0.0
        %5553 = vmatpush.msra.mxu0 0.0
        %5554 = vmatpush.msra.mxu0 0.0
        %5555 = vmatpush.msra.mxu0 0.0
        %5556 = vmatpush.msra.mxu0 0.0
        %5557 = vmatpush.msra.mxu0 %v5497
        %5558 = vmatmul.f32.gmra.mxu0 %v5487
        %v5559 = vpop.f32.mrf.mxu0
        %v5560 = vadd.f32 0.0, %v5559
        %5561 = vdwg.mxu0
        %5562 = vmatpush.msra.mxu0 0.0
        %5563 = vmatpush.msra.mxu0 0.0
        %5564 = vmatpush.msra.mxu0 0.0
        %5565 = vmatpush.msra.mxu0 0.0
        %5566 = vmatpush.msra.mxu0 0.0
        %5567 = vmatpush.msra.mxu0 0.0
        %5568 = vmatpush.msra.mxu0 0.0
        %5569 = vmatpush.msra.mxu0 0.0
        %5570 = vmatpush.msra.mxu0 0.0
        %5571 = vmatpush.msra.mxu0 0.0
        %5572 = vmatpush.msra.mxu0 0.0
        %5573 = vmatpush.msra.mxu0 0.0
        %5574 = vmatpush.msra.mxu0 0.0
        %5575 = vmatpush.msra.mxu0 0.0
        %5576 = vmatpush.msra.mxu0 0.0
        %5577 = vmatpush.msra.mxu0 %v5500
        %5578 = vmatmul.f32.gmra.mxu0 %v5487
        %v5579 = vpop.f32.mrf.mxu0
        %v5580 = vadd.f32 0.0, %v5579
        %5581 = vdwg.mxu0
        %v5582 = vld [vmem:[#allocation19] sm:$0xff]
        %v5583 = vld [vmem:[#allocation19 + $0x8] sm:$0xff]
        %v5584 = vld [vmem:[#allocation19 + $0x10] sm:$0xff]
        %v5585 = vld [vmem:[#allocation19 + $0x18] sm:$0xff]
        %v5586 = vld [vmem:[#allocation19 + $0x20] sm:$0xff]
        %v5587 = vld [vmem:[#allocation19 + $0x28] sm:$0xff]
        %v5588 = vld [vmem:[#allocation19 + $0x30] sm:$0xff]
        %v5589 = vld [vmem:[#allocation19 + $0x38] sm:$0xff]
        %v5590 = vld [vmem:[#allocation19 + $0x40] sm:$0xff]
        %v5591 = vld [vmem:[#allocation19 + $0x48] sm:$0xff]
        %v5592 = vld [vmem:[#allocation19 + $0x50] sm:$0xff]
        %v5593 = vld [vmem:[#allocation19 + $0x58] sm:$0xff]
        %v5594 = vld [vmem:[#allocation19 + $0x60] sm:$0xff]
        %v5595 = vld [vmem:[#allocation19 + $0x68] sm:$0xff]
        %v5596 = vld [vmem:[#allocation19 + $0x70] sm:$0xff]
        %v5597 = vld [vmem:[#allocation19 + $0x78] sm:$0xff]
        %v5598 = vld [vmem:[#allocation19 + $0x80] sm:$0xff]
        %v5599 = vld [vmem:[#allocation19 + $0x88] sm:$0xff]
        %v5600 = vld [vmem:[#allocation19 + $0x90] sm:$0xff]
        %v5601 = vld [vmem:[#allocation19 + $0x98] sm:$0xff]
        %v5602 = vld [vmem:[#allocation19 + $0xa0] sm:$0xff]
        %v5603 = vld [vmem:[#allocation19 + $0xa8] sm:$0xff]
        %v5604 = vld [vmem:[#allocation19 + $0xb0] sm:$0xff]
        %v5605 = vld [vmem:[#allocation19 + $0xb8] sm:$0xff]
        %v5606 = vld [vmem:[#allocation19 + $0xc0] sm:$0xff]
        %v5607 = vld [vmem:[#allocation19 + $0xc8] sm:$0xff]
        %v5608 = vld [vmem:[#allocation19 + $0xd0] sm:$0xff]
        %v5609 = vld [vmem:[#allocation19 + $0xd8] sm:$0xff]
        %v5610 = vld [vmem:[#allocation19 + $0xe0] sm:$0xff]
        %v5611 = vld [vmem:[#allocation19 + $0xe8] sm:$0xff]
        %v5612 = vld [vmem:[#allocation19 + $0xf0] sm:$0xff]
        %v5613 = vld [vmem:[#allocation19 + $0xf8] sm:$0xff]
        %v5614 = vld [vmem:[#allocation19 + $0x100] sm:$0xff]
        %v5615 = vld [vmem:[#allocation19 + $0x108] sm:$0xff]
        %v5616 = vld [vmem:[#allocation19 + $0x110] sm:$0xff]
        %v5617 = vld [vmem:[#allocation19 + $0x118] sm:$0xff]
        %v5618 = vld [vmem:[#allocation19 + $0x120] sm:$0xff]
        %v5619 = vld [vmem:[#allocation19 + $0x128] sm:$0xff]
        %v5620 = vld [vmem:[#allocation19 + $0x130] sm:$0xff]
        %v5621 = vld [vmem:[#allocation19 + $0x138] sm:$0xff]
        %v5622 = vld [vmem:[#allocation19 + $0x140] sm:$0xff]
        %v5623 = vld [vmem:[#allocation19 + $0x148] sm:$0xff]
        %v5624 = vld [vmem:[#allocation19 + $0x150] sm:$0xff]
        %v5625 = vld [vmem:[#allocation19 + $0x158] sm:$0xff]
        %v5626 = vld [vmem:[#allocation19 + $0x160] sm:$0xff]
        %v5627 = vld [vmem:[#allocation19 + $0x168] sm:$0xff]
        %v5628 = vld [vmem:[#allocation19 + $0x170] sm:$0xff]
        %v5629 = vld [vmem:[#allocation19 + $0x178] sm:$0xff]
        %v5630 = vld [vmem:[#allocation19 + $0x180] sm:$0xff]
        %v5631 = vld [vmem:[#allocation19 + $0x188] sm:$0xff]
        %v5632 = vld [vmem:[#allocation19 + $0x190] sm:$0xff]
        %v5633 = vld [vmem:[#allocation19 + $0x198] sm:$0xff]
        %v5634 = vld [vmem:[#allocation19 + $0x1a0] sm:$0xff]
        %v5635 = vld [vmem:[#allocation19 + $0x1a8] sm:$0xff]
        %v5636 = vld [vmem:[#allocation19 + $0x1b0] sm:$0xff]
        %v5637 = vld [vmem:[#allocation19 + $0x1b8] sm:$0xff]
        %v5638 = vld [vmem:[#allocation19 + $0x1c0] sm:$0xff]
        %v5639 = vld [vmem:[#allocation19 + $0x1c8] sm:$0xff]
        %v5640 = vld [vmem:[#allocation19 + $0x1d0] sm:$0xff]
        %v5641 = vld [vmem:[#allocation19 + $0x1d8] sm:$0xff]
        %v5642 = vld [vmem:[#allocation19 + $0x1e0] sm:$0xff]
        %v5643 = vld [vmem:[#allocation19 + $0x1e8] sm:$0xff]
        %v5644 = vld [vmem:[#allocation19 + $0x1f0] sm:$0xff]
        %v5645 = vld [vmem:[#allocation19 + $0x1f8] sm:$0xff]
        %v5646 = vld [vmem:[#allocation19 + $0x200] sm:$0xff]
        %v5647 = vld [vmem:[#allocation19 + $0x208] sm:$0xff]
        %v5648 = vld [vmem:[#allocation19 + $0x210] sm:$0xff]
        %v5649 = vld [vmem:[#allocation19 + $0x218] sm:$0xff]
        %v5650 = vld [vmem:[#allocation19 + $0x220] sm:$0xff]
        %v5651 = vld [vmem:[#allocation19 + $0x228] sm:$0xff]
        %v5652 = vld [vmem:[#allocation19 + $0x230] sm:$0xff]
        %v5653 = vld [vmem:[#allocation19 + $0x238] sm:$0xff]
        %v5654 = vld [vmem:[#allocation19 + $0x240] sm:$0xff]
        %v5655 = vld [vmem:[#allocation19 + $0x248] sm:$0xff]
        %v5656 = vld [vmem:[#allocation19 + $0x250] sm:$0xff]
        %v5657 = vld [vmem:[#allocation19 + $0x258] sm:$0xff]
        %v5658 = vld [vmem:[#allocation19 + $0x260] sm:$0xff]
        %v5659 = vld [vmem:[#allocation19 + $0x268] sm:$0xff]
        %v5660 = vld [vmem:[#allocation19 + $0x270] sm:$0xff]
        %v5661 = vld [vmem:[#allocation19 + $0x278] sm:$0xff]
        %v5662 = vld [vmem:[#allocation19 + $0x280] sm:$0xff]
        %v5663 = vld [vmem:[#allocation19 + $0x288] sm:$0xff]
        %v5664 = vld [vmem:[#allocation19 + $0x290] sm:$0xff]
        %v5665 = vld [vmem:[#allocation19 + $0x298] sm:$0xff]
        %v5666 = vld [vmem:[#allocation19 + $0x2a0] sm:$0xff]
        %v5667 = vld [vmem:[#allocation19 + $0x2a8] sm:$0xff]
        %v5668 = vld [vmem:[#allocation19 + $0x2b0] sm:$0xff]
        %v5669 = vld [vmem:[#allocation19 + $0x2b8] sm:$0xff]
        %v5670 = vld [vmem:[#allocation19 + $0x2c0] sm:$0xff]
        %v5671 = vld [vmem:[#allocation19 + $0x2c8] sm:$0xff]
        %v5672 = vld [vmem:[#allocation19 + $0x2d0] sm:$0xff]
        %v5673 = vld [vmem:[#allocation19 + $0x2d8] sm:$0xff]
        %v5674 = vld [vmem:[#allocation19 + $0x2e0] sm:$0xff]
        %v5675 = vld [vmem:[#allocation19 + $0x2e8] sm:$0xff]
        %v5676 = vld [vmem:[#allocation19 + $0x2f0] sm:$0xff]
        %v5677 = vld [vmem:[#allocation19 + $0x2f8] sm:$0xff]
        %v5678 = vld [vmem:[#allocation19 + $0x300] sm:$0xff]
        %v5679 = vld [vmem:[#allocation19 + $0x308] sm:$0xff]
        %v5680 = vld [vmem:[#allocation19 + $0x310] sm:$0xff]
        %v5681 = vld [vmem:[#allocation19 + $0x318] sm:$0xff]
        %v5682 = vld [vmem:[#allocation19 + $0x320] sm:$0xff]
        %v5683 = vld [vmem:[#allocation19 + $0x328] sm:$0xff]
        %v5684 = vld [vmem:[#allocation19 + $0x330] sm:$0xff]
        %v5685 = vld [vmem:[#allocation19 + $0x338] sm:$0xff]
        %v5686 = vld [vmem:[#allocation19 + $0x340] sm:$0xff]
        %v5687 = vld [vmem:[#allocation19 + $0x348] sm:$0xff]
        %v5688 = vld [vmem:[#allocation19 + $0x350] sm:$0xff]
        %v5689 = vld [vmem:[#allocation19 + $0x358] sm:$0xff]
        %v5690 = vld [vmem:[#allocation19 + $0x360] sm:$0xff]
        %v5691 = vld [vmem:[#allocation19 + $0x368] sm:$0xff]
        %v5692 = vld [vmem:[#allocation19 + $0x370] sm:$0xff]
        %v5693 = vld [vmem:[#allocation19 + $0x378] sm:$0xff]
        %v5694 = vld [vmem:[#allocation19 + $0x380] sm:$0xff]
        %v5695 = vld [vmem:[#allocation19 + $0x388] sm:$0xff]
        %v5696 = vld [vmem:[#allocation19 + $0x390] sm:$0xff]
        %v5697 = vld [vmem:[#allocation19 + $0x398] sm:$0xff]
        %v5698 = vld [vmem:[#allocation19 + $0x3a0] sm:$0xff]
        %v5699 = vld [vmem:[#allocation19 + $0x3a8] sm:$0xff]
        %v5700 = vld [vmem:[#allocation19 + $0x3b0] sm:$0xff]
        %v5701 = vld [vmem:[#allocation19 + $0x3b8] sm:$0xff]
        %v5702 = vld [vmem:[#allocation19 + $0x3c0] sm:$0xff]
        %v5703 = vld [vmem:[#allocation19 + $0x3c8] sm:$0xff]
        %v5704 = vld [vmem:[#allocation19 + $0x3d0] sm:$0xff]
        %v5705 = vld [vmem:[#allocation19 + $0x3d8] sm:$0xff]
        %v5706 = vld [vmem:[#allocation19 + $0x3e0] sm:$0xff]
        %v5707 = vld [vmem:[#allocation19 + $0x3e8] sm:$0xff]
        %v5708 = vld [vmem:[#allocation19 + $0x3f0] sm:$0xff]
        %v5709 = vld [vmem:[#allocation19 + $0x3f8] sm:$0xff]
        %v5710 = vld [vmem:[#allocation19 + $0x400] sm:$0xff]
        %v5711 = vld [vmem:[#allocation19 + $0x408] sm:$0xff]
        %v5712 = vld [vmem:[#allocation19 + $0x410] sm:$0xff]
        %v5713 = vld [vmem:[#allocation19 + $0x418] sm:$0xff]
        %v5714 = vld [vmem:[#allocation19 + $0x420] sm:$0xff]
        %v5715 = vld [vmem:[#allocation19 + $0x428] sm:$0xff]
        %v5716 = vld [vmem:[#allocation19 + $0x430] sm:$0xff]
        %v5717 = vld [vmem:[#allocation19 + $0x438] sm:$0xff]
        %v5718 = vld [vmem:[#allocation19 + $0x440] sm:$0xff]
        %v5719 = vld [vmem:[#allocation19 + $0x448] sm:$0xff]
        %v5720 = vld [vmem:[#allocation19 + $0x450] sm:$0xff]
        %v5721 = vld [vmem:[#allocation19 + $0x458] sm:$0xff]
        %v5722 = vld [vmem:[#allocation19 + $0x460] sm:$0xff]
        %v5723 = vld [vmem:[#allocation19 + $0x468] sm:$0xff]
        %v5724 = vld [vmem:[#allocation19 + $0x470] sm:$0xff]
        %v5725 = vld [vmem:[#allocation19 + $0x478] sm:$0xff]
        %v5726 = vld [vmem:[#allocation19 + $0x480] sm:$0xff]
        %v5727 = vld [vmem:[#allocation19 + $0x488] sm:$0xff]
        %v5728 = vld [vmem:[#allocation19 + $0x490] sm:$0xff]
        %v5729 = vld [vmem:[#allocation19 + $0x498] sm:$0xff]
        %v5730 = vld [vmem:[#allocation19 + $0x4a0] sm:$0xff]
        %v5731 = vld [vmem:[#allocation19 + $0x4a8] sm:$0xff]
        %v5732 = vld [vmem:[#allocation19 + $0x4b0] sm:$0xff]
        %v5733 = vld [vmem:[#allocation19 + $0x4b8] sm:$0xff]
        %v5734 = vld [vmem:[#allocation19 + $0x4c0] sm:$0xff]
        %v5735 = vld [vmem:[#allocation19 + $0x4c8] sm:$0xff]
        %v5736 = vld [vmem:[#allocation19 + $0x4d0] sm:$0xff]
        %v5737 = vld [vmem:[#allocation19 + $0x4d8] sm:$0xff]
        %v5738 = vld [vmem:[#allocation19 + $0x4e0] sm:$0xff]
        %v5739 = vld [vmem:[#allocation19 + $0x4e8] sm:$0xff]
        %v5740 = vld [vmem:[#allocation19 + $0x4f0] sm:$0xff]
        %v5741 = vld [vmem:[#allocation19 + $0x4f8] sm:$0xff]
        %v5742 = vld [vmem:[#allocation19 + $0x500] sm:$0xff]
        %v5743 = vld [vmem:[#allocation19 + $0x508] sm:$0xff]
        %v5744 = vld [vmem:[#allocation19 + $0x510] sm:$0xff]
        %v5745 = vld [vmem:[#allocation19 + $0x518] sm:$0xff]
        %v5746 = vld [vmem:[#allocation19 + $0x520] sm:$0xff]
        %v5747 = vld [vmem:[#allocation19 + $0x528] sm:$0xff]
        %v5748 = vld [vmem:[#allocation19 + $0x530] sm:$0xff]
        %v5749 = vld [vmem:[#allocation19 + $0x538] sm:$0xff]
        %v5750 = vld [vmem:[#allocation19 + $0x540] sm:$0xff]
        %v5751 = vld [vmem:[#allocation19 + $0x548] sm:$0xff]
        %v5752 = vld [vmem:[#allocation19 + $0x550] sm:$0xff]
        %v5753 = vld [vmem:[#allocation19 + $0x558] sm:$0xff]
        %v5754 = vld [vmem:[#allocation19 + $0x560] sm:$0xff]
        %v5755 = vld [vmem:[#allocation19 + $0x568] sm:$0xff]
        %v5756 = vld [vmem:[#allocation19 + $0x570] sm:$0xff]
        %v5757 = vld [vmem:[#allocation19 + $0x578] sm:$0xff]
        %v5758 = vld [vmem:[#allocation19 + $0x580] sm:$0xff]
        %v5759 = vld [vmem:[#allocation19 + $0x588] sm:$0xff]
        %v5760 = vld [vmem:[#allocation19 + $0x590] sm:$0xff]
        %v5761 = vld [vmem:[#allocation19 + $0x598] sm:$0xff]
        %v5762 = vld [vmem:[#allocation19 + $0x5a0] sm:$0xff]
        %v5763 = vld [vmem:[#allocation19 + $0x5a8] sm:$0xff]
        %v5764 = vld [vmem:[#allocation19 + $0x5b0] sm:$0xff]
        %v5765 = vld [vmem:[#allocation19 + $0x5b8] sm:$0xff]
        %v5766 = vld [vmem:[#allocation19 + $0x5c0] sm:$0xff]
        %v5767 = vld [vmem:[#allocation19 + $0x5c8] sm:$0xff]
        %v5768 = vld [vmem:[#allocation19 + $0x5d0] sm:$0xff]
        %v5769 = vld [vmem:[#allocation19 + $0x5d8] sm:$0xff]
        %v5770 = vld [vmem:[#allocation19 + $0x5e0] sm:$0xff]
        %v5771 = vld [vmem:[#allocation19 + $0x5e8] sm:$0xff]
        %v5772 = vld [vmem:[#allocation19 + $0x5f0] sm:$0xff]
        %v5773 = vld [vmem:[#allocation19 + $0x5f8] sm:$0xff]
        %v5774 = vld [vmem:[#allocation19 + $0x600] sm:$0xff]
        %v5775 = vld [vmem:[#allocation19 + $0x608] sm:$0xff]
        %v5776 = vld [vmem:[#allocation19 + $0x610] sm:$0xff]
        %v5777 = vld [vmem:[#allocation19 + $0x618] sm:$0xff]
        %v5778 = vld [vmem:[#allocation19 + $0x620] sm:$0xff]
        %v5779 = vld [vmem:[#allocation19 + $0x628] sm:$0xff]
        %v5780 = vld [vmem:[#allocation19 + $0x630] sm:$0xff]
        %v5781 = vld [vmem:[#allocation19 + $0x638] sm:$0xff]
        %v5782 = vld [vmem:[#allocation19 + $0x640] sm:$0xff]
        %v5783 = vld [vmem:[#allocation19 + $0x648] sm:$0xff]
        %v5784 = vld [vmem:[#allocation19 + $0x650] sm:$0xff]
        %v5785 = vld [vmem:[#allocation19 + $0x658] sm:$0xff]
        %v5786 = vld [vmem:[#allocation19 + $0x660] sm:$0xff]
        %v5787 = vld [vmem:[#allocation19 + $0x668] sm:$0xff]
        %v5788 = vld [vmem:[#allocation19 + $0x670] sm:$0xff]
        %v5789 = vld [vmem:[#allocation19 + $0x678] sm:$0xff]
        %v5790 = vld [vmem:[#allocation19 + $0x680] sm:$0xff]
        %v5791 = vld [vmem:[#allocation19 + $0x688] sm:$0xff]
        %v5792 = vld [vmem:[#allocation19 + $0x690] sm:$0xff]
        %v5793 = vld [vmem:[#allocation19 + $0x698] sm:$0xff]
        %v5794 = vld [vmem:[#allocation19 + $0x6a0] sm:$0xff]
        %v5795 = vld [vmem:[#allocation19 + $0x6a8] sm:$0xff]
        %v5796 = vld [vmem:[#allocation19 + $0x6b0] sm:$0xff]
        %v5797 = vld [vmem:[#allocation19 + $0x6b8] sm:$0xff]
        %v5798 = vld [vmem:[#allocation19 + $0x6c0] sm:$0xff]
        %v5799 = vld [vmem:[#allocation19 + $0x6c8] sm:$0xff]
        %v5800 = vld [vmem:[#allocation19 + $0x6d0] sm:$0xff]
        %v5801 = vld [vmem:[#allocation19 + $0x6d8] sm:$0xff]
        %v5802 = vld [vmem:[#allocation19 + $0x6e0] sm:$0xff]
        %v5803 = vld [vmem:[#allocation19 + $0x6e8] sm:$0xff]
        %v5804 = vld [vmem:[#allocation19 + $0x6f0] sm:$0xff]
        %v5805 = vld [vmem:[#allocation19 + $0x6f8] sm:$0xff]
        %s5806 = scalar_lea.vmem [#allocation17], 8
        %v5807 = vld [vmem:[%s5806] sm:$0x7f]
        %v5809 = vsel %vm5485, %v5807, 0
        %5811 = vmatpush.msra.mxu0 0.0
        %5812 = vmatpush.msra.mxu0 0.0
        %5813 = vmatpush.msra.mxu0 0.0
        %5814 = vmatpush.msra.mxu0 0.0
        %5815 = vmatpush.msra.mxu0 0.0
        %5816 = vmatpush.msra.mxu0 0.0
        %5817 = vmatpush.msra.mxu0 0.0
        %5818 = vmatpush.msra.mxu0 0.0
        %5819 = vmatpush.msra.mxu0 0.0
        %5820 = vmatpush.msra.mxu0 0.0
        %5821 = vmatpush.msra.mxu0 0.0
        %5822 = vmatpush.msra.mxu0 0.0
        %5823 = vmatpush.msra.mxu0 0.0
        %5824 = vmatpush.msra.mxu0 0.0
        %5825 = vmatpush.msra.mxu0 0.0
        %5826 = vmatpush.msra.mxu0 %v5491
        %5827 = vmatmul.f32.gmra.mxu0 %v5809
        %v5828 = vpop.f32.mrf.mxu0
        %v5829 = vadd.f32 0.0, %v5828
        %5830 = vdwg.mxu0
        %5831 = vmatpush.msra.mxu0 0.0
        %5832 = vmatpush.msra.mxu0 0.0
        %5833 = vmatpush.msra.mxu0 0.0
        %5834 = vmatpush.msra.mxu0 0.0
        %5835 = vmatpush.msra.mxu0 0.0
        %5836 = vmatpush.msra.mxu0 0.0
        %5837 = vmatpush.msra.mxu0 0.0
        %5838 = vmatpush.msra.mxu0 0.0
        %5839 = vmatpush.msra.mxu0 0.0
        %5840 = vmatpush.msra.mxu0 0.0
        %5841 = vmatpush.msra.mxu0 0.0
        %5842 = vmatpush.msra.mxu0 0.0
        %5843 = vmatpush.msra.mxu0 0.0
        %5844 = vmatpush.msra.mxu0 0.0
        %5845 = vmatpush.msra.mxu0 0.0
        %5846 = vmatpush.msra.mxu0 %v5494
        %5847 = vmatmul.f32.gmra.mxu0 %v5809
        %v5848 = vpop.f32.mrf.mxu0
        %v5849 = vadd.f32 0.0, %v5848
        %5850 = vdwg.mxu0
        %5851 = vmatpush.msra.mxu0 0.0
        %5852 = vmatpush.msra.mxu0 0.0
        %5853 = vmatpush.msra.mxu0 0.0
        %5854 = vmatpush.msra.mxu0 0.0
        %5855 = vmatpush.msra.mxu0 0.0
        %5856 = vmatpush.msra.mxu0 0.0
        %5857 = vmatpush.msra.mxu0 0.0
        %5858 = vmatpush.msra.mxu0 0.0
        %5859 = vmatpush.msra.mxu0 0.0
        %5860 = vmatpush.msra.mxu0 0.0
        %5861 = vmatpush.msra.mxu0 0.0
        %5862 = vmatpush.msra.mxu0 0.0
        %5863 = vmatpush.msra.mxu0 0.0
        %5864 = vmatpush.msra.mxu0 0.0
        %5865 = vmatpush.msra.mxu0 0.0
        %5866 = vmatpush.msra.mxu0 %v5497
        %5867 = vmatmul.f32.gmra.mxu0 %v5809
        %v5868 = vpop.f32.mrf.mxu0
        %v5869 = vadd.f32 0.0, %v5868
        %5870 = vdwg.mxu0
        %5871 = vmatpush.msra.mxu0 0.0
        %5872 = vmatpush.msra.mxu0 0.0
        %5873 = vmatpush.msra.mxu0 0.0
        %5874 = vmatpush.msra.mxu0 0.0
        %5875 = vmatpush.msra.mxu0 0.0
        %5876 = vmatpush.msra.mxu0 0.0
        %5877 = vmatpush.msra.mxu0 0.0
        %5878 = vmatpush.msra.mxu0 0.0
        %5879 = vmatpush.msra.mxu0 0.0
        %5880 = vmatpush.msra.mxu0 0.0
        %5881 = vmatpush.msra.mxu0 0.0
        %5882 = vmatpush.msra.mxu0 0.0
        %5883 = vmatpush.msra.mxu0 0.0
        %5884 = vmatpush.msra.mxu0 0.0
        %5885 = vmatpush.msra.mxu0 0.0
        %5886 = vmatpush.msra.mxu0 %v5500
        %5887 = vmatmul.f32.gmra.mxu0 %v5809
        %v5888 = vpop.f32.mrf.mxu0
        %v5889 = vadd.f32 0.0, %v5888
        %5890 = vdwg.mxu0
        %s5891 = scalar_lea.vmem [#allocation19], 1792
        %v5892 = vld [vmem:[%s5891] sm:$0xff]
        %v5893 = vld [vmem:[%s5891 + $0x8] sm:$0xff]
        %v5894 = vld [vmem:[%s5891 + $0x10] sm:$0xff]
        %v5895 = vld [vmem:[%s5891 + $0x18] sm:$0xff]
        %v5896 = vld [vmem:[%s5891 + $0x20] sm:$0xff]
        %v5897 = vld [vmem:[%s5891 + $0x28] sm:$0xff]
        %v5898 = vld [vmem:[%s5891 + $0x30] sm:$0xff]
        %v5899 = vld [vmem:[%s5891 + $0x38] sm:$0xff]
        %v5900 = vld [vmem:[%s5891 + $0x40] sm:$0xff]
        %v5901 = vld [vmem:[%s5891 + $0x48] sm:$0xff]
        %v5902 = vld [vmem:[%s5891 + $0x50] sm:$0xff]
        %v5903 = vld [vmem:[%s5891 + $0x58] sm:$0xff]
        %v5904 = vld [vmem:[%s5891 + $0x60] sm:$0xff]
        %v5905 = vld [vmem:[%s5891 + $0x68] sm:$0xff]
        %v5906 = vld [vmem:[%s5891 + $0x70] sm:$0xff]
        %v5907 = vld [vmem:[%s5891 + $0x78] sm:$0xff]
        %v5908 = vld [vmem:[%s5891 + $0x80] sm:$0xff]
        %v5909 = vld [vmem:[%s5891 + $0x88] sm:$0xff]
        %v5910 = vld [vmem:[%s5891 + $0x90] sm:$0xff]
        %v5911 = vld [vmem:[%s5891 + $0x98] sm:$0xff]
        %v5912 = vld [vmem:[%s5891 + $0xa0] sm:$0xff]
        %v5913 = vld [vmem:[%s5891 + $0xa8] sm:$0xff]
        %v5914 = vld [vmem:[%s5891 + $0xb0] sm:$0xff]
        %v5915 = vld [vmem:[%s5891 + $0xb8] sm:$0xff]
        %v5916 = vld [vmem:[%s5891 + $0xc0] sm:$0xff]
        %v5917 = vld [vmem:[%s5891 + $0xc8] sm:$0xff]
        %v5918 = vld [vmem:[%s5891 + $0xd0] sm:$0xff]
        %v5919 = vld [vmem:[%s5891 + $0xd8] sm:$0xff]
        %v5920 = vld [vmem:[%s5891 + $0xe0] sm:$0xff]
        %v5921 = vld [vmem:[%s5891 + $0xe8] sm:$0xff]
        %v5922 = vld [vmem:[%s5891 + $0xf0] sm:$0xff]
        %v5923 = vld [vmem:[%s5891 + $0xf8] sm:$0xff]
        %v5924 = vld [vmem:[%s5891 + $0x100] sm:$0xff]
        %v5925 = vld [vmem:[%s5891 + $0x108] sm:$0xff]
        %v5926 = vld [vmem:[%s5891 + $0x110] sm:$0xff]
        %v5927 = vld [vmem:[%s5891 + $0x118] sm:$0xff]
        %v5928 = vld [vmem:[%s5891 + $0x120] sm:$0xff]
        %v5929 = vld [vmem:[%s5891 + $0x128] sm:$0xff]
        %v5930 = vld [vmem:[%s5891 + $0x130] sm:$0xff]
        %v5931 = vld [vmem:[%s5891 + $0x138] sm:$0xff]
        %v5932 = vld [vmem:[%s5891 + $0x140] sm:$0xff]
        %v5933 = vld [vmem:[%s5891 + $0x148] sm:$0xff]
        %v5934 = vld [vmem:[%s5891 + $0x150] sm:$0xff]
        %v5935 = vld [vmem:[%s5891 + $0x158] sm:$0xff]
        %v5936 = vld [vmem:[%s5891 + $0x160] sm:$0xff]
        %v5937 = vld [vmem:[%s5891 + $0x168] sm:$0xff]
        %v5938 = vld [vmem:[%s5891 + $0x170] sm:$0xff]
        %v5939 = vld [vmem:[%s5891 + $0x178] sm:$0xff]
        %v5940 = vld [vmem:[%s5891 + $0x180] sm:$0xff]
        %v5941 = vld [vmem:[%s5891 + $0x188] sm:$0xff]
        %v5942 = vld [vmem:[%s5891 + $0x190] sm:$0xff]
        %v5943 = vld [vmem:[%s5891 + $0x198] sm:$0xff]
        %v5944 = vld [vmem:[%s5891 + $0x1a0] sm:$0xff]
        %v5945 = vld [vmem:[%s5891 + $0x1a8] sm:$0xff]
        %v5946 = vld [vmem:[%s5891 + $0x1b0] sm:$0xff]
        %v5947 = vld [vmem:[%s5891 + $0x1b8] sm:$0xff]
        %v5948 = vld [vmem:[%s5891 + $0x1c0] sm:$0xff]
        %v5949 = vld [vmem:[%s5891 + $0x1c8] sm:$0xff]
        %v5950 = vld [vmem:[%s5891 + $0x1d0] sm:$0xff]
        %v5951 = vld [vmem:[%s5891 + $0x1d8] sm:$0xff]
        %v5952 = vld [vmem:[%s5891 + $0x1e0] sm:$0xff]
        %v5953 = vld [vmem:[%s5891 + $0x1e8] sm:$0xff]
        %v5954 = vld [vmem:[%s5891 + $0x1f0] sm:$0xff]
        %v5955 = vld [vmem:[%s5891 + $0x1f8] sm:$0xff]
        %v5956 = vld [vmem:[%s5891 + $0x200] sm:$0xff]
        %v5957 = vld [vmem:[%s5891 + $0x208] sm:$0xff]
        %v5958 = vld [vmem:[%s5891 + $0x210] sm:$0xff]
        %v5959 = vld [vmem:[%s5891 + $0x218] sm:$0xff]
        %v5960 = vld [vmem:[%s5891 + $0x220] sm:$0xff]
        %v5961 = vld [vmem:[%s5891 + $0x228] sm:$0xff]
        %v5962 = vld [vmem:[%s5891 + $0x230] sm:$0xff]
        %v5963 = vld [vmem:[%s5891 + $0x238] sm:$0xff]
        %v5964 = vld [vmem:[%s5891 + $0x240] sm:$0xff]
        %v5965 = vld [vmem:[%s5891 + $0x248] sm:$0xff]
        %v5966 = vld [vmem:[%s5891 + $0x250] sm:$0xff]
        %v5967 = vld [vmem:[%s5891 + $0x258] sm:$0xff]
        %v5968 = vld [vmem:[%s5891 + $0x260] sm:$0xff]
        %v5969 = vld [vmem:[%s5891 + $0x268] sm:$0xff]
        %v5970 = vld [vmem:[%s5891 + $0x270] sm:$0xff]
        %v5971 = vld [vmem:[%s5891 + $0x278] sm:$0xff]
        %v5972 = vld [vmem:[%s5891 + $0x280] sm:$0xff]
        %v5973 = vld [vmem:[%s5891 + $0x288] sm:$0xff]
        %v5974 = vld [vmem:[%s5891 + $0x290] sm:$0xff]
        %v5975 = vld [vmem:[%s5891 + $0x298] sm:$0xff]
        %v5976 = vld [vmem:[%s5891 + $0x2a0] sm:$0xff]
        %v5977 = vld [vmem:[%s5891 + $0x2a8] sm:$0xff]
        %v5978 = vld [vmem:[%s5891 + $0x2b0] sm:$0xff]
        %v5979 = vld [vmem:[%s5891 + $0x2b8] sm:$0xff]
        %v5980 = vld [vmem:[%s5891 + $0x2c0] sm:$0xff]
        %v5981 = vld [vmem:[%s5891 + $0x2c8] sm:$0xff]
        %v5982 = vld [vmem:[%s5891 + $0x2d0] sm:$0xff]
        %v5983 = vld [vmem:[%s5891 + $0x2d8] sm:$0xff]
        %v5984 = vld [vmem:[%s5891 + $0x2e0] sm:$0xff]
        %v5985 = vld [vmem:[%s5891 + $0x2e8] sm:$0xff]
        %v5986 = vld [vmem:[%s5891 + $0x2f0] sm:$0xff]
        %v5987 = vld [vmem:[%s5891 + $0x2f8] sm:$0xff]
        %v5988 = vld [vmem:[%s5891 + $0x300] sm:$0xff]
        %v5989 = vld [vmem:[%s5891 + $0x308] sm:$0xff]
        %v5990 = vld [vmem:[%s5891 + $0x310] sm:$0xff]
        %v5991 = vld [vmem:[%s5891 + $0x318] sm:$0xff]
        %v5992 = vld [vmem:[%s5891 + $0x320] sm:$0xff]
        %v5993 = vld [vmem:[%s5891 + $0x328] sm:$0xff]
        %v5994 = vld [vmem:[%s5891 + $0x330] sm:$0xff]
        %v5995 = vld [vmem:[%s5891 + $0x338] sm:$0xff]
        %v5996 = vld [vmem:[%s5891 + $0x340] sm:$0xff]
        %v5997 = vld [vmem:[%s5891 + $0x348] sm:$0xff]
        %v5998 = vld [vmem:[%s5891 + $0x350] sm:$0xff]
        %v5999 = vld [vmem:[%s5891 + $0x358] sm:$0xff]
        %v6000 = vld [vmem:[%s5891 + $0x360] sm:$0xff]
        %v6001 = vld [vmem:[%s5891 + $0x368] sm:$0xff]
        %v6002 = vld [vmem:[%s5891 + $0x370] sm:$0xff]
        %v6003 = vld [vmem:[%s5891 + $0x378] sm:$0xff]
        %v6004 = vld [vmem:[%s5891 + $0x380] sm:$0xff]
        %v6005 = vld [vmem:[%s5891 + $0x388] sm:$0xff]
        %v6006 = vld [vmem:[%s5891 + $0x390] sm:$0xff]
        %v6007 = vld [vmem:[%s5891 + $0x398] sm:$0xff]
        %v6008 = vld [vmem:[%s5891 + $0x3a0] sm:$0xff]
        %v6009 = vld [vmem:[%s5891 + $0x3a8] sm:$0xff]
        %v6010 = vld [vmem:[%s5891 + $0x3b0] sm:$0xff]
        %v6011 = vld [vmem:[%s5891 + $0x3b8] sm:$0xff]
        %v6012 = vld [vmem:[%s5891 + $0x3c0] sm:$0xff]
        %v6013 = vld [vmem:[%s5891 + $0x3c8] sm:$0xff]
        %v6014 = vld [vmem:[%s5891 + $0x3d0] sm:$0xff]
        %v6015 = vld [vmem:[%s5891 + $0x3d8] sm:$0xff]
        %v6016 = vld [vmem:[%s5891 + $0x3e0] sm:$0xff]
        %v6017 = vld [vmem:[%s5891 + $0x3e8] sm:$0xff]
        %v6018 = vld [vmem:[%s5891 + $0x3f0] sm:$0xff]
        %v6019 = vld [vmem:[%s5891 + $0x3f8] sm:$0xff]
        %v6020 = vld [vmem:[%s5891 + $0x400] sm:$0xff]
        %v6021 = vld [vmem:[%s5891 + $0x408] sm:$0xff]
        %v6022 = vld [vmem:[%s5891 + $0x410] sm:$0xff]
        %v6023 = vld [vmem:[%s5891 + $0x418] sm:$0xff]
        %v6024 = vld [vmem:[%s5891 + $0x420] sm:$0xff]
        %v6025 = vld [vmem:[%s5891 + $0x428] sm:$0xff]
        %v6026 = vld [vmem:[%s5891 + $0x430] sm:$0xff]
        %v6027 = vld [vmem:[%s5891 + $0x438] sm:$0xff]
        %v6028 = vld [vmem:[%s5891 + $0x440] sm:$0xff]
        %v6029 = vld [vmem:[%s5891 + $0x448] sm:$0xff]
        %v6030 = vld [vmem:[%s5891 + $0x450] sm:$0xff]
        %v6031 = vld [vmem:[%s5891 + $0x458] sm:$0xff]
        %v6032 = vld [vmem:[%s5891 + $0x460] sm:$0xff]
        %v6033 = vld [vmem:[%s5891 + $0x468] sm:$0xff]
        %v6034 = vld [vmem:[%s5891 + $0x470] sm:$0xff]
        %v6035 = vld [vmem:[%s5891 + $0x478] sm:$0xff]
        %v6036 = vld [vmem:[%s5891 + $0x480] sm:$0xff]
        %v6037 = vld [vmem:[%s5891 + $0x488] sm:$0xff]
        %v6038 = vld [vmem:[%s5891 + $0x490] sm:$0xff]
        %v6039 = vld [vmem:[%s5891 + $0x498] sm:$0xff]
        %v6040 = vld [vmem:[%s5891 + $0x4a0] sm:$0xff]
        %v6041 = vld [vmem:[%s5891 + $0x4a8] sm:$0xff]
        %v6042 = vld [vmem:[%s5891 + $0x4b0] sm:$0xff]
        %v6043 = vld [vmem:[%s5891 + $0x4b8] sm:$0xff]
        %v6044 = vld [vmem:[%s5891 + $0x4c0] sm:$0xff]
        %v6045 = vld [vmem:[%s5891 + $0x4c8] sm:$0xff]
        %v6046 = vld [vmem:[%s5891 + $0x4d0] sm:$0xff]
        %v6047 = vld [vmem:[%s5891 + $0x4d8] sm:$0xff]
        %v6048 = vld [vmem:[%s5891 + $0x4e0] sm:$0xff]
        %v6049 = vld [vmem:[%s5891 + $0x4e8] sm:$0xff]
        %v6050 = vld [vmem:[%s5891 + $0x4f0] sm:$0xff]
        %v6051 = vld [vmem:[%s5891 + $0x4f8] sm:$0xff]
        %v6052 = vld [vmem:[%s5891 + $0x500] sm:$0xff]
        %v6053 = vld [vmem:[%s5891 + $0x508] sm:$0xff]
        %v6054 = vld [vmem:[%s5891 + $0x510] sm:$0xff]
        %v6055 = vld [vmem:[%s5891 + $0x518] sm:$0xff]
        %v6056 = vld [vmem:[%s5891 + $0x520] sm:$0xff]
        %v6057 = vld [vmem:[%s5891 + $0x528] sm:$0xff]
        %v6058 = vld [vmem:[%s5891 + $0x530] sm:$0xff]
        %v6059 = vld [vmem:[%s5891 + $0x538] sm:$0xff]
        %v6060 = vld [vmem:[%s5891 + $0x540] sm:$0xff]
        %v6061 = vld [vmem:[%s5891 + $0x548] sm:$0xff]
        %v6062 = vld [vmem:[%s5891 + $0x550] sm:$0xff]
        %v6063 = vld [vmem:[%s5891 + $0x558] sm:$0xff]
        %v6064 = vld [vmem:[%s5891 + $0x560] sm:$0xff]
        %v6065 = vld [vmem:[%s5891 + $0x568] sm:$0xff]
        %v6066 = vld [vmem:[%s5891 + $0x570] sm:$0xff]
        %v6067 = vld [vmem:[%s5891 + $0x578] sm:$0xff]
        %v6068 = vld [vmem:[%s5891 + $0x580] sm:$0xff]
        %v6069 = vld [vmem:[%s5891 + $0x588] sm:$0xff]
        %v6070 = vld [vmem:[%s5891 + $0x590] sm:$0xff]
        %v6071 = vld [vmem:[%s5891 + $0x598] sm:$0xff]
        %v6072 = vld [vmem:[%s5891 + $0x5a0] sm:$0xff]
        %v6073 = vld [vmem:[%s5891 + $0x5a8] sm:$0xff]
        %v6074 = vld [vmem:[%s5891 + $0x5b0] sm:$0xff]
        %v6075 = vld [vmem:[%s5891 + $0x5b8] sm:$0xff]
        %v6076 = vld [vmem:[%s5891 + $0x5c0] sm:$0xff]
        %v6077 = vld [vmem:[%s5891 + $0x5c8] sm:$0xff]
        %v6078 = vld [vmem:[%s5891 + $0x5d0] sm:$0xff]
        %v6079 = vld [vmem:[%s5891 + $0x5d8] sm:$0xff]
        %v6080 = vld [vmem:[%s5891 + $0x5e0] sm:$0xff]
        %v6081 = vld [vmem:[%s5891 + $0x5e8] sm:$0xff]
        %v6082 = vld [vmem:[%s5891 + $0x5f0] sm:$0xff]
        %v6083 = vld [vmem:[%s5891 + $0x5f8] sm:$0xff]
        %v6084 = vld [vmem:[%s5891 + $0x600] sm:$0xff]
        %v6085 = vld [vmem:[%s5891 + $0x608] sm:$0xff]
        %v6086 = vld [vmem:[%s5891 + $0x610] sm:$0xff]
        %v6087 = vld [vmem:[%s5891 + $0x618] sm:$0xff]
        %v6088 = vld [vmem:[%s5891 + $0x620] sm:$0xff]
        %v6089 = vld [vmem:[%s5891 + $0x628] sm:$0xff]
        %v6090 = vld [vmem:[%s5891 + $0x630] sm:$0xff]
        %v6091 = vld [vmem:[%s5891 + $0x638] sm:$0xff]
        %v6092 = vld [vmem:[%s5891 + $0x640] sm:$0xff]
        %v6093 = vld [vmem:[%s5891 + $0x648] sm:$0xff]
        %v6094 = vld [vmem:[%s5891 + $0x650] sm:$0xff]
        %v6095 = vld [vmem:[%s5891 + $0x658] sm:$0xff]
        %v6096 = vld [vmem:[%s5891 + $0x660] sm:$0xff]
        %v6097 = vld [vmem:[%s5891 + $0x668] sm:$0xff]
        %v6098 = vld [vmem:[%s5891 + $0x670] sm:$0xff]
        %v6099 = vld [vmem:[%s5891 + $0x678] sm:$0xff]
        %v6100 = vld [vmem:[%s5891 + $0x680] sm:$0xff]
        %v6101 = vld [vmem:[%s5891 + $0x688] sm:$0xff]
        %v6102 = vld [vmem:[%s5891 + $0x690] sm:$0xff]
        %v6103 = vld [vmem:[%s5891 + $0x698] sm:$0xff]
        %v6104 = vld [vmem:[%s5891 + $0x6a0] sm:$0xff]
        %v6105 = vld [vmem:[%s5891 + $0x6a8] sm:$0xff]
        %v6106 = vld [vmem:[%s5891 + $0x6b0] sm:$0xff]
        %v6107 = vld [vmem:[%s5891 + $0x6b8] sm:$0xff]
        %v6108 = vld [vmem:[%s5891 + $0x6c0] sm:$0xff]
        %v6109 = vld [vmem:[%s5891 + $0x6c8] sm:$0xff]
        %v6110 = vld [vmem:[%s5891 + $0x6d0] sm:$0xff]
        %v6111 = vld [vmem:[%s5891 + $0x6d8] sm:$0xff]
        %v6112 = vld [vmem:[%s5891 + $0x6e0] sm:$0xff]
        %v6113 = vld [vmem:[%s5891 + $0x6e8] sm:$0xff]
        %v6114 = vld [vmem:[%s5891 + $0x6f0] sm:$0xff]
        %v6115 = vld [vmem:[%s5891 + $0x6f8] sm:$0xff]
        %v6117 = vsel %vm2070, %v5889, 0
        %6119 = vmatpush.msra.mxu0 %v5952
        %6120 = vmatpush.msra.mxu0 %v5948
        %6121 = vmatpush.msra.mxu0 %v5944
        %6122 = vmatpush.msra.mxu0 %v5940
        %6123 = vmatpush.msra.mxu0 %v5936
        %6124 = vmatpush.msra.mxu0 %v5932
        %6125 = vmatpush.msra.mxu0 %v5928
        %6126 = vmatpush.msra.mxu0 %v5924
        %6127 = vmatpush.msra.mxu0 %v5920
        %6128 = vmatpush.msra.mxu0 %v5916
        %6129 = vmatpush.msra.mxu0 %v5912
        %6130 = vmatpush.msra.mxu0 %v5908
        %6131 = vmatpush.msra.mxu0 %v5904
        %6132 = vmatpush.msra.mxu0 %v5900
        %6133 = vmatpush.msra.mxu0 %v5896
        %6134 = vmatpush.msra.mxu0 %v5892
        %6135 = vmatmul.f32.gmra.mxu0 %v5829
        %v6136 = vpop.f32.mrf.mxu0
        %v6137 = vadd.f32 0.0, %v6136
        %6138 = vdwg.mxu0
        %6139 = vmatpush.msra.mxu0 %v6016
        %6140 = vmatpush.msra.mxu0 %v6012
        %6141 = vmatpush.msra.mxu0 %v6008
        %6142 = vmatpush.msra.mxu0 %v6004
        %6143 = vmatpush.msra.mxu0 %v6000
        %6144 = vmatpush.msra.mxu0 %v5996
        %6145 = vmatpush.msra.mxu0 %v5992
        %6146 = vmatpush.msra.mxu0 %v5988
        %6147 = vmatpush.msra.mxu0 %v5984
        %6148 = vmatpush.msra.mxu0 %v5980
        %6149 = vmatpush.msra.mxu0 %v5976
        %6150 = vmatpush.msra.mxu0 %v5972
        %6151 = vmatpush.msra.mxu0 %v5968
        %6152 = vmatpush.msra.mxu0 %v5964
        %6153 = vmatpush.msra.mxu0 %v5960
        %6154 = vmatpush.msra.mxu0 %v5956
        %6155 = vmatmul.f32.gmra.mxu0 %v5849
        %v6156 = vpop.f32.mrf.mxu0
        %v6157 = vadd.f32 %v6137, %v6156
        %6158 = vdwg.mxu0
        %6159 = vmatpush.msra.mxu0 %v6080
        %6160 = vmatpush.msra.mxu0 %v6076
        %6161 = vmatpush.msra.mxu0 %v6072
        %6162 = vmatpush.msra.mxu0 %v6068
        %6163 = vmatpush.msra.mxu0 %v6064
        %6164 = vmatpush.msra.mxu0 %v6060
        %6165 = vmatpush.msra.mxu0 %v6056
        %6166 = vmatpush.msra.mxu0 %v6052
        %6167 = vmatpush.msra.mxu0 %v6048
        %6168 = vmatpush.msra.mxu0 %v6044
        %6169 = vmatpush.msra.mxu0 %v6040
        %6170 = vmatpush.msra.mxu0 %v6036
        %6171 = vmatpush.msra.mxu0 %v6032
        %6172 = vmatpush.msra.mxu0 %v6028
        %6173 = vmatpush.msra.mxu0 %v6024
        %6174 = vmatpush.msra.mxu0 %v6020
        %6175 = vmatmul.f32.gmra.mxu0 %v5869
        %v6176 = vpop.f32.mrf.mxu0
        %v6177 = vadd.f32 %v6157, %v6176
        %6178 = vdwg.mxu0
        %6179 = vmatpush.msra.mxu0 0.0
        %6180 = vmatpush.msra.mxu0 0.0
        %6181 = vmatpush.msra.mxu0 0.0
        %6182 = vmatpush.msra.mxu0 0.0
        %6183 = vmatpush.msra.mxu0 0.0
        %6184 = vmatpush.msra.mxu0 0.0
        %6185 = vmatpush.msra.mxu0 0.0
        %6186 = vmatpush.msra.mxu0 0.0
        %6187 = vmatpush.msra.mxu0 %v6112
        %6188 = vmatpush.msra.mxu0 %v6108
        %6189 = vmatpush.msra.mxu0 %v6104
        %6190 = vmatpush.msra.mxu0 %v6100
        %6191 = vmatpush.msra.mxu0 %v6096
        %6192 = vmatpush.msra.mxu0 %v6092
        %6193 = vmatpush.msra.mxu0 %v6088
        %6194 = vmatpush.msra.mxu0 %v6084
        %6195 = vmatmul.f32.gmra.mxu0 %v6117
        %v6196 = vpop.f32.mrf.mxu0
        %v6197 = vadd.f32 %v6177, %v6196
        %6198 = vdwg.mxu0
        %6199 = vmatpush.msra.mxu0 %v5953
        %6200 = vmatpush.msra.mxu0 %v5949
        %6201 = vmatpush.msra.mxu0 %v5945
        %6202 = vmatpush.msra.mxu0 %v5941
        %6203 = vmatpush.msra.mxu0 %v5937
        %6204 = vmatpush.msra.mxu0 %v5933
        %6205 = vmatpush.msra.mxu0 %v5929
        %6206 = vmatpush.msra.mxu0 %v5925
        %6207 = vmatpush.msra.mxu0 %v5921
        %6208 = vmatpush.msra.mxu0 %v5917
        %6209 = vmatpush.msra.mxu0 %v5913
        %6210 = vmatpush.msra.mxu0 %v5909
        %6211 = vmatpush.msra.mxu0 %v5905
        %6212 = vmatpush.msra.mxu0 %v5901
        %6213 = vmatpush.msra.mxu0 %v5897
        %6214 = vmatpush.msra.mxu0 %v5893
        %6215 = vmatmul.f32.gmra.mxu0 %v5829
        %v6216 = vpop.f32.mrf.mxu0
        %v6217 = vadd.f32 0.0, %v6216
        %6218 = vdwg.mxu0
        %6219 = vmatpush.msra.mxu0 %v6017
        %6220 = vmatpush.msra.mxu0 %v6013
        %6221 = vmatpush.msra.mxu0 %v6009
        %6222 = vmatpush.msra.mxu0 %v6005
        %6223 = vmatpush.msra.mxu0 %v6001
        %6224 = vmatpush.msra.mxu0 %v5997
        %6225 = vmatpush.msra.mxu0 %v5993
        %6226 = vmatpush.msra.mxu0 %v5989
        %6227 = vmatpush.msra.mxu0 %v5985
        %6228 = vmatpush.msra.mxu0 %v5981
        %6229 = vmatpush.msra.mxu0 %v5977
        %6230 = vmatpush.msra.mxu0 %v5973
        %6231 = vmatpush.msra.mxu0 %v5969
        %6232 = vmatpush.msra.mxu0 %v5965
        %6233 = vmatpush.msra.mxu0 %v5961
        %6234 = vmatpush.msra.mxu0 %v5957
        %6235 = vmatmul.f32.gmra.mxu0 %v5849
        %v6236 = vpop.f32.mrf.mxu0
        %v6237 = vadd.f32 %v6217, %v6236
        %6238 = vdwg.mxu0
        %6239 = vmatpush.msra.mxu0 %v6081
        %6240 = vmatpush.msra.mxu0 %v6077
        %6241 = vmatpush.msra.mxu0 %v6073
        %6242 = vmatpush.msra.mxu0 %v6069
        %6243 = vmatpush.msra.mxu0 %v6065
        %6244 = vmatpush.msra.mxu0 %v6061
        %6245 = vmatpush.msra.mxu0 %v6057
        %6246 = vmatpush.msra.mxu0 %v6053
        %6247 = vmatpush.msra.mxu0 %v6049
        %6248 = vmatpush.msra.mxu0 %v6045
        %6249 = vmatpush.msra.mxu0 %v6041
        %6250 = vmatpush.msra.mxu0 %v6037
        %6251 = vmatpush.msra.mxu0 %v6033
        %6252 = vmatpush.msra.mxu0 %v6029
        %6253 = vmatpush.msra.mxu0 %v6025
        %6254 = vmatpush.msra.mxu0 %v6021
        %6255 = vmatmul.f32.gmra.mxu0 %v5869
        %v6256 = vpop.f32.mrf.mxu0
        %v6257 = vadd.f32 %v6237, %v6256
        %6258 = vdwg.mxu0
        %6259 = vmatpush.msra.mxu0 0.0
        %6260 = vmatpush.msra.mxu0 0.0
        %6261 = vmatpush.msra.mxu0 0.0
        %6262 = vmatpush.msra.mxu0 0.0
        %6263 = vmatpush.msra.mxu0 0.0
        %6264 = vmatpush.msra.mxu0 0.0
        %6265 = vmatpush.msra.mxu0 0.0
        %6266 = vmatpush.msra.mxu0 0.0
        %6267 = vmatpush.msra.mxu0 %v6113
        %6268 = vmatpush.msra.mxu0 %v6109
        %6269 = vmatpush.msra.mxu0 %v6105
        %6270 = vmatpush.msra.mxu0 %v6101
        %6271 = vmatpush.msra.mxu0 %v6097
        %6272 = vmatpush.msra.mxu0 %v6093
        %6273 = vmatpush.msra.mxu0 %v6089
        %6274 = vmatpush.msra.mxu0 %v6085
        %6275 = vmatmul.f32.gmra.mxu0 %v6117
        %v6276 = vpop.f32.mrf.mxu0
        %v6277 = vadd.f32 %v6257, %v6276
        %6278 = vdwg.mxu0
        %6279 = vmatpush.msra.mxu0 %v5954
        %6280 = vmatpush.msra.mxu0 %v5950
        %6281 = vmatpush.msra.mxu0 %v5946
        %6282 = vmatpush.msra.mxu0 %v5942
        %6283 = vmatpush.msra.mxu0 %v5938
        %6284 = vmatpush.msra.mxu0 %v5934
        %6285 = vmatpush.msra.mxu0 %v5930
        %6286 = vmatpush.msra.mxu0 %v5926
        %6287 = vmatpush.msra.mxu0 %v5922
        %6288 = vmatpush.msra.mxu0 %v5918
        %6289 = vmatpush.msra.mxu0 %v5914
        %6290 = vmatpush.msra.mxu0 %v5910
        %6291 = vmatpush.msra.mxu0 %v5906
        %6292 = vmatpush.msra.mxu0 %v5902
        %6293 = vmatpush.msra.mxu0 %v5898
        %6294 = vmatpush.msra.mxu0 %v5894
        %6295 = vmatmul.f32.gmra.mxu0 %v5829
        %v6296 = vpop.f32.mrf.mxu0
        %v6297 = vadd.f32 0.0, %v6296
        %6298 = vdwg.mxu0
        %6299 = vmatpush.msra.mxu0 %v6018
        %6300 = vmatpush.msra.mxu0 %v6014
        %6301 = vmatpush.msra.mxu0 %v6010
        %6302 = vmatpush.msra.mxu0 %v6006
        %6303 = vmatpush.msra.mxu0 %v6002
        %6304 = vmatpush.msra.mxu0 %v5998
        %6305 = vmatpush.msra.mxu0 %v5994
        %6306 = vmatpush.msra.mxu0 %v5990
        %6307 = vmatpush.msra.mxu0 %v5986
        %6308 = vmatpush.msra.mxu0 %v5982
        %6309 = vmatpush.msra.mxu0 %v5978
        %6310 = vmatpush.msra.mxu0 %v5974
        %6311 = vmatpush.msra.mxu0 %v5970
        %6312 = vmatpush.msra.mxu0 %v5966
        %6313 = vmatpush.msra.mxu0 %v5962
        %6314 = vmatpush.msra.mxu0 %v5958
        %6315 = vmatmul.f32.gmra.mxu0 %v5849
        %v6316 = vpop.f32.mrf.mxu0
        %v6317 = vadd.f32 %v6297, %v6316
        %6318 = vdwg.mxu0
        %6319 = vmatpush.msra.mxu0 %v6082
        %6320 = vmatpush.msra.mxu0 %v6078
        %6321 = vmatpush.msra.mxu0 %v6074
        %6322 = vmatpush.msra.mxu0 %v6070
        %6323 = vmatpush.msra.mxu0 %v6066
        %6324 = vmatpush.msra.mxu0 %v6062
        %6325 = vmatpush.msra.mxu0 %v6058
        %6326 = vmatpush.msra.mxu0 %v6054
        %6327 = vmatpush.msra.mxu0 %v6050
        %6328 = vmatpush.msra.mxu0 %v6046
        %6329 = vmatpush.msra.mxu0 %v6042
        %6330 = vmatpush.msra.mxu0 %v6038
        %6331 = vmatpush.msra.mxu0 %v6034
        %6332 = vmatpush.msra.mxu0 %v6030
        %6333 = vmatpush.msra.mxu0 %v6026
        %6334 = vmatpush.msra.mxu0 %v6022
        %6335 = vmatmul.f32.gmra.mxu0 %v5869
        %v6336 = vpop.f32.mrf.mxu0
        %v6337 = vadd.f32 %v6317, %v6336
        %6338 = vdwg.mxu0
        %6339 = vmatpush.msra.mxu0 0.0
        %6340 = vmatpush.msra.mxu0 0.0
        %6341 = vmatpush.msra.mxu0 0.0
        %6342 = vmatpush.msra.mxu0 0.0
        %6343 = vmatpush.msra.mxu0 0.0
        %6344 = vmatpush.msra.mxu0 0.0
        %6345 = vmatpush.msra.mxu0 0.0
        %6346 = vmatpush.msra.mxu0 0.0
        %6347 = vmatpush.msra.mxu0 %v6114
        %6348 = vmatpush.msra.mxu0 %v6110
        %6349 = vmatpush.msra.mxu0 %v6106
        %6350 = vmatpush.msra.mxu0 %v6102
        %6351 = vmatpush.msra.mxu0 %v6098
        %6352 = vmatpush.msra.mxu0 %v6094
        %6353 = vmatpush.msra.mxu0 %v6090
        %6354 = vmatpush.msra.mxu0 %v6086
        %6355 = vmatmul.f32.gmra.mxu0 %v6117
        %v6356 = vpop.f32.mrf.mxu0
        %v6357 = vadd.f32 %v6337, %v6356
        %6358 = vdwg.mxu0
        %6359 = vmatpush.msra.mxu0 %v5955
        %6360 = vmatpush.msra.mxu0 %v5951
        %6361 = vmatpush.msra.mxu0 %v5947
        %6362 = vmatpush.msra.mxu0 %v5943
        %6363 = vmatpush.msra.mxu0 %v5939
        %6364 = vmatpush.msra.mxu0 %v5935
        %6365 = vmatpush.msra.mxu0 %v5931
        %6366 = vmatpush.msra.mxu0 %v5927
        %6367 = vmatpush.msra.mxu0 %v5923
        %6368 = vmatpush.msra.mxu0 %v5919
        %6369 = vmatpush.msra.mxu0 %v5915
        %6370 = vmatpush.msra.mxu0 %v5911
        %6371 = vmatpush.msra.mxu0 %v5907
        %6372 = vmatpush.msra.mxu0 %v5903
        %6373 = vmatpush.msra.mxu0 %v5899
        %6374 = vmatpush.msra.mxu0 %v5895
        %6375 = vmatmul.f32.gmra.mxu0 %v5829
        %v6376 = vpop.f32.mrf.mxu0
        %v6377 = vadd.f32 0.0, %v6376
        %6378 = vdwg.mxu0
        %6379 = vmatpush.msra.mxu0 %v6019
        %6380 = vmatpush.msra.mxu0 %v6015
        %6381 = vmatpush.msra.mxu0 %v6011
        %6382 = vmatpush.msra.mxu0 %v6007
        %6383 = vmatpush.msra.mxu0 %v6003
        %6384 = vmatpush.msra.mxu0 %v5999
        %6385 = vmatpush.msra.mxu0 %v5995
        %6386 = vmatpush.msra.mxu0 %v5991
        %6387 = vmatpush.msra.mxu0 %v5987
        %6388 = vmatpush.msra.mxu0 %v5983
        %6389 = vmatpush.msra.mxu0 %v5979
        %6390 = vmatpush.msra.mxu0 %v5975
        %6391 = vmatpush.msra.mxu0 %v5971
        %6392 = vmatpush.msra.mxu0 %v5967
        %6393 = vmatpush.msra.mxu0 %v5963
        %6394 = vmatpush.msra.mxu0 %v5959
        %6395 = vmatmul.f32.gmra.mxu0 %v5849
        %v6396 = vpop.f32.mrf.mxu0
        %v6397 = vadd.f32 %v6377, %v6396
        %6398 = vdwg.mxu0
        %6399 = vmatpush.msra.mxu0 %v6083
        %6400 = vmatpush.msra.mxu0 %v6079
        %6401 = vmatpush.msra.mxu0 %v6075
        %6402 = vmatpush.msra.mxu0 %v6071
        %6403 = vmatpush.msra.mxu0 %v6067
        %6404 = vmatpush.msra.mxu0 %v6063
        %6405 = vmatpush.msra.mxu0 %v6059
        %6406 = vmatpush.msra.mxu0 %v6055
        %6407 = vmatpush.msra.mxu0 %v6051
        %6408 = vmatpush.msra.mxu0 %v6047
        %6409 = vmatpush.msra.mxu0 %v6043
        %6410 = vmatpush.msra.mxu0 %v6039
        %6411 = vmatpush.msra.mxu0 %v6035
        %6412 = vmatpush.msra.mxu0 %v6031
        %6413 = vmatpush.msra.mxu0 %v6027
        %6414 = vmatpush.msra.mxu0 %v6023
        %6415 = vmatmul.f32.gmra.mxu0 %v5869
        %v6416 = vpop.f32.mrf.mxu0
        %v6417 = vadd.f32 %v6397, %v6416
        %6418 = vdwg.mxu0
        %6419 = vmatpush.msra.mxu0 0.0
        %6420 = vmatpush.msra.mxu0 0.0
        %6421 = vmatpush.msra.mxu0 0.0
        %6422 = vmatpush.msra.mxu0 0.0
        %6423 = vmatpush.msra.mxu0 0.0
        %6424 = vmatpush.msra.mxu0 0.0
        %6425 = vmatpush.msra.mxu0 0.0
        %6426 = vmatpush.msra.mxu0 0.0
        %6427 = vmatpush.msra.mxu0 %v6115
        %6428 = vmatpush.msra.mxu0 %v6111
        %6429 = vmatpush.msra.mxu0 %v6107
        %6430 = vmatpush.msra.mxu0 %v6103
        %6431 = vmatpush.msra.mxu0 %v6099
        %6432 = vmatpush.msra.mxu0 %v6095
        %6433 = vmatpush.msra.mxu0 %v6091
        %6434 = vmatpush.msra.mxu0 %v6087
        %6435 = vmatmul.f32.gmra.mxu0 %v6117
        %v6436 = vpop.f32.mrf.mxu0
        %v6437 = vadd.f32 %v6417, %v6436
        %6438 = vdwg.mxu0
        %v6440 = vsel %vm2070, %v5580, 0
        %6442 = vmatpush.msra.mxu0 %v5642
        %6443 = vmatpush.msra.mxu0 %v5638
        %6444 = vmatpush.msra.mxu0 %v5634
        %6445 = vmatpush.msra.mxu0 %v5630
        %6446 = vmatpush.msra.mxu0 %v5626
        %6447 = vmatpush.msra.mxu0 %v5622
        %6448 = vmatpush.msra.mxu0 %v5618
        %6449 = vmatpush.msra.mxu0 %v5614
        %6450 = vmatpush.msra.mxu0 %v5610
        %6451 = vmatpush.msra.mxu0 %v5606
        %6452 = vmatpush.msra.mxu0 %v5602
        %6453 = vmatpush.msra.mxu0 %v5598
        %6454 = vmatpush.msra.mxu0 %v5594
        %6455 = vmatpush.msra.mxu0 %v5590
        %6456 = vmatpush.msra.mxu0 %v5586
        %6457 = vmatpush.msra.mxu0 %v5582
        %6458 = vmatmul.f32.gmra.mxu0 %v5520
        %v6459 = vpop.f32.mrf.mxu0
        %v6460 = vadd.f32 %v6197, %v6459
        %6461 = vdwg.mxu0
        %6462 = vmatpush.msra.mxu0 %v5706
        %6463 = vmatpush.msra.mxu0 %v5702
        %6464 = vmatpush.msra.mxu0 %v5698
        %6465 = vmatpush.msra.mxu0 %v5694
        %6466 = vmatpush.msra.mxu0 %v5690
        %6467 = vmatpush.msra.mxu0 %v5686
        %6468 = vmatpush.msra.mxu0 %v5682
        %6469 = vmatpush.msra.mxu0 %v5678
        %6470 = vmatpush.msra.mxu0 %v5674
        %6471 = vmatpush.msra.mxu0 %v5670
        %6472 = vmatpush.msra.mxu0 %v5666
        %6473 = vmatpush.msra.mxu0 %v5662
        %6474 = vmatpush.msra.mxu0 %v5658
        %6475 = vmatpush.msra.mxu0 %v5654
        %6476 = vmatpush.msra.mxu0 %v5650
        %6477 = vmatpush.msra.mxu0 %v5646
        %6478 = vmatmul.f32.gmra.mxu0 %v5540
        %v6479 = vpop.f32.mrf.mxu0
        %v6480 = vadd.f32 %v6460, %v6479
        %6481 = vdwg.mxu0
        %6482 = vmatpush.msra.mxu0 %v5770
        %6483 = vmatpush.msra.mxu0 %v5766
        %6484 = vmatpush.msra.mxu0 %v5762
        %6485 = vmatpush.msra.mxu0 %v5758
        %6486 = vmatpush.msra.mxu0 %v5754
        %6487 = vmatpush.msra.mxu0 %v5750
        %6488 = vmatpush.msra.mxu0 %v5746
        %6489 = vmatpush.msra.mxu0 %v5742
        %6490 = vmatpush.msra.mxu0 %v5738
        %6491 = vmatpush.msra.mxu0 %v5734
        %6492 = vmatpush.msra.mxu0 %v5730
        %6493 = vmatpush.msra.mxu0 %v5726
        %6494 = vmatpush.msra.mxu0 %v5722
        %6495 = vmatpush.msra.mxu0 %v5718
        %6496 = vmatpush.msra.mxu0 %v5714
        %6497 = vmatpush.msra.mxu0 %v5710
        %6498 = vmatmul.f32.gmra.mxu0 %v5560
        %v6499 = vpop.f32.mrf.mxu0
        %v6500 = vadd.f32 %v6480, %v6499
        %6501 = vdwg.mxu0
        %6502 = vmatpush.msra.mxu0 0.0
        %6503 = vmatpush.msra.mxu0 0.0
        %6504 = vmatpush.msra.mxu0 0.0
        %6505 = vmatpush.msra.mxu0 0.0
        %6506 = vmatpush.msra.mxu0 0.0
        %6507 = vmatpush.msra.mxu0 0.0
        %6508 = vmatpush.msra.mxu0 0.0
        %6509 = vmatpush.msra.mxu0 0.0
        %6510 = vmatpush.msra.mxu0 %v5802
        %6511 = vmatpush.msra.mxu0 %v5798
        %6512 = vmatpush.msra.mxu0 %v5794
        %6513 = vmatpush.msra.mxu0 %v5790
        %6514 = vmatpush.msra.mxu0 %v5786
        %6515 = vmatpush.msra.mxu0 %v5782
        %6516 = vmatpush.msra.mxu0 %v5778
        %6517 = vmatpush.msra.mxu0 %v5774
        %6518 = vmatmul.f32.gmra.mxu0 %v6440
        %v6519 = vpop.f32.mrf.mxu0
        %v6520 = vadd.f32 %v6500, %v6519
        %6521 = vdwg.mxu0
        %6522 = vmatpush.msra.mxu0 %v5643
        %6523 = vmatpush.msra.mxu0 %v5639
        %6524 = vmatpush.msra.mxu0 %v5635
        %6525 = vmatpush.msra.mxu0 %v5631
        %6526 = vmatpush.msra.mxu0 %v5627
        %6527 = vmatpush.msra.mxu0 %v5623
        %6528 = vmatpush.msra.mxu0 %v5619
        %6529 = vmatpush.msra.mxu0 %v5615
        %6530 = vmatpush.msra.mxu0 %v5611
        %6531 = vmatpush.msra.mxu0 %v5607
        %6532 = vmatpush.msra.mxu0 %v5603
        %6533 = vmatpush.msra.mxu0 %v5599
        %6534 = vmatpush.msra.mxu0 %v5595
        %6535 = vmatpush.msra.mxu0 %v5591
        %6536 = vmatpush.msra.mxu0 %v5587
        %6537 = vmatpush.msra.mxu0 %v5583
        %6538 = vmatmul.f32.gmra.mxu0 %v5520
        %v6539 = vpop.f32.mrf.mxu0
        %v6540 = vadd.f32 %v6277, %v6539
        %6541 = vdwg.mxu0
        %6542 = vmatpush.msra.mxu0 %v5707
        %6543 = vmatpush.msra.mxu0 %v5703
        %6544 = vmatpush.msra.mxu0 %v5699
        %6545 = vmatpush.msra.mxu0 %v5695
        %6546 = vmatpush.msra.mxu0 %v5691
        %6547 = vmatpush.msra.mxu0 %v5687
        %6548 = vmatpush.msra.mxu0 %v5683
        %6549 = vmatpush.msra.mxu0 %v5679
        %6550 = vmatpush.msra.mxu0 %v5675
        %6551 = vmatpush.msra.mxu0 %v5671
        %6552 = vmatpush.msra.mxu0 %v5667
        %6553 = vmatpush.msra.mxu0 %v5663
        %6554 = vmatpush.msra.mxu0 %v5659
        %6555 = vmatpush.msra.mxu0 %v5655
        %6556 = vmatpush.msra.mxu0 %v5651
        %6557 = vmatpush.msra.mxu0 %v5647
        %6558 = vmatmul.f32.gmra.mxu0 %v5540
        %v6559 = vpop.f32.mrf.mxu0
        %v6560 = vadd.f32 %v6540, %v6559
        %6561 = vdwg.mxu0
        %6562 = vmatpush.msra.mxu0 %v5771
        %6563 = vmatpush.msra.mxu0 %v5767
        %6564 = vmatpush.msra.mxu0 %v5763
        %6565 = vmatpush.msra.mxu0 %v5759
        %6566 = vmatpush.msra.mxu0 %v5755
        %6567 = vmatpush.msra.mxu0 %v5751
        %6568 = vmatpush.msra.mxu0 %v5747
        %6569 = vmatpush.msra.mxu0 %v5743
        %6570 = vmatpush.msra.mxu0 %v5739
        %6571 = vmatpush.msra.mxu0 %v5735
        %6572 = vmatpush.msra.mxu0 %v5731
        %6573 = vmatpush.msra.mxu0 %v5727
        %6574 = vmatpush.msra.mxu0 %v5723
        %6575 = vmatpush.msra.mxu0 %v5719
        %6576 = vmatpush.msra.mxu0 %v5715
        %6577 = vmatpush.msra.mxu0 %v5711
        %6578 = vmatmul.f32.gmra.mxu0 %v5560
        %v6579 = vpop.f32.mrf.mxu0
        %v6580 = vadd.f32 %v6560, %v6579
        %6581 = vdwg.mxu0
        %6582 = vmatpush.msra.mxu0 0.0
        %6583 = vmatpush.msra.mxu0 0.0
        %6584 = vmatpush.msra.mxu0 0.0
        %6585 = vmatpush.msra.mxu0 0.0
        %6586 = vmatpush.msra.mxu0 0.0
        %6587 = vmatpush.msra.mxu0 0.0
        %6588 = vmatpush.msra.mxu0 0.0
        %6589 = vmatpush.msra.mxu0 0.0
        %6590 = vmatpush.msra.mxu0 %v5803
        %6591 = vmatpush.msra.mxu0 %v5799
        %6592 = vmatpush.msra.mxu0 %v5795
        %6593 = vmatpush.msra.mxu0 %v5791
        %6594 = vmatpush.msra.mxu0 %v5787
        %6595 = vmatpush.msra.mxu0 %v5783
        %6596 = vmatpush.msra.mxu0 %v5779
        %6597 = vmatpush.msra.mxu0 %v5775
        %6598 = vmatmul.f32.gmra.mxu0 %v6440
        %v6599 = vpop.f32.mrf.mxu0
        %v6600 = vadd.f32 %v6580, %v6599
        %6601 = vdwg.mxu0
        %6602 = vmatpush.msra.mxu0 %v5644
        %6603 = vmatpush.msra.mxu0 %v5640
        %6604 = vmatpush.msra.mxu0 %v5636
        %6605 = vmatpush.msra.mxu0 %v5632
        %6606 = vmatpush.msra.mxu0 %v5628
        %6607 = vmatpush.msra.mxu0 %v5624
        %6608 = vmatpush.msra.mxu0 %v5620
        %6609 = vmatpush.msra.mxu0 %v5616
        %6610 = vmatpush.msra.mxu0 %v5612
        %6611 = vmatpush.msra.mxu0 %v5608
        %6612 = vmatpush.msra.mxu0 %v5604
        %6613 = vmatpush.msra.mxu0 %v5600
        %6614 = vmatpush.msra.mxu0 %v5596
        %6615 = vmatpush.msra.mxu0 %v5592
        %6616 = vmatpush.msra.mxu0 %v5588
        %6617 = vmatpush.msra.mxu0 %v5584
        %6618 = vmatmul.f32.gmra.mxu0 %v5520
        %v6619 = vpop.f32.mrf.mxu0
        %v6620 = vadd.f32 %v6357, %v6619
        %6621 = vdwg.mxu0
        %6622 = vmatpush.msra.mxu0 %v5708
        %6623 = vmatpush.msra.mxu0 %v5704
        %6624 = vmatpush.msra.mxu0 %v5700
        %6625 = vmatpush.msra.mxu0 %v5696
        %6626 = vmatpush.msra.mxu0 %v5692
        %6627 = vmatpush.msra.mxu0 %v5688
        %6628 = vmatpush.msra.mxu0 %v5684
        %6629 = vmatpush.msra.mxu0 %v5680
        %6630 = vmatpush.msra.mxu0 %v5676
        %6631 = vmatpush.msra.mxu0 %v5672
        %6632 = vmatpush.msra.mxu0 %v5668
        %6633 = vmatpush.msra.mxu0 %v5664
        %6634 = vmatpush.msra.mxu0 %v5660
        %6635 = vmatpush.msra.mxu0 %v5656
        %6636 = vmatpush.msra.mxu0 %v5652
        %6637 = vmatpush.msra.mxu0 %v5648
        %6638 = vmatmul.f32.gmra.mxu0 %v5540
        %v6639 = vpop.f32.mrf.mxu0
        %v6640 = vadd.f32 %v6620, %v6639
        %6641 = vdwg.mxu0
        %6642 = vmatpush.msra.mxu0 %v5772
        %6643 = vmatpush.msra.mxu0 %v5768
        %6644 = vmatpush.msra.mxu0 %v5764
        %6645 = vmatpush.msra.mxu0 %v5760
        %6646 = vmatpush.msra.mxu0 %v5756
        %6647 = vmatpush.msra.mxu0 %v5752
        %6648 = vmatpush.msra.mxu0 %v5748
        %6649 = vmatpush.msra.mxu0 %v5744
        %6650 = vmatpush.msra.mxu0 %v5740
        %6651 = vmatpush.msra.mxu0 %v5736
        %6652 = vmatpush.msra.mxu0 %v5732
        %6653 = vmatpush.msra.mxu0 %v5728
        %6654 = vmatpush.msra.mxu0 %v5724
        %6655 = vmatpush.msra.mxu0 %v5720
        %6656 = vmatpush.msra.mxu0 %v5716
        %6657 = vmatpush.msra.mxu0 %v5712
        %6658 = vmatmul.f32.gmra.mxu0 %v5560
        %v6659 = vpop.f32.mrf.mxu0
        %v6660 = vadd.f32 %v6640, %v6659
        %6661 = vdwg.mxu0
        %6662 = vmatpush.msra.mxu0 0.0
        %6663 = vmatpush.msra.mxu0 0.0
        %6664 = vmatpush.msra.mxu0 0.0
        %6665 = vmatpush.msra.mxu0 0.0
        %6666 = vmatpush.msra.mxu0 0.0
        %6667 = vmatpush.msra.mxu0 0.0
        %6668 = vmatpush.msra.mxu0 0.0
        %6669 = vmatpush.msra.mxu0 0.0
        %6670 = vmatpush.msra.mxu0 %v5804
        %6671 = vmatpush.msra.mxu0 %v5800
        %6672 = vmatpush.msra.mxu0 %v5796
        %6673 = vmatpush.msra.mxu0 %v5792
        %6674 = vmatpush.msra.mxu0 %v5788
        %6675 = vmatpush.msra.mxu0 %v5784
        %6676 = vmatpush.msra.mxu0 %v5780
        %6677 = vmatpush.msra.mxu0 %v5776
        %6678 = vmatmul.f32.gmra.mxu0 %v6440
        %v6679 = vpop.f32.mrf.mxu0
        %v6680 = vadd.f32 %v6660, %v6679
        %6681 = vdwg.mxu0
        %6682 = vmatpush.msra.mxu0 %v5645
        %6683 = vmatpush.msra.mxu0 %v5641
        %6684 = vmatpush.msra.mxu0 %v5637
        %6685 = vmatpush.msra.mxu0 %v5633
        %6686 = vmatpush.msra.mxu0 %v5629
        %6687 = vmatpush.msra.mxu0 %v5625
        %6688 = vmatpush.msra.mxu0 %v5621
        %6689 = vmatpush.msra.mxu0 %v5617
        %6690 = vmatpush.msra.mxu0 %v5613
        %6691 = vmatpush.msra.mxu0 %v5609
        %6692 = vmatpush.msra.mxu0 %v5605
        %6693 = vmatpush.msra.mxu0 %v5601
        %6694 = vmatpush.msra.mxu0 %v5597
        %6695 = vmatpush.msra.mxu0 %v5593
        %6696 = vmatpush.msra.mxu0 %v5589
        %6697 = vmatpush.msra.mxu0 %v5585
        %6698 = vmatmul.f32.gmra.mxu0 %v5520
        %v6699 = vpop.f32.mrf.mxu0
        %v6700 = vadd.f32 %v6437, %v6699
        %6701 = vdwg.mxu0
        %6702 = vmatpush.msra.mxu0 %v5709
        %6703 = vmatpush.msra.mxu0 %v5705
        %6704 = vmatpush.msra.mxu0 %v5701
        %6705 = vmatpush.msra.mxu0 %v5697
        %6706 = vmatpush.msra.mxu0 %v5693
        %6707 = vmatpush.msra.mxu0 %v5689
        %6708 = vmatpush.msra.mxu0 %v5685
        %6709 = vmatpush.msra.mxu0 %v5681
        %6710 = vmatpush.msra.mxu0 %v5677
        %6711 = vmatpush.msra.mxu0 %v5673
        %6712 = vmatpush.msra.mxu0 %v5669
        %6713 = vmatpush.msra.mxu0 %v5665
        %6714 = vmatpush.msra.mxu0 %v5661
        %6715 = vmatpush.msra.mxu0 %v5657
        %6716 = vmatpush.msra.mxu0 %v5653
        %6717 = vmatpush.msra.mxu0 %v5649
        %6718 = vmatmul.f32.gmra.mxu0 %v5540
        %v6719 = vpop.f32.mrf.mxu0
        %v6720 = vadd.f32 %v6700, %v6719
        %6721 = vdwg.mxu0
        %6722 = vmatpush.msra.mxu0 %v5773
        %6723 = vmatpush.msra.mxu0 %v5769
        %6724 = vmatpush.msra.mxu0 %v5765
        %6725 = vmatpush.msra.mxu0 %v5761
        %6726 = vmatpush.msra.mxu0 %v5757
        %6727 = vmatpush.msra.mxu0 %v5753
        %6728 = vmatpush.msra.mxu0 %v5749
        %6729 = vmatpush.msra.mxu0 %v5745
        %6730 = vmatpush.msra.mxu0 %v5741
        %6731 = vmatpush.msra.mxu0 %v5737
        %6732 = vmatpush.msra.mxu0 %v5733
        %6733 = vmatpush.msra.mxu0 %v5729
        %6734 = vmatpush.msra.mxu0 %v5725
        %6735 = vmatpush.msra.mxu0 %v5721
        %6736 = vmatpush.msra.mxu0 %v5717
        %6737 = vmatpush.msra.mxu0 %v5713
        %6738 = vmatmul.f32.gmra.mxu0 %v5560
        %v6739 = vpop.f32.mrf.mxu0
        %v6740 = vadd.f32 %v6720, %v6739
        %6741 = vdwg.mxu0
        %6742 = vmatpush.msra.mxu0 0.0
        %6743 = vmatpush.msra.mxu0 0.0
        %6744 = vmatpush.msra.mxu0 0.0
        %6745 = vmatpush.msra.mxu0 0.0
        %6746 = vmatpush.msra.mxu0 0.0
        %6747 = vmatpush.msra.mxu0 0.0
        %6748 = vmatpush.msra.mxu0 0.0
        %6749 = vmatpush.msra.mxu0 0.0
        %6750 = vmatpush.msra.mxu0 %v5805
        %6751 = vmatpush.msra.mxu0 %v5801
        %6752 = vmatpush.msra.mxu0 %v5797
        %6753 = vmatpush.msra.mxu0 %v5793
        %6754 = vmatpush.msra.mxu0 %v5789
        %6755 = vmatpush.msra.mxu0 %v5785
        %6756 = vmatpush.msra.mxu0 %v5781
        %6757 = vmatpush.msra.mxu0 %v5777
        %6758 = vmatmul.f32.gmra.mxu0 %v6440
        %v6759 = vpop.f32.mrf.mxu0
        %v6760 = vadd.f32 %v6740, %v6759
        %6761 = vdwg.mxu0
        %s6762 = scalar_lea.vmem [#allocation17], 16
        %v6763 = vld [vmem:[%s6762] sm:$0x7f]
        %v6765 = vsel %vm5485, %v6763, 0
        %6767 = vmatpush.msra.mxu0 0.0
        %6768 = vmatpush.msra.mxu0 0.0
        %6769 = vmatpush.msra.mxu0 0.0
        %6770 = vmatpush.msra.mxu0 0.0
        %6771 = vmatpush.msra.mxu0 0.0
        %6772 = vmatpush.msra.mxu0 0.0
        %6773 = vmatpush.msra.mxu0 0.0
        %6774 = vmatpush.msra.mxu0 0.0
        %6775 = vmatpush.msra.mxu0 0.0
        %6776 = vmatpush.msra.mxu0 0.0
        %6777 = vmatpush.msra.mxu0 0.0
        %6778 = vmatpush.msra.mxu0 0.0
        %6779 = vmatpush.msra.mxu0 0.0
        %6780 = vmatpush.msra.mxu0 0.0
        %6781 = vmatpush.msra.mxu0 0.0
        %6782 = vmatpush.msra.mxu0 %v5491
        %6783 = vmatmul.f32.gmra.mxu0 %v6765
        %v6784 = vpop.f32.mrf.mxu0
        %v6785 = vadd.f32 0.0, %v6784
        %6786 = vdwg.mxu0
        %6787 = vmatpush.msra.mxu0 0.0
        %6788 = vmatpush.msra.mxu0 0.0
        %6789 = vmatpush.msra.mxu0 0.0
        %6790 = vmatpush.msra.mxu0 0.0
        %6791 = vmatpush.msra.mxu0 0.0
        %6792 = vmatpush.msra.mxu0 0.0
        %6793 = vmatpush.msra.mxu0 0.0
        %6794 = vmatpush.msra.mxu0 0.0
        %6795 = vmatpush.msra.mxu0 0.0
        %6796 = vmatpush.msra.mxu0 0.0
        %6797 = vmatpush.msra.mxu0 0.0
        %6798 = vmatpush.msra.mxu0 0.0
        %6799 = vmatpush.msra.mxu0 0.0
        %6800 = vmatpush.msra.mxu0 0.0
        %6801 = vmatpush.msra.mxu0 0.0
        %6802 = vmatpush.msra.mxu0 %v5494
        %6803 = vmatmul.f32.gmra.mxu0 %v6765
        %v6804 = vpop.f32.mrf.mxu0
        %v6805 = vadd.f32 0.0, %v6804
        %6806 = vdwg.mxu0
        %6807 = vmatpush.msra.mxu0 0.0
        %6808 = vmatpush.msra.mxu0 0.0
        %6809 = vmatpush.msra.mxu0 0.0
        %6810 = vmatpush.msra.mxu0 0.0
        %6811 = vmatpush.msra.mxu0 0.0
        %6812 = vmatpush.msra.mxu0 0.0
        %6813 = vmatpush.msra.mxu0 0.0
        %6814 = vmatpush.msra.mxu0 0.0
        %6815 = vmatpush.msra.mxu0 0.0
        %6816 = vmatpush.msra.mxu0 0.0
        %6817 = vmatpush.msra.mxu0 0.0
        %6818 = vmatpush.msra.mxu0 0.0
        %6819 = vmatpush.msra.mxu0 0.0
        %6820 = vmatpush.msra.mxu0 0.0
        %6821 = vmatpush.msra.mxu0 0.0
        %6822 = vmatpush.msra.mxu0 %v5497
        %6823 = vmatmul.f32.gmra.mxu0 %v6765
        %v6824 = vpop.f32.mrf.mxu0
        %v6825 = vadd.f32 0.0, %v6824
        %6826 = vdwg.mxu0
        %6827 = vmatpush.msra.mxu0 0.0
        %6828 = vmatpush.msra.mxu0 0.0
        %6829 = vmatpush.msra.mxu0 0.0
        %6830 = vmatpush.msra.mxu0 0.0
        %6831 = vmatpush.msra.mxu0 0.0
        %6832 = vmatpush.msra.mxu0 0.0
        %6833 = vmatpush.msra.mxu0 0.0
        %6834 = vmatpush.msra.mxu0 0.0
        %6835 = vmatpush.msra.mxu0 0.0
        %6836 = vmatpush.msra.mxu0 0.0
        %6837 = vmatpush.msra.mxu0 0.0
        %6838 = vmatpush.msra.mxu0 0.0
        %6839 = vmatpush.msra.mxu0 0.0
        %6840 = vmatpush.msra.mxu0 0.0
        %6841 = vmatpush.msra.mxu0 0.0
        %6842 = vmatpush.msra.mxu0 %v5500
        %6843 = vmatmul.f32.gmra.mxu0 %v6765
        %v6844 = vpop.f32.mrf.mxu0
        %v6845 = vadd.f32 0.0, %v6844
        %6846 = vdwg.mxu0
        %s6847 = scalar_lea.vmem [#allocation19], 3584
        %v6848 = vld [vmem:[%s6847] sm:$0xff]
        %v6849 = vld [vmem:[%s6847 + $0x8] sm:$0xff]
        %v6850 = vld [vmem:[%s6847 + $0x10] sm:$0xff]
        %v6851 = vld [vmem:[%s6847 + $0x18] sm:$0xff]
        %v6852 = vld [vmem:[%s6847 + $0x20] sm:$0xff]
        %v6853 = vld [vmem:[%s6847 + $0x28] sm:$0xff]
        %v6854 = vld [vmem:[%s6847 + $0x30] sm:$0xff]
        %v6855 = vld [vmem:[%s6847 + $0x38] sm:$0xff]
        %v6856 = vld [vmem:[%s6847 + $0x40] sm:$0xff]
        %v6857 = vld [vmem:[%s6847 + $0x48] sm:$0xff]
        %v6858 = vld [vmem:[%s6847 + $0x50] sm:$0xff]
        %v6859 = vld [vmem:[%s6847 + $0x58] sm:$0xff]
        %v6860 = vld [vmem:[%s6847 + $0x60] sm:$0xff]
        %v6861 = vld [vmem:[%s6847 + $0x68] sm:$0xff]
        %v6862 = vld [vmem:[%s6847 + $0x70] sm:$0xff]
        %v6863 = vld [vmem:[%s6847 + $0x78] sm:$0xff]
        %v6864 = vld [vmem:[%s6847 + $0x80] sm:$0xff]
        %v6865 = vld [vmem:[%s6847 + $0x88] sm:$0xff]
        %v6866 = vld [vmem:[%s6847 + $0x90] sm:$0xff]
        %v6867 = vld [vmem:[%s6847 + $0x98] sm:$0xff]
        %v6868 = vld [vmem:[%s6847 + $0xa0] sm:$0xff]
        %v6869 = vld [vmem:[%s6847 + $0xa8] sm:$0xff]
        %v6870 = vld [vmem:[%s6847 + $0xb0] sm:$0xff]
        %v6871 = vld [vmem:[%s6847 + $0xb8] sm:$0xff]
        %v6872 = vld [vmem:[%s6847 + $0xc0] sm:$0xff]
        %v6873 = vld [vmem:[%s6847 + $0xc8] sm:$0xff]
        %v6874 = vld [vmem:[%s6847 + $0xd0] sm:$0xff]
        %v6875 = vld [vmem:[%s6847 + $0xd8] sm:$0xff]
        %v6876 = vld [vmem:[%s6847 + $0xe0] sm:$0xff]
        %v6877 = vld [vmem:[%s6847 + $0xe8] sm:$0xff]
        %v6878 = vld [vmem:[%s6847 + $0xf0] sm:$0xff]
        %v6879 = vld [vmem:[%s6847 + $0xf8] sm:$0xff]
        %v6880 = vld [vmem:[%s6847 + $0x100] sm:$0xff]
        %v6881 = vld [vmem:[%s6847 + $0x108] sm:$0xff]
        %v6882 = vld [vmem:[%s6847 + $0x110] sm:$0xff]
        %v6883 = vld [vmem:[%s6847 + $0x118] sm:$0xff]
        %v6884 = vld [vmem:[%s6847 + $0x120] sm:$0xff]
        %v6885 = vld [vmem:[%s6847 + $0x128] sm:$0xff]
        %v6886 = vld [vmem:[%s6847 + $0x130] sm:$0xff]
        %v6887 = vld [vmem:[%s6847 + $0x138] sm:$0xff]
        %v6888 = vld [vmem:[%s6847 + $0x140] sm:$0xff]
        %v6889 = vld [vmem:[%s6847 + $0x148] sm:$0xff]
        %v6890 = vld [vmem:[%s6847 + $0x150] sm:$0xff]
        %v6891 = vld [vmem:[%s6847 + $0x158] sm:$0xff]
        %v6892 = vld [vmem:[%s6847 + $0x160] sm:$0xff]
        %v6893 = vld [vmem:[%s6847 + $0x168] sm:$0xff]
        %v6894 = vld [vmem:[%s6847 + $0x170] sm:$0xff]
        %v6895 = vld [vmem:[%s6847 + $0x178] sm:$0xff]
        %v6896 = vld [vmem:[%s6847 + $0x180] sm:$0xff]
        %v6897 = vld [vmem:[%s6847 + $0x188] sm:$0xff]
        %v6898 = vld [vmem:[%s6847 + $0x190] sm:$0xff]
        %v6899 = vld [vmem:[%s6847 + $0x198] sm:$0xff]
        %v6900 = vld [vmem:[%s6847 + $0x1a0] sm:$0xff]
        %v6901 = vld [vmem:[%s6847 + $0x1a8] sm:$0xff]
        %v6902 = vld [vmem:[%s6847 + $0x1b0] sm:$0xff]
        %v6903 = vld [vmem:[%s6847 + $0x1b8] sm:$0xff]
        %v6904 = vld [vmem:[%s6847 + $0x1c0] sm:$0xff]
        %v6905 = vld [vmem:[%s6847 + $0x1c8] sm:$0xff]
        %v6906 = vld [vmem:[%s6847 + $0x1d0] sm:$0xff]
        %v6907 = vld [vmem:[%s6847 + $0x1d8] sm:$0xff]
        %v6908 = vld [vmem:[%s6847 + $0x1e0] sm:$0xff]
        %v6909 = vld [vmem:[%s6847 + $0x1e8] sm:$0xff]
        %v6910 = vld [vmem:[%s6847 + $0x1f0] sm:$0xff]
        %v6911 = vld [vmem:[%s6847 + $0x1f8] sm:$0xff]
        %v6912 = vld [vmem:[%s6847 + $0x200] sm:$0xff]
        %v6913 = vld [vmem:[%s6847 + $0x208] sm:$0xff]
        %v6914 = vld [vmem:[%s6847 + $0x210] sm:$0xff]
        %v6915 = vld [vmem:[%s6847 + $0x218] sm:$0xff]
        %v6916 = vld [vmem:[%s6847 + $0x220] sm:$0xff]
        %v6917 = vld [vmem:[%s6847 + $0x228] sm:$0xff]
        %v6918 = vld [vmem:[%s6847 + $0x230] sm:$0xff]
        %v6919 = vld [vmem:[%s6847 + $0x238] sm:$0xff]
        %v6920 = vld [vmem:[%s6847 + $0x240] sm:$0xff]
        %v6921 = vld [vmem:[%s6847 + $0x248] sm:$0xff]
        %v6922 = vld [vmem:[%s6847 + $0x250] sm:$0xff]
        %v6923 = vld [vmem:[%s6847 + $0x258] sm:$0xff]
        %v6924 = vld [vmem:[%s6847 + $0x260] sm:$0xff]
        %v6925 = vld [vmem:[%s6847 + $0x268] sm:$0xff]
        %v6926 = vld [vmem:[%s6847 + $0x270] sm:$0xff]
        %v6927 = vld [vmem:[%s6847 + $0x278] sm:$0xff]
        %v6928 = vld [vmem:[%s6847 + $0x280] sm:$0xff]
        %v6929 = vld [vmem:[%s6847 + $0x288] sm:$0xff]
        %v6930 = vld [vmem:[%s6847 + $0x290] sm:$0xff]
        %v6931 = vld [vmem:[%s6847 + $0x298] sm:$0xff]
        %v6932 = vld [vmem:[%s6847 + $0x2a0] sm:$0xff]
        %v6933 = vld [vmem:[%s6847 + $0x2a8] sm:$0xff]
        %v6934 = vld [vmem:[%s6847 + $0x2b0] sm:$0xff]
        %v6935 = vld [vmem:[%s6847 + $0x2b8] sm:$0xff]
        %v6936 = vld [vmem:[%s6847 + $0x2c0] sm:$0xff]
        %v6937 = vld [vmem:[%s6847 + $0x2c8] sm:$0xff]
        %v6938 = vld [vmem:[%s6847 + $0x2d0] sm:$0xff]
        %v6939 = vld [vmem:[%s6847 + $0x2d8] sm:$0xff]
        %v6940 = vld [vmem:[%s6847 + $0x2e0] sm:$0xff]
        %v6941 = vld [vmem:[%s6847 + $0x2e8] sm:$0xff]
        %v6942 = vld [vmem:[%s6847 + $0x2f0] sm:$0xff]
        %v6943 = vld [vmem:[%s6847 + $0x2f8] sm:$0xff]
        %v6944 = vld [vmem:[%s6847 + $0x300] sm:$0xff]
        %v6945 = vld [vmem:[%s6847 + $0x308] sm:$0xff]
        %v6946 = vld [vmem:[%s6847 + $0x310] sm:$0xff]
        %v6947 = vld [vmem:[%s6847 + $0x318] sm:$0xff]
        %v6948 = vld [vmem:[%s6847 + $0x320] sm:$0xff]
        %v6949 = vld [vmem:[%s6847 + $0x328] sm:$0xff]
        %v6950 = vld [vmem:[%s6847 + $0x330] sm:$0xff]
        %v6951 = vld [vmem:[%s6847 + $0x338] sm:$0xff]
        %v6952 = vld [vmem:[%s6847 + $0x340] sm:$0xff]
        %v6953 = vld [vmem:[%s6847 + $0x348] sm:$0xff]
        %v6954 = vld [vmem:[%s6847 + $0x350] sm:$0xff]
        %v6955 = vld [vmem:[%s6847 + $0x358] sm:$0xff]
        %v6956 = vld [vmem:[%s6847 + $0x360] sm:$0xff]
        %v6957 = vld [vmem:[%s6847 + $0x368] sm:$0xff]
        %v6958 = vld [vmem:[%s6847 + $0x370] sm:$0xff]
        %v6959 = vld [vmem:[%s6847 + $0x378] sm:$0xff]
        %v6960 = vld [vmem:[%s6847 + $0x380] sm:$0xff]
        %v6961 = vld [vmem:[%s6847 + $0x388] sm:$0xff]
        %v6962 = vld [vmem:[%s6847 + $0x390] sm:$0xff]
        %v6963 = vld [vmem:[%s6847 + $0x398] sm:$0xff]
        %v6964 = vld [vmem:[%s6847 + $0x3a0] sm:$0xff]
        %v6965 = vld [vmem:[%s6847 + $0x3a8] sm:$0xff]
        %v6966 = vld [vmem:[%s6847 + $0x3b0] sm:$0xff]
        %v6967 = vld [vmem:[%s6847 + $0x3b8] sm:$0xff]
        %v6968 = vld [vmem:[%s6847 + $0x3c0] sm:$0xff]
        %v6969 = vld [vmem:[%s6847 + $0x3c8] sm:$0xff]
        %v6970 = vld [vmem:[%s6847 + $0x3d0] sm:$0xff]
        %v6971 = vld [vmem:[%s6847 + $0x3d8] sm:$0xff]
        %v6972 = vld [vmem:[%s6847 + $0x3e0] sm:$0xff]
        %v6973 = vld [vmem:[%s6847 + $0x3e8] sm:$0xff]
        %v6974 = vld [vmem:[%s6847 + $0x3f0] sm:$0xff]
        %v6975 = vld [vmem:[%s6847 + $0x3f8] sm:$0xff]
        %v6976 = vld [vmem:[%s6847 + $0x400] sm:$0xff]
        %v6977 = vld [vmem:[%s6847 + $0x408] sm:$0xff]
        %v6978 = vld [vmem:[%s6847 + $0x410] sm:$0xff]
        %v6979 = vld [vmem:[%s6847 + $0x418] sm:$0xff]
        %v6980 = vld [vmem:[%s6847 + $0x420] sm:$0xff]
        %v6981 = vld [vmem:[%s6847 + $0x428] sm:$0xff]
        %v6982 = vld [vmem:[%s6847 + $0x430] sm:$0xff]
        %v6983 = vld [vmem:[%s6847 + $0x438] sm:$0xff]
        %v6984 = vld [vmem:[%s6847 + $0x440] sm:$0xff]
        %v6985 = vld [vmem:[%s6847 + $0x448] sm:$0xff]
        %v6986 = vld [vmem:[%s6847 + $0x450] sm:$0xff]
        %v6987 = vld [vmem:[%s6847 + $0x458] sm:$0xff]
        %v6988 = vld [vmem:[%s6847 + $0x460] sm:$0xff]
        %v6989 = vld [vmem:[%s6847 + $0x468] sm:$0xff]
        %v6990 = vld [vmem:[%s6847 + $0x470] sm:$0xff]
        %v6991 = vld [vmem:[%s6847 + $0x478] sm:$0xff]
        %v6992 = vld [vmem:[%s6847 + $0x480] sm:$0xff]
        %v6993 = vld [vmem:[%s6847 + $0x488] sm:$0xff]
        %v6994 = vld [vmem:[%s6847 + $0x490] sm:$0xff]
        %v6995 = vld [vmem:[%s6847 + $0x498] sm:$0xff]
        %v6996 = vld [vmem:[%s6847 + $0x4a0] sm:$0xff]
        %v6997 = vld [vmem:[%s6847 + $0x4a8] sm:$0xff]
        %v6998 = vld [vmem:[%s6847 + $0x4b0] sm:$0xff]
        %v6999 = vld [vmem:[%s6847 + $0x4b8] sm:$0xff]
        %v7000 = vld [vmem:[%s6847 + $0x4c0] sm:$0xff]
        %v7001 = vld [vmem:[%s6847 + $0x4c8] sm:$0xff]
        %v7002 = vld [vmem:[%s6847 + $0x4d0] sm:$0xff]
        %v7003 = vld [vmem:[%s6847 + $0x4d8] sm:$0xff]
        %v7004 = vld [vmem:[%s6847 + $0x4e0] sm:$0xff]
        %v7005 = vld [vmem:[%s6847 + $0x4e8] sm:$0xff]
        %v7006 = vld [vmem:[%s6847 + $0x4f0] sm:$0xff]
        %v7007 = vld [vmem:[%s6847 + $0x4f8] sm:$0xff]
        %v7008 = vld [vmem:[%s6847 + $0x500] sm:$0xff]
        %v7009 = vld [vmem:[%s6847 + $0x508] sm:$0xff]
        %v7010 = vld [vmem:[%s6847 + $0x510] sm:$0xff]
        %v7011 = vld [vmem:[%s6847 + $0x518] sm:$0xff]
        %v7012 = vld [vmem:[%s6847 + $0x520] sm:$0xff]
        %v7013 = vld [vmem:[%s6847 + $0x528] sm:$0xff]
        %v7014 = vld [vmem:[%s6847 + $0x530] sm:$0xff]
        %v7015 = vld [vmem:[%s6847 + $0x538] sm:$0xff]
        %v7016 = vld [vmem:[%s6847 + $0x540] sm:$0xff]
        %v7017 = vld [vmem:[%s6847 + $0x548] sm:$0xff]
        %v7018 = vld [vmem:[%s6847 + $0x550] sm:$0xff]
        %v7019 = vld [vmem:[%s6847 + $0x558] sm:$0xff]
        %v7020 = vld [vmem:[%s6847 + $0x560] sm:$0xff]
        %v7021 = vld [vmem:[%s6847 + $0x568] sm:$0xff]
        %v7022 = vld [vmem:[%s6847 + $0x570] sm:$0xff]
        %v7023 = vld [vmem:[%s6847 + $0x578] sm:$0xff]
        %v7024 = vld [vmem:[%s6847 + $0x580] sm:$0xff]
        %v7025 = vld [vmem:[%s6847 + $0x588] sm:$0xff]
        %v7026 = vld [vmem:[%s6847 + $0x590] sm:$0xff]
        %v7027 = vld [vmem:[%s6847 + $0x598] sm:$0xff]
        %v7028 = vld [vmem:[%s6847 + $0x5a0] sm:$0xff]
        %v7029 = vld [vmem:[%s6847 + $0x5a8] sm:$0xff]
        %v7030 = vld [vmem:[%s6847 + $0x5b0] sm:$0xff]
        %v7031 = vld [vmem:[%s6847 + $0x5b8] sm:$0xff]
        %v7032 = vld [vmem:[%s6847 + $0x5c0] sm:$0xff]
        %v7033 = vld [vmem:[%s6847 + $0x5c8] sm:$0xff]
        %v7034 = vld [vmem:[%s6847 + $0x5d0] sm:$0xff]
        %v7035 = vld [vmem:[%s6847 + $0x5d8] sm:$0xff]
        %v7036 = vld [vmem:[%s6847 + $0x5e0] sm:$0xff]
        %v7037 = vld [vmem:[%s6847 + $0x5e8] sm:$0xff]
        %v7038 = vld [vmem:[%s6847 + $0x5f0] sm:$0xff]
        %v7039 = vld [vmem:[%s6847 + $0x5f8] sm:$0xff]
        %v7040 = vld [vmem:[%s6847 + $0x600] sm:$0xff]
        %v7041 = vld [vmem:[%s6847 + $0x608] sm:$0xff]
        %v7042 = vld [vmem:[%s6847 + $0x610] sm:$0xff]
        %v7043 = vld [vmem:[%s6847 + $0x618] sm:$0xff]
        %v7044 = vld [vmem:[%s6847 + $0x620] sm:$0xff]
        %v7045 = vld [vmem:[%s6847 + $0x628] sm:$0xff]
        %v7046 = vld [vmem:[%s6847 + $0x630] sm:$0xff]
        %v7047 = vld [vmem:[%s6847 + $0x638] sm:$0xff]
        %v7048 = vld [vmem:[%s6847 + $0x640] sm:$0xff]
        %v7049 = vld [vmem:[%s6847 + $0x648] sm:$0xff]
        %v7050 = vld [vmem:[%s6847 + $0x650] sm:$0xff]
        %v7051 = vld [vmem:[%s6847 + $0x658] sm:$0xff]
        %v7052 = vld [vmem:[%s6847 + $0x660] sm:$0xff]
        %v7053 = vld [vmem:[%s6847 + $0x668] sm:$0xff]
        %v7054 = vld [vmem:[%s6847 + $0x670] sm:$0xff]
        %v7055 = vld [vmem:[%s6847 + $0x678] sm:$0xff]
        %v7056 = vld [vmem:[%s6847 + $0x680] sm:$0xff]
        %v7057 = vld [vmem:[%s6847 + $0x688] sm:$0xff]
        %v7058 = vld [vmem:[%s6847 + $0x690] sm:$0xff]
        %v7059 = vld [vmem:[%s6847 + $0x698] sm:$0xff]
        %v7060 = vld [vmem:[%s6847 + $0x6a0] sm:$0xff]
        %v7061 = vld [vmem:[%s6847 + $0x6a8] sm:$0xff]
        %v7062 = vld [vmem:[%s6847 + $0x6b0] sm:$0xff]
        %v7063 = vld [vmem:[%s6847 + $0x6b8] sm:$0xff]
        %v7064 = vld [vmem:[%s6847 + $0x6c0] sm:$0xff]
        %v7065 = vld [vmem:[%s6847 + $0x6c8] sm:$0xff]
        %v7066 = vld [vmem:[%s6847 + $0x6d0] sm:$0xff]
        %v7067 = vld [vmem:[%s6847 + $0x6d8] sm:$0xff]
        %v7068 = vld [vmem:[%s6847 + $0x6e0] sm:$0xff]
        %v7069 = vld [vmem:[%s6847 + $0x6e8] sm:$0xff]
        %v7070 = vld [vmem:[%s6847 + $0x6f0] sm:$0xff]
        %v7071 = vld [vmem:[%s6847 + $0x6f8] sm:$0xff]
        %v7073 = vsel %vm2070, %v6845, 0
        %7075 = vmatpush.msra.mxu0 %v6908
        %7076 = vmatpush.msra.mxu0 %v6904
        %7077 = vmatpush.msra.mxu0 %v6900
        %7078 = vmatpush.msra.mxu0 %v6896
        %7079 = vmatpush.msra.mxu0 %v6892
        %7080 = vmatpush.msra.mxu0 %v6888
        %7081 = vmatpush.msra.mxu0 %v6884
        %7082 = vmatpush.msra.mxu0 %v6880
        %7083 = vmatpush.msra.mxu0 %v6876
        %7084 = vmatpush.msra.mxu0 %v6872
        %7085 = vmatpush.msra.mxu0 %v6868
        %7086 = vmatpush.msra.mxu0 %v6864
        %7087 = vmatpush.msra.mxu0 %v6860
        %7088 = vmatpush.msra.mxu0 %v6856
        %7089 = vmatpush.msra.mxu0 %v6852
        %7090 = vmatpush.msra.mxu0 %v6848
        %7091 = vmatmul.f32.gmra.mxu0 %v6785
        %v7092 = vpop.f32.mrf.mxu0
        %v7093 = vadd.f32 0.0, %v7092
        %7094 = vdwg.mxu0
        %7095 = vmatpush.msra.mxu0 %v6972
        %7096 = vmatpush.msra.mxu0 %v6968
        %7097 = vmatpush.msra.mxu0 %v6964
        %7098 = vmatpush.msra.mxu0 %v6960
        %7099 = vmatpush.msra.mxu0 %v6956
        %7100 = vmatpush.msra.mxu0 %v6952
        %7101 = vmatpush.msra.mxu0 %v6948
        %7102 = vmatpush.msra.mxu0 %v6944
        %7103 = vmatpush.msra.mxu0 %v6940
        %7104 = vmatpush.msra.mxu0 %v6936
        %7105 = vmatpush.msra.mxu0 %v6932
        %7106 = vmatpush.msra.mxu0 %v6928
        %7107 = vmatpush.msra.mxu0 %v6924
        %7108 = vmatpush.msra.mxu0 %v6920
        %7109 = vmatpush.msra.mxu0 %v6916
        %7110 = vmatpush.msra.mxu0 %v6912
        %7111 = vmatmul.f32.gmra.mxu0 %v6805
        %v7112 = vpop.f32.mrf.mxu0
        %v7113 = vadd.f32 %v7093, %v7112
        %7114 = vdwg.mxu0
        %7115 = vmatpush.msra.mxu0 %v7036
        %7116 = vmatpush.msra.mxu0 %v7032
        %7117 = vmatpush.msra.mxu0 %v7028
        %7118 = vmatpush.msra.mxu0 %v7024
        %7119 = vmatpush.msra.mxu0 %v7020
        %7120 = vmatpush.msra.mxu0 %v7016
        %7121 = vmatpush.msra.mxu0 %v7012
        %7122 = vmatpush.msra.mxu0 %v7008
        %7123 = vmatpush.msra.mxu0 %v7004
        %7124 = vmatpush.msra.mxu0 %v7000
        %7125 = vmatpush.msra.mxu0 %v6996
        %7126 = vmatpush.msra.mxu0 %v6992
        %7127 = vmatpush.msra.mxu0 %v6988
        %7128 = vmatpush.msra.mxu0 %v6984
        %7129 = vmatpush.msra.mxu0 %v6980
        %7130 = vmatpush.msra.mxu0 %v6976
        %7131 = vmatmul.f32.gmra.mxu0 %v6825
        %v7132 = vpop.f32.mrf.mxu0
        %v7133 = vadd.f32 %v7113, %v7132
        %7134 = vdwg.mxu0
        %7135 = vmatpush.msra.mxu0 0.0
        %7136 = vmatpush.msra.mxu0 0.0
        %7137 = vmatpush.msra.mxu0 0.0
        %7138 = vmatpush.msra.mxu0 0.0
        %7139 = vmatpush.msra.mxu0 0.0
        %7140 = vmatpush.msra.mxu0 0.0
        %7141 = vmatpush.msra.mxu0 0.0
        %7142 = vmatpush.msra.mxu0 0.0
        %7143 = vmatpush.msra.mxu0 %v7068
        %7144 = vmatpush.msra.mxu0 %v7064
        %7145 = vmatpush.msra.mxu0 %v7060
        %7146 = vmatpush.msra.mxu0 %v7056
        %7147 = vmatpush.msra.mxu0 %v7052
        %7148 = vmatpush.msra.mxu0 %v7048
        %7149 = vmatpush.msra.mxu0 %v7044
        %7150 = vmatpush.msra.mxu0 %v7040
        %7151 = vmatmul.f32.gmra.mxu0 %v7073
        %v7152 = vpop.f32.mrf.mxu0
        %v7153 = vadd.f32 %v7133, %v7152
        %7154 = vdwg.mxu0
        %7155 = vmatpush.msra.mxu0 %v6909
        %7156 = vmatpush.msra.mxu0 %v6905
        %7157 = vmatpush.msra.mxu0 %v6901
        %7158 = vmatpush.msra.mxu0 %v6897
        %7159 = vmatpush.msra.mxu0 %v6893
        %7160 = vmatpush.msra.mxu0 %v6889
        %7161 = vmatpush.msra.mxu0 %v6885
        %7162 = vmatpush.msra.mxu0 %v6881
        %7163 = vmatpush.msra.mxu0 %v6877
        %7164 = vmatpush.msra.mxu0 %v6873
        %7165 = vmatpush.msra.mxu0 %v6869
        %7166 = vmatpush.msra.mxu0 %v6865
        %7167 = vmatpush.msra.mxu0 %v6861
        %7168 = vmatpush.msra.mxu0 %v6857
        %7169 = vmatpush.msra.mxu0 %v6853
        %7170 = vmatpush.msra.mxu0 %v6849
        %7171 = vmatmul.f32.gmra.mxu0 %v6785
        %v7172 = vpop.f32.mrf.mxu0
        %v7173 = vadd.f32 0.0, %v7172
        %7174 = vdwg.mxu0
        %7175 = vmatpush.msra.mxu0 %v6973
        %7176 = vmatpush.msra.mxu0 %v6969
        %7177 = vmatpush.msra.mxu0 %v6965
        %7178 = vmatpush.msra.mxu0 %v6961
        %7179 = vmatpush.msra.mxu0 %v6957
        %7180 = vmatpush.msra.mxu0 %v6953
        %7181 = vmatpush.msra.mxu0 %v6949
        %7182 = vmatpush.msra.mxu0 %v6945
        %7183 = vmatpush.msra.mxu0 %v6941
        %7184 = vmatpush.msra.mxu0 %v6937
        %7185 = vmatpush.msra.mxu0 %v6933
        %7186 = vmatpush.msra.mxu0 %v6929
        %7187 = vmatpush.msra.mxu0 %v6925
        %7188 = vmatpush.msra.mxu0 %v6921
        %7189 = vmatpush.msra.mxu0 %v6917
        %7190 = vmatpush.msra.mxu0 %v6913
        %7191 = vmatmul.f32.gmra.mxu0 %v6805
        %v7192 = vpop.f32.mrf.mxu0
        %v7193 = vadd.f32 %v7173, %v7192
        %7194 = vdwg.mxu0
        %7195 = vmatpush.msra.mxu0 %v7037
        %7196 = vmatpush.msra.mxu0 %v7033
        %7197 = vmatpush.msra.mxu0 %v7029
        %7198 = vmatpush.msra.mxu0 %v7025
        %7199 = vmatpush.msra.mxu0 %v7021
        %7200 = vmatpush.msra.mxu0 %v7017
        %7201 = vmatpush.msra.mxu0 %v7013
        %7202 = vmatpush.msra.mxu0 %v7009
        %7203 = vmatpush.msra.mxu0 %v7005
        %7204 = vmatpush.msra.mxu0 %v7001
        %7205 = vmatpush.msra.mxu0 %v6997
        %7206 = vmatpush.msra.mxu0 %v6993
        %7207 = vmatpush.msra.mxu0 %v6989
        %7208 = vmatpush.msra.mxu0 %v6985
        %7209 = vmatpush.msra.mxu0 %v6981
        %7210 = vmatpush.msra.mxu0 %v6977
        %7211 = vmatmul.f32.gmra.mxu0 %v6825
        %v7212 = vpop.f32.mrf.mxu0
        %v7213 = vadd.f32 %v7193, %v7212
        %7214 = vdwg.mxu0
        %7215 = vmatpush.msra.mxu0 0.0
        %7216 = vmatpush.msra.mxu0 0.0
        %7217 = vmatpush.msra.mxu0 0.0
        %7218 = vmatpush.msra.mxu0 0.0
        %7219 = vmatpush.msra.mxu0 0.0
        %7220 = vmatpush.msra.mxu0 0.0
        %7221 = vmatpush.msra.mxu0 0.0
        %7222 = vmatpush.msra.mxu0 0.0
        %7223 = vmatpush.msra.mxu0 %v7069
        %7224 = vmatpush.msra.mxu0 %v7065
        %7225 = vmatpush.msra.mxu0 %v7061
        %7226 = vmatpush.msra.mxu0 %v7057
        %7227 = vmatpush.msra.mxu0 %v7053
        %7228 = vmatpush.msra.mxu0 %v7049
        %7229 = vmatpush.msra.mxu0 %v7045
        %7230 = vmatpush.msra.mxu0 %v7041
        %7231 = vmatmul.f32.gmra.mxu0 %v7073
        %v7232 = vpop.f32.mrf.mxu0
        %v7233 = vadd.f32 %v7213, %v7232
        %7234 = vdwg.mxu0
        %7235 = vmatpush.msra.mxu0 %v6910
        %7236 = vmatpush.msra.mxu0 %v6906
        %7237 = vmatpush.msra.mxu0 %v6902
        %7238 = vmatpush.msra.mxu0 %v6898
        %7239 = vmatpush.msra.mxu0 %v6894
        %7240 = vmatpush.msra.mxu0 %v6890
        %7241 = vmatpush.msra.mxu0 %v6886
        %7242 = vmatpush.msra.mxu0 %v6882
        %7243 = vmatpush.msra.mxu0 %v6878
        %7244 = vmatpush.msra.mxu0 %v6874
        %7245 = vmatpush.msra.mxu0 %v6870
        %7246 = vmatpush.msra.mxu0 %v6866
        %7247 = vmatpush.msra.mxu0 %v6862
        %7248 = vmatpush.msra.mxu0 %v6858
        %7249 = vmatpush.msra.mxu0 %v6854
        %7250 = vmatpush.msra.mxu0 %v6850
        %7251 = vmatmul.f32.gmra.mxu0 %v6785
        %v7252 = vpop.f32.mrf.mxu0
        %v7253 = vadd.f32 0.0, %v7252
        %7254 = vdwg.mxu0
        %7255 = vmatpush.msra.mxu0 %v6974
        %7256 = vmatpush.msra.mxu0 %v6970
        %7257 = vmatpush.msra.mxu0 %v6966
        %7258 = vmatpush.msra.mxu0 %v6962
        %7259 = vmatpush.msra.mxu0 %v6958
        %7260 = vmatpush.msra.mxu0 %v6954
        %7261 = vmatpush.msra.mxu0 %v6950
        %7262 = vmatpush.msra.mxu0 %v6946
        %7263 = vmatpush.msra.mxu0 %v6942
        %7264 = vmatpush.msra.mxu0 %v6938
        %7265 = vmatpush.msra.mxu0 %v6934
        %7266 = vmatpush.msra.mxu0 %v6930
        %7267 = vmatpush.msra.mxu0 %v6926
        %7268 = vmatpush.msra.mxu0 %v6922
        %7269 = vmatpush.msra.mxu0 %v6918
        %7270 = vmatpush.msra.mxu0 %v6914
        %7271 = vmatmul.f32.gmra.mxu0 %v6805
        %v7272 = vpop.f32.mrf.mxu0
        %v7273 = vadd.f32 %v7253, %v7272
        %7274 = vdwg.mxu0
        %7275 = vmatpush.msra.mxu0 %v7038
        %7276 = vmatpush.msra.mxu0 %v7034
        %7277 = vmatpush.msra.mxu0 %v7030
        %7278 = vmatpush.msra.mxu0 %v7026
        %7279 = vmatpush.msra.mxu0 %v7022
        %7280 = vmatpush.msra.mxu0 %v7018
        %7281 = vmatpush.msra.mxu0 %v7014
        %7282 = vmatpush.msra.mxu0 %v7010
        %7283 = vmatpush.msra.mxu0 %v7006
        %7284 = vmatpush.msra.mxu0 %v7002
        %7285 = vmatpush.msra.mxu0 %v6998
        %7286 = vmatpush.msra.mxu0 %v6994
        %7287 = vmatpush.msra.mxu0 %v6990
        %7288 = vmatpush.msra.mxu0 %v6986
        %7289 = vmatpush.msra.mxu0 %v6982
        %7290 = vmatpush.msra.mxu0 %v6978
        %7291 = vmatmul.f32.gmra.mxu0 %v6825
        %v7292 = vpop.f32.mrf.mxu0
        %v7293 = vadd.f32 %v7273, %v7292
        %7294 = vdwg.mxu0
        %7295 = vmatpush.msra.mxu0 0.0
        %7296 = vmatpush.msra.mxu0 0.0
        %7297 = vmatpush.msra.mxu0 0.0
        %7298 = vmatpush.msra.mxu0 0.0
        %7299 = vmatpush.msra.mxu0 0.0
        %7300 = vmatpush.msra.mxu0 0.0
        %7301 = vmatpush.msra.mxu0 0.0
        %7302 = vmatpush.msra.mxu0 0.0
        %7303 = vmatpush.msra.mxu0 %v7070
        %7304 = vmatpush.msra.mxu0 %v7066
        %7305 = vmatpush.msra.mxu0 %v7062
        %7306 = vmatpush.msra.mxu0 %v7058
        %7307 = vmatpush.msra.mxu0 %v7054
        %7308 = vmatpush.msra.mxu0 %v7050
        %7309 = vmatpush.msra.mxu0 %v7046
        %7310 = vmatpush.msra.mxu0 %v7042
        %7311 = vmatmul.f32.gmra.mxu0 %v7073
        %v7312 = vpop.f32.mrf.mxu0
        %v7313 = vadd.f32 %v7293, %v7312
        %7314 = vdwg.mxu0
        %7315 = vmatpush.msra.mxu0 %v6911
        %7316 = vmatpush.msra.mxu0 %v6907
        %7317 = vmatpush.msra.mxu0 %v6903
        %7318 = vmatpush.msra.mxu0 %v6899
        %7319 = vmatpush.msra.mxu0 %v6895
        %7320 = vmatpush.msra.mxu0 %v6891
        %7321 = vmatpush.msra.mxu0 %v6887
        %7322 = vmatpush.msra.mxu0 %v6883
        %7323 = vmatpush.msra.mxu0 %v6879
        %7324 = vmatpush.msra.mxu0 %v6875
        %7325 = vmatpush.msra.mxu0 %v6871
        %7326 = vmatpush.msra.mxu0 %v6867
        %7327 = vmatpush.msra.mxu0 %v6863
        %7328 = vmatpush.msra.mxu0 %v6859
        %7329 = vmatpush.msra.mxu0 %v6855
        %7330 = vmatpush.msra.mxu0 %v6851
        %7331 = vmatmul.f32.gmra.mxu0 %v6785
        %v7332 = vpop.f32.mrf.mxu0
        %v7333 = vadd.f32 0.0, %v7332
        %7334 = vdwg.mxu0
        %7335 = vmatpush.msra.mxu0 %v6975
        %7336 = vmatpush.msra.mxu0 %v6971
        %7337 = vmatpush.msra.mxu0 %v6967
        %7338 = vmatpush.msra.mxu0 %v6963
        %7339 = vmatpush.msra.mxu0 %v6959
        %7340 = vmatpush.msra.mxu0 %v6955
        %7341 = vmatpush.msra.mxu0 %v6951
        %7342 = vmatpush.msra.mxu0 %v6947
        %7343 = vmatpush.msra.mxu0 %v6943
        %7344 = vmatpush.msra.mxu0 %v6939
        %7345 = vmatpush.msra.mxu0 %v6935
        %7346 = vmatpush.msra.mxu0 %v6931
        %7347 = vmatpush.msra.mxu0 %v6927
        %7348 = vmatpush.msra.mxu0 %v6923
        %7349 = vmatpush.msra.mxu0 %v6919
        %7350 = vmatpush.msra.mxu0 %v6915
        %7351 = vmatmul.f32.gmra.mxu0 %v6805
        %v7352 = vpop.f32.mrf.mxu0
        %v7353 = vadd.f32 %v7333, %v7352
        %7354 = vdwg.mxu0
        %7355 = vmatpush.msra.mxu0 %v7039
        %7356 = vmatpush.msra.mxu0 %v7035
        %7357 = vmatpush.msra.mxu0 %v7031
        %7358 = vmatpush.msra.mxu0 %v7027
        %7359 = vmatpush.msra.mxu0 %v7023
        %7360 = vmatpush.msra.mxu0 %v7019
        %7361 = vmatpush.msra.mxu0 %v7015
        %7362 = vmatpush.msra.mxu0 %v7011
        %7363 = vmatpush.msra.mxu0 %v7007
        %7364 = vmatpush.msra.mxu0 %v7003
        %7365 = vmatpush.msra.mxu0 %v6999
        %7366 = vmatpush.msra.mxu0 %v6995
        %7367 = vmatpush.msra.mxu0 %v6991
        %7368 = vmatpush.msra.mxu0 %v6987
        %7369 = vmatpush.msra.mxu0 %v6983
        %7370 = vmatpush.msra.mxu0 %v6979
        %7371 = vmatmul.f32.gmra.mxu0 %v6825
        %v7372 = vpop.f32.mrf.mxu0
        %v7373 = vadd.f32 %v7353, %v7372
        %7374 = vdwg.mxu0
        %7375 = vmatpush.msra.mxu0 0.0
        %7376 = vmatpush.msra.mxu0 0.0
        %7377 = vmatpush.msra.mxu0 0.0
        %7378 = vmatpush.msra.mxu0 0.0
        %7379 = vmatpush.msra.mxu0 0.0
        %7380 = vmatpush.msra.mxu0 0.0
        %7381 = vmatpush.msra.mxu0 0.0
        %7382 = vmatpush.msra.mxu0 0.0
        %7383 = vmatpush.msra.mxu0 %v7071
        %7384 = vmatpush.msra.mxu0 %v7067
        %7385 = vmatpush.msra.mxu0 %v7063
        %7386 = vmatpush.msra.mxu0 %v7059
        %7387 = vmatpush.msra.mxu0 %v7055
        %7388 = vmatpush.msra.mxu0 %v7051
        %7389 = vmatpush.msra.mxu0 %v7047
        %7390 = vmatpush.msra.mxu0 %v7043
        %7391 = vmatmul.f32.gmra.mxu0 %v7073
        %v7392 = vpop.f32.mrf.mxu0
        %v7393 = vadd.f32 %v7373, %v7392
        %7394 = vdwg.mxu0
        %v7395 = vadd.f32 %v6520, %v7153
        %v7396 = vadd.f32 %v6600, %v7233
        %v7397 = vadd.f32 %v6680, %v7313
        %v7398 = vadd.f32 %v6760, %v7393
        %v7399 = vld [vmem:[#allocation20] sm:$0xf]
        %v7401 = vperm.slane %v7399, 0
        %v7402 = vperm.slane %v7399, 1
        %v7403 = vperm.slane %v7399, 2
        %v7404 = vperm.slane %v7399, 3
        %v7409 = vadd.f32 %v7395, %v7401
        %v7410 = vadd.f32 %v7396, %v7402
        %v7411 = vadd.f32 %v7397, %v7403
        %v7412 = vadd.f32 %v7398, %v7404
        %v7413 = vmax.f32 %v7409, 0.0
        %v7414 = vmax.f32 %v7410, 0.0
        %v7415 = vmax.f32 %v7411, 0.0
        %v7416 = vmax.f32 %v7412, 0.0
        %v7417 = vld [vmem:[#allocation22] sm:$0xf]
        %v7419 = vsel %vm5485, %v7417, 0
        %v7422 = vsel %vm5489, %v7413, 0
        %v7425 = vsel %vm5489, %v7414, 0
        %v7428 = vsel %vm5489, %v7415, 0
        %v7431 = vsel %vm5489, %v7416, 0
        %7433 = vmatpush.msra.mxu0 0.0
        %7434 = vmatpush.msra.mxu0 0.0
        %7435 = vmatpush.msra.mxu0 0.0
        %7436 = vmatpush.msra.mxu0 0.0
        %7437 = vmatpush.msra.mxu0 0.0
        %7438 = vmatpush.msra.mxu0 0.0
        %7439 = vmatpush.msra.mxu0 0.0
        %7440 = vmatpush.msra.mxu0 0.0
        %7441 = vmatpush.msra.mxu0 0.0
        %7442 = vmatpush.msra.mxu0 0.0
        %7443 = vmatpush.msra.mxu0 0.0
        %7444 = vmatpush.msra.mxu0 0.0
        %7445 = vmatpush.msra.mxu0 0.0
        %7446 = vmatpush.msra.mxu0 0.0
        %7447 = vmatpush.msra.mxu0 0.0
        %7448 = vmatpush.msra.mxu0 %v7422
        %7449 = vmatmul.f32.gmra.mxu0 %v7419
        %v7450 = vpop.f32.mrf.mxu0
        %v7451 = vadd.f32 0.0, %v7450
        %7452 = vdwg.mxu0
        %7453 = vmatpush.msra.mxu0 0.0
        %7454 = vmatpush.msra.mxu0 0.0
        %7455 = vmatpush.msra.mxu0 0.0
        %7456 = vmatpush.msra.mxu0 0.0
        %7457 = vmatpush.msra.mxu0 0.0
        %7458 = vmatpush.msra.mxu0 0.0
        %7459 = vmatpush.msra.mxu0 0.0
        %7460 = vmatpush.msra.mxu0 0.0
        %7461 = vmatpush.msra.mxu0 0.0
        %7462 = vmatpush.msra.mxu0 0.0
        %7463 = vmatpush.msra.mxu0 0.0
        %7464 = vmatpush.msra.mxu0 0.0
        %7465 = vmatpush.msra.mxu0 0.0
        %7466 = vmatpush.msra.mxu0 0.0
        %7467 = vmatpush.msra.mxu0 0.0
        %7468 = vmatpush.msra.mxu0 %v7425
        %7469 = vmatmul.f32.gmra.mxu0 %v7419
        %v7470 = vpop.f32.mrf.mxu0
        %v7471 = vadd.f32 0.0, %v7470
        %7472 = vdwg.mxu0
        %7473 = vmatpush.msra.mxu0 0.0
        %7474 = vmatpush.msra.mxu0 0.0
        %7475 = vmatpush.msra.mxu0 0.0
        %7476 = vmatpush.msra.mxu0 0.0
        %7477 = vmatpush.msra.mxu0 0.0
        %7478 = vmatpush.msra.mxu0 0.0
        %7479 = vmatpush.msra.mxu0 0.0
        %7480 = vmatpush.msra.mxu0 0.0
        %7481 = vmatpush.msra.mxu0 0.0
        %7482 = vmatpush.msra.mxu0 0.0
        %7483 = vmatpush.msra.mxu0 0.0
        %7484 = vmatpush.msra.mxu0 0.0
        %7485 = vmatpush.msra.mxu0 0.0
        %7486 = vmatpush.msra.mxu0 0.0
        %7487 = vmatpush.msra.mxu0 0.0
        %7488 = vmatpush.msra.mxu0 %v7428
        %7489 = vmatmul.f32.gmra.mxu0 %v7419
        %v7490 = vpop.f32.mrf.mxu0
        %v7491 = vadd.f32 0.0, %v7490
        %7492 = vdwg.mxu0
        %7493 = vmatpush.msra.mxu0 0.0
        %7494 = vmatpush.msra.mxu0 0.0
        %7495 = vmatpush.msra.mxu0 0.0
        %7496 = vmatpush.msra.mxu0 0.0
        %7497 = vmatpush.msra.mxu0 0.0
        %7498 = vmatpush.msra.mxu0 0.0
        %7499 = vmatpush.msra.mxu0 0.0
        %7500 = vmatpush.msra.mxu0 0.0
        %7501 = vmatpush.msra.mxu0 0.0
        %7502 = vmatpush.msra.mxu0 0.0
        %7503 = vmatpush.msra.mxu0 0.0
        %7504 = vmatpush.msra.mxu0 0.0
        %7505 = vmatpush.msra.mxu0 0.0
        %7506 = vmatpush.msra.mxu0 0.0
        %7507 = vmatpush.msra.mxu0 0.0
        %7508 = vmatpush.msra.mxu0 %v7431
        %7509 = vmatmul.f32.gmra.mxu0 %v7419
        %v7510 = vpop.f32.mrf.mxu0
        %v7511 = vadd.f32 0.0, %v7510
        %7512 = vdwg.mxu0
        %v7513 = vld [vmem:[#allocation23] sm:$0xff]
        %v7514 = vld [vmem:[#allocation23 + $0x8] sm:$0xff]
        %v7515 = vld [vmem:[#allocation23 + $0x10] sm:$0xff]
        %v7516 = vld [vmem:[#allocation23 + $0x18] sm:$0xff]
        %v7517 = vld [vmem:[#allocation23 + $0x20] sm:$0xff]
        %v7518 = vld [vmem:[#allocation23 + $0x28] sm:$0xff]
        %v7519 = vld [vmem:[#allocation23 + $0x30] sm:$0xff]
        %v7520 = vld [vmem:[#allocation23 + $0x38] sm:$0xff]
        %v7521 = vld [vmem:[#allocation23 + $0x40] sm:$0xff]
        %v7522 = vld [vmem:[#allocation23 + $0x48] sm:$0xff]
        %v7523 = vld [vmem:[#allocation23 + $0x50] sm:$0xff]
        %v7524 = vld [vmem:[#allocation23 + $0x58] sm:$0xff]
        %v7525 = vld [vmem:[#allocation23 + $0x60] sm:$0xff]
        %v7526 = vld [vmem:[#allocation23 + $0x68] sm:$0xff]
        %v7527 = vld [vmem:[#allocation23 + $0x70] sm:$0xff]
        %v7528 = vld [vmem:[#allocation23 + $0x78] sm:$0xff]
        %v7529 = vld [vmem:[#allocation23 + $0x80] sm:$0xff]
        %v7530 = vld [vmem:[#allocation23 + $0x88] sm:$0xff]
        %v7531 = vld [vmem:[#allocation23 + $0x90] sm:$0xff]
        %v7532 = vld [vmem:[#allocation23 + $0x98] sm:$0xff]
        %v7533 = vld [vmem:[#allocation23 + $0xa0] sm:$0xff]
        %v7534 = vld [vmem:[#allocation23 + $0xa8] sm:$0xff]
        %v7535 = vld [vmem:[#allocation23 + $0xb0] sm:$0xff]
        %v7536 = vld [vmem:[#allocation23 + $0xb8] sm:$0xff]
        %v7537 = vld [vmem:[#allocation23 + $0xc0] sm:$0xff]
        %v7538 = vld [vmem:[#allocation23 + $0xc8] sm:$0xff]
        %v7539 = vld [vmem:[#allocation23 + $0xd0] sm:$0xff]
        %v7540 = vld [vmem:[#allocation23 + $0xd8] sm:$0xff]
        %v7541 = vld [vmem:[#allocation23 + $0xe0] sm:$0xff]
        %v7542 = vld [vmem:[#allocation23 + $0xe8] sm:$0xff]
        %v7543 = vld [vmem:[#allocation23 + $0xf0] sm:$0xff]
        %v7544 = vld [vmem:[#allocation23 + $0xf8] sm:$0xff]
        %v7545 = vld [vmem:[#allocation23 + $0x100] sm:$0xff]
        %v7546 = vld [vmem:[#allocation23 + $0x108] sm:$0xff]
        %v7547 = vld [vmem:[#allocation23 + $0x110] sm:$0xff]
        %v7548 = vld [vmem:[#allocation23 + $0x118] sm:$0xff]
        %v7549 = vld [vmem:[#allocation23 + $0x120] sm:$0xff]
        %v7550 = vld [vmem:[#allocation23 + $0x128] sm:$0xff]
        %v7551 = vld [vmem:[#allocation23 + $0x130] sm:$0xff]
        %v7552 = vld [vmem:[#allocation23 + $0x138] sm:$0xff]
        %v7553 = vld [vmem:[#allocation23 + $0x140] sm:$0xff]
        %v7554 = vld [vmem:[#allocation23 + $0x148] sm:$0xff]
        %v7555 = vld [vmem:[#allocation23 + $0x150] sm:$0xff]
        %v7556 = vld [vmem:[#allocation23 + $0x158] sm:$0xff]
        %v7557 = vld [vmem:[#allocation23 + $0x160] sm:$0xff]
        %v7558 = vld [vmem:[#allocation23 + $0x168] sm:$0xff]
        %v7559 = vld [vmem:[#allocation23 + $0x170] sm:$0xff]
        %v7560 = vld [vmem:[#allocation23 + $0x178] sm:$0xff]
        %v7561 = vld [vmem:[#allocation23 + $0x180] sm:$0xff]
        %v7562 = vld [vmem:[#allocation23 + $0x188] sm:$0xff]
        %v7563 = vld [vmem:[#allocation23 + $0x190] sm:$0xff]
        %v7564 = vld [vmem:[#allocation23 + $0x198] sm:$0xff]
        %v7565 = vld [vmem:[#allocation23 + $0x1a0] sm:$0xff]
        %v7566 = vld [vmem:[#allocation23 + $0x1a8] sm:$0xff]
        %v7567 = vld [vmem:[#allocation23 + $0x1b0] sm:$0xff]
        %v7568 = vld [vmem:[#allocation23 + $0x1b8] sm:$0xff]
        %v7569 = vld [vmem:[#allocation23 + $0x1c0] sm:$0xff]
        %v7570 = vld [vmem:[#allocation23 + $0x1c8] sm:$0xff]
        %v7571 = vld [vmem:[#allocation23 + $0x1d0] sm:$0xff]
        %v7572 = vld [vmem:[#allocation23 + $0x1d8] sm:$0xff]
        %v7573 = vld [vmem:[#allocation23 + $0x1e0] sm:$0xff]
        %v7574 = vld [vmem:[#allocation23 + $0x1e8] sm:$0xff]
        %v7575 = vld [vmem:[#allocation23 + $0x1f0] sm:$0xff]
        %v7576 = vld [vmem:[#allocation23 + $0x1f8] sm:$0xff]
        %v7577 = vld [vmem:[#allocation23 + $0x200] sm:$0xff]
        %v7578 = vld [vmem:[#allocation23 + $0x208] sm:$0xff]
        %v7579 = vld [vmem:[#allocation23 + $0x210] sm:$0xff]
        %v7580 = vld [vmem:[#allocation23 + $0x218] sm:$0xff]
        %v7581 = vld [vmem:[#allocation23 + $0x220] sm:$0xff]
        %v7582 = vld [vmem:[#allocation23 + $0x228] sm:$0xff]
        %v7583 = vld [vmem:[#allocation23 + $0x230] sm:$0xff]
        %v7584 = vld [vmem:[#allocation23 + $0x238] sm:$0xff]
        %v7585 = vld [vmem:[#allocation23 + $0x240] sm:$0xff]
        %v7586 = vld [vmem:[#allocation23 + $0x248] sm:$0xff]
        %v7587 = vld [vmem:[#allocation23 + $0x250] sm:$0xff]
        %v7588 = vld [vmem:[#allocation23 + $0x258] sm:$0xff]
        %v7589 = vld [vmem:[#allocation23 + $0x260] sm:$0xff]
        %v7590 = vld [vmem:[#allocation23 + $0x268] sm:$0xff]
        %v7591 = vld [vmem:[#allocation23 + $0x270] sm:$0xff]
        %v7592 = vld [vmem:[#allocation23 + $0x278] sm:$0xff]
        %v7593 = vld [vmem:[#allocation23 + $0x280] sm:$0xff]
        %v7594 = vld [vmem:[#allocation23 + $0x288] sm:$0xff]
        %v7595 = vld [vmem:[#allocation23 + $0x290] sm:$0xff]
        %v7596 = vld [vmem:[#allocation23 + $0x298] sm:$0xff]
        %v7597 = vld [vmem:[#allocation23 + $0x2a0] sm:$0xff]
        %v7598 = vld [vmem:[#allocation23 + $0x2a8] sm:$0xff]
        %v7599 = vld [vmem:[#allocation23 + $0x2b0] sm:$0xff]
        %v7600 = vld [vmem:[#allocation23 + $0x2b8] sm:$0xff]
        %v7601 = vld [vmem:[#allocation23 + $0x2c0] sm:$0xff]
        %v7602 = vld [vmem:[#allocation23 + $0x2c8] sm:$0xff]
        %v7603 = vld [vmem:[#allocation23 + $0x2d0] sm:$0xff]
        %v7604 = vld [vmem:[#allocation23 + $0x2d8] sm:$0xff]
        %v7605 = vld [vmem:[#allocation23 + $0x2e0] sm:$0xff]
        %v7606 = vld [vmem:[#allocation23 + $0x2e8] sm:$0xff]
        %v7607 = vld [vmem:[#allocation23 + $0x2f0] sm:$0xff]
        %v7608 = vld [vmem:[#allocation23 + $0x2f8] sm:$0xff]
        %v7609 = vld [vmem:[#allocation23 + $0x300] sm:$0xff]
        %v7610 = vld [vmem:[#allocation23 + $0x308] sm:$0xff]
        %v7611 = vld [vmem:[#allocation23 + $0x310] sm:$0xff]
        %v7612 = vld [vmem:[#allocation23 + $0x318] sm:$0xff]
        %v7613 = vld [vmem:[#allocation23 + $0x320] sm:$0xff]
        %v7614 = vld [vmem:[#allocation23 + $0x328] sm:$0xff]
        %v7615 = vld [vmem:[#allocation23 + $0x330] sm:$0xff]
        %v7616 = vld [vmem:[#allocation23 + $0x338] sm:$0xff]
        %v7617 = vld [vmem:[#allocation23 + $0x340] sm:$0xff]
        %v7618 = vld [vmem:[#allocation23 + $0x348] sm:$0xff]
        %v7619 = vld [vmem:[#allocation23 + $0x350] sm:$0xff]
        %v7620 = vld [vmem:[#allocation23 + $0x358] sm:$0xff]
        %v7621 = vld [vmem:[#allocation23 + $0x360] sm:$0xff]
        %v7622 = vld [vmem:[#allocation23 + $0x368] sm:$0xff]
        %v7623 = vld [vmem:[#allocation23 + $0x370] sm:$0xff]
        %v7624 = vld [vmem:[#allocation23 + $0x378] sm:$0xff]
        %s7625 = scalar_lea.vmem [#allocation22], 4
        %v7626 = vld [vmem:[%s7625] sm:$0xf]
        %v7628 = vsel %vm5485, %v7626, 0
        %7630 = vmatpush.msra.mxu0 0.0
        %7631 = vmatpush.msra.mxu0 0.0
        %7632 = vmatpush.msra.mxu0 0.0
        %7633 = vmatpush.msra.mxu0 0.0
        %7634 = vmatpush.msra.mxu0 0.0
        %7635 = vmatpush.msra.mxu0 0.0
        %7636 = vmatpush.msra.mxu0 0.0
        %7637 = vmatpush.msra.mxu0 0.0
        %7638 = vmatpush.msra.mxu0 0.0
        %7639 = vmatpush.msra.mxu0 0.0
        %7640 = vmatpush.msra.mxu0 0.0
        %7641 = vmatpush.msra.mxu0 0.0
        %7642 = vmatpush.msra.mxu0 0.0
        %7643 = vmatpush.msra.mxu0 0.0
        %7644 = vmatpush.msra.mxu0 0.0
        %7645 = vmatpush.msra.mxu0 %v7422
        %7646 = vmatmul.f32.gmra.mxu0 %v7628
        %v7647 = vpop.f32.mrf.mxu0
        %v7648 = vadd.f32 0.0, %v7647
        %7649 = vdwg.mxu0
        %7650 = vmatpush.msra.mxu0 0.0
        %7651 = vmatpush.msra.mxu0 0.0
        %7652 = vmatpush.msra.mxu0 0.0
        %7653 = vmatpush.msra.mxu0 0.0
        %7654 = vmatpush.msra.mxu0 0.0
        %7655 = vmatpush.msra.mxu0 0.0
        %7656 = vmatpush.msra.mxu0 0.0
        %7657 = vmatpush.msra.mxu0 0.0
        %7658 = vmatpush.msra.mxu0 0.0
        %7659 = vmatpush.msra.mxu0 0.0
        %7660 = vmatpush.msra.mxu0 0.0
        %7661 = vmatpush.msra.mxu0 0.0
        %7662 = vmatpush.msra.mxu0 0.0
        %7663 = vmatpush.msra.mxu0 0.0
        %7664 = vmatpush.msra.mxu0 0.0
        %7665 = vmatpush.msra.mxu0 %v7425
        %7666 = vmatmul.f32.gmra.mxu0 %v7628
        %v7667 = vpop.f32.mrf.mxu0
        %v7668 = vadd.f32 0.0, %v7667
        %7669 = vdwg.mxu0
        %7670 = vmatpush.msra.mxu0 0.0
        %7671 = vmatpush.msra.mxu0 0.0
        %7672 = vmatpush.msra.mxu0 0.0
        %7673 = vmatpush.msra.mxu0 0.0
        %7674 = vmatpush.msra.mxu0 0.0
        %7675 = vmatpush.msra.mxu0 0.0
        %7676 = vmatpush.msra.mxu0 0.0
        %7677 = vmatpush.msra.mxu0 0.0
        %7678 = vmatpush.msra.mxu0 0.0
        %7679 = vmatpush.msra.mxu0 0.0
        %7680 = vmatpush.msra.mxu0 0.0
        %7681 = vmatpush.msra.mxu0 0.0
        %7682 = vmatpush.msra.mxu0 0.0
        %7683 = vmatpush.msra.mxu0 0.0
        %7684 = vmatpush.msra.mxu0 0.0
        %7685 = vmatpush.msra.mxu0 %v7428
        %7686 = vmatmul.f32.gmra.mxu0 %v7628
        %v7687 = vpop.f32.mrf.mxu0
        %v7688 = vadd.f32 0.0, %v7687
        %7689 = vdwg.mxu0
        %7690 = vmatpush.msra.mxu0 0.0
        %7691 = vmatpush.msra.mxu0 0.0
        %7692 = vmatpush.msra.mxu0 0.0
        %7693 = vmatpush.msra.mxu0 0.0
        %7694 = vmatpush.msra.mxu0 0.0
        %7695 = vmatpush.msra.mxu0 0.0
        %7696 = vmatpush.msra.mxu0 0.0
        %7697 = vmatpush.msra.mxu0 0.0
        %7698 = vmatpush.msra.mxu0 0.0
        %7699 = vmatpush.msra.mxu0 0.0
        %7700 = vmatpush.msra.mxu0 0.0
        %7701 = vmatpush.msra.mxu0 0.0
        %7702 = vmatpush.msra.mxu0 0.0
        %7703 = vmatpush.msra.mxu0 0.0
        %7704 = vmatpush.msra.mxu0 0.0
        %7705 = vmatpush.msra.mxu0 %v7431
        %7706 = vmatmul.f32.gmra.mxu0 %v7628
        %v7707 = vpop.f32.mrf.mxu0
        %v7708 = vadd.f32 0.0, %v7707
        %7709 = vdwg.mxu0
        %s7710 = scalar_lea.vmem [#allocation23], 896
        %v7711 = vld [vmem:[%s7710] sm:$0xff]
        %v7712 = vld [vmem:[%s7710 + $0x8] sm:$0xff]
        %v7713 = vld [vmem:[%s7710 + $0x10] sm:$0xff]
        %v7714 = vld [vmem:[%s7710 + $0x18] sm:$0xff]
        %v7715 = vld [vmem:[%s7710 + $0x20] sm:$0xff]
        %v7716 = vld [vmem:[%s7710 + $0x28] sm:$0xff]
        %v7717 = vld [vmem:[%s7710 + $0x30] sm:$0xff]
        %v7718 = vld [vmem:[%s7710 + $0x38] sm:$0xff]
        %v7719 = vld [vmem:[%s7710 + $0x40] sm:$0xff]
        %v7720 = vld [vmem:[%s7710 + $0x48] sm:$0xff]
        %v7721 = vld [vmem:[%s7710 + $0x50] sm:$0xff]
        %v7722 = vld [vmem:[%s7710 + $0x58] sm:$0xff]
        %v7723 = vld [vmem:[%s7710 + $0x60] sm:$0xff]
        %v7724 = vld [vmem:[%s7710 + $0x68] sm:$0xff]
        %v7725 = vld [vmem:[%s7710 + $0x70] sm:$0xff]
        %v7726 = vld [vmem:[%s7710 + $0x78] sm:$0xff]
        %v7727 = vld [vmem:[%s7710 + $0x80] sm:$0xff]
        %v7728 = vld [vmem:[%s7710 + $0x88] sm:$0xff]
        %v7729 = vld [vmem:[%s7710 + $0x90] sm:$0xff]
        %v7730 = vld [vmem:[%s7710 + $0x98] sm:$0xff]
        %v7731 = vld [vmem:[%s7710 + $0xa0] sm:$0xff]
        %v7732 = vld [vmem:[%s7710 + $0xa8] sm:$0xff]
        %v7733 = vld [vmem:[%s7710 + $0xb0] sm:$0xff]
        %v7734 = vld [vmem:[%s7710 + $0xb8] sm:$0xff]
        %v7735 = vld [vmem:[%s7710 + $0xc0] sm:$0xff]
        %v7736 = vld [vmem:[%s7710 + $0xc8] sm:$0xff]
        %v7737 = vld [vmem:[%s7710 + $0xd0] sm:$0xff]
        %v7738 = vld [vmem:[%s7710 + $0xd8] sm:$0xff]
        %v7739 = vld [vmem:[%s7710 + $0xe0] sm:$0xff]
        %v7740 = vld [vmem:[%s7710 + $0xe8] sm:$0xff]
        %v7741 = vld [vmem:[%s7710 + $0xf0] sm:$0xff]
        %v7742 = vld [vmem:[%s7710 + $0xf8] sm:$0xff]
        %v7743 = vld [vmem:[%s7710 + $0x100] sm:$0xff]
        %v7744 = vld [vmem:[%s7710 + $0x108] sm:$0xff]
        %v7745 = vld [vmem:[%s7710 + $0x110] sm:$0xff]
        %v7746 = vld [vmem:[%s7710 + $0x118] sm:$0xff]
        %v7747 = vld [vmem:[%s7710 + $0x120] sm:$0xff]
        %v7748 = vld [vmem:[%s7710 + $0x128] sm:$0xff]
        %v7749 = vld [vmem:[%s7710 + $0x130] sm:$0xff]
        %v7750 = vld [vmem:[%s7710 + $0x138] sm:$0xff]
        %v7751 = vld [vmem:[%s7710 + $0x140] sm:$0xff]
        %v7752 = vld [vmem:[%s7710 + $0x148] sm:$0xff]
        %v7753 = vld [vmem:[%s7710 + $0x150] sm:$0xff]
        %v7754 = vld [vmem:[%s7710 + $0x158] sm:$0xff]
        %v7755 = vld [vmem:[%s7710 + $0x160] sm:$0xff]
        %v7756 = vld [vmem:[%s7710 + $0x168] sm:$0xff]
        %v7757 = vld [vmem:[%s7710 + $0x170] sm:$0xff]
        %v7758 = vld [vmem:[%s7710 + $0x178] sm:$0xff]
        %v7759 = vld [vmem:[%s7710 + $0x180] sm:$0xff]
        %v7760 = vld [vmem:[%s7710 + $0x188] sm:$0xff]
        %v7761 = vld [vmem:[%s7710 + $0x190] sm:$0xff]
        %v7762 = vld [vmem:[%s7710 + $0x198] sm:$0xff]
        %v7763 = vld [vmem:[%s7710 + $0x1a0] sm:$0xff]
        %v7764 = vld [vmem:[%s7710 + $0x1a8] sm:$0xff]
        %v7765 = vld [vmem:[%s7710 + $0x1b0] sm:$0xff]
        %v7766 = vld [vmem:[%s7710 + $0x1b8] sm:$0xff]
        %v7767 = vld [vmem:[%s7710 + $0x1c0] sm:$0xff]
        %v7768 = vld [vmem:[%s7710 + $0x1c8] sm:$0xff]
        %v7769 = vld [vmem:[%s7710 + $0x1d0] sm:$0xff]
        %v7770 = vld [vmem:[%s7710 + $0x1d8] sm:$0xff]
        %v7771 = vld [vmem:[%s7710 + $0x1e0] sm:$0xff]
        %v7772 = vld [vmem:[%s7710 + $0x1e8] sm:$0xff]
        %v7773 = vld [vmem:[%s7710 + $0x1f0] sm:$0xff]
        %v7774 = vld [vmem:[%s7710 + $0x1f8] sm:$0xff]
        %v7775 = vld [vmem:[%s7710 + $0x200] sm:$0xff]
        %v7776 = vld [vmem:[%s7710 + $0x208] sm:$0xff]
        %v7777 = vld [vmem:[%s7710 + $0x210] sm:$0xff]
        %v7778 = vld [vmem:[%s7710 + $0x218] sm:$0xff]
        %v7779 = vld [vmem:[%s7710 + $0x220] sm:$0xff]
        %v7780 = vld [vmem:[%s7710 + $0x228] sm:$0xff]
        %v7781 = vld [vmem:[%s7710 + $0x230] sm:$0xff]
        %v7782 = vld [vmem:[%s7710 + $0x238] sm:$0xff]
        %v7783 = vld [vmem:[%s7710 + $0x240] sm:$0xff]
        %v7784 = vld [vmem:[%s7710 + $0x248] sm:$0xff]
        %v7785 = vld [vmem:[%s7710 + $0x250] sm:$0xff]
        %v7786 = vld [vmem:[%s7710 + $0x258] sm:$0xff]
        %v7787 = vld [vmem:[%s7710 + $0x260] sm:$0xff]
        %v7788 = vld [vmem:[%s7710 + $0x268] sm:$0xff]
        %v7789 = vld [vmem:[%s7710 + $0x270] sm:$0xff]
        %v7790 = vld [vmem:[%s7710 + $0x278] sm:$0xff]
        %v7791 = vld [vmem:[%s7710 + $0x280] sm:$0xff]
        %v7792 = vld [vmem:[%s7710 + $0x288] sm:$0xff]
        %v7793 = vld [vmem:[%s7710 + $0x290] sm:$0xff]
        %v7794 = vld [vmem:[%s7710 + $0x298] sm:$0xff]
        %v7795 = vld [vmem:[%s7710 + $0x2a0] sm:$0xff]
        %v7796 = vld [vmem:[%s7710 + $0x2a8] sm:$0xff]
        %v7797 = vld [vmem:[%s7710 + $0x2b0] sm:$0xff]
        %v7798 = vld [vmem:[%s7710 + $0x2b8] sm:$0xff]
        %v7799 = vld [vmem:[%s7710 + $0x2c0] sm:$0xff]
        %v7800 = vld [vmem:[%s7710 + $0x2c8] sm:$0xff]
        %v7801 = vld [vmem:[%s7710 + $0x2d0] sm:$0xff]
        %v7802 = vld [vmem:[%s7710 + $0x2d8] sm:$0xff]
        %v7803 = vld [vmem:[%s7710 + $0x2e0] sm:$0xff]
        %v7804 = vld [vmem:[%s7710 + $0x2e8] sm:$0xff]
        %v7805 = vld [vmem:[%s7710 + $0x2f0] sm:$0xff]
        %v7806 = vld [vmem:[%s7710 + $0x2f8] sm:$0xff]
        %v7807 = vld [vmem:[%s7710 + $0x300] sm:$0xff]
        %v7808 = vld [vmem:[%s7710 + $0x308] sm:$0xff]
        %v7809 = vld [vmem:[%s7710 + $0x310] sm:$0xff]
        %v7810 = vld [vmem:[%s7710 + $0x318] sm:$0xff]
        %v7811 = vld [vmem:[%s7710 + $0x320] sm:$0xff]
        %v7812 = vld [vmem:[%s7710 + $0x328] sm:$0xff]
        %v7813 = vld [vmem:[%s7710 + $0x330] sm:$0xff]
        %v7814 = vld [vmem:[%s7710 + $0x338] sm:$0xff]
        %v7815 = vld [vmem:[%s7710 + $0x340] sm:$0xff]
        %v7816 = vld [vmem:[%s7710 + $0x348] sm:$0xff]
        %v7817 = vld [vmem:[%s7710 + $0x350] sm:$0xff]
        %v7818 = vld [vmem:[%s7710 + $0x358] sm:$0xff]
        %v7819 = vld [vmem:[%s7710 + $0x360] sm:$0xff]
        %v7820 = vld [vmem:[%s7710 + $0x368] sm:$0xff]
        %v7821 = vld [vmem:[%s7710 + $0x370] sm:$0xff]
        %v7822 = vld [vmem:[%s7710 + $0x378] sm:$0xff]
        %v7824 = vsel %vm2070, %v7708, 0
        %7826 = vmatpush.msra.mxu0 %v7741
        %7827 = vmatpush.msra.mxu0 %v7739
        %7828 = vmatpush.msra.mxu0 %v7737
        %7829 = vmatpush.msra.mxu0 %v7735
        %7830 = vmatpush.msra.mxu0 %v7733
        %7831 = vmatpush.msra.mxu0 %v7731
        %7832 = vmatpush.msra.mxu0 %v7729
        %7833 = vmatpush.msra.mxu0 %v7727
        %7834 = vmatpush.msra.mxu0 %v7725
        %7835 = vmatpush.msra.mxu0 %v7723
        %7836 = vmatpush.msra.mxu0 %v7721
        %7837 = vmatpush.msra.mxu0 %v7719
        %7838 = vmatpush.msra.mxu0 %v7717
        %7839 = vmatpush.msra.mxu0 %v7715
        %7840 = vmatpush.msra.mxu0 %v7713
        %7841 = vmatpush.msra.mxu0 %v7711
        %7842 = vmatmul.f32.gmra.mxu0 %v7648
        %v7843 = vpop.f32.mrf.mxu0
        %v7844 = vadd.f32 0.0, %v7843
        %7845 = vdwg.mxu0
        %7846 = vmatpush.msra.mxu0 %v7773
        %7847 = vmatpush.msra.mxu0 %v7771
        %7848 = vmatpush.msra.mxu0 %v7769
        %7849 = vmatpush.msra.mxu0 %v7767
        %7850 = vmatpush.msra.mxu0 %v7765
        %7851 = vmatpush.msra.mxu0 %v7763
        %7852 = vmatpush.msra.mxu0 %v7761
        %7853 = vmatpush.msra.mxu0 %v7759
        %7854 = vmatpush.msra.mxu0 %v7757
        %7855 = vmatpush.msra.mxu0 %v7755
        %7856 = vmatpush.msra.mxu0 %v7753
        %7857 = vmatpush.msra.mxu0 %v7751
        %7858 = vmatpush.msra.mxu0 %v7749
        %7859 = vmatpush.msra.mxu0 %v7747
        %7860 = vmatpush.msra.mxu0 %v7745
        %7861 = vmatpush.msra.mxu0 %v7743
        %7862 = vmatmul.f32.gmra.mxu0 %v7668
        %v7863 = vpop.f32.mrf.mxu0
        %v7864 = vadd.f32 %v7844, %v7863
        %7865 = vdwg.mxu0
        %7866 = vmatpush.msra.mxu0 %v7805
        %7867 = vmatpush.msra.mxu0 %v7803
        %7868 = vmatpush.msra.mxu0 %v7801
        %7869 = vmatpush.msra.mxu0 %v7799
        %7870 = vmatpush.msra.mxu0 %v7797
        %7871 = vmatpush.msra.mxu0 %v7795
        %7872 = vmatpush.msra.mxu0 %v7793
        %7873 = vmatpush.msra.mxu0 %v7791
        %7874 = vmatpush.msra.mxu0 %v7789
        %7875 = vmatpush.msra.mxu0 %v7787
        %7876 = vmatpush.msra.mxu0 %v7785
        %7877 = vmatpush.msra.mxu0 %v7783
        %7878 = vmatpush.msra.mxu0 %v7781
        %7879 = vmatpush.msra.mxu0 %v7779
        %7880 = vmatpush.msra.mxu0 %v7777
        %7881 = vmatpush.msra.mxu0 %v7775
        %7882 = vmatmul.f32.gmra.mxu0 %v7688
        %v7883 = vpop.f32.mrf.mxu0
        %v7884 = vadd.f32 %v7864, %v7883
        %7885 = vdwg.mxu0
        %7886 = vmatpush.msra.mxu0 0.0
        %7887 = vmatpush.msra.mxu0 0.0
        %7888 = vmatpush.msra.mxu0 0.0
        %7889 = vmatpush.msra.mxu0 0.0
        %7890 = vmatpush.msra.mxu0 0.0
        %7891 = vmatpush.msra.mxu0 0.0
        %7892 = vmatpush.msra.mxu0 0.0
        %7893 = vmatpush.msra.mxu0 0.0
        %7894 = vmatpush.msra.mxu0 %v7821
        %7895 = vmatpush.msra.mxu0 %v7819
        %7896 = vmatpush.msra.mxu0 %v7817
        %7897 = vmatpush.msra.mxu0 %v7815
        %7898 = vmatpush.msra.mxu0 %v7813
        %7899 = vmatpush.msra.mxu0 %v7811
        %7900 = vmatpush.msra.mxu0 %v7809
        %7901 = vmatpush.msra.mxu0 %v7807
        %7902 = vmatmul.f32.gmra.mxu0 %v7824
        %v7903 = vpop.f32.mrf.mxu0
        %v7904 = vadd.f32 %v7884, %v7903
        %7905 = vdwg.mxu0
        %7906 = vmatpush.msra.mxu0 %v7742
        %7907 = vmatpush.msra.mxu0 %v7740
        %7908 = vmatpush.msra.mxu0 %v7738
        %7909 = vmatpush.msra.mxu0 %v7736
        %7910 = vmatpush.msra.mxu0 %v7734
        %7911 = vmatpush.msra.mxu0 %v7732
        %7912 = vmatpush.msra.mxu0 %v7730
        %7913 = vmatpush.msra.mxu0 %v7728
        %7914 = vmatpush.msra.mxu0 %v7726
        %7915 = vmatpush.msra.mxu0 %v7724
        %7916 = vmatpush.msra.mxu0 %v7722
        %7917 = vmatpush.msra.mxu0 %v7720
        %7918 = vmatpush.msra.mxu0 %v7718
        %7919 = vmatpush.msra.mxu0 %v7716
        %7920 = vmatpush.msra.mxu0 %v7714
        %7921 = vmatpush.msra.mxu0 %v7712
        %7922 = vmatmul.f32.gmra.mxu0 %v7648
        %v7923 = vpop.f32.mrf.mxu0
        %v7924 = vadd.f32 0.0, %v7923
        %7925 = vdwg.mxu0
        %7926 = vmatpush.msra.mxu0 %v7774
        %7927 = vmatpush.msra.mxu0 %v7772
        %7928 = vmatpush.msra.mxu0 %v7770
        %7929 = vmatpush.msra.mxu0 %v7768
        %7930 = vmatpush.msra.mxu0 %v7766
        %7931 = vmatpush.msra.mxu0 %v7764
        %7932 = vmatpush.msra.mxu0 %v7762
        %7933 = vmatpush.msra.mxu0 %v7760
        %7934 = vmatpush.msra.mxu0 %v7758
        %7935 = vmatpush.msra.mxu0 %v7756
        %7936 = vmatpush.msra.mxu0 %v7754
        %7937 = vmatpush.msra.mxu0 %v7752
        %7938 = vmatpush.msra.mxu0 %v7750
        %7939 = vmatpush.msra.mxu0 %v7748
        %7940 = vmatpush.msra.mxu0 %v7746
        %7941 = vmatpush.msra.mxu0 %v7744
        %7942 = vmatmul.f32.gmra.mxu0 %v7668
        %v7943 = vpop.f32.mrf.mxu0
        %v7944 = vadd.f32 %v7924, %v7943
        %7945 = vdwg.mxu0
        %7946 = vmatpush.msra.mxu0 %v7806
        %7947 = vmatpush.msra.mxu0 %v7804
        %7948 = vmatpush.msra.mxu0 %v7802
        %7949 = vmatpush.msra.mxu0 %v7800
        %7950 = vmatpush.msra.mxu0 %v7798
        %7951 = vmatpush.msra.mxu0 %v7796
        %7952 = vmatpush.msra.mxu0 %v7794
        %7953 = vmatpush.msra.mxu0 %v7792
        %7954 = vmatpush.msra.mxu0 %v7790
        %7955 = vmatpush.msra.mxu0 %v7788
        %7956 = vmatpush.msra.mxu0 %v7786
        %7957 = vmatpush.msra.mxu0 %v7784
        %7958 = vmatpush.msra.mxu0 %v7782
        %7959 = vmatpush.msra.mxu0 %v7780
        %7960 = vmatpush.msra.mxu0 %v7778
        %7961 = vmatpush.msra.mxu0 %v7776
        %7962 = vmatmul.f32.gmra.mxu0 %v7688
        %v7963 = vpop.f32.mrf.mxu0
        %v7964 = vadd.f32 %v7944, %v7963
        %7965 = vdwg.mxu0
        %7966 = vmatpush.msra.mxu0 0.0
        %7967 = vmatpush.msra.mxu0 0.0
        %7968 = vmatpush.msra.mxu0 0.0
        %7969 = vmatpush.msra.mxu0 0.0
        %7970 = vmatpush.msra.mxu0 0.0
        %7971 = vmatpush.msra.mxu0 0.0
        %7972 = vmatpush.msra.mxu0 0.0
        %7973 = vmatpush.msra.mxu0 0.0
        %7974 = vmatpush.msra.mxu0 %v7822
        %7975 = vmatpush.msra.mxu0 %v7820
        %7976 = vmatpush.msra.mxu0 %v7818
        %7977 = vmatpush.msra.mxu0 %v7816
        %7978 = vmatpush.msra.mxu0 %v7814
        %7979 = vmatpush.msra.mxu0 %v7812
        %7980 = vmatpush.msra.mxu0 %v7810
        %7981 = vmatpush.msra.mxu0 %v7808
        %7982 = vmatmul.f32.gmra.mxu0 %v7824
        %v7983 = vpop.f32.mrf.mxu0
        %v7984 = vadd.f32 %v7964, %v7983
        %7985 = vdwg.mxu0
        %v7987 = vsel %vm2070, %v7511, 0
        %7989 = vmatpush.msra.mxu0 %v7543
        %7990 = vmatpush.msra.mxu0 %v7541
        %7991 = vmatpush.msra.mxu0 %v7539
        %7992 = vmatpush.msra.mxu0 %v7537
        %7993 = vmatpush.msra.mxu0 %v7535
        %7994 = vmatpush.msra.mxu0 %v7533
        %7995 = vmatpush.msra.mxu0 %v7531
        %7996 = vmatpush.msra.mxu0 %v7529
        %7997 = vmatpush.msra.mxu0 %v7527
        %7998 = vmatpush.msra.mxu0 %v7525
        %7999 = vmatpush.msra.mxu0 %v7523
        %8000 = vmatpush.msra.mxu0 %v7521
        %8001 = vmatpush.msra.mxu0 %v7519
        %8002 = vmatpush.msra.mxu0 %v7517
        %8003 = vmatpush.msra.mxu0 %v7515
        %8004 = vmatpush.msra.mxu0 %v7513
        %8005 = vmatmul.f32.gmra.mxu0 %v7451
        %v8006 = vpop.f32.mrf.mxu0
        %v8007 = vadd.f32 %v7904, %v8006
        %8008 = vdwg.mxu0
        %8009 = vmatpush.msra.mxu0 %v7575
        %8010 = vmatpush.msra.mxu0 %v7573
        %8011 = vmatpush.msra.mxu0 %v7571
        %8012 = vmatpush.msra.mxu0 %v7569
        %8013 = vmatpush.msra.mxu0 %v7567
        %8014 = vmatpush.msra.mxu0 %v7565
        %8015 = vmatpush.msra.mxu0 %v7563
        %8016 = vmatpush.msra.mxu0 %v7561
        %8017 = vmatpush.msra.mxu0 %v7559
        %8018 = vmatpush.msra.mxu0 %v7557
        %8019 = vmatpush.msra.mxu0 %v7555
        %8020 = vmatpush.msra.mxu0 %v7553
        %8021 = vmatpush.msra.mxu0 %v7551
        %8022 = vmatpush.msra.mxu0 %v7549
        %8023 = vmatpush.msra.mxu0 %v7547
        %8024 = vmatpush.msra.mxu0 %v7545
        %8025 = vmatmul.f32.gmra.mxu0 %v7471
        %v8026 = vpop.f32.mrf.mxu0
        %v8027 = vadd.f32 %v8007, %v8026
        %8028 = vdwg.mxu0
        %8029 = vmatpush.msra.mxu0 %v7607
        %8030 = vmatpush.msra.mxu0 %v7605
        %8031 = vmatpush.msra.mxu0 %v7603
        %8032 = vmatpush.msra.mxu0 %v7601
        %8033 = vmatpush.msra.mxu0 %v7599
        %8034 = vmatpush.msra.mxu0 %v7597
        %8035 = vmatpush.msra.mxu0 %v7595
        %8036 = vmatpush.msra.mxu0 %v7593
        %8037 = vmatpush.msra.mxu0 %v7591
        %8038 = vmatpush.msra.mxu0 %v7589
        %8039 = vmatpush.msra.mxu0 %v7587
        %8040 = vmatpush.msra.mxu0 %v7585
        %8041 = vmatpush.msra.mxu0 %v7583
        %8042 = vmatpush.msra.mxu0 %v7581
        %8043 = vmatpush.msra.mxu0 %v7579
        %8044 = vmatpush.msra.mxu0 %v7577
        %8045 = vmatmul.f32.gmra.mxu0 %v7491
        %v8046 = vpop.f32.mrf.mxu0
        %v8047 = vadd.f32 %v8027, %v8046
        %8048 = vdwg.mxu0
        %8049 = vmatpush.msra.mxu0 0.0
        %8050 = vmatpush.msra.mxu0 0.0
        %8051 = vmatpush.msra.mxu0 0.0
        %8052 = vmatpush.msra.mxu0 0.0
        %8053 = vmatpush.msra.mxu0 0.0
        %8054 = vmatpush.msra.mxu0 0.0
        %8055 = vmatpush.msra.mxu0 0.0
        %8056 = vmatpush.msra.mxu0 0.0
        %8057 = vmatpush.msra.mxu0 %v7623
        %8058 = vmatpush.msra.mxu0 %v7621
        %8059 = vmatpush.msra.mxu0 %v7619
        %8060 = vmatpush.msra.mxu0 %v7617
        %8061 = vmatpush.msra.mxu0 %v7615
        %8062 = vmatpush.msra.mxu0 %v7613
        %8063 = vmatpush.msra.mxu0 %v7611
        %8064 = vmatpush.msra.mxu0 %v7609
        %8065 = vmatmul.f32.gmra.mxu0 %v7987
        %v8066 = vpop.f32.mrf.mxu0
        %v8067 = vadd.f32 %v8047, %v8066
        %8068 = vdwg.mxu0
        %8069 = vmatpush.msra.mxu0 %v7544
        %8070 = vmatpush.msra.mxu0 %v7542
        %8071 = vmatpush.msra.mxu0 %v7540
        %8072 = vmatpush.msra.mxu0 %v7538
        %8073 = vmatpush.msra.mxu0 %v7536
        %8074 = vmatpush.msra.mxu0 %v7534
        %8075 = vmatpush.msra.mxu0 %v7532
        %8076 = vmatpush.msra.mxu0 %v7530
        %8077 = vmatpush.msra.mxu0 %v7528
        %8078 = vmatpush.msra.mxu0 %v7526
        %8079 = vmatpush.msra.mxu0 %v7524
        %8080 = vmatpush.msra.mxu0 %v7522
        %8081 = vmatpush.msra.mxu0 %v7520
        %8082 = vmatpush.msra.mxu0 %v7518
        %8083 = vmatpush.msra.mxu0 %v7516
        %8084 = vmatpush.msra.mxu0 %v7514
        %8085 = vmatmul.f32.gmra.mxu0 %v7451
        %v8086 = vpop.f32.mrf.mxu0
        %v8087 = vadd.f32 %v7984, %v8086
        %8088 = vdwg.mxu0
        %8089 = vmatpush.msra.mxu0 %v7576
        %8090 = vmatpush.msra.mxu0 %v7574
        %8091 = vmatpush.msra.mxu0 %v7572
        %8092 = vmatpush.msra.mxu0 %v7570
        %8093 = vmatpush.msra.mxu0 %v7568
        %8094 = vmatpush.msra.mxu0 %v7566
        %8095 = vmatpush.msra.mxu0 %v7564
        %8096 = vmatpush.msra.mxu0 %v7562
        %8097 = vmatpush.msra.mxu0 %v7560
        %8098 = vmatpush.msra.mxu0 %v7558
        %8099 = vmatpush.msra.mxu0 %v7556
        %8100 = vmatpush.msra.mxu0 %v7554
        %8101 = vmatpush.msra.mxu0 %v7552
        %8102 = vmatpush.msra.mxu0 %v7550
        %8103 = vmatpush.msra.mxu0 %v7548
        %8104 = vmatpush.msra.mxu0 %v7546
        %8105 = vmatmul.f32.gmra.mxu0 %v7471
        %v8106 = vpop.f32.mrf.mxu0
        %v8107 = vadd.f32 %v8087, %v8106
        %8108 = vdwg.mxu0
        %8109 = vmatpush.msra.mxu0 %v7608
        %8110 = vmatpush.msra.mxu0 %v7606
        %8111 = vmatpush.msra.mxu0 %v7604
        %8112 = vmatpush.msra.mxu0 %v7602
        %8113 = vmatpush.msra.mxu0 %v7600
        %8114 = vmatpush.msra.mxu0 %v7598
        %8115 = vmatpush.msra.mxu0 %v7596
        %8116 = vmatpush.msra.mxu0 %v7594
        %8117 = vmatpush.msra.mxu0 %v7592
        %8118 = vmatpush.msra.mxu0 %v7590
        %8119 = vmatpush.msra.mxu0 %v7588
        %8120 = vmatpush.msra.mxu0 %v7586
        %8121 = vmatpush.msra.mxu0 %v7584
        %8122 = vmatpush.msra.mxu0 %v7582
        %8123 = vmatpush.msra.mxu0 %v7580
        %8124 = vmatpush.msra.mxu0 %v7578
        %8125 = vmatmul.f32.gmra.mxu0 %v7491
        %v8126 = vpop.f32.mrf.mxu0
        %v8127 = vadd.f32 %v8107, %v8126
        %8128 = vdwg.mxu0
        %8129 = vmatpush.msra.mxu0 0.0
        %8130 = vmatpush.msra.mxu0 0.0
        %8131 = vmatpush.msra.mxu0 0.0
        %8132 = vmatpush.msra.mxu0 0.0
        %8133 = vmatpush.msra.mxu0 0.0
        %8134 = vmatpush.msra.mxu0 0.0
        %8135 = vmatpush.msra.mxu0 0.0
        %8136 = vmatpush.msra.mxu0 0.0
        %8137 = vmatpush.msra.mxu0 %v7624
        %8138 = vmatpush.msra.mxu0 %v7622
        %8139 = vmatpush.msra.mxu0 %v7620
        %8140 = vmatpush.msra.mxu0 %v7618
        %8141 = vmatpush.msra.mxu0 %v7616
        %8142 = vmatpush.msra.mxu0 %v7614
        %8143 = vmatpush.msra.mxu0 %v7612
        %8144 = vmatpush.msra.mxu0 %v7610
        %8145 = vmatmul.f32.gmra.mxu0 %v7987
        %v8146 = vpop.f32.mrf.mxu0
        %v8147 = vadd.f32 %v8127, %v8146
        %8148 = vdwg.mxu0
        %s8149 = scalar_lea.vmem [#allocation22], 8
        %v8150 = vld [vmem:[%s8149] sm:$0xf]
        %v8152 = vsel %vm5485, %v8150, 0
        %8154 = vmatpush.msra.mxu0 0.0
        %8155 = vmatpush.msra.mxu0 0.0
        %8156 = vmatpush.msra.mxu0 0.0
        %8157 = vmatpush.msra.mxu0 0.0
        %8158 = vmatpush.msra.mxu0 0.0
        %8159 = vmatpush.msra.mxu0 0.0
        %8160 = vmatpush.msra.mxu0 0.0
        %8161 = vmatpush.msra.mxu0 0.0
        %8162 = vmatpush.msra.mxu0 0.0
        %8163 = vmatpush.msra.mxu0 0.0
        %8164 = vmatpush.msra.mxu0 0.0
        %8165 = vmatpush.msra.mxu0 0.0
        %8166 = vmatpush.msra.mxu0 0.0
        %8167 = vmatpush.msra.mxu0 0.0
        %8168 = vmatpush.msra.mxu0 0.0
        %8169 = vmatpush.msra.mxu0 %v7422
        %8170 = vmatmul.f32.gmra.mxu0 %v8152
        %v8171 = vpop.f32.mrf.mxu0
        %v8172 = vadd.f32 0.0, %v8171
        %8173 = vdwg.mxu0
        %8174 = vmatpush.msra.mxu0 0.0
        %8175 = vmatpush.msra.mxu0 0.0
        %8176 = vmatpush.msra.mxu0 0.0
        %8177 = vmatpush.msra.mxu0 0.0
        %8178 = vmatpush.msra.mxu0 0.0
        %8179 = vmatpush.msra.mxu0 0.0
        %8180 = vmatpush.msra.mxu0 0.0
        %8181 = vmatpush.msra.mxu0 0.0
        %8182 = vmatpush.msra.mxu0 0.0
        %8183 = vmatpush.msra.mxu0 0.0
        %8184 = vmatpush.msra.mxu0 0.0
        %8185 = vmatpush.msra.mxu0 0.0
        %8186 = vmatpush.msra.mxu0 0.0
        %8187 = vmatpush.msra.mxu0 0.0
        %8188 = vmatpush.msra.mxu0 0.0
        %8189 = vmatpush.msra.mxu0 %v7425
        %8190 = vmatmul.f32.gmra.mxu0 %v8152
        %v8191 = vpop.f32.mrf.mxu0
        %v8192 = vadd.f32 0.0, %v8191
        %8193 = vdwg.mxu0
        %8194 = vmatpush.msra.mxu0 0.0
        %8195 = vmatpush.msra.mxu0 0.0
        %8196 = vmatpush.msra.mxu0 0.0
        %8197 = vmatpush.msra.mxu0 0.0
        %8198 = vmatpush.msra.mxu0 0.0
        %8199 = vmatpush.msra.mxu0 0.0
        %8200 = vmatpush.msra.mxu0 0.0
        %8201 = vmatpush.msra.mxu0 0.0
        %8202 = vmatpush.msra.mxu0 0.0
        %8203 = vmatpush.msra.mxu0 0.0
        %8204 = vmatpush.msra.mxu0 0.0
        %8205 = vmatpush.msra.mxu0 0.0
        %8206 = vmatpush.msra.mxu0 0.0
        %8207 = vmatpush.msra.mxu0 0.0
        %8208 = vmatpush.msra.mxu0 0.0
        %8209 = vmatpush.msra.mxu0 %v7428
        %8210 = vmatmul.f32.gmra.mxu0 %v8152
        %v8211 = vpop.f32.mrf.mxu0
        %v8212 = vadd.f32 0.0, %v8211
        %8213 = vdwg.mxu0
        %8214 = vmatpush.msra.mxu0 0.0
        %8215 = vmatpush.msra.mxu0 0.0
        %8216 = vmatpush.msra.mxu0 0.0
        %8217 = vmatpush.msra.mxu0 0.0
        %8218 = vmatpush.msra.mxu0 0.0
        %8219 = vmatpush.msra.mxu0 0.0
        %8220 = vmatpush.msra.mxu0 0.0
        %8221 = vmatpush.msra.mxu0 0.0
        %8222 = vmatpush.msra.mxu0 0.0
        %8223 = vmatpush.msra.mxu0 0.0
        %8224 = vmatpush.msra.mxu0 0.0
        %8225 = vmatpush.msra.mxu0 0.0
        %8226 = vmatpush.msra.mxu0 0.0
        %8227 = vmatpush.msra.mxu0 0.0
        %8228 = vmatpush.msra.mxu0 0.0
        %8229 = vmatpush.msra.mxu0 %v7431
        %8230 = vmatmul.f32.gmra.mxu0 %v8152
        %v8231 = vpop.f32.mrf.mxu0
        %v8232 = vadd.f32 0.0, %v8231
        %8233 = vdwg.mxu0
        %s8234 = scalar_lea.vmem [#allocation23], 1792
        %v8235 = vld [vmem:[%s8234] sm:$0xff]
        %v8236 = vld [vmem:[%s8234 + $0x8] sm:$0xff]
        %v8237 = vld [vmem:[%s8234 + $0x10] sm:$0xff]
        %v8238 = vld [vmem:[%s8234 + $0x18] sm:$0xff]
        %v8239 = vld [vmem:[%s8234 + $0x20] sm:$0xff]
        %v8240 = vld [vmem:[%s8234 + $0x28] sm:$0xff]
        %v8241 = vld [vmem:[%s8234 + $0x30] sm:$0xff]
        %v8242 = vld [vmem:[%s8234 + $0x38] sm:$0xff]
        %v8243 = vld [vmem:[%s8234 + $0x40] sm:$0xff]
        %v8244 = vld [vmem:[%s8234 + $0x48] sm:$0xff]
        %v8245 = vld [vmem:[%s8234 + $0x50] sm:$0xff]
        %v8246 = vld [vmem:[%s8234 + $0x58] sm:$0xff]
        %v8247 = vld [vmem:[%s8234 + $0x60] sm:$0xff]
        %v8248 = vld [vmem:[%s8234 + $0x68] sm:$0xff]
        %v8249 = vld [vmem:[%s8234 + $0x70] sm:$0xff]
        %v8250 = vld [vmem:[%s8234 + $0x78] sm:$0xff]
        %v8251 = vld [vmem:[%s8234 + $0x80] sm:$0xff]
        %v8252 = vld [vmem:[%s8234 + $0x88] sm:$0xff]
        %v8253 = vld [vmem:[%s8234 + $0x90] sm:$0xff]
        %v8254 = vld [vmem:[%s8234 + $0x98] sm:$0xff]
        %v8255 = vld [vmem:[%s8234 + $0xa0] sm:$0xff]
        %v8256 = vld [vmem:[%s8234 + $0xa8] sm:$0xff]
        %v8257 = vld [vmem:[%s8234 + $0xb0] sm:$0xff]
        %v8258 = vld [vmem:[%s8234 + $0xb8] sm:$0xff]
        %v8259 = vld [vmem:[%s8234 + $0xc0] sm:$0xff]
        %v8260 = vld [vmem:[%s8234 + $0xc8] sm:$0xff]
        %v8261 = vld [vmem:[%s8234 + $0xd0] sm:$0xff]
        %v8262 = vld [vmem:[%s8234 + $0xd8] sm:$0xff]
        %v8263 = vld [vmem:[%s8234 + $0xe0] sm:$0xff]
        %v8264 = vld [vmem:[%s8234 + $0xe8] sm:$0xff]
        %v8265 = vld [vmem:[%s8234 + $0xf0] sm:$0xff]
        %v8266 = vld [vmem:[%s8234 + $0xf8] sm:$0xff]
        %v8267 = vld [vmem:[%s8234 + $0x100] sm:$0xff]
        %v8268 = vld [vmem:[%s8234 + $0x108] sm:$0xff]
        %v8269 = vld [vmem:[%s8234 + $0x110] sm:$0xff]
        %v8270 = vld [vmem:[%s8234 + $0x118] sm:$0xff]
        %v8271 = vld [vmem:[%s8234 + $0x120] sm:$0xff]
        %v8272 = vld [vmem:[%s8234 + $0x128] sm:$0xff]
        %v8273 = vld [vmem:[%s8234 + $0x130] sm:$0xff]
        %v8274 = vld [vmem:[%s8234 + $0x138] sm:$0xff]
        %v8275 = vld [vmem:[%s8234 + $0x140] sm:$0xff]
        %v8276 = vld [vmem:[%s8234 + $0x148] sm:$0xff]
        %v8277 = vld [vmem:[%s8234 + $0x150] sm:$0xff]
        %v8278 = vld [vmem:[%s8234 + $0x158] sm:$0xff]
        %v8279 = vld [vmem:[%s8234 + $0x160] sm:$0xff]
        %v8280 = vld [vmem:[%s8234 + $0x168] sm:$0xff]
        %v8281 = vld [vmem:[%s8234 + $0x170] sm:$0xff]
        %v8282 = vld [vmem:[%s8234 + $0x178] sm:$0xff]
        %v8283 = vld [vmem:[%s8234 + $0x180] sm:$0xff]
        %v8284 = vld [vmem:[%s8234 + $0x188] sm:$0xff]
        %v8285 = vld [vmem:[%s8234 + $0x190] sm:$0xff]
        %v8286 = vld [vmem:[%s8234 + $0x198] sm:$0xff]
        %v8287 = vld [vmem:[%s8234 + $0x1a0] sm:$0xff]
        %v8288 = vld [vmem:[%s8234 + $0x1a8] sm:$0xff]
        %v8289 = vld [vmem:[%s8234 + $0x1b0] sm:$0xff]
        %v8290 = vld [vmem:[%s8234 + $0x1b8] sm:$0xff]
        %v8291 = vld [vmem:[%s8234 + $0x1c0] sm:$0xff]
        %v8292 = vld [vmem:[%s8234 + $0x1c8] sm:$0xff]
        %v8293 = vld [vmem:[%s8234 + $0x1d0] sm:$0xff]
        %v8294 = vld [vmem:[%s8234 + $0x1d8] sm:$0xff]
        %v8295 = vld [vmem:[%s8234 + $0x1e0] sm:$0xff]
        %v8296 = vld [vmem:[%s8234 + $0x1e8] sm:$0xff]
        %v8297 = vld [vmem:[%s8234 + $0x1f0] sm:$0xff]
        %v8298 = vld [vmem:[%s8234 + $0x1f8] sm:$0xff]
        %v8299 = vld [vmem:[%s8234 + $0x200] sm:$0xff]
        %v8300 = vld [vmem:[%s8234 + $0x208] sm:$0xff]
        %v8301 = vld [vmem:[%s8234 + $0x210] sm:$0xff]
        %v8302 = vld [vmem:[%s8234 + $0x218] sm:$0xff]
        %v8303 = vld [vmem:[%s8234 + $0x220] sm:$0xff]
        %v8304 = vld [vmem:[%s8234 + $0x228] sm:$0xff]
        %v8305 = vld [vmem:[%s8234 + $0x230] sm:$0xff]
        %v8306 = vld [vmem:[%s8234 + $0x238] sm:$0xff]
        %v8307 = vld [vmem:[%s8234 + $0x240] sm:$0xff]
        %v8308 = vld [vmem:[%s8234 + $0x248] sm:$0xff]
        %v8309 = vld [vmem:[%s8234 + $0x250] sm:$0xff]
        %v8310 = vld [vmem:[%s8234 + $0x258] sm:$0xff]
        %v8311 = vld [vmem:[%s8234 + $0x260] sm:$0xff]
        %v8312 = vld [vmem:[%s8234 + $0x268] sm:$0xff]
        %v8313 = vld [vmem:[%s8234 + $0x270] sm:$0xff]
        %v8314 = vld [vmem:[%s8234 + $0x278] sm:$0xff]
        %v8315 = vld [vmem:[%s8234 + $0x280] sm:$0xff]
        %v8316 = vld [vmem:[%s8234 + $0x288] sm:$0xff]
        %v8317 = vld [vmem:[%s8234 + $0x290] sm:$0xff]
        %v8318 = vld [vmem:[%s8234 + $0x298] sm:$0xff]
        %v8319 = vld [vmem:[%s8234 + $0x2a0] sm:$0xff]
        %v8320 = vld [vmem:[%s8234 + $0x2a8] sm:$0xff]
        %v8321 = vld [vmem:[%s8234 + $0x2b0] sm:$0xff]
        %v8322 = vld [vmem:[%s8234 + $0x2b8] sm:$0xff]
        %v8323 = vld [vmem:[%s8234 + $0x2c0] sm:$0xff]
        %v8324 = vld [vmem:[%s8234 + $0x2c8] sm:$0xff]
        %v8325 = vld [vmem:[%s8234 + $0x2d0] sm:$0xff]
        %v8326 = vld [vmem:[%s8234 + $0x2d8] sm:$0xff]
        %v8327 = vld [vmem:[%s8234 + $0x2e0] sm:$0xff]
        %v8328 = vld [vmem:[%s8234 + $0x2e8] sm:$0xff]
        %v8329 = vld [vmem:[%s8234 + $0x2f0] sm:$0xff]
        %v8330 = vld [vmem:[%s8234 + $0x2f8] sm:$0xff]
        %v8331 = vld [vmem:[%s8234 + $0x300] sm:$0xff]
        %v8332 = vld [vmem:[%s8234 + $0x308] sm:$0xff]
        %v8333 = vld [vmem:[%s8234 + $0x310] sm:$0xff]
        %v8334 = vld [vmem:[%s8234 + $0x318] sm:$0xff]
        %v8335 = vld [vmem:[%s8234 + $0x320] sm:$0xff]
        %v8336 = vld [vmem:[%s8234 + $0x328] sm:$0xff]
        %v8337 = vld [vmem:[%s8234 + $0x330] sm:$0xff]
        %v8338 = vld [vmem:[%s8234 + $0x338] sm:$0xff]
        %v8339 = vld [vmem:[%s8234 + $0x340] sm:$0xff]
        %v8340 = vld [vmem:[%s8234 + $0x348] sm:$0xff]
        %v8341 = vld [vmem:[%s8234 + $0x350] sm:$0xff]
        %v8342 = vld [vmem:[%s8234 + $0x358] sm:$0xff]
        %v8343 = vld [vmem:[%s8234 + $0x360] sm:$0xff]
        %v8344 = vld [vmem:[%s8234 + $0x368] sm:$0xff]
        %v8345 = vld [vmem:[%s8234 + $0x370] sm:$0xff]
        %v8346 = vld [vmem:[%s8234 + $0x378] sm:$0xff]
        %v8348 = vsel %vm2070, %v8232, 0
        %8350 = vmatpush.msra.mxu0 %v8265
        %8351 = vmatpush.msra.mxu0 %v8263
        %8352 = vmatpush.msra.mxu0 %v8261
        %8353 = vmatpush.msra.mxu0 %v8259
        %8354 = vmatpush.msra.mxu0 %v8257
        %8355 = vmatpush.msra.mxu0 %v8255
        %8356 = vmatpush.msra.mxu0 %v8253
        %8357 = vmatpush.msra.mxu0 %v8251
        %8358 = vmatpush.msra.mxu0 %v8249
        %8359 = vmatpush.msra.mxu0 %v8247
        %8360 = vmatpush.msra.mxu0 %v8245
        %8361 = vmatpush.msra.mxu0 %v8243
        %8362 = vmatpush.msra.mxu0 %v8241
        %8363 = vmatpush.msra.mxu0 %v8239
        %8364 = vmatpush.msra.mxu0 %v8237
        %8365 = vmatpush.msra.mxu0 %v8235
        %8366 = vmatmul.f32.gmra.mxu0 %v8172
        %v8367 = vpop.f32.mrf.mxu0
        %v8368 = vadd.f32 0.0, %v8367
        %8369 = vdwg.mxu0
        %8370 = vmatpush.msra.mxu0 %v8297
        %8371 = vmatpush.msra.mxu0 %v8295
        %8372 = vmatpush.msra.mxu0 %v8293
        %8373 = vmatpush.msra.mxu0 %v8291
        %8374 = vmatpush.msra.mxu0 %v8289
        %8375 = vmatpush.msra.mxu0 %v8287
        %8376 = vmatpush.msra.mxu0 %v8285
        %8377 = vmatpush.msra.mxu0 %v8283
        %8378 = vmatpush.msra.mxu0 %v8281
        %8379 = vmatpush.msra.mxu0 %v8279
        %8380 = vmatpush.msra.mxu0 %v8277
        %8381 = vmatpush.msra.mxu0 %v8275
        %8382 = vmatpush.msra.mxu0 %v8273
        %8383 = vmatpush.msra.mxu0 %v8271
        %8384 = vmatpush.msra.mxu0 %v8269
        %8385 = vmatpush.msra.mxu0 %v8267
        %8386 = vmatmul.f32.gmra.mxu0 %v8192
        %v8387 = vpop.f32.mrf.mxu0
        %v8388 = vadd.f32 %v8368, %v8387
        %8389 = vdwg.mxu0
        %8390 = vmatpush.msra.mxu0 %v8329
        %8391 = vmatpush.msra.mxu0 %v8327
        %8392 = vmatpush.msra.mxu0 %v8325
        %8393 = vmatpush.msra.mxu0 %v8323
        %8394 = vmatpush.msra.mxu0 %v8321
        %8395 = vmatpush.msra.mxu0 %v8319
        %8396 = vmatpush.msra.mxu0 %v8317
        %8397 = vmatpush.msra.mxu0 %v8315
        %8398 = vmatpush.msra.mxu0 %v8313
        %8399 = vmatpush.msra.mxu0 %v8311
        %8400 = vmatpush.msra.mxu0 %v8309
        %8401 = vmatpush.msra.mxu0 %v8307
        %8402 = vmatpush.msra.mxu0 %v8305
        %8403 = vmatpush.msra.mxu0 %v8303
        %8404 = vmatpush.msra.mxu0 %v8301
        %8405 = vmatpush.msra.mxu0 %v8299
        %8406 = vmatmul.f32.gmra.mxu0 %v8212
        %v8407 = vpop.f32.mrf.mxu0
        %v8408 = vadd.f32 %v8388, %v8407
        %8409 = vdwg.mxu0
        %8410 = vmatpush.msra.mxu0 0.0
        %8411 = vmatpush.msra.mxu0 0.0
        %8412 = vmatpush.msra.mxu0 0.0
        %8413 = vmatpush.msra.mxu0 0.0
        %8414 = vmatpush.msra.mxu0 0.0
        %8415 = vmatpush.msra.mxu0 0.0
        %8416 = vmatpush.msra.mxu0 0.0
        %8417 = vmatpush.msra.mxu0 0.0
        %8418 = vmatpush.msra.mxu0 %v8345
        %8419 = vmatpush.msra.mxu0 %v8343
        %8420 = vmatpush.msra.mxu0 %v8341
        %8421 = vmatpush.msra.mxu0 %v8339
        %8422 = vmatpush.msra.mxu0 %v8337
        %8423 = vmatpush.msra.mxu0 %v8335
        %8424 = vmatpush.msra.mxu0 %v8333
        %8425 = vmatpush.msra.mxu0 %v8331
        %8426 = vmatmul.f32.gmra.mxu0 %v8348
        %v8427 = vpop.f32.mrf.mxu0
        %v8428 = vadd.f32 %v8408, %v8427
        %8429 = vdwg.mxu0
        %8430 = vmatpush.msra.mxu0 %v8266
        %8431 = vmatpush.msra.mxu0 %v8264
        %8432 = vmatpush.msra.mxu0 %v8262
        %8433 = vmatpush.msra.mxu0 %v8260
        %8434 = vmatpush.msra.mxu0 %v8258
        %8435 = vmatpush.msra.mxu0 %v8256
        %8436 = vmatpush.msra.mxu0 %v8254
        %8437 = vmatpush.msra.mxu0 %v8252
        %8438 = vmatpush.msra.mxu0 %v8250
        %8439 = vmatpush.msra.mxu0 %v8248
        %8440 = vmatpush.msra.mxu0 %v8246
        %8441 = vmatpush.msra.mxu0 %v8244
        %8442 = vmatpush.msra.mxu0 %v8242
        %8443 = vmatpush.msra.mxu0 %v8240
        %8444 = vmatpush.msra.mxu0 %v8238
        %8445 = vmatpush.msra.mxu0 %v8236
        %8446 = vmatmul.f32.gmra.mxu0 %v8172
        %v8447 = vpop.f32.mrf.mxu0
        %v8448 = vadd.f32 0.0, %v8447
        %8449 = vdwg.mxu0
        %8450 = vmatpush.msra.mxu0 %v8298
        %8451 = vmatpush.msra.mxu0 %v8296
        %8452 = vmatpush.msra.mxu0 %v8294
        %8453 = vmatpush.msra.mxu0 %v8292
        %8454 = vmatpush.msra.mxu0 %v8290
        %8455 = vmatpush.msra.mxu0 %v8288
        %8456 = vmatpush.msra.mxu0 %v8286
        %8457 = vmatpush.msra.mxu0 %v8284
        %8458 = vmatpush.msra.mxu0 %v8282
        %8459 = vmatpush.msra.mxu0 %v8280
        %8460 = vmatpush.msra.mxu0 %v8278
        %8461 = vmatpush.msra.mxu0 %v8276
        %8462 = vmatpush.msra.mxu0 %v8274
        %8463 = vmatpush.msra.mxu0 %v8272
        %8464 = vmatpush.msra.mxu0 %v8270
        %8465 = vmatpush.msra.mxu0 %v8268
        %8466 = vmatmul.f32.gmra.mxu0 %v8192
        %v8467 = vpop.f32.mrf.mxu0
        %v8468 = vadd.f32 %v8448, %v8467
        %8469 = vdwg.mxu0
        %8470 = vmatpush.msra.mxu0 %v8330
        %8471 = vmatpush.msra.mxu0 %v8328
        %8472 = vmatpush.msra.mxu0 %v8326
        %8473 = vmatpush.msra.mxu0 %v8324
        %8474 = vmatpush.msra.mxu0 %v8322
        %8475 = vmatpush.msra.mxu0 %v8320
        %8476 = vmatpush.msra.mxu0 %v8318
        %8477 = vmatpush.msra.mxu0 %v8316
        %8478 = vmatpush.msra.mxu0 %v8314
        %8479 = vmatpush.msra.mxu0 %v8312
        %8480 = vmatpush.msra.mxu0 %v8310
        %8481 = vmatpush.msra.mxu0 %v8308
        %8482 = vmatpush.msra.mxu0 %v8306
        %8483 = vmatpush.msra.mxu0 %v8304
        %8484 = vmatpush.msra.mxu0 %v8302
        %8485 = vmatpush.msra.mxu0 %v8300
        %8486 = vmatmul.f32.gmra.mxu0 %v8212
        %v8487 = vpop.f32.mrf.mxu0
        %v8488 = vadd.f32 %v8468, %v8487
        %8489 = vdwg.mxu0
        %8490 = vmatpush.msra.mxu0 0.0
        %8491 = vmatpush.msra.mxu0 0.0
        %8492 = vmatpush.msra.mxu0 0.0
        %8493 = vmatpush.msra.mxu0 0.0
        %8494 = vmatpush.msra.mxu0 0.0
        %8495 = vmatpush.msra.mxu0 0.0
        %8496 = vmatpush.msra.mxu0 0.0
        %8497 = vmatpush.msra.mxu0 0.0
        %8498 = vmatpush.msra.mxu0 %v8346
        %8499 = vmatpush.msra.mxu0 %v8344
        %8500 = vmatpush.msra.mxu0 %v8342
        %8501 = vmatpush.msra.mxu0 %v8340
        %8502 = vmatpush.msra.mxu0 %v8338
        %8503 = vmatpush.msra.mxu0 %v8336
        %8504 = vmatpush.msra.mxu0 %v8334
        %8505 = vmatpush.msra.mxu0 %v8332
        %8506 = vmatmul.f32.gmra.mxu0 %v8348
        %v8507 = vpop.f32.mrf.mxu0
        %v8508 = vadd.f32 %v8488, %v8507
        %8509 = vdwg.mxu0
        %v8510 = vadd.f32 %v8067, %v8428
        %v8511 = vadd.f32 %v8147, %v8508
        %v8512 = vld [vmem:[#allocation25] sm:$0x3]
        %v8514 = vperm.slane %v8512, 0
        %v8515 = vperm.slane %v8512, 1
        %v8518 = vadd.f32 %v8510, %v8514
        %v8519 = vadd.f32 %v8511, %v8515
        %v8520 = vmax.f32 %v8518, 0.0
        %v8521 = vmax.f32 %v8519, 0.0
        %v8522 = vld [vmem:[#allocation26] sm:$0x1]
        %vm8523 = vcmask 31744
        %v8525 = vsel %vm8523, %v8522, 0
        %v8528 = vsel %vm901, %v8520, 0
        %v8531 = vsel %vm901, %v8521, 0
        %8533 = vmatpush.msra.mxu0 0.0
        %8534 = vmatpush.msra.mxu0 0.0
        %8535 = vmatpush.msra.mxu0 0.0
        %8536 = vmatpush.msra.mxu0 0.0
        %8537 = vmatpush.msra.mxu0 0.0
        %8538 = vmatpush.msra.mxu0 0.0
        %8539 = vmatpush.msra.mxu0 0.0
        %8540 = vmatpush.msra.mxu0 0.0
        %8541 = vmatpush.msra.mxu0 0.0
        %8542 = vmatpush.msra.mxu0 0.0
        %8543 = vmatpush.msra.mxu0 0.0
        %8544 = vmatpush.msra.mxu0 0.0
        %8545 = vmatpush.msra.mxu0 0.0
        %8546 = vmatpush.msra.mxu0 0.0
        %8547 = vmatpush.msra.mxu0 0.0
        %8548 = vmatpush.msra.mxu0 %v8528
        %8549 = vmatmul.f32.gmra.mxu0 %v8525
        %v8550 = vpop.f32.mrf.mxu0
        %v8551 = vadd.f32 0.0, %v8550
        %8552 = vdwg.mxu0
        %8553 = vmatpush.msra.mxu0 0.0
        %8554 = vmatpush.msra.mxu0 0.0
        %8555 = vmatpush.msra.mxu0 0.0
        %8556 = vmatpush.msra.mxu0 0.0
        %8557 = vmatpush.msra.mxu0 0.0
        %8558 = vmatpush.msra.mxu0 0.0
        %8559 = vmatpush.msra.mxu0 0.0
        %8560 = vmatpush.msra.mxu0 0.0
        %8561 = vmatpush.msra.mxu0 0.0
        %8562 = vmatpush.msra.mxu0 0.0
        %8563 = vmatpush.msra.mxu0 0.0
        %8564 = vmatpush.msra.mxu0 0.0
        %8565 = vmatpush.msra.mxu0 0.0
        %8566 = vmatpush.msra.mxu0 0.0
        %8567 = vmatpush.msra.mxu0 0.0
        %8568 = vmatpush.msra.mxu0 %v8531
        %8569 = vmatmul.f32.gmra.mxu0 %v8525
        %v8570 = vpop.f32.mrf.mxu0
        %v8571 = vadd.f32 0.0, %v8570
        %8572 = vdwg.mxu0
        %v8573 = vld [vmem:[%s17] sm:$0xff]
        %v8574 = vld [vmem:[%s17 + $0x8] sm:$0xff]
        %v8575 = vld [vmem:[%s17 + $0x10] sm:$0xff]
        %v8576 = vld [vmem:[%s17 + $0x18] sm:$0xff]
        %v8577 = vld [vmem:[%s17 + $0x20] sm:$0xff]
        %v8578 = vld [vmem:[%s17 + $0x28] sm:$0xff]
        %v8579 = vld [vmem:[%s17 + $0x30] sm:$0xff]
        %v8580 = vld [vmem:[%s17 + $0x38] sm:$0xff]
        %v8581 = vld [vmem:[%s17 + $0x40] sm:$0xff]
        %v8582 = vld [vmem:[%s17 + $0x48] sm:$0xff]
        %v8583 = vld [vmem:[%s17 + $0x50] sm:$0xff]
        %v8584 = vld [vmem:[%s17 + $0x58] sm:$0xff]
        %v8585 = vld [vmem:[%s17 + $0x60] sm:$0xff]
        %v8586 = vld [vmem:[%s17 + $0x68] sm:$0xff]
        %v8587 = vld [vmem:[%s17 + $0x70] sm:$0xff]
        %v8588 = vld [vmem:[%s17 + $0x78] sm:$0xff]
        %v8589 = vld [vmem:[%s17 + $0x80] sm:$0xff]
        %v8590 = vld [vmem:[%s17 + $0x88] sm:$0xff]
        %v8591 = vld [vmem:[%s17 + $0x90] sm:$0xff]
        %v8592 = vld [vmem:[%s17 + $0x98] sm:$0xff]
        %v8593 = vld [vmem:[%s17 + $0xa0] sm:$0xff]
        %v8594 = vld [vmem:[%s17 + $0xa8] sm:$0xff]
        %v8595 = vld [vmem:[%s17 + $0xb0] sm:$0xff]
        %v8596 = vld [vmem:[%s17 + $0xb8] sm:$0xff]
        %v8597 = vld [vmem:[%s17 + $0xc0] sm:$0xff]
        %v8598 = vld [vmem:[%s17 + $0xc8] sm:$0xff]
        %v8599 = vld [vmem:[%s17 + $0xd0] sm:$0xff]
        %v8600 = vld [vmem:[%s17 + $0xd8] sm:$0xff]
        %v8601 = vld [vmem:[%s17 + $0xe0] sm:$0xff]
        %v8602 = vld [vmem:[%s17 + $0xe8] sm:$0xff]
        %v8603 = vld [vmem:[%s17 + $0xf0] sm:$0xff]
        %v8604 = vld [vmem:[%s17 + $0xf8] sm:$0xff]
        %s8605 = scalar_lea.vmem [#allocation26], 1
        %v8606 = vld [vmem:[%s8605] sm:$0x1]
        %v8608 = vsel %vm8523, %v8606, 0
        %8610 = vmatpush.msra.mxu0 0.0
        %8611 = vmatpush.msra.mxu0 0.0
        %8612 = vmatpush.msra.mxu0 0.0
        %8613 = vmatpush.msra.mxu0 0.0
        %8614 = vmatpush.msra.mxu0 0.0
        %8615 = vmatpush.msra.mxu0 0.0
        %8616 = vmatpush.msra.mxu0 0.0
        %8617 = vmatpush.msra.mxu0 0.0
        %8618 = vmatpush.msra.mxu0 0.0
        %8619 = vmatpush.msra.mxu0 0.0
        %8620 = vmatpush.msra.mxu0 0.0
        %8621 = vmatpush.msra.mxu0 0.0
        %8622 = vmatpush.msra.mxu0 0.0
        %8623 = vmatpush.msra.mxu0 0.0
        %8624 = vmatpush.msra.mxu0 0.0
        %8625 = vmatpush.msra.mxu0 %v8528
        %8626 = vmatmul.f32.gmra.mxu0 %v8608
        %v8627 = vpop.f32.mrf.mxu0
        %v8628 = vadd.f32 0.0, %v8627
        %8629 = vdwg.mxu0
        %8630 = vmatpush.msra.mxu0 0.0
        %8631 = vmatpush.msra.mxu0 0.0
        %8632 = vmatpush.msra.mxu0 0.0
        %8633 = vmatpush.msra.mxu0 0.0
        %8634 = vmatpush.msra.mxu0 0.0
        %8635 = vmatpush.msra.mxu0 0.0
        %8636 = vmatpush.msra.mxu0 0.0
        %8637 = vmatpush.msra.mxu0 0.0
        %8638 = vmatpush.msra.mxu0 0.0
        %8639 = vmatpush.msra.mxu0 0.0
        %8640 = vmatpush.msra.mxu0 0.0
        %8641 = vmatpush.msra.mxu0 0.0
        %8642 = vmatpush.msra.mxu0 0.0
        %8643 = vmatpush.msra.mxu0 0.0
        %8644 = vmatpush.msra.mxu0 0.0
        %8645 = vmatpush.msra.mxu0 %v8531
        %8646 = vmatmul.f32.gmra.mxu0 %v8608
        %v8647 = vpop.f32.mrf.mxu0
        %v8648 = vadd.f32 0.0, %v8647
        %8649 = vdwg.mxu0
        %s8650 = scalar_lea.vmem %s17, 256
        %v8651 = vld [vmem:[%s8650] sm:$0xff]
        %v8652 = vld [vmem:[%s8650 + $0x8] sm:$0xff]
        %v8653 = vld [vmem:[%s8650 + $0x10] sm:$0xff]
        %v8654 = vld [vmem:[%s8650 + $0x18] sm:$0xff]
        %v8655 = vld [vmem:[%s8650 + $0x20] sm:$0xff]
        %v8656 = vld [vmem:[%s8650 + $0x28] sm:$0xff]
        %v8657 = vld [vmem:[%s8650 + $0x30] sm:$0xff]
        %v8658 = vld [vmem:[%s8650 + $0x38] sm:$0xff]
        %v8659 = vld [vmem:[%s8650 + $0x40] sm:$0xff]
        %v8660 = vld [vmem:[%s8650 + $0x48] sm:$0xff]
        %v8661 = vld [vmem:[%s8650 + $0x50] sm:$0xff]
        %v8662 = vld [vmem:[%s8650 + $0x58] sm:$0xff]
        %v8663 = vld [vmem:[%s8650 + $0x60] sm:$0xff]
        %v8664 = vld [vmem:[%s8650 + $0x68] sm:$0xff]
        %v8665 = vld [vmem:[%s8650 + $0x70] sm:$0xff]
        %v8666 = vld [vmem:[%s8650 + $0x78] sm:$0xff]
        %v8667 = vld [vmem:[%s8650 + $0x80] sm:$0xff]
        %v8668 = vld [vmem:[%s8650 + $0x88] sm:$0xff]
        %v8669 = vld [vmem:[%s8650 + $0x90] sm:$0xff]
        %v8670 = vld [vmem:[%s8650 + $0x98] sm:$0xff]
        %v8671 = vld [vmem:[%s8650 + $0xa0] sm:$0xff]
        %v8672 = vld [vmem:[%s8650 + $0xa8] sm:$0xff]
        %v8673 = vld [vmem:[%s8650 + $0xb0] sm:$0xff]
        %v8674 = vld [vmem:[%s8650 + $0xb8] sm:$0xff]
        %v8675 = vld [vmem:[%s8650 + $0xc0] sm:$0xff]
        %v8676 = vld [vmem:[%s8650 + $0xc8] sm:$0xff]
        %v8677 = vld [vmem:[%s8650 + $0xd0] sm:$0xff]
        %v8678 = vld [vmem:[%s8650 + $0xd8] sm:$0xff]
        %v8679 = vld [vmem:[%s8650 + $0xe0] sm:$0xff]
        %v8680 = vld [vmem:[%s8650 + $0xe8] sm:$0xff]
        %v8681 = vld [vmem:[%s8650 + $0xf0] sm:$0xff]
        %v8682 = vld [vmem:[%s8650 + $0xf8] sm:$0xff]
        %8683 = vmatpush.msra.mxu0 %v8666
        %8684 = vmatpush.msra.mxu0 %v8665
        %8685 = vmatpush.msra.mxu0 %v8664
        %8686 = vmatpush.msra.mxu0 %v8663
        %8687 = vmatpush.msra.mxu0 %v8662
        %8688 = vmatpush.msra.mxu0 %v8661
        %8689 = vmatpush.msra.mxu0 %v8660
        %8690 = vmatpush.msra.mxu0 %v8659
        %8691 = vmatpush.msra.mxu0 %v8658
        %8692 = vmatpush.msra.mxu0 %v8657
        %8693 = vmatpush.msra.mxu0 %v8656
        %8694 = vmatpush.msra.mxu0 %v8655
        %8695 = vmatpush.msra.mxu0 %v8654
        %8696 = vmatpush.msra.mxu0 %v8653
        %8697 = vmatpush.msra.mxu0 %v8652
        %8698 = vmatpush.msra.mxu0 %v8651
        %8699 = vmatmul.f32.gmra.mxu0 %v8628
        %v8700 = vpop.f32.mrf.mxu0
        %v8701 = vadd.f32 0.0, %v8700
        %8702 = vdwg.mxu0
        %8703 = vmatpush.msra.mxu0 %v8682
        %8704 = vmatpush.msra.mxu0 %v8681
        %8705 = vmatpush.msra.mxu0 %v8680
        %8706 = vmatpush.msra.mxu0 %v8679
        %8707 = vmatpush.msra.mxu0 %v8678
        %8708 = vmatpush.msra.mxu0 %v8677
        %8709 = vmatpush.msra.mxu0 %v8676
        %8710 = vmatpush.msra.mxu0 %v8675
        %8711 = vmatpush.msra.mxu0 %v8674
        %8712 = vmatpush.msra.mxu0 %v8673
        %8713 = vmatpush.msra.mxu0 %v8672
        %8714 = vmatpush.msra.mxu0 %v8671
        %8715 = vmatpush.msra.mxu0 %v8670
        %8716 = vmatpush.msra.mxu0 %v8669
        %8717 = vmatpush.msra.mxu0 %v8668
        %8718 = vmatpush.msra.mxu0 %v8667
        %8719 = vmatmul.f32.gmra.mxu0 %v8648
        %v8720 = vpop.f32.mrf.mxu0
        %v8721 = vadd.f32 %v8701, %v8720
        %8722 = vdwg.mxu0
        %8723 = vmatpush.msra.mxu0 %v8588
        %8724 = vmatpush.msra.mxu0 %v8587
        %8725 = vmatpush.msra.mxu0 %v8586
        %8726 = vmatpush.msra.mxu0 %v8585
        %8727 = vmatpush.msra.mxu0 %v8584
        %8728 = vmatpush.msra.mxu0 %v8583
        %8729 = vmatpush.msra.mxu0 %v8582
        %8730 = vmatpush.msra.mxu0 %v8581
        %8731 = vmatpush.msra.mxu0 %v8580
        %8732 = vmatpush.msra.mxu0 %v8579
        %8733 = vmatpush.msra.mxu0 %v8578
        %8734 = vmatpush.msra.mxu0 %v8577
        %8735 = vmatpush.msra.mxu0 %v8576
        %8736 = vmatpush.msra.mxu0 %v8575
        %8737 = vmatpush.msra.mxu0 %v8574
        %8738 = vmatpush.msra.mxu0 %v8573
        %8739 = vmatmul.f32.gmra.mxu0 %v8551
        %v8740 = vpop.f32.mrf.mxu0
        %v8741 = vadd.f32 %v8721, %v8740
        %8742 = vdwg.mxu0
        %8743 = vmatpush.msra.mxu0 %v8604
        %8744 = vmatpush.msra.mxu0 %v8603
        %8745 = vmatpush.msra.mxu0 %v8602
        %8746 = vmatpush.msra.mxu0 %v8601
        %8747 = vmatpush.msra.mxu0 %v8600
        %8748 = vmatpush.msra.mxu0 %v8599
        %8749 = vmatpush.msra.mxu0 %v8598
        %8750 = vmatpush.msra.mxu0 %v8597
        %8751 = vmatpush.msra.mxu0 %v8596
        %8752 = vmatpush.msra.mxu0 %v8595
        %8753 = vmatpush.msra.mxu0 %v8594
        %8754 = vmatpush.msra.mxu0 %v8593
        %8755 = vmatpush.msra.mxu0 %v8592
        %8756 = vmatpush.msra.mxu0 %v8591
        %8757 = vmatpush.msra.mxu0 %v8590
        %8758 = vmatpush.msra.mxu0 %v8589
        %8759 = vmatmul.f32.gmra.mxu0 %v8571
        %v8760 = vpop.f32.mrf.mxu0
        %v8761 = vadd.f32 %v8741, %v8760
        %8762 = vdwg.mxu0
        %s8763 = scalar_lea.vmem [#allocation26], 2
        %v8764 = vld [vmem:[%s8763] sm:$0x1]
        %v8766 = vsel %vm8523, %v8764, 0
        %8768 = vmatpush.msra.mxu0 0.0
        %8769 = vmatpush.msra.mxu0 0.0
        %8770 = vmatpush.msra.mxu0 0.0
        %8771 = vmatpush.msra.mxu0 0.0
        %8772 = vmatpush.msra.mxu0 0.0
        %8773 = vmatpush.msra.mxu0 0.0
        %8774 = vmatpush.msra.mxu0 0.0
        %8775 = vmatpush.msra.mxu0 0.0
        %8776 = vmatpush.msra.mxu0 0.0
        %8777 = vmatpush.msra.mxu0 0.0
        %8778 = vmatpush.msra.mxu0 0.0
        %8779 = vmatpush.msra.mxu0 0.0
        %8780 = vmatpush.msra.mxu0 0.0
        %8781 = vmatpush.msra.mxu0 0.0
        %8782 = vmatpush.msra.mxu0 0.0
        %8783 = vmatpush.msra.mxu0 %v8528
        %8784 = vmatmul.f32.gmra.mxu0 %v8766
        %v8785 = vpop.f32.mrf.mxu0
        %v8786 = vadd.f32 0.0, %v8785
        %8787 = vdwg.mxu0
        %8788 = vmatpush.msra.mxu0 0.0
        %8789 = vmatpush.msra.mxu0 0.0
        %8790 = vmatpush.msra.mxu0 0.0
        %8791 = vmatpush.msra.mxu0 0.0
        %8792 = vmatpush.msra.mxu0 0.0
        %8793 = vmatpush.msra.mxu0 0.0
        %8794 = vmatpush.msra.mxu0 0.0
        %8795 = vmatpush.msra.mxu0 0.0
        %8796 = vmatpush.msra.mxu0 0.0
        %8797 = vmatpush.msra.mxu0 0.0
        %8798 = vmatpush.msra.mxu0 0.0
        %8799 = vmatpush.msra.mxu0 0.0
        %8800 = vmatpush.msra.mxu0 0.0
        %8801 = vmatpush.msra.mxu0 0.0
        %8802 = vmatpush.msra.mxu0 0.0
        %8803 = vmatpush.msra.mxu0 %v8531
        %8804 = vmatmul.f32.gmra.mxu0 %v8766
        %v8805 = vpop.f32.mrf.mxu0
        %v8806 = vadd.f32 0.0, %v8805
        %8807 = vdwg.mxu0
        %s8808 = scalar_lea.vmem %s17, 512
        %v8809 = vld [vmem:[%s8808] sm:$0xff]
        %v8810 = vld [vmem:[%s8808 + $0x8] sm:$0xff]
        %v8811 = vld [vmem:[%s8808 + $0x10] sm:$0xff]
        %v8812 = vld [vmem:[%s8808 + $0x18] sm:$0xff]
        %v8813 = vld [vmem:[%s8808 + $0x20] sm:$0xff]
        %v8814 = vld [vmem:[%s8808 + $0x28] sm:$0xff]
        %v8815 = vld [vmem:[%s8808 + $0x30] sm:$0xff]
        %v8816 = vld [vmem:[%s8808 + $0x38] sm:$0xff]
        %v8817 = vld [vmem:[%s8808 + $0x40] sm:$0xff]
        %v8818 = vld [vmem:[%s8808 + $0x48] sm:$0xff]
        %v8819 = vld [vmem:[%s8808 + $0x50] sm:$0xff]
        %v8820 = vld [vmem:[%s8808 + $0x58] sm:$0xff]
        %v8821 = vld [vmem:[%s8808 + $0x60] sm:$0xff]
        %v8822 = vld [vmem:[%s8808 + $0x68] sm:$0xff]
        %v8823 = vld [vmem:[%s8808 + $0x70] sm:$0xff]
        %v8824 = vld [vmem:[%s8808 + $0x78] sm:$0xff]
        %v8825 = vld [vmem:[%s8808 + $0x80] sm:$0xff]
        %v8826 = vld [vmem:[%s8808 + $0x88] sm:$0xff]
        %v8827 = vld [vmem:[%s8808 + $0x90] sm:$0xff]
        %v8828 = vld [vmem:[%s8808 + $0x98] sm:$0xff]
        %v8829 = vld [vmem:[%s8808 + $0xa0] sm:$0xff]
        %v8830 = vld [vmem:[%s8808 + $0xa8] sm:$0xff]
        %v8831 = vld [vmem:[%s8808 + $0xb0] sm:$0xff]
        %v8832 = vld [vmem:[%s8808 + $0xb8] sm:$0xff]
        %v8833 = vld [vmem:[%s8808 + $0xc0] sm:$0xff]
        %v8834 = vld [vmem:[%s8808 + $0xc8] sm:$0xff]
        %v8835 = vld [vmem:[%s8808 + $0xd0] sm:$0xff]
        %v8836 = vld [vmem:[%s8808 + $0xd8] sm:$0xff]
        %v8837 = vld [vmem:[%s8808 + $0xe0] sm:$0xff]
        %v8838 = vld [vmem:[%s8808 + $0xe8] sm:$0xff]
        %v8839 = vld [vmem:[%s8808 + $0xf0] sm:$0xff]
        %v8840 = vld [vmem:[%s8808 + $0xf8] sm:$0xff]
        %8841 = vmatpush.msra.mxu0 %v8824
        %8842 = vmatpush.msra.mxu0 %v8823
        %8843 = vmatpush.msra.mxu0 %v8822
        %8844 = vmatpush.msra.mxu0 %v8821
        %8845 = vmatpush.msra.mxu0 %v8820
        %8846 = vmatpush.msra.mxu0 %v8819
        %8847 = vmatpush.msra.mxu0 %v8818
        %8848 = vmatpush.msra.mxu0 %v8817
        %8849 = vmatpush.msra.mxu0 %v8816
        %8850 = vmatpush.msra.mxu0 %v8815
        %8851 = vmatpush.msra.mxu0 %v8814
        %8852 = vmatpush.msra.mxu0 %v8813
        %8853 = vmatpush.msra.mxu0 %v8812
        %8854 = vmatpush.msra.mxu0 %v8811
        %8855 = vmatpush.msra.mxu0 %v8810
        %8856 = vmatpush.msra.mxu0 %v8809
        %8857 = vmatmul.f32.gmra.mxu0 %v8786
        %v8858 = vpop.f32.mrf.mxu0
        %v8859 = vadd.f32 0.0, %v8858
        %8860 = vdwg.mxu0
        %8861 = vmatpush.msra.mxu0 %v8840
        %8862 = vmatpush.msra.mxu0 %v8839
        %8863 = vmatpush.msra.mxu0 %v8838
        %8864 = vmatpush.msra.mxu0 %v8837
        %8865 = vmatpush.msra.mxu0 %v8836
        %8866 = vmatpush.msra.mxu0 %v8835
        %8867 = vmatpush.msra.mxu0 %v8834
        %8868 = vmatpush.msra.mxu0 %v8833
        %8869 = vmatpush.msra.mxu0 %v8832
        %8870 = vmatpush.msra.mxu0 %v8831
        %8871 = vmatpush.msra.mxu0 %v8830
        %8872 = vmatpush.msra.mxu0 %v8829
        %8873 = vmatpush.msra.mxu0 %v8828
        %8874 = vmatpush.msra.mxu0 %v8827
        %8875 = vmatpush.msra.mxu0 %v8826
        %8876 = vmatpush.msra.mxu0 %v8825
        %8877 = vmatmul.f32.gmra.mxu0 %v8806
        %v8878 = vpop.f32.mrf.mxu0
        %v8879 = vadd.f32 %v8859, %v8878
        %8880 = vdwg.mxu0
        %v8881 = vadd.f32 %v8761, %v8879
        %s8882 = scalar_lea.vmem [#allocation26], 3
        %v8883 = vld [vmem:[%s8882] sm:$0x1]
        %v8885 = vsel %vm8523, %v8883, 0
        %8887 = vmatpush.msra.mxu0 0.0
        %8888 = vmatpush.msra.mxu0 0.0
        %8889 = vmatpush.msra.mxu0 0.0
        %8890 = vmatpush.msra.mxu0 0.0
        %8891 = vmatpush.msra.mxu0 0.0
        %8892 = vmatpush.msra.mxu0 0.0
        %8893 = vmatpush.msra.mxu0 0.0
        %8894 = vmatpush.msra.mxu0 0.0
        %8895 = vmatpush.msra.mxu0 0.0
        %8896 = vmatpush.msra.mxu0 0.0
        %8897 = vmatpush.msra.mxu0 0.0
        %8898 = vmatpush.msra.mxu0 0.0
        %8899 = vmatpush.msra.mxu0 0.0
        %8900 = vmatpush.msra.mxu0 0.0
        %8901 = vmatpush.msra.mxu0 0.0
        %8902 = vmatpush.msra.mxu0 %v8528
        %8903 = vmatmul.f32.gmra.mxu0 %v8885
        %v8904 = vpop.f32.mrf.mxu0
        %v8905 = vadd.f32 0.0, %v8904
        %8906 = vdwg.mxu0
        %8907 = vmatpush.msra.mxu0 0.0
        %8908 = vmatpush.msra.mxu0 0.0
        %8909 = vmatpush.msra.mxu0 0.0
        %8910 = vmatpush.msra.mxu0 0.0
        %8911 = vmatpush.msra.mxu0 0.0
        %8912 = vmatpush.msra.mxu0 0.0
        %8913 = vmatpush.msra.mxu0 0.0
        %8914 = vmatpush.msra.mxu0 0.0
        %8915 = vmatpush.msra.mxu0 0.0
        %8916 = vmatpush.msra.mxu0 0.0
        %8917 = vmatpush.msra.mxu0 0.0
        %8918 = vmatpush.msra.mxu0 0.0
        %8919 = vmatpush.msra.mxu0 0.0
        %8920 = vmatpush.msra.mxu0 0.0
        %8921 = vmatpush.msra.mxu0 0.0
        %8922 = vmatpush.msra.mxu0 %v8531
        %8923 = vmatmul.f32.gmra.mxu0 %v8885
        %v8924 = vpop.f32.mrf.mxu0
        %v8925 = vadd.f32 0.0, %v8924
        %8926 = vdwg.mxu0
        %s8927 = scalar_lea.vmem %s17, 768
        %v8928 = vld [vmem:[%s8927] sm:$0xff]
        %v8929 = vld [vmem:[%s8927 + $0x8] sm:$0xff]
        %v8930 = vld [vmem:[%s8927 + $0x10] sm:$0xff]
        %v8931 = vld [vmem:[%s8927 + $0x18] sm:$0xff]
        %v8932 = vld [vmem:[%s8927 + $0x20] sm:$0xff]
        %v8933 = vld [vmem:[%s8927 + $0x28] sm:$0xff]
        %v8934 = vld [vmem:[%s8927 + $0x30] sm:$0xff]
        %v8935 = vld [vmem:[%s8927 + $0x38] sm:$0xff]
        %v8936 = vld [vmem:[%s8927 + $0x40] sm:$0xff]
        %v8937 = vld [vmem:[%s8927 + $0x48] sm:$0xff]
        %v8938 = vld [vmem:[%s8927 + $0x50] sm:$0xff]
        %v8939 = vld [vmem:[%s8927 + $0x58] sm:$0xff]
        %v8940 = vld [vmem:[%s8927 + $0x60] sm:$0xff]
        %v8941 = vld [vmem:[%s8927 + $0x68] sm:$0xff]
        %v8942 = vld [vmem:[%s8927 + $0x70] sm:$0xff]
        %v8943 = vld [vmem:[%s8927 + $0x78] sm:$0xff]
        %v8944 = vld [vmem:[%s8927 + $0x80] sm:$0xff]
        %v8945 = vld [vmem:[%s8927 + $0x88] sm:$0xff]
        %v8946 = vld [vmem:[%s8927 + $0x90] sm:$0xff]
        %v8947 = vld [vmem:[%s8927 + $0x98] sm:$0xff]
        %v8948 = vld [vmem:[%s8927 + $0xa0] sm:$0xff]
        %v8949 = vld [vmem:[%s8927 + $0xa8] sm:$0xff]
        %v8950 = vld [vmem:[%s8927 + $0xb0] sm:$0xff]
        %v8951 = vld [vmem:[%s8927 + $0xb8] sm:$0xff]
        %v8952 = vld [vmem:[%s8927 + $0xc0] sm:$0xff]
        %v8953 = vld [vmem:[%s8927 + $0xc8] sm:$0xff]
        %v8954 = vld [vmem:[%s8927 + $0xd0] sm:$0xff]
        %v8955 = vld [vmem:[%s8927 + $0xd8] sm:$0xff]
        %v8956 = vld [vmem:[%s8927 + $0xe0] sm:$0xff]
        %v8957 = vld [vmem:[%s8927 + $0xe8] sm:$0xff]
        %v8958 = vld [vmem:[%s8927 + $0xf0] sm:$0xff]
        %v8959 = vld [vmem:[%s8927 + $0xf8] sm:$0xff]
        %8960 = vmatpush.msra.mxu0 %v8943
        %8961 = vmatpush.msra.mxu0 %v8942
        %8962 = vmatpush.msra.mxu0 %v8941
        %8963 = vmatpush.msra.mxu0 %v8940
        %8964 = vmatpush.msra.mxu0 %v8939
        %8965 = vmatpush.msra.mxu0 %v8938
        %8966 = vmatpush.msra.mxu0 %v8937
        %8967 = vmatpush.msra.mxu0 %v8936
        %8968 = vmatpush.msra.mxu0 %v8935
        %8969 = vmatpush.msra.mxu0 %v8934
        %8970 = vmatpush.msra.mxu0 %v8933
        %8971 = vmatpush.msra.mxu0 %v8932
        %8972 = vmatpush.msra.mxu0 %v8931
        %8973 = vmatpush.msra.mxu0 %v8930
        %8974 = vmatpush.msra.mxu0 %v8929
        %8975 = vmatpush.msra.mxu0 %v8928
        %8976 = vmatmul.f32.gmra.mxu0 %v8905
        %v8977 = vpop.f32.mrf.mxu0
        %v8978 = vadd.f32 0.0, %v8977
        %8979 = vdwg.mxu0
        %8980 = vmatpush.msra.mxu0 %v8959
        %8981 = vmatpush.msra.mxu0 %v8958
        %8982 = vmatpush.msra.mxu0 %v8957
        %8983 = vmatpush.msra.mxu0 %v8956
        %8984 = vmatpush.msra.mxu0 %v8955
        %8985 = vmatpush.msra.mxu0 %v8954
        %8986 = vmatpush.msra.mxu0 %v8953
        %8987 = vmatpush.msra.mxu0 %v8952
        %8988 = vmatpush.msra.mxu0 %v8951
        %8989 = vmatpush.msra.mxu0 %v8950
        %8990 = vmatpush.msra.mxu0 %v8949
        %8991 = vmatpush.msra.mxu0 %v8948
        %8992 = vmatpush.msra.mxu0 %v8947
        %8993 = vmatpush.msra.mxu0 %v8946
        %8994 = vmatpush.msra.mxu0 %v8945
        %8995 = vmatpush.msra.mxu0 %v8944
        %8996 = vmatmul.f32.gmra.mxu0 %v8925
        %v8997 = vpop.f32.mrf.mxu0
        %v8998 = vadd.f32 %v8978, %v8997
        %8999 = vdwg.mxu0
        %v9000 = vadd.f32 %v8881, %v8998
        %v9001 = vld [vmem:[#allocation28] sm:$0x1]
        %v9002 = vadd.f32 %v9000, %v9001
        %vm9003 = vcmask 57344
        %9004 = vst.msk [vmem:[%s863] sm:$0x1] %vm9003, %v9002
        %s9005 = sand.u32 %s454, 1
        %s9006 = scalar_lea.sflag [#allocation4], %s9005
        %s9007 = sand.u32 %s454, 1
        %s9008 = scalar_lea.vmem [#allocation29], %s9007
        // Predicated region
        $region165: #{conv_encoder_forward.1} parent=95 // pred_check
          %p9009 = pneg %p464
        $region166: #{conv_encoder_forward.1} parent=95 // pred_check_branch
          %9011 = sbr.rel (%p9009) target = $region168
        $region167: #{conv_encoder_forward.1} parent=95 // pred_region
          %9013 = vsyncadd %s9006, 0
          %s9014 = scalar_lea.hbm %s19, %s42
          %s9016 = sshll.u32 %s9008, 4
          %s9017 = int_to_ptr.vmem [resolvable:$true] %s9016
          %s9018 = sshll.u32 %s9014, 4
          %s9019 = int_to_ptr.hbm [resolvable:$true] %s9018
          %9021 = dma.vmem_to_hbm [thread:$0]  %s9017, 16, %s9019, %s9006
        $region168: #{conv_encoder_forward.1} parent=95 // pred_fallthru
          _
      $region96: #{conv_encoder_forward.1} parent=5 // pred_fallthru
        _
      %p9022 = scmp.le.s32.totalorder 2, %s37
      // Predicated region
      $region169: #{conv_encoder_forward.1} parent=5 // pred_check
        %p9023 = pneg %p9022
      $region170: #{conv_encoder_forward.1} parent=5 // pred_check_branch
        %9025 = sbr.rel (%p9023) target = $region172
      $region171: #{conv_encoder_forward.1} parent=5 // pred_region
        %s9026 = ssub.s32 %s37, 2
        // Predicated region
        $region173: #{conv_encoder_forward.1} parent=171 // pred_check
          %p9027 = pneg %p470
        $region174: #{conv_encoder_forward.1} parent=171 // pred_check_branch
          %9029 = sbr.rel (%p9027) target = $region176
        $region175: #{conv_encoder_forward.1} parent=171 // pred_region
          %s9030 = sand.u32 %s455, 1
          %s9031 = scalar_lea.sflag [#allocation4], %s9030
          %s9032 = sand.u32 %s455, 1
          %s9033 = scalar_lea.vmem [#allocation29], %s9032
          %9035 = dma.done %s9031, 16
        $region176: #{conv_encoder_forward.1} parent=171 // pred_fallthru
          _
      $region172: #{conv_encoder_forward.1} parent=5 // pred_fallthru
        _
    $region6: #{conv_encoder_forward.1} parent=1 // loop_footer
      %s41 = sadd.s32 1, %s37
    $region7: #{conv_encoder_forward.1} parent=1 // loop_footer_branch
      %36 = sbr.rel target = $region3
    $region8: #{conv_encoder_forward.1} parent=1 // loop_exit
      _
    %9036 = vsyncpa [#allocation3], 1
    %s9037 = scalar_lea.sflag [#allocation3], 1
    %9038 = vsyncpa %s9037, 1
    %9039 = vsyncpa [#allocation6], 1
    %9040 = vsyncpa [#allocation9], 1
    %9041 = vsyncpa [#allocation12], 1
    %9042 = vsyncpa [#allocation15], 1
    %9043 = vsyncpa [#allocation18], 1
    %9044 = vsyncpa [#allocation21], 1
    %9045 = vsyncpa [#allocation24], 1
    %9046 = vsyncpa [#allocation27], 1
    %9047 = vsyncpa [#allocation4], 1
    %s9048 = scalar_lea.sflag [#allocation4], 1
    %9049 = vsyncpa %s9048, 1

</llo_original>
